<compile_context>
chip_gen: v5e
topology: v5e:2x2
jax: 0.10.0
libtpu: 0.0.40
codegen_flags: <defaults>
</compile_context>

<pallas_src>
import jax
import jax.numpy as jnp
from jax import lax
from jax.experimental import pallas as pl
from jax.experimental.pallas import tpu as pltpu


# ----------------------------------------------------------------------------
# fused kernel: proj -> 2-layer GRU (time loop in-kernel) -> Bert layer -> fc
# Grid iterates over batch BLOCKS ("parallel" -> both TCs on v7x).
#
# vecs_ref rows (each (1, Hp), real data in lanes [0:H)):
#   0 proj bias (comb|cont), 1 cont_proj weight row, 2 proj LN gamma,
#   3 proj LN beta, 4 attn output bias, 5 LN1 gamma, 6 LN1 beta,
#   7 intermediate bias, 8 ffn output bias, 9 LN2 gamma, 10 LN2 beta,
#   11 fc weight row
# ----------------------------------------------------------------------------
def make_fused_kernel(S, B_blk, H, Hp, n_heads, n_layers):
    dh = H // n_heads
    half = H // 2
    scale = 1.0 / float(dh) ** 0.5
    Gp = 3 * Hp                      # fused GRU gate width, 128-aligned slabs
    M = S * B_blk

    def kernel(xin_ref, cont_ref, mask_ref,
               w_proj_ref,
               gru_wx_ref, gru_wh_ref, gru_bx_ref, gru_bh_ref,
               w_qkv_ref, b_qkv_ref, attn_w_ref, vecs_ref, bfc_ref,
               out_ref,
               gx0_sc, g_sc, gbm_sc):
        f32 = jnp.float32
        bf16 = jnp.bfloat16

        lane = lax.broadcasted_iota(jnp.int32, (1, Hp), 1)
        m_l = (lane < half).astype(f32)                      # comb half
        m_r = jnp.logical_and(lane >= half, lane < H).astype(f32)  # cont half
        m_h = (lane < H).astype(f32)                         # real hidden lanes

        # ---------------- comb_proj / cont_proj (block-diag) ----------------
        # Embeddings go through one K=4*intd matmul; the single cont column is
        # a rank-1 VPU update.  Two independent half-width LayerNorms are done
        # with lane masks (padding lanes [H:Hp) stay exactly zero).
        xin = xin_ref[...].reshape(M, -1).astype(bf16)       # (M, Kp)
        raw = jnp.dot(xin, w_proj_ref[...], preferred_element_type=f32)
        cont = cont_ref[...].reshape(M, 1)
        raw = raw + cont * vecs_ref[1] + vecs_ref[0]
        inv_half = 1.0 / half
        mu = (jnp.sum(raw * m_l, -1, keepdims=True) * m_l +
              jnp.sum(raw * m_r, -1, keepdims=True) * m_r) * inv_half
        d = (raw - mu) * (m_l + m_r)
        var = (jnp.sum(d * d * m_l, -1, keepdims=True) * m_l +
               jnp.sum(d * d * m_r, -1, keepdims=True) * m_r) * inv_half
        x_ln = d * lax.rsqrt(var + 1e-5) * vecs_ref[2] + vecs_ref[3]  # (M, Hp)

        # ---------------- GRU over time (batched across B_blk) --------------
        # Hoist the non-recurrent layer-0 input matmul: one (M, 3Hp) matmul.
        gx0 = jnp.dot(x_ln.astype(bf16), gru_wx_ref[0],
                      preferred_element_type=f32) + gru_bx_ref[0]
        gx0_sc[...] = gx0.reshape(S, B_blk, Gp)

        # PyTorch GRU gate order [r|z|n]; each gate in its own 128-lane slab.
        def cell(gx, h, wh, bh):
            gh = jnp.dot(h.astype(bf16), wh, preferred_element_type=f32) + bh
            r = jax.nn.sigmoid(gx[:, 0:Hp] + gh[:, 0:Hp])
            z = jax.nn.sigmoid(gx[:, Hp:2 * Hp] + gh[:, Hp:2 * Hp])
            n = jnp.tanh(gx[:, 2 * Hp:3 * Hp] + r * gh[:, 2 * Hp:3 * Hp])
            return (1.0 - z) * n + z * h

        def step(t, hs):
            new_hs = [cell(gx0_sc[t], hs[0], gru_wh_ref[0], gru_bh_ref[0])]
            for l in range(1, n_layers):
                gx = jnp.dot(new_hs[-1].astype(bf16), gru_wx_ref[l],
                             preferred_element_type=f32) + gru_bx_ref[l]
                new_hs.append(cell(gx, hs[l], gru_wh_ref[l], gru_bh_ref[l]))
            g_sc[t] = new_hs[-1]                             # dense (B_blk, Hp) store
            return tuple(new_hs)

        h_init = tuple(jnp.zeros((B_blk, Hp), f32) for _ in range(n_layers))
        lax.fori_loop(0, S, step, h_init, unroll=(True if S <= 16 else 4))

        # time-major -> batch-major (small static copy loop)
        for t in range(S):
            gbm_sc[:, t, :] = g_sc[t]
        g_bm = gbm_sc[...]                                   # (B_blk, S, Hp)
        g2 = g_bm.reshape(M, Hp)

        # ---------------- Bert layer (MHA + add&LN + FFN + add&LN) ----------
        neg = ((1.0 - mask_ref[...]) * -10000.0)[:, None, :]  # (B_blk, 1, S)
        qkv = (jnp.dot(g2.astype(bf16), w_qkv_ref[...],
                       preferred_element_type=f32) + b_qkv_ref[...]
               ).reshape(B_blk, S, n_heads * 3 * Hp)

        attn2 = jnp.zeros((M, Hp), f32)
        for h in range(n_heads):
            base = h * 3 * Hp
            qh = qkv[:, :, base:base + Hp].astype(bf16)
            kh = qkv[:, :, base + Hp:base + 2 * Hp].astype(bf16)
            vh = qkv[:, :, base + 2 * Hp:base + 3 * Hp].astype(bf16)
            sc = jnp.einsum('bqd,bkd->bqk', qh, kh,
                            preferred_element_type=f32) * scale + neg
            sc = sc - jnp.max(sc, axis=-1, keepdims=True)
            e = jnp.exp(sc)
            prob = e * pl.reciprocal(jnp.sum(e, -1, keepdims=True), approx=True)
            ctx = jnp.einsum('bqk,bkd->bqd', prob.astype(bf16), vh,
                             preferred_element_type=f32)     # (B_blk, S, Hp)
            # fold the per-head output projection (no head concatenate)
            attn2 = attn2 + jnp.dot(ctx.reshape(M, Hp).astype(bf16),
                                    attn_w_ref[h], preferred_element_type=f32)
        attn2 = attn2 + vecs_ref[4]

        inv_h = 1.0 / H

        def ln_h(x, gamma, beta):        # LayerNorm over the real H lanes only
            mu2 = jnp.sum(x * m_h, -1, keepdims=True) * inv_h
            dd = (x - mu2) * m_h
            var2 = jnp.sum(dd * dd, -1, keepdims=True) * inv_h
            return dd * lax.rsqrt(var2 + 1e-12) * gamma + beta

        h1 = ln_h(attn2 + g2, vecs_ref[5], vecs_ref[6])

        # TODO(synk): HF BERT default activation is exact erf-GELU; the tanh
        # approximation is used here (maps to TPU EUP), difference ~1e-3.
        inter = jax.nn.gelu(
            jnp.dot(h1.astype(bf16), attn_w_ref[n_heads],
                    preferred_element_type=f32) + vecs_ref[7], approximate=True)
        ffo = jnp.dot(inter.astype(bf16), attn_w_ref[n_heads + 1],
                      preferred_element_type=f32) + vecs_ref[8]
        h2 = ln_h(ffo + h1, vecs_ref[9], vecs_ref[10])       # (M, Hp)

        # fc head: VPU multiply + lane reduction (no N=1 MXU matmul)
        logits = jnp.sum(h2.reshape(B_blk, S, Hp) * vecs_ref[11], axis=-1)
        out_ref[...] = logits + bfc_ref[...]                 # (B_blk, S)

    return kernel


def fused_forward(xin_tm, cont_tm, mask_bm, p, *, hidden, n_heads, n_layers,
                  b_blk):
    S, B_pad, Kp = xin_tm.shape
    Hp = p['w_proj'].shape[1]
    Gp = 3 * Hp

    def full(shape):
        return pl.BlockSpec(shape, lambda b, _n=len(shape): (0,) * _n)

    # NOTE: on v7x, pick b_blk so B_pad // b_blk is a multiple of 2 when
    # possible, so both TensorCores get work under "parallel" semantics.
    out = pl.pallas_call(
        make_fused_kernel(S, b_blk, hidden, Hp, n_heads, n_layers),
        out_shape=jax.ShapeDtypeStruct((B_pad, S), jnp.float32),
        grid=(B_pad // b_blk,),
        in_specs=[
            pl.BlockSpec((S, b_blk, Kp), lambda b: (0, b, 0)),
            pl.BlockSpec((S, b_blk, 1), lambda b: (0, b, 0)),
            pl.BlockSpec((b_blk, S), lambda b: (b, 0)),
            full(p['w_proj'].shape),
            full(p['gru_wx'].shape), full(p['gru_wh'].shape),
            full(p['gru_bx'].shape), full(p['gru_bh'].shape),
            full(p['w_qkv'].shape), full(p['b_qkv'].shape),
            full(p['attn_w'].shape), full(p['vecs'].shape),
            full(p['bfc'].shape),
        ],
        out_specs=pl.BlockSpec((b_blk, S), lambda b: (b, 0)),
        scratch_shapes=[pltpu.VMEM((S, b_blk, Gp), jnp.float32),  # hoisted GX0
                        pltpu.VMEM((S, b_blk, Hp), jnp.float32),  # GRU out (time-major)
                        pltpu.VMEM((b_blk, S, Hp), jnp.float32)], # GRU out (batch-major)
        compiler_params=pltpu.CompilerParams(
            dimension_semantics=("parallel",)),
    )(xin_tm, cont_tm, mask_bm,
      p['w_proj'],
      p['gru_wx'], p['gru_wh'], p['gru_bx'], p['gru_bh'],
      p['w_qkv'], p['b_qkv'], p['attn_w'], p['vecs'], p['bfc'])
    return out                                               # (B_pad, S)


# ----------------------------------------------------------------------------
# full forward (embedding gathers + input packing in XLA, rest in the kernel)
# ----------------------------------------------------------------------------
def lgcn_gru_attn_forward(params, test, question, tag, correct, mask,
                          interaction, elapsed, *, hidden_dim=64, n_heads=2,
                          n_layers=2, b_blk=8):
    # `correct` is carried for signature fidelity but (as in the PyTorch base
    # forward) is not used directly; `interaction` encodes it.
    B, S = interaction.shape

    e_int = jnp.take(params['emb_interaction'], interaction, axis=0)
    e_test = jnp.take(params['emb_test'], test, axis=0)
    e_q = jnp.take(params['emb_question'], question, axis=0)
    e_tag = jnp.take(params['emb_tag'], tag, axis=0)
    feats = jnp.concatenate([e_int, e_test, e_q, e_tag], axis=-1)  # (B, S, 4*intd)

    cont = elapsed.astype(jnp.float32)                       # (B, S)
    maskf = mask.astype(jnp.float32)                         # (B, S)

    # pad batch to a multiple of the batch block
    B_pad = ((B + b_blk - 1) // b_blk) * b_blk
    if B_pad != B:
        padb = B_pad - B
        feats = jnp.concatenate(
            [feats, jnp.zeros((padb,) + feats.shape[1:], feats.dtype)], axis=0)
        cont = jnp.concatenate([cont, jnp.zeros((padb, S), cont.dtype)], axis=0)
        maskf = jnp.concatenate([maskf, jnp.zeros((padb, S), maskf.dtype)], axis=0)

    # time-major inputs for the in-kernel GRU time loop (transpose done in XLA)
    xin_tm = jnp.transpose(feats, (1, 0, 2))                 # (S, B_pad, Kp)
    cont_tm = jnp.transpose(cont, (1, 0))[:, :, None]        # (S, B_pad, 1)

    out = fused_forward(xin_tm, cont_tm, maskf, params,
                        hidden=hidden_dim, n_heads=n_heads,
                        n_layers=n_layers, b_blk=b_blk)
    return out[:B]                                           # (B, S)


# ----------------------------------------------------------------------------
# deterministic synthetic parameter initialization (pre-packed, bf16 matmuls)
# ----------------------------------------------------------------------------
def init_params(key, hd=64, dim_div=2, n_tests=1538, n_questions=9455,
                n_tags=913, n_heads=2, n_layers=2):
    intd = hd // dim_div
    half = hd // 2
    dh = hd // n_heads
    Hp = ((hd + 127) // 128) * 128                           # lane-padded hidden
    Gp = 3 * Hp
    keys = iter(jax.random.split(key, 256))

    def w(shape, scale=0.02):
        return (scale * jax.random.normal(next(keys), shape)).astype(jnp.float32)

    p = {}
    p['emb_interaction'] = w((3, intd))
    p['emb_test'] = w((n_tests + 1, intd))
    p['emb_question'] = w((n_questions + 1, intd))
    p['emb_tag'] = w((n_tags + 1, intd))

    # comb_proj weight only (K = 4*intd = 128); cont_proj handled as rank-1.
    kc = 4 * intd
    w_proj = jnp.zeros((kc, Hp), jnp.float32).at[:, :half].set(w((kc, half)))
    p['w_proj'] = w_proj.astype(jnp.bfloat16)

    # GRU fused gates [r|z|n], each gate in its own 128-lane slab; unused
    # rows/lanes are zero so the Hp padding stays exactly zero in the state.
    def pack_gates():
        m = jnp.zeros((Hp, Gp), jnp.float32)
        for g in range(3):
            m = m.at[:hd, g * Hp:g * Hp + hd].set(w((hd, hd)))
        return m

    p['gru_wx'] = jnp.stack([pack_gates() for _ in range(n_layers)]
                            ).astype(jnp.bfloat16)
    p['gru_wh'] = jnp.stack([pack_gates() for _ in range(n_layers)]
                            ).astype(jnp.bfloat16)
    p['gru_bx'] = jnp.zeros((n_layers, 1, Gp), jnp.float32)
    p['gru_bh'] = jnp.zeros((n_layers, 1, Gp), jnp.float32)

    # attention QKV: per head, q/k/v each in its own 128-lane slab
    wq = jnp.zeros((Hp, n_heads * 3 * Hp), jnp.float32)
    for h in range(n_heads):
        base = h * 3 * Hp
        wq = wq.at[:hd, base:base + dh].set(w((hd, dh)))
        wq = wq.at[:hd, base + Hp:base + Hp + dh].set(w((hd, dh)))
        wq = wq.at[:hd, base + 2 * Hp:base + 2 * Hp + dh].set(w((hd, dh)))
    p['w_qkv'] = wq.astype(jnp.bfloat16)
    p['b_qkv'] = jnp.zeros((1, n_heads * 3 * Hp), jnp.float32)

    # attn_w: [per-head output proj x n_heads, W_intermediate, W_ffn_out]
    aw = jnp.zeros((n_heads + 2, Hp, Hp), jnp.float32)
    for h in range(n_heads):
        aw = aw.at[h, :dh, :hd].set(w((dh, hd)))
    aw = aw.at[n_heads, :hd, :hd].set(w((hd, hd)))
    aw = aw.at[n_heads + 1, :hd, :hd].set(w((hd, hd)))
    p['attn_w'] = aw.astype(jnp.bfloat16)

    def vec(vals, start=0):
        v = jnp.zeros((1, Hp), jnp.float32)
        return v.at[0, start:start + vals.shape[0]].set(vals)

    ones_h = jnp.ones((hd,), jnp.float32)
    zeros_h = jnp.zeros((hd,), jnp.float32)
    p['vecs'] = jnp.stack([
        vec(zeros_h),                 # 0 proj bias (comb_b | cont_b)
        vec(w((half,)), start=half),  # 1 cont_proj weight row (1 -> hd//2)
        vec(ones_h),                  # 2 proj LN gamma
        vec(zeros_h),                 # 3 proj LN beta
        vec(zeros_h),                 # 4 attention output bias
        vec(ones_h),                  # 5 LN1 gamma
        vec(zeros_h),                 # 6 LN1 beta
        vec(zeros_h),                 # 7 intermediate bias
        vec(zeros_h),                 # 8 ffn output bias
        vec(ones_h),                  # 9 LN2 gamma
        vec(zeros_h),                 # 10 LN2 beta
        vec(w((hd,))),                # 11 fc weight row
    ], axis=0)                        # (12, 1, Hp)
    p['bfc'] = jnp.zeros((1, 1), jnp.float32)
    return p


# ----------------------------------------------------------------------------
if __name__ == "__main__":
    B, S, HD = 2, 8, 64
    N_TESTS, N_QUESTIONS, N_TAGS, N_HEADS, N_LAYERS = 1538, 9455, 913, 2, 2

    params = init_params(jax.random.PRNGKey(0), hd=HD,
                         n_tests=N_TESTS, n_questions=N_QUESTIONS,
                         n_tags=N_TAGS, n_heads=N_HEADS, n_layers=N_LAYERS)

    k1, k2, k3, k4, k5, k6 = jax.random.split(jax.random.PRNGKey(0), 6)
    test = jax.random.randint(k1, (B, S), 0, N_TESTS + 1, dtype=jnp.int32)
    question = jax.random.randint(k2, (B, S), 0, N_QUESTIONS + 1, dtype=jnp.int32)
    tag = jax.random.randint(k3, (B, S), 0, N_TAGS + 1, dtype=jnp.int32)
    correct = jax.random.randint(k4, (B, S), 0, 2, dtype=jnp.int32)
    interaction = jax.random.randint(k5, (B, S), 0, 3, dtype=jnp.int32)
    elapsed = jax.random.uniform(k6, (B, S), dtype=jnp.float32)
    mask = jnp.ones((B, S), jnp.float32).at[1, 6:].set(0.0)

    fwd = jax.jit(lambda *a: lgcn_gru_attn_forward(
        *a, hidden_dim=HD, n_heads=N_HEADS, n_layers=N_LAYERS, b_blk=8))
    out = fwd(params, test, question, tag, correct, mask, interaction, elapsed)
    out = jax.block_until_ready(out)
    assert out.shape == (B, S), out.shape
    assert bool(jnp.all(jnp.isfinite(out)))
    print("KERNEL_OK")
</pallas_src>

<mosaic_0001>
module attributes {stable_mosaic.version = 11 : i64} {
  func.func @kernel(%arg0: i32, %arg1: memref<8x8x128xf32, #tpu.memory_space<vmem>>, %arg2: memref<8x8x1xf32, #tpu.memory_space<vmem>>, %arg3: memref<8x8xf32, #tpu.memory_space<vmem>>, %arg4: memref<128x128xbf16, #tpu.memory_space<vmem>>, %arg5: memref<2x128x384xbf16, #tpu.memory_space<vmem>>, %arg6: memref<2x128x384xbf16, #tpu.memory_space<vmem>>, %arg7: memref<2x1x384xf32, #tpu.memory_space<vmem>>, %arg8: memref<2x1x384xf32, #tpu.memory_space<vmem>>, %arg9: memref<128x768xbf16, #tpu.memory_space<vmem>>, %arg10: memref<1x768xf32, #tpu.memory_space<vmem>>, %arg11: memref<4x128x128xbf16, #tpu.memory_space<vmem>>, %arg12: memref<12x1x128xf32, #tpu.memory_space<vmem>>, %arg13: memref<1x1xf32, #tpu.memory_space<vmem>>, %arg14: memref<8x8xf32, #tpu.memory_space<vmem>>, %arg15: memref<8x8x384xf32, #tpu.memory_space<vmem>>, %arg16: memref<8x8x128xf32, #tpu.memory_space<vmem>>, %arg17: memref<8x8x128xf32, #tpu.memory_space<vmem>>) attributes {dimension_semantics = [#tpu.dimension_semantics<parallel>], iteration_bounds = array<i64: 1>, scalar_prefetch = 0 : i64, scratch_operands = 3 : i64, tpu.core_type = #tpu.core_type<tc>, window_params = [{transform_indices = @transform_0, window_bounds = array<i64: 8, 8, 128>}, {transform_indices = @transform_1, window_bounds = array<i64: 8, 8, 1>}, {transform_indices = @transform_2, window_bounds = array<i64: 8, 8>}, {pipeline_mode = #tpu.pipeline_mode<synchronous>, transform_indices = @transform_3, window_bounds = array<i64: 128, 128>}, {pipeline_mode = #tpu.pipeline_mode<synchronous>, transform_indices = @transform_4, window_bounds = array<i64: 2, 128, 384>}, {pipeline_mode = #tpu.pipeline_mode<synchronous>, transform_indices = @transform_5, window_bounds = array<i64: 2, 128, 384>}, {pipeline_mode = #tpu.pipeline_mode<synchronous>, transform_indices = @transform_6, window_bounds = array<i64: 2, 1, 384>}, {pipeline_mode = #tpu.pipeline_mode<synchronous>, transform_indices = @transform_7, window_bounds = array<i64: 2, 1, 384>}, {pipeline_mode = #tpu.pipeline_mode<synchronous>, transform_indices = @transform_8, window_bounds = array<i64: 128, 768>}, {pipeline_mode = #tpu.pipeline_mode<synchronous>, transform_indices = @transform_9, window_bounds = array<i64: 1, 768>}, {pipeline_mode = #tpu.pipeline_mode<synchronous>, transform_indices = @transform_10, window_bounds = array<i64: 4, 128, 128>}, {pipeline_mode = #tpu.pipeline_mode<synchronous>, transform_indices = @transform_11, window_bounds = array<i64: 12, 1, 128>}, {pipeline_mode = #tpu.pipeline_mode<synchronous>, transform_indices = @transform_12, window_bounds = array<i64: 1, 1>}, {transform_indices = @transform_13, window_bounds = array<i64: 8, 8>}]} {
    %0 = tpu.iota {dimensions = array<i32: 1>} : vector<1x128xi32>
    %c32_i32 = arith.constant 32 : i32
    %1 = vector.broadcast %c32_i32 : i32 to vector<1x128xi32>
    %2 = arith.cmpi slt, %0, %1 : vector<1x128xi32>
    %3 = arith.extui %2 : vector<1x128xi1> to vector<1x128xi32>
    %4 = arith.sitofp %3 : vector<1x128xi32> to vector<1x128xf32>
    %c32_i32_0 = arith.constant 32 : i32
    %5 = vector.broadcast %c32_i32_0 : i32 to vector<1x128xi32>
    %6 = arith.cmpi sge, %0, %5 : vector<1x128xi32>
    %c64_i32 = arith.constant 64 : i32
    %7 = vector.broadcast %c64_i32 : i32 to vector<1x128xi32>
    %8 = arith.cmpi slt, %0, %7 : vector<1x128xi32>
    %9 = arith.andi %6, %8 : vector<1x128xi1>
    %10 = arith.extui %9 : vector<1x128xi1> to vector<1x128xi32>
    %11 = arith.sitofp %10 : vector<1x128xi32> to vector<1x128xf32>
    %c64_i32_1 = arith.constant 64 : i32
    %12 = vector.broadcast %c64_i32_1 : i32 to vector<1x128xi32>
    %13 = arith.cmpi slt, %0, %12 : vector<1x128xi32>
    %14 = arith.extui %13 : vector<1x128xi1> to vector<1x128xi32>
    %15 = arith.sitofp %14 : vector<1x128xi32> to vector<1x128xf32>
    %c0 = arith.constant 0 : index
    %c0_2 = arith.constant 0 : index
    %c0_3 = arith.constant 0 : index
    %16 = vector.load %arg1[%c0, %c0_2, %c0_3] : memref<8x8x128xf32, #tpu.memory_space<vmem>>, vector<8x8x128xf32>
    %17 = vector.shape_cast %16 : vector<8x8x128xf32> to vector<64x128xf32>
    %18 = arith.truncf %17 : vector<64x128xf32> to vector<64x128xbf16>
    %c0_4 = arith.constant 0 : index
    %c0_5 = arith.constant 0 : index
    %19 = vector.load %arg4[%c0_4, %c0_5] : memref<128x128xbf16, #tpu.memory_space<vmem>>, vector<128x128xbf16>
    %cst = arith.constant dense<0.000000e+00> : vector<64x128xf32>
    %20 = tpu.matmul %18, %19, %cst {dimension_numbers = #tpu.dot_dimension_numbers<[1], [0], [0], [1], [0, 0, 1, 1], [], []>} : vector<64x128xbf16>, vector<128x128xbf16>, vector<64x128xf32> -> vector<64x128xf32>
    %c0_6 = arith.constant 0 : index
    %c0_7 = arith.constant 0 : index
    %c0_8 = arith.constant 0 : index
    %21 = vector.load %arg2[%c0_6, %c0_7, %c0_8] : memref<8x8x1xf32, #tpu.memory_space<vmem>>, vector<8x8x1xf32>
    %22 = vector.shape_cast %21 : vector<8x8x1xf32> to vector<64x1xf32>
    %c1 = arith.constant 1 : index
    %c0_9 = arith.constant 0 : index
    %c0_10 = arith.constant 0 : index
    %23 = vector.load %arg12[%c1, %c0_9, %c0_10] : memref<12x1x128xf32, #tpu.memory_space<vmem>>, vector<1x1x128xf32>
    %24 = vector.shape_cast %23 : vector<1x1x128xf32> to vector<1x128xf32>
    %25 = vector.broadcast %22 : vector<64x1xf32> to vector<64x128xf32>
    %26 = vector.broadcast %24 : vector<1x128xf32> to vector<64x128xf32>
    %27 = arith.mulf %25, %26 : vector<64x128xf32>
    %28 = arith.addf %20, %27 : vector<64x128xf32>
    %c0_11 = arith.constant 0 : index
    %c0_12 = arith.constant 0 : index
    %c0_13 = arith.constant 0 : index
    %29 = vector.load %arg12[%c0_11, %c0_12, %c0_13] : memref<12x1x128xf32, #tpu.memory_space<vmem>>, vector<1x1x128xf32>
    %30 = vector.shape_cast %29 : vector<1x1x128xf32> to vector<1x128xf32>
    %31 = vector.broadcast %30 : vector<1x128xf32> to vector<64x128xf32>
    %32 = arith.addf %28, %31 : vector<64x128xf32>
    %33 = vector.broadcast %4 : vector<1x128xf32> to vector<64x128xf32>
    %34 = arith.mulf %32, %33 : vector<64x128xf32>
    %cst_14 = arith.constant dense<0.000000e+00> : vector<64xf32>
    %35 = vector.multi_reduction <add>, %34, %cst_14 [1] : vector<64x128xf32> to vector<64xf32>
    %36 = vector.shape_cast %35 : vector<64xf32> to vector<64x1xf32>
    %37 = vector.broadcast %36 : vector<64x1xf32> to vector<64x128xf32>
    %38 = vector.broadcast %4 : vector<1x128xf32> to vector<64x128xf32>
    %39 = arith.mulf %37, %38 : vector<64x128xf32>
    %40 = vector.broadcast %11 : vector<1x128xf32> to vector<64x128xf32>
    %41 = arith.mulf %32, %40 : vector<64x128xf32>
    %cst_15 = arith.constant dense<0.000000e+00> : vector<64xf32>
    %42 = vector.multi_reduction <add>, %41, %cst_15 [1] : vector<64x128xf32> to vector<64xf32>
    %43 = vector.shape_cast %42 : vector<64xf32> to vector<64x1xf32>
    %44 = vector.broadcast %43 : vector<64x1xf32> to vector<64x128xf32>
    %45 = vector.broadcast %11 : vector<1x128xf32> to vector<64x128xf32>
    %46 = arith.mulf %44, %45 : vector<64x128xf32>
    %47 = arith.addf %39, %46 : vector<64x128xf32>
    %cst_16 = arith.constant 3.125000e-02 : f32
    %48 = vector.broadcast %cst_16 : f32 to vector<64x128xf32>
    %49 = arith.mulf %47, %48 : vector<64x128xf32>
    %50 = arith.subf %32, %49 : vector<64x128xf32>
    %51 = arith.addf %4, %11 : vector<1x128xf32>
    %52 = vector.broadcast %51 : vector<1x128xf32> to vector<64x128xf32>
    %53 = arith.mulf %50, %52 : vector<64x128xf32>
    %54 = arith.mulf %53, %53 : vector<64x128xf32>
    %55 = vector.broadcast %4 : vector<1x128xf32> to vector<64x128xf32>
    %56 = arith.mulf %54, %55 : vector<64x128xf32>
    %cst_17 = arith.constant dense<0.000000e+00> : vector<64xf32>
    %57 = vector.multi_reduction <add>, %56, %cst_17 [1] : vector<64x128xf32> to vector<64xf32>
    %58 = vector.shape_cast %57 : vector<64xf32> to vector<64x1xf32>
    %59 = vector.broadcast %58 : vector<64x1xf32> to vector<64x128xf32>
    %60 = vector.broadcast %4 : vector<1x128xf32> to vector<64x128xf32>
    %61 = arith.mulf %59, %60 : vector<64x128xf32>
    %62 = arith.mulf %53, %53 : vector<64x128xf32>
    %63 = vector.broadcast %11 : vector<1x128xf32> to vector<64x128xf32>
    %64 = arith.mulf %62, %63 : vector<64x128xf32>
    %cst_18 = arith.constant dense<0.000000e+00> : vector<64xf32>
    %65 = vector.multi_reduction <add>, %64, %cst_18 [1] : vector<64x128xf32> to vector<64xf32>
    %66 = vector.shape_cast %65 : vector<64xf32> to vector<64x1xf32>
    %67 = vector.broadcast %66 : vector<64x1xf32> to vector<64x128xf32>
    %68 = vector.broadcast %11 : vector<1x128xf32> to vector<64x128xf32>
    %69 = arith.mulf %67, %68 : vector<64x128xf32>
    %70 = arith.addf %61, %69 : vector<64x128xf32>
    %cst_19 = arith.constant 3.125000e-02 : f32
    %71 = vector.broadcast %cst_19 : f32 to vector<64x128xf32>
    %72 = arith.mulf %70, %71 : vector<64x128xf32>
    %cst_20 = arith.constant 9.99999974E-6 : f32
    %73 = vector.broadcast %cst_20 : f32 to vector<64x128xf32>
    %74 = arith.addf %72, %73 : vector<64x128xf32>
    %75 = math.rsqrt %74 : vector<64x128xf32>
    %76 = arith.mulf %53, %75 : vector<64x128xf32>
    %c2 = arith.constant 2 : index
    %c0_21 = arith.constant 0 : index
    %c0_22 = arith.constant 0 : index
    %77 = vector.load %arg12[%c2, %c0_21, %c0_22] : memref<12x1x128xf32, #tpu.memory_space<vmem>>, vector<1x1x128xf32>
    %78 = vector.shape_cast %77 : vector<1x1x128xf32> to vector<1x128xf32>
    %79 = vector.broadcast %78 : vector<1x128xf32> to vector<64x128xf32>
    %80 = arith.mulf %76, %79 : vector<64x128xf32>
    %c3 = arith.constant 3 : index
    %c0_23 = arith.constant 0 : index
    %c0_24 = arith.constant 0 : index
    %81 = vector.load %arg12[%c3, %c0_23, %c0_24] : memref<12x1x128xf32, #tpu.memory_space<vmem>>, vector<1x1x128xf32>
    %82 = vector.shape_cast %81 : vector<1x1x128xf32> to vector<1x128xf32>
    %83 = vector.broadcast %82 : vector<1x128xf32> to vector<64x128xf32>
    %84 = arith.addf %80, %83 : vector<64x128xf32>
    %85 = arith.truncf %84 : vector<64x128xf32> to vector<64x128xbf16>
    %c0_25 = arith.constant 0 : index
    %c0_26 = arith.constant 0 : index
    %c0_27 = arith.constant 0 : index
    %86 = vector.load %arg5[%c0_25, %c0_26, %c0_27] : memref<2x128x384xbf16, #tpu.memory_space<vmem>>, vector<1x128x384xbf16>
    %87 = vector.shape_cast %86 : vector<1x128x384xbf16> to vector<128x384xbf16>
    %cst_28 = arith.constant dense<0.000000e+00> : vector<64x384xf32>
    %88 = tpu.matmul %85, %87, %cst_28 {dimension_numbers = #tpu.dot_dimension_numbers<[1], [0], [0], [1], [0, 0, 1, 1], [], []>} : vector<64x128xbf16>, vector<128x384xbf16>, vector<64x384xf32> -> vector<64x384xf32>
    %c0_29 = arith.constant 0 : index
    %c0_30 = arith.constant 0 : index
    %c0_31 = arith.constant 0 : index
    %89 = vector.load %arg7[%c0_29, %c0_30, %c0_31] : memref<2x1x384xf32, #tpu.memory_space<vmem>>, vector<1x1x384xf32>
    %90 = vector.shape_cast %89 : vector<1x1x384xf32> to vector<1x384xf32>
    %91 = vector.broadcast %90 : vector<1x384xf32> to vector<64x384xf32>
    %92 = arith.addf %88, %91 : vector<64x384xf32>
    %93 = vector.shape_cast %92 : vector<64x384xf32> to vector<8x8x384xf32>
    %c0_32 = arith.constant 0 : index
    %c0_33 = arith.constant 0 : index
    %c0_34 = arith.constant 0 : index
    %94 = vector.load %arg15[%c0_32, %c0_33, %c0_34] : memref<8x8x384xf32, #tpu.memory_space<vmem>>, vector<8x8x384xf32>
    tpu.vector_store %arg15[%c0_32, %c0_33, %c0_34], %93 {strides = array<i32>} : memref<8x8x384xf32, #tpu.memory_space<vmem>>, vector<8x8x384xf32>,
    %cst_35 = arith.constant 0.000000e+00 : f32
    %95 = vector.broadcast %cst_35 : f32 to vector<8x128xf32>
    %cst_36 = arith.constant 0.000000e+00 : f32
    %96 = vector.broadcast %cst_36 : f32 to vector<8x128xf32>
    %c0_i32 = arith.constant 0 : i32
    %97 = arith.index_cast %c0_i32 : i32 to index
    %c0_37 = arith.constant 0 : index
    %c0_38 = arith.constant 0 : index
    %98 = vector.load %arg15[%97, %c0_37, %c0_38] : memref<8x8x384xf32, #tpu.memory_space<vmem>>, vector<1x8x384xf32>
    %99 = vector.shape_cast %98 : vector<1x8x384xf32> to vector<8x384xf32>
    %c0_39 = arith.constant 0 : index
    %c0_40 = arith.constant 0 : index
    %c0_41 = arith.constant 0 : index
    %100 = vector.load %arg6[%c0_39, %c0_40, %c0_41] : memref<2x128x384xbf16, #tpu.memory_space<vmem>>, vector<1x128x384xbf16>
    %101 = vector.shape_cast %100 : vector<1x128x384xbf16> to vector<128x384xbf16>
    %c0_42 = arith.constant 0 : index
    %c0_43 = arith.constant 0 : index
    %c0_44 = arith.constant 0 : index
    %102 = vector.load %arg8[%c0_42, %c0_43, %c0_44] : memref<2x1x384xf32, #tpu.memory_space<vmem>>, vector<1x1x384xf32>
    %103 = vector.shape_cast %102 : vector<1x1x384xf32> to vector<1x384xf32>
    %104 = arith.truncf %95 : vector<8x128xf32> to vector<8x128xbf16>
    %cst_45 = arith.constant dense<0.000000e+00> : vector<8x384xf32>
    %105 = tpu.matmul %104, %101, %cst_45 {dimension_numbers = #tpu.dot_dimension_numbers<[1], [0], [0], [1], [0, 0, 1, 1], [], []>} : vector<8x128xbf16>, vector<128x384xbf16>, vector<8x384xf32> -> vector<8x384xf32>
    %106 = vector.broadcast %103 : vector<1x384xf32> to vector<8x384xf32>
    %107 = arith.addf %105, %106 : vector<8x384xf32>
    %108 = vector.extract_strided_slice %99 {offsets = [0, 0], sizes = [8, 128], strides = [1, 1]} : vector<8x384xf32> to vector<8x128xf32>
    %109 = vector.extract_strided_slice %107 {offsets = [0, 0], sizes = [8, 128], strides = [1, 1]} : vector<8x384xf32> to vector<8x128xf32>
    %110 = arith.addf %108, %109 : vector<8x128xf32>
    %111 = arith.negf %110 : vector<8x128xf32>
    %112 = math.exp %111 : vector<8x128xf32>
    %cst_46 = arith.constant 1.000000e+00 : f32
    %113 = vector.broadcast %cst_46 : f32 to vector<8x128xf32>
    %114 = arith.addf %113, %112 : vector<8x128xf32>
    %115 = arith.divf %113, %114 : vector<8x128xf32>
    %116 = vector.extract_strided_slice %99 {offsets = [0, 128], sizes = [8, 128], strides = [1, 1]} : vector<8x384xf32> to vector<8x128xf32>
    %117 = vector.extract_strided_slice %107 {offsets = [0, 128], sizes = [8, 128], strides = [1, 1]} : vector<8x384xf32> to vector<8x128xf32>
    %118 = arith.addf %116, %117 : vector<8x128xf32>
    %119 = arith.negf %118 : vector<8x128xf32>
    %120 = math.exp %119 : vector<8x128xf32>
    %cst_47 = arith.constant 1.000000e+00 : f32
    %121 = vector.broadcast %cst_47 : f32 to vector<8x128xf32>
    %122 = arith.addf %121, %120 : vector<8x128xf32>
    %123 = arith.divf %121, %122 : vector<8x128xf32>
    %124 = vector.extract_strided_slice %99 {offsets = [0, 256], sizes = [8, 128], strides = [1, 1]} : vector<8x384xf32> to vector<8x128xf32>
    %125 = vector.extract_strided_slice %107 {offsets = [0, 256], sizes = [8, 128], strides = [1, 1]} : vector<8x384xf32> to vector<8x128xf32>
    %126 = arith.mulf %115, %125 : vector<8x128xf32>
    %127 = arith.addf %124, %126 : vector<8x128xf32>
    %128 = math.tanh %127 : vector<8x128xf32>
    %cst_48 = arith.constant 1.000000e+00 : f32
    %129 = vector.broadcast %cst_48 : f32 to vector<8x128xf32>
    %130 = arith.subf %129, %123 : vector<8x128xf32>
    %131 = arith.mulf %130, %128 : vector<8x128xf32>
    %132 = arith.mulf %123, %95 : vector<8x128xf32>
    %133 = arith.addf %131, %132 : vector<8x128xf32>
    %134 = arith.truncf %133 : vector<8x128xf32> to vector<8x128xbf16>
    %c1_49 = arith.constant 1 : index
    %c0_50 = arith.constant 0 : index
    %c0_51 = arith.constant 0 : index
    %135 = vector.load %arg5[%c1_49, %c0_50, %c0_51] : memref<2x128x384xbf16, #tpu.memory_space<vmem>>, vector<1x128x384xbf16>
    %136 = vector.shape_cast %135 : vector<1x128x384xbf16> to vector<128x384xbf16>
    %cst_52 = arith.constant dense<0.000000e+00> : vector<8x384xf32>
    %137 = tpu.matmul %134, %136, %cst_52 {dimension_numbers = #tpu.dot_dimension_numbers<[1], [0], [0], [1], [0, 0, 1, 1], [], []>} : vector<8x128xbf16>, vector<128x384xbf16>, vector<8x384xf32> -> vector<8x384xf32>
    %c1_53 = arith.constant 1 : index
    %c0_54 = arith.constant 0 : index
    %c0_55 = arith.constant 0 : index
    %138 = vector.load %arg7[%c1_53, %c0_54, %c0_55] : memref<2x1x384xf32, #tpu.memory_space<vmem>>, vector<1x1x384xf32>
    %139 = vector.shape_cast %138 : vector<1x1x384xf32> to vector<1x384xf32>
    %140 = vector.broadcast %139 : vector<1x384xf32> to vector<8x384xf32>
    %141 = arith.addf %137, %140 : vector<8x384xf32>
    %c1_56 = arith.constant 1 : index
    %c0_57 = arith.constant 0 : index
    %c0_58 = arith.constant 0 : index
    %142 = vector.load %arg6[%c1_56, %c0_57, %c0_58] : memref<2x128x384xbf16, #tpu.memory_space<vmem>>, vector<1x128x384xbf16>
    %143 = vector.shape_cast %142 : vector<1x128x384xbf16> to vector<128x384xbf16>
    %c1_59 = arith.constant 1 : index
    %c0_60 = arith.constant 0 : index
    %c0_61 = arith.constant 0 : index
    %144 = vector.load %arg8[%c1_59, %c0_60, %c0_61] : memref<2x1x384xf32, #tpu.memory_space<vmem>>, vector<1x1x384xf32>
    %145 = vector.shape_cast %144 : vector<1x1x384xf32> to vector<1x384xf32>
    %146 = arith.truncf %96 : vector<8x128xf32> to vector<8x128xbf16>
    %cst_62 = arith.constant dense<0.000000e+00> : vector<8x384xf32>
    %147 = tpu.matmul %146, %143, %cst_62 {dimension_numbers = #tpu.dot_dimension_numbers<[1], [0], [0], [1], [0, 0, 1, 1], [], []>} : vector<8x128xbf16>, vector<128x384xbf16>, vector<8x384xf32> -> vector<8x384xf32>
    %148 = vector.broadcast %145 : vector<1x384xf32> to vector<8x384xf32>
    %149 = arith.addf %147, %148 : vector<8x384xf32>
    %150 = vector.extract_strided_slice %141 {offsets = [0, 0], sizes = [8, 128], strides = [1, 1]} : vector<8x384xf32> to vector<8x128xf32>
    %151 = vector.extract_strided_slice %149 {offsets = [0, 0], sizes = [8, 128], strides = [1, 1]} : vector<8x384xf32> to vector<8x128xf32>
    %152 = arith.addf %150, %151 : vector<8x128xf32>
    %153 = arith.negf %152 : vector<8x128xf32>
    %154 = math.exp %153 : vector<8x128xf32>
    %cst_63 = arith.constant 1.000000e+00 : f32
    %155 = vector.broadcast %cst_63 : f32 to vector<8x128xf32>
    %156 = arith.addf %155, %154 : vector<8x128xf32>
    %157 = arith.divf %155, %156 : vector<8x128xf32>
    %158 = vector.extract_strided_slice %141 {offsets = [0, 128], sizes = [8, 128], strides = [1, 1]} : vector<8x384xf32> to vector<8x128xf32>
    %159 = vector.extract_strided_slice %149 {offsets = [0, 128], sizes = [8, 128], strides = [1, 1]} : vector<8x384xf32> to vector<8x128xf32>
    %160 = arith.addf %158, %159 : vector<8x128xf32>
    %161 = arith.negf %160 : vector<8x128xf32>
    %162 = math.exp %161 : vector<8x128xf32>
    %cst_64 = arith.constant 1.000000e+00 : f32
    %163 = vector.broadcast %cst_64 : f32 to vector<8x128xf32>
    %164 = arith.addf %163, %162 : vector<8x128xf32>
    %165 = arith.divf %163, %164 : vector<8x128xf32>
    %166 = vector.extract_strided_slice %141 {offsets = [0, 256], sizes = [8, 128], strides = [1, 1]} : vector<8x384xf32> to vector<8x128xf32>
    %167 = vector.extract_strided_slice %149 {offsets = [0, 256], sizes = [8, 128], strides = [1, 1]} : vector<8x384xf32> to vector<8x128xf32>
    %168 = arith.mulf %157, %167 : vector<8x128xf32>
    %169 = arith.addf %166, %168 : vector<8x128xf32>
    %170 = math.tanh %169 : vector<8x128xf32>
    %cst_65 = arith.constant 1.000000e+00 : f32
    %171 = vector.broadcast %cst_65 : f32 to vector<8x128xf32>
    %172 = arith.subf %171, %165 : vector<8x128xf32>
    %173 = arith.mulf %172, %170 : vector<8x128xf32>
    %174 = arith.mulf %165, %96 : vector<8x128xf32>
    %175 = arith.addf %173, %174 : vector<8x128xf32>
    %176 = arith.index_cast %c0_i32 : i32 to index
    %c0_66 = arith.constant 0 : index
    %c0_67 = arith.constant 0 : index
    %177 = vector.load %arg16[%176, %c0_66, %c0_67] : memref<8x8x128xf32, #tpu.memory_space<vmem>>, vector<1x8x128xf32>
    %178 = vector.shape_cast %177 : vector<1x8x128xf32> to vector<8x128xf32>
    %179 = vector.shape_cast %175 : vector<8x128xf32> to vector<1x8x128xf32>
    tpu.vector_store %arg16[%176, %c0_66, %c0_67], %179 {strides = array<i32>} : memref<8x8x128xf32, #tpu.memory_space<vmem>>, vector<1x8x128xf32>,
    %c1_i32 = arith.constant 1 : i32
    %180 = arith.index_cast %c1_i32 : i32 to index
    %c0_68 = arith.constant 0 : index
    %c0_69 = arith.constant 0 : index
    %181 = vector.load %arg15[%180, %c0_68, %c0_69] : memref<8x8x384xf32, #tpu.memory_space<vmem>>, vector<1x8x384xf32>
    %182 = vector.shape_cast %181 : vector<1x8x384xf32> to vector<8x384xf32>
    %c0_70 = arith.constant 0 : index
    %c0_71 = arith.constant 0 : index
    %c0_72 = arith.constant 0 : index
    %183 = vector.load %arg6[%c0_70, %c0_71, %c0_72] : memref<2x128x384xbf16, #tpu.memory_space<vmem>>, vector<1x128x384xbf16>
    %184 = vector.shape_cast %183 : vector<1x128x384xbf16> to vector<128x384xbf16>
    %c0_73 = arith.constant 0 : index
    %c0_74 = arith.constant 0 : index
    %c0_75 = arith.constant 0 : index
    %185 = vector.load %arg8[%c0_73, %c0_74, %c0_75] : memref<2x1x384xf32, #tpu.memory_space<vmem>>, vector<1x1x384xf32>
    %186 = vector.shape_cast %185 : vector<1x1x384xf32> to vector<1x384xf32>
    %187 = arith.truncf %133 : vector<8x128xf32> to vector<8x128xbf16>
    %cst_76 = arith.constant dense<0.000000e+00> : vector<8x384xf32>
    %188 = tpu.matmul %187, %184, %cst_76 {dimension_numbers = #tpu.dot_dimension_numbers<[1], [0], [0], [1], [0, 0, 1, 1], [], []>} : vector<8x128xbf16>, vector<128x384xbf16>, vector<8x384xf32> -> vector<8x384xf32>
    %189 = vector.broadcast %186 : vector<1x384xf32> to vector<8x384xf32>
    %190 = arith.addf %188, %189 : vector<8x384xf32>
    %191 = vector.extract_strided_slice %182 {offsets = [0, 0], sizes = [8, 128], strides = [1, 1]} : vector<8x384xf32> to vector<8x128xf32>
    %192 = vector.extract_strided_slice %190 {offsets = [0, 0], sizes = [8, 128], strides = [1, 1]} : vector<8x384xf32> to vector<8x128xf32>
    %193 = arith.addf %191, %192 : vector<8x128xf32>
    %194 = arith.negf %193 : vector<8x128xf32>
    %195 = math.exp %194 : vector<8x128xf32>
    %cst_77 = arith.constant 1.000000e+00 : f32
    %196 = vector.broadcast %cst_77 : f32 to vector<8x128xf32>
    %197 = arith.addf %196, %195 : vector<8x128xf32>
    %198 = arith.divf %196, %197 : vector<8x128xf32>
    %199 = vector.extract_strided_slice %182 {offsets = [0, 128], sizes = [8, 128], strides = [1, 1]} : vector<8x384xf32> to vector<8x128xf32>
    %200 = vector.extract_strided_slice %190 {offsets = [0, 128], sizes = [8, 128], strides = [1, 1]} : vector<8x384xf32> to vector<8x128xf32>
    %201 = arith.addf %199, %200 : vector<8x128xf32>
    %202 = arith.negf %201 : vector<8x128xf32>
    %203 = math.exp %202 : vector<8x128xf32>
    %cst_78 = arith.constant 1.000000e+00 : f32
    %204 = vector.broadcast %cst_78 : f32 to vector<8x128xf32>
    %205 = arith.addf %204, %203 : vector<8x128xf32>
    %206 = arith.divf %204, %205 : vector<8x128xf32>
    %207 = vector.extract_strided_slice %182 {offsets = [0, 256], sizes = [8, 128], strides = [1, 1]} : vector<8x384xf32> to vector<8x128xf32>
    %208 = vector.extract_strided_slice %190 {offsets = [0, 256], sizes = [8, 128], strides = [1, 1]} : vector<8x384xf32> to vector<8x128xf32>
    %209 = arith.mulf %198, %208 : vector<8x128xf32>
    %210 = arith.addf %207, %209 : vector<8x128xf32>
    %211 = math.tanh %210 : vector<8x128xf32>
    %cst_79 = arith.constant 1.000000e+00 : f32
    %212 = vector.broadcast %cst_79 : f32 to vector<8x128xf32>
    %213 = arith.subf %212, %206 : vector<8x128xf32>
    %214 = arith.mulf %213, %211 : vector<8x128xf32>
    %215 = arith.mulf %206, %133 : vector<8x128xf32>
    %216 = arith.addf %214, %215 : vector<8x128xf32>
    %217 = arith.truncf %216 : vector<8x128xf32> to vector<8x128xbf16>
    %c1_80 = arith.constant 1 : index
    %c0_81 = arith.constant 0 : index
    %c0_82 = arith.constant 0 : index
    %218 = vector.load %arg5[%c1_80, %c0_81, %c0_82] : memref<2x128x384xbf16, #tpu.memory_space<vmem>>, vector<1x128x384xbf16>
    %219 = vector.shape_cast %218 : vector<1x128x384xbf16> to vector<128x384xbf16>
    %cst_83 = arith.constant dense<0.000000e+00> : vector<8x384xf32>
    %220 = tpu.matmul %217, %219, %cst_83 {dimension_numbers = #tpu.dot_dimension_numbers<[1], [0], [0], [1], [0, 0, 1, 1], [], []>} : vector<8x128xbf16>, vector<128x384xbf16>, vector<8x384xf32> -> vector<8x384xf32>
    %c1_84 = arith.constant 1 : index
    %c0_85 = arith.constant 0 : index
    %c0_86 = arith.constant 0 : index
    %221 = vector.load %arg7[%c1_84, %c0_85, %c0_86] : memref<2x1x384xf32, #tpu.memory_space<vmem>>, vector<1x1x384xf32>
    %222 = vector.shape_cast %221 : vector<1x1x384xf32> to vector<1x384xf32>
    %223 = vector.broadcast %222 : vector<1x384xf32> to vector<8x384xf32>
    %224 = arith.addf %220, %223 : vector<8x384xf32>
    %c1_87 = arith.constant 1 : index
    %c0_88 = arith.constant 0 : index
    %c0_89 = arith.constant 0 : index
    %225 = vector.load %arg6[%c1_87, %c0_88, %c0_89] : memref<2x128x384xbf16, #tpu.memory_space<vmem>>, vector<1x128x384xbf16>
    %226 = vector.shape_cast %225 : vector<1x128x384xbf16> to vector<128x384xbf16>
    %c1_90 = arith.constant 1 : index
    %c0_91 = arith.constant 0 : index
    %c0_92 = arith.constant 0 : index
    %227 = vector.load %arg8[%c1_90, %c0_91, %c0_92] : memref<2x1x384xf32, #tpu.memory_space<vmem>>, vector<1x1x384xf32>
    %228 = vector.shape_cast %227 : vector<1x1x384xf32> to vector<1x384xf32>
    %229 = arith.truncf %175 : vector<8x128xf32> to vector<8x128xbf16>
    %cst_93 = arith.constant dense<0.000000e+00> : vector<8x384xf32>
    %230 = tpu.matmul %229, %226, %cst_93 {dimension_numbers = #tpu.dot_dimension_numbers<[1], [0], [0], [1], [0, 0, 1, 1], [], []>} : vector<8x128xbf16>, vector<128x384xbf16>, vector<8x384xf32> -> vector<8x384xf32>
    %231 = vector.broadcast %228 : vector<1x384xf32> to vector<8x384xf32>
    %232 = arith.addf %230, %231 : vector<8x384xf32>
    %233 = vector.extract_strided_slice %224 {offsets = [0, 0], sizes = [8, 128], strides = [1, 1]} : vector<8x384xf32> to vector<8x128xf32>
    %234 = vector.extract_strided_slice %232 {offsets = [0, 0], sizes = [8, 128], strides = [1, 1]} : vector<8x384xf32> to vector<8x128xf32>
    %235 = arith.addf %233, %234 : vector<8x128xf32>
    %236 = arith.negf %235 : vector<8x128xf32>
    %237 = math.exp %236 : vector<8x128xf32>
    %cst_94 = arith.constant 1.000000e+00 : f32
    %238 = vector.broadcast %cst_94 : f32 to vector<8x128xf32>
    %239 = arith.addf %238, %237 : vector<8x128xf32>
    %240 = arith.divf %238, %239 : vector<8x128xf32>
    %241 = vector.extract_strided_slice %224 {offsets = [0, 128], sizes = [8, 128], strides = [1, 1]} : vector<8x384xf32> to vector<8x128xf32>
    %242 = vector.extract_strided_slice %232 {offsets = [0, 128], sizes = [8, 128], strides = [1, 1]} : vector<8x384xf32> to vector<8x128xf32>
    %243 = arith.addf %241, %242 : vector<8x128xf32>
    %244 = arith.negf %243 : vector<8x128xf32>
    %245 = math.exp %244 : vector<8x128xf32>
    %cst_95 = arith.constant 1.000000e+00 : f32
    %246 = vector.broadcast %cst_95 : f32 to vector<8x128xf32>
    %247 = arith.addf %246, %245 : vector<8x128xf32>
    %248 = arith.divf %246, %247 : vector<8x128xf32>
    %249 = vector.extract_strided_slice %224 {offsets = [0, 256], sizes = [8, 128], strides = [1, 1]} : vector<8x384xf32> to vector<8x128xf32>
    %250 = vector.extract_strided_slice %232 {offsets = [0, 256], sizes = [8, 128], strides = [1, 1]} : vector<8x384xf32> to vector<8x128xf32>
    %251 = arith.mulf %240, %250 : vector<8x128xf32>
    %252 = arith.addf %249, %251 : vector<8x128xf32>
    %253 = math.tanh %252 : vector<8x128xf32>
    %cst_96 = arith.constant 1.000000e+00 : f32
    %254 = vector.broadcast %cst_96 : f32 to vector<8x128xf32>
    %255 = arith.subf %254, %248 : vector<8x128xf32>
    %256 = arith.mulf %255, %253 : vector<8x128xf32>
    %257 = arith.mulf %248, %175 : vector<8x128xf32>
    %258 = arith.addf %256, %257 : vector<8x128xf32>
    %259 = arith.index_cast %c1_i32 : i32 to index
    %c0_97 = arith.constant 0 : index
    %c0_98 = arith.constant 0 : index
    %260 = vector.load %arg16[%259, %c0_97, %c0_98] : memref<8x8x128xf32, #tpu.memory_space<vmem>>, vector<1x8x128xf32>
    %261 = vector.shape_cast %260 : vector<1x8x128xf32> to vector<8x128xf32>
    %262 = vector.shape_cast %258 : vector<8x128xf32> to vector<1x8x128xf32>
    tpu.vector_store %arg16[%259, %c0_97, %c0_98], %262 {strides = array<i32>} : memref<8x8x128xf32, #tpu.memory_space<vmem>>, vector<1x8x128xf32>,
    %c2_i32 = arith.constant 2 : i32
    %263 = arith.index_cast %c2_i32 : i32 to index
    %c0_99 = arith.constant 0 : index
    %c0_100 = arith.constant 0 : index
    %264 = vector.load %arg15[%263, %c0_99, %c0_100] : memref<8x8x384xf32, #tpu.memory_space<vmem>>, vector<1x8x384xf32>
    %265 = vector.shape_cast %264 : vector<1x8x384xf32> to vector<8x384xf32>
    %c0_101 = arith.constant 0 : index
    %c0_102 = arith.constant 0 : index
    %c0_103 = arith.constant 0 : index
    %266 = vector.load %arg6[%c0_101, %c0_102, %c0_103] : memref<2x128x384xbf16, #tpu.memory_space<vmem>>, vector<1x128x384xbf16>
    %267 = vector.shape_cast %266 : vector<1x128x384xbf16> to vector<128x384xbf16>
    %c0_104 = arith.constant 0 : index
    %c0_105 = arith.constant 0 : index
    %c0_106 = arith.constant 0 : index
    %268 = vector.load %arg8[%c0_104, %c0_105, %c0_106] : memref<2x1x384xf32, #tpu.memory_space<vmem>>, vector<1x1x384xf32>
    %269 = vector.shape_cast %268 : vector<1x1x384xf32> to vector<1x384xf32>
    %270 = arith.truncf %216 : vector<8x128xf32> to vector<8x128xbf16>
    %cst_107 = arith.constant dense<0.000000e+00> : vector<8x384xf32>
    %271 = tpu.matmul %270, %267, %cst_107 {dimension_numbers = #tpu.dot_dimension_numbers<[1], [0], [0], [1], [0, 0, 1, 1], [], []>} : vector<8x128xbf16>, vector<128x384xbf16>, vector<8x384xf32> -> vector<8x384xf32>
    %272 = vector.broadcast %269 : vector<1x384xf32> to vector<8x384xf32>
    %273 = arith.addf %271, %272 : vector<8x384xf32>
    %274 = vector.extract_strided_slice %265 {offsets = [0, 0], sizes = [8, 128], strides = [1, 1]} : vector<8x384xf32> to vector<8x128xf32>
    %275 = vector.extract_strided_slice %273 {offsets = [0, 0], sizes = [8, 128], strides = [1, 1]} : vector<8x384xf32> to vector<8x128xf32>
    %276 = arith.addf %274, %275 : vector<8x128xf32>
    %277 = arith.negf %276 : vector<8x128xf32>
    %278 = math.exp %277 : vector<8x128xf32>
    %cst_108 = arith.constant 1.000000e+00 : f32
    %279 = vector.broadcast %cst_108 : f32 to vector<8x128xf32>
    %280 = arith.addf %279, %278 : vector<8x128xf32>
    %281 = arith.divf %279, %280 : vector<8x128xf32>
    %282 = vector.extract_strided_slice %265 {offsets = [0, 128], sizes = [8, 128], strides = [1, 1]} : vector<8x384xf32> to vector<8x128xf32>
    %283 = vector.extract_strided_slice %273 {offsets = [0, 128], sizes = [8, 128], strides = [1, 1]} : vector<8x384xf32> to vector<8x128xf32>
    %284 = arith.addf %282, %283 : vector<8x128xf32>
    %285 = arith.negf %284 : vector<8x128xf32>
    %286 = math.exp %285 : vector<8x128xf32>
    %cst_109 = arith.constant 1.000000e+00 : f32
    %287 = vector.broadcast %cst_109 : f32 to vector<8x128xf32>
    %288 = arith.addf %287, %286 : vector<8x128xf32>
    %289 = arith.divf %287, %288 : vector<8x128xf32>
    %290 = vector.extract_strided_slice %265 {offsets = [0, 256], sizes = [8, 128], strides = [1, 1]} : vector<8x384xf32> to vector<8x128xf32>
    %291 = vector.extract_strided_slice %273 {offsets = [0, 256], sizes = [8, 128], strides = [1, 1]} : vector<8x384xf32> to vector<8x128xf32>
    %292 = arith.mulf %281, %291 : vector<8x128xf32>
    %293 = arith.addf %290, %292 : vector<8x128xf32>
    %294 = math.tanh %293 : vector<8x128xf32>
    %cst_110 = arith.constant 1.000000e+00 : f32
    %295 = vector.broadcast %cst_110 : f32 to vector<8x128xf32>
    %296 = arith.subf %295, %289 : vector<8x128xf32>
    %297 = arith.mulf %296, %294 : vector<8x128xf32>
    %298 = arith.mulf %289, %216 : vector<8x128xf32>
    %299 = arith.addf %297, %298 : vector<8x128xf32>
    %300 = arith.truncf %299 : vector<8x128xf32> to vector<8x128xbf16>
    %c1_111 = arith.constant 1 : index
    %c0_112 = arith.constant 0 : index
    %c0_113 = arith.constant 0 : index
    %301 = vector.load %arg5[%c1_111, %c0_112, %c0_113] : memref<2x128x384xbf16, #tpu.memory_space<vmem>>, vector<1x128x384xbf16>
    %302 = vector.shape_cast %301 : vector<1x128x384xbf16> to vector<128x384xbf16>
    %cst_114 = arith.constant dense<0.000000e+00> : vector<8x384xf32>
    %303 = tpu.matmul %300, %302, %cst_114 {dimension_numbers = #tpu.dot_dimension_numbers<[1], [0], [0], [1], [0, 0, 1, 1], [], []>} : vector<8x128xbf16>, vector<128x384xbf16>, vector<8x384xf32> -> vector<8x384xf32>
    %c1_115 = arith.constant 1 : index
    %c0_116 = arith.constant 0 : index
    %c0_117 = arith.constant 0 : index
    %304 = vector.load %arg7[%c1_115, %c0_116, %c0_117] : memref<2x1x384xf32, #tpu.memory_space<vmem>>, vector<1x1x384xf32>
    %305 = vector.shape_cast %304 : vector<1x1x384xf32> to vector<1x384xf32>
    %306 = vector.broadcast %305 : vector<1x384xf32> to vector<8x384xf32>
    %307 = arith.addf %303, %306 : vector<8x384xf32>
    %c1_118 = arith.constant 1 : index
    %c0_119 = arith.constant 0 : index
    %c0_120 = arith.constant 0 : index
    %308 = vector.load %arg6[%c1_118, %c0_119, %c0_120] : memref<2x128x384xbf16, #tpu.memory_space<vmem>>, vector<1x128x384xbf16>
    %309 = vector.shape_cast %308 : vector<1x128x384xbf16> to vector<128x384xbf16>
    %c1_121 = arith.constant 1 : index
    %c0_122 = arith.constant 0 : index
    %c0_123 = arith.constant 0 : index
    %310 = vector.load %arg8[%c1_121, %c0_122, %c0_123] : memref<2x1x384xf32, #tpu.memory_space<vmem>>, vector<1x1x384xf32>
    %311 = vector.shape_cast %310 : vector<1x1x384xf32> to vector<1x384xf32>
    %312 = arith.truncf %258 : vector<8x128xf32> to vector<8x128xbf16>
    %cst_124 = arith.constant dense<0.000000e+00> : vector<8x384xf32>
    %313 = tpu.matmul %312, %309, %cst_124 {dimension_numbers = #tpu.dot_dimension_numbers<[1], [0], [0], [1], [0, 0, 1, 1], [], []>} : vector<8x128xbf16>, vector<128x384xbf16>, vector<8x384xf32> -> vector<8x384xf32>
    %314 = vector.broadcast %311 : vector<1x384xf32> to vector<8x384xf32>
    %315 = arith.addf %313, %314 : vector<8x384xf32>
    %316 = vector.extract_strided_slice %307 {offsets = [0, 0], sizes = [8, 128], strides = [1, 1]} : vector<8x384xf32> to vector<8x128xf32>
    %317 = vector.extract_strided_slice %315 {offsets = [0, 0], sizes = [8, 128], strides = [1, 1]} : vector<8x384xf32> to vector<8x128xf32>
    %318 = arith.addf %316, %317 : vector<8x128xf32>
    %319 = arith.negf %318 : vector<8x128xf32>
    %320 = math.exp %319 : vector<8x128xf32>
    %cst_125 = arith.constant 1.000000e+00 : f32
    %321 = vector.broadcast %cst_125 : f32 to vector<8x128xf32>
    %322 = arith.addf %321, %320 : vector<8x128xf32>
    %323 = arith.divf %321, %322 : vector<8x128xf32>
    %324 = vector.extract_strided_slice %307 {offsets = [0, 128], sizes = [8, 128], strides = [1, 1]} : vector<8x384xf32> to vector<8x128xf32>
    %325 = vector.extract_strided_slice %315 {offsets = [0, 128], sizes = [8, 128], strides = [1, 1]} : vector<8x384xf32> to vector<8x128xf32>
    %326 = arith.addf %324, %325 : vector<8x128xf32>
    %327 = arith.negf %326 : vector<8x128xf32>
    %328 = math.exp %327 : vector<8x128xf32>
    %cst_126 = arith.constant 1.000000e+00 : f32
    %329 = vector.broadcast %cst_126 : f32 to vector<8x128xf32>
    %330 = arith.addf %329, %328 : vector<8x128xf32>
    %331 = arith.divf %329, %330 : vector<8x128xf32>
    %332 = vector.extract_strided_slice %307 {offsets = [0, 256], sizes = [8, 128], strides = [1, 1]} : vector<8x384xf32> to vector<8x128xf32>
    %333 = vector.extract_strided_slice %315 {offsets = [0, 256], sizes = [8, 128], strides = [1, 1]} : vector<8x384xf32> to vector<8x128xf32>
    %334 = arith.mulf %323, %333 : vector<8x128xf32>
    %335 = arith.addf %332, %334 : vector<8x128xf32>
    %336 = math.tanh %335 : vector<8x128xf32>
    %cst_127 = arith.constant 1.000000e+00 : f32
    %337 = vector.broadcast %cst_127 : f32 to vector<8x128xf32>
    %338 = arith.subf %337, %331 : vector<8x128xf32>
    %339 = arith.mulf %338, %336 : vector<8x128xf32>
    %340 = arith.mulf %331, %258 : vector<8x128xf32>
    %341 = arith.addf %339, %340 : vector<8x128xf32>
    %342 = arith.index_cast %c2_i32 : i32 to index
    %c0_128 = arith.constant 0 : index
    %c0_129 = arith.constant 0 : index
    %343 = vector.load %arg16[%342, %c0_128, %c0_129] : memref<8x8x128xf32, #tpu.memory_space<vmem>>, vector<1x8x128xf32>
    %344 = vector.shape_cast %343 : vector<1x8x128xf32> to vector<8x128xf32>
    %345 = vector.shape_cast %341 : vector<8x128xf32> to vector<1x8x128xf32>
    tpu.vector_store %arg16[%342, %c0_128, %c0_129], %345 {strides = array<i32>} : memref<8x8x128xf32, #tpu.memory_space<vmem>>, vector<1x8x128xf32>,
    %c3_i32 = arith.constant 3 : i32
    %346 = arith.index_cast %c3_i32 : i32 to index
    %c0_130 = arith.constant 0 : index
    %c0_131 = arith.constant 0 : index
    %347 = vector.load %arg15[%346, %c0_130, %c0_131] : memref<8x8x384xf32, #tpu.memory_space<vmem>>, vector<1x8x384xf32>
    %348 = vector.shape_cast %347 : vector<1x8x384xf32> to vector<8x384xf32>
    %c0_132 = arith.constant 0 : index
    %c0_133 = arith.constant 0 : index
    %c0_134 = arith.constant 0 : index
    %349 = vector.load %arg6[%c0_132, %c0_133, %c0_134] : memref<2x128x384xbf16, #tpu.memory_space<vmem>>, vector<1x128x384xbf16>
    %350 = vector.shape_cast %349 : vector<1x128x384xbf16> to vector<128x384xbf16>
    %c0_135 = arith.constant 0 : index
    %c0_136 = arith.constant 0 : index
    %c0_137 = arith.constant 0 : index
    %351 = vector.load %arg8[%c0_135, %c0_136, %c0_137] : memref<2x1x384xf32, #tpu.memory_space<vmem>>, vector<1x1x384xf32>
    %352 = vector.shape_cast %351 : vector<1x1x384xf32> to vector<1x384xf32>
    %353 = arith.truncf %299 : vector<8x128xf32> to vector<8x128xbf16>
    %cst_138 = arith.constant dense<0.000000e+00> : vector<8x384xf32>
    %354 = tpu.matmul %353, %350, %cst_138 {dimension_numbers = #tpu.dot_dimension_numbers<[1], [0], [0], [1], [0, 0, 1, 1], [], []>} : vector<8x128xbf16>, vector<128x384xbf16>, vector<8x384xf32> -> vector<8x384xf32>
    %355 = vector.broadcast %352 : vector<1x384xf32> to vector<8x384xf32>
    %356 = arith.addf %354, %355 : vector<8x384xf32>
    %357 = vector.extract_strided_slice %348 {offsets = [0, 0], sizes = [8, 128], strides = [1, 1]} : vector<8x384xf32> to vector<8x128xf32>
    %358 = vector.extract_strided_slice %356 {offsets = [0, 0], sizes = [8, 128], strides = [1, 1]} : vector<8x384xf32> to vector<8x128xf32>
    %359 = arith.addf %357, %358 : vector<8x128xf32>
    %360 = arith.negf %359 : vector<8x128xf32>
    %361 = math.exp %360 : vector<8x128xf32>
    %cst_139 = arith.constant 1.000000e+00 : f32
    %362 = vector.broadcast %cst_139 : f32 to vector<8x128xf32>
    %363 = arith.addf %362, %361 : vector<8x128xf32>
    %364 = arith.divf %362, %363 : vector<8x128xf32>
    %365 = vector.extract_strided_slice %348 {offsets = [0, 128], sizes = [8, 128], strides = [1, 1]} : vector<8x384xf32> to vector<8x128xf32>
    %366 = vector.extract_strided_slice %356 {offsets = [0, 128], sizes = [8, 128], strides = [1, 1]} : vector<8x384xf32> to vector<8x128xf32>
    %367 = arith.addf %365, %366 : vector<8x128xf32>
    %368 = arith.negf %367 : vector<8x128xf32>
    %369 = math.exp %368 : vector<8x128xf32>
    %cst_140 = arith.constant 1.000000e+00 : f32
    %370 = vector.broadcast %cst_140 : f32 to vector<8x128xf32>
    %371 = arith.addf %370, %369 : vector<8x128xf32>
    %372 = arith.divf %370, %371 : vector<8x128xf32>
    %373 = vector.extract_strided_slice %348 {offsets = [0, 256], sizes = [8, 128], strides = [1, 1]} : vector<8x384xf32> to vector<8x128xf32>
    %374 = vector.extract_strided_slice %356 {offsets = [0, 256], sizes = [8, 128], strides = [1, 1]} : vector<8x384xf32> to vector<8x128xf32>
    %375 = arith.mulf %364, %374 : vector<8x128xf32>
    %376 = arith.addf %373, %375 : vector<8x128xf32>
    %377 = math.tanh %376 : vector<8x128xf32>
    %cst_141 = arith.constant 1.000000e+00 : f32
    %378 = vector.broadcast %cst_141 : f32 to vector<8x128xf32>
    %379 = arith.subf %378, %372 : vector<8x128xf32>
    %380 = arith.mulf %379, %377 : vector<8x128xf32>
    %381 = arith.mulf %372, %299 : vector<8x128xf32>
    %382 = arith.addf %380, %381 : vector<8x128xf32>
    %383 = arith.truncf %382 : vector<8x128xf32> to vector<8x128xbf16>
    %c1_142 = arith.constant 1 : index
    %c0_143 = arith.constant 0 : index
    %c0_144 = arith.constant 0 : index
    %384 = vector.load %arg5[%c1_142, %c0_143, %c0_144] : memref<2x128x384xbf16, #tpu.memory_space<vmem>>, vector<1x128x384xbf16>
    %385 = vector.shape_cast %384 : vector<1x128x384xbf16> to vector<128x384xbf16>
    %cst_145 = arith.constant dense<0.000000e+00> : vector<8x384xf32>
    %386 = tpu.matmul %383, %385, %cst_145 {dimension_numbers = #tpu.dot_dimension_numbers<[1], [0], [0], [1], [0, 0, 1, 1], [], []>} : vector<8x128xbf16>, vector<128x384xbf16>, vector<8x384xf32> -> vector<8x384xf32>
    %c1_146 = arith.constant 1 : index
    %c0_147 = arith.constant 0 : index
    %c0_148 = arith.constant 0 : index
    %387 = vector.load %arg7[%c1_146, %c0_147, %c0_148] : memref<2x1x384xf32, #tpu.memory_space<vmem>>, vector<1x1x384xf32>
    %388 = vector.shape_cast %387 : vector<1x1x384xf32> to vector<1x384xf32>
    %389 = vector.broadcast %388 : vector<1x384xf32> to vector<8x384xf32>
    %390 = arith.addf %386, %389 : vector<8x384xf32>
    %c1_149 = arith.constant 1 : index
    %c0_150 = arith.constant 0 : index
    %c0_151 = arith.constant 0 : index
    %391 = vector.load %arg6[%c1_149, %c0_150, %c0_151] : memref<2x128x384xbf16, #tpu.memory_space<vmem>>, vector<1x128x384xbf16>
    %392 = vector.shape_cast %391 : vector<1x128x384xbf16> to vector<128x384xbf16>
    %c1_152 = arith.constant 1 : index
    %c0_153 = arith.constant 0 : index
    %c0_154 = arith.constant 0 : index
    %393 = vector.load %arg8[%c1_152, %c0_153, %c0_154] : memref<2x1x384xf32, #tpu.memory_space<vmem>>, vector<1x1x384xf32>
    %394 = vector.shape_cast %393 : vector<1x1x384xf32> to vector<1x384xf32>
    %395 = arith.truncf %341 : vector<8x128xf32> to vector<8x128xbf16>
    %cst_155 = arith.constant dense<0.000000e+00> : vector<8x384xf32>
    %396 = tpu.matmul %395, %392, %cst_155 {dimension_numbers = #tpu.dot_dimension_numbers<[1], [0], [0], [1], [0, 0, 1, 1], [], []>} : vector<8x128xbf16>, vector<128x384xbf16>, vector<8x384xf32> -> vector<8x384xf32>
    %397 = vector.broadcast %394 : vector<1x384xf32> to vector<8x384xf32>
    %398 = arith.addf %396, %397 : vector<8x384xf32>
    %399 = vector.extract_strided_slice %390 {offsets = [0, 0], sizes = [8, 128], strides = [1, 1]} : vector<8x384xf32> to vector<8x128xf32>
    %400 = vector.extract_strided_slice %398 {offsets = [0, 0], sizes = [8, 128], strides = [1, 1]} : vector<8x384xf32> to vector<8x128xf32>
    %401 = arith.addf %399, %400 : vector<8x128xf32>
    %402 = arith.negf %401 : vector<8x128xf32>
    %403 = math.exp %402 : vector<8x128xf32>
    %cst_156 = arith.constant 1.000000e+00 : f32
    %404 = vector.broadcast %cst_156 : f32 to vector<8x128xf32>
    %405 = arith.addf %404, %403 : vector<8x128xf32>
    %406 = arith.divf %404, %405 : vector<8x128xf32>
    %407 = vector.extract_strided_slice %390 {offsets = [0, 128], sizes = [8, 128], strides = [1, 1]} : vector<8x384xf32> to vector<8x128xf32>
    %408 = vector.extract_strided_slice %398 {offsets = [0, 128], sizes = [8, 128], strides = [1, 1]} : vector<8x384xf32> to vector<8x128xf32>
    %409 = arith.addf %407, %408 : vector<8x128xf32>
    %410 = arith.negf %409 : vector<8x128xf32>
    %411 = math.exp %410 : vector<8x128xf32>
    %cst_157 = arith.constant 1.000000e+00 : f32
    %412 = vector.broadcast %cst_157 : f32 to vector<8x128xf32>
    %413 = arith.addf %412, %411 : vector<8x128xf32>
    %414 = arith.divf %412, %413 : vector<8x128xf32>
    %415 = vector.extract_strided_slice %390 {offsets = [0, 256], sizes = [8, 128], strides = [1, 1]} : vector<8x384xf32> to vector<8x128xf32>
    %416 = vector.extract_strided_slice %398 {offsets = [0, 256], sizes = [8, 128], strides = [1, 1]} : vector<8x384xf32> to vector<8x128xf32>
    %417 = arith.mulf %406, %416 : vector<8x128xf32>
    %418 = arith.addf %415, %417 : vector<8x128xf32>
    %419 = math.tanh %418 : vector<8x128xf32>
    %cst_158 = arith.constant 1.000000e+00 : f32
    %420 = vector.broadcast %cst_158 : f32 to vector<8x128xf32>
    %421 = arith.subf %420, %414 : vector<8x128xf32>
    %422 = arith.mulf %421, %419 : vector<8x128xf32>
    %423 = arith.mulf %414, %341 : vector<8x128xf32>
    %424 = arith.addf %422, %423 : vector<8x128xf32>
    %425 = arith.index_cast %c3_i32 : i32 to index
    %c0_159 = arith.constant 0 : index
    %c0_160 = arith.constant 0 : index
    %426 = vector.load %arg16[%425, %c0_159, %c0_160] : memref<8x8x128xf32, #tpu.memory_space<vmem>>, vector<1x8x128xf32>
    %427 = vector.shape_cast %426 : vector<1x8x128xf32> to vector<8x128xf32>
    %428 = vector.shape_cast %424 : vector<8x128xf32> to vector<1x8x128xf32>
    tpu.vector_store %arg16[%425, %c0_159, %c0_160], %428 {strides = array<i32>} : memref<8x8x128xf32, #tpu.memory_space<vmem>>, vector<1x8x128xf32>,
    %c4_i32 = arith.constant 4 : i32
    %429 = arith.index_cast %c4_i32 : i32 to index
    %c0_161 = arith.constant 0 : index
    %c0_162 = arith.constant 0 : index
    %430 = vector.load %arg15[%429, %c0_161, %c0_162] : memref<8x8x384xf32, #tpu.memory_space<vmem>>, vector<1x8x384xf32>
    %431 = vector.shape_cast %430 : vector<1x8x384xf32> to vector<8x384xf32>
    %c0_163 = arith.constant 0 : index
    %c0_164 = arith.constant 0 : index
    %c0_165 = arith.constant 0 : index
    %432 = vector.load %arg6[%c0_163, %c0_164, %c0_165] : memref<2x128x384xbf16, #tpu.memory_space<vmem>>, vector<1x128x384xbf16>
    %433 = vector.shape_cast %432 : vector<1x128x384xbf16> to vector<128x384xbf16>
    %c0_166 = arith.constant 0 : index
    %c0_167 = arith.constant 0 : index
    %c0_168 = arith.constant 0 : index
    %434 = vector.load %arg8[%c0_166, %c0_167, %c0_168] : memref<2x1x384xf32, #tpu.memory_space<vmem>>, vector<1x1x384xf32>
    %435 = vector.shape_cast %434 : vector<1x1x384xf32> to vector<1x384xf32>
    %436 = arith.truncf %382 : vector<8x128xf32> to vector<8x128xbf16>
    %cst_169 = arith.constant dense<0.000000e+00> : vector<8x384xf32>
    %437 = tpu.matmul %436, %433, %cst_169 {dimension_numbers = #tpu.dot_dimension_numbers<[1], [0], [0], [1], [0, 0, 1, 1], [], []>} : vector<8x128xbf16>, vector<128x384xbf16>, vector<8x384xf32> -> vector<8x384xf32>
    %438 = vector.broadcast %435 : vector<1x384xf32> to vector<8x384xf32>
    %439 = arith.addf %437, %438 : vector<8x384xf32>
    %440 = vector.extract_strided_slice %431 {offsets = [0, 0], sizes = [8, 128], strides = [1, 1]} : vector<8x384xf32> to vector<8x128xf32>
    %441 = vector.extract_strided_slice %439 {offsets = [0, 0], sizes = [8, 128], strides = [1, 1]} : vector<8x384xf32> to vector<8x128xf32>
    %442 = arith.addf %440, %441 : vector<8x128xf32>
    %443 = arith.negf %442 : vector<8x128xf32>
    %444 = math.exp %443 : vector<8x128xf32>
    %cst_170 = arith.constant 1.000000e+00 : f32
    %445 = vector.broadcast %cst_170 : f32 to vector<8x128xf32>
    %446 = arith.addf %445, %444 : vector<8x128xf32>
    %447 = arith.divf %445, %446 : vector<8x128xf32>
    %448 = vector.extract_strided_slice %431 {offsets = [0, 128], sizes = [8, 128], strides = [1, 1]} : vector<8x384xf32> to vector<8x128xf32>
    %449 = vector.extract_strided_slice %439 {offsets = [0, 128], sizes = [8, 128], strides = [1, 1]} : vector<8x384xf32> to vector<8x128xf32>
    %450 = arith.addf %448, %449 : vector<8x128xf32>
    %451 = arith.negf %450 : vector<8x128xf32>
    %452 = math.exp %451 : vector<8x128xf32>
    %cst_171 = arith.constant 1.000000e+00 : f32
    %453 = vector.broadcast %cst_171 : f32 to vector<8x128xf32>
    %454 = arith.addf %453, %452 : vector<8x128xf32>
    %455 = arith.divf %453, %454 : vector<8x128xf32>
    %456 = vector.extract_strided_slice %431 {offsets = [0, 256], sizes = [8, 128], strides = [1, 1]} : vector<8x384xf32> to vector<8x128xf32>
    %457 = vector.extract_strided_slice %439 {offsets = [0, 256], sizes = [8, 128], strides = [1, 1]} : vector<8x384xf32> to vector<8x128xf32>
    %458 = arith.mulf %447, %457 : vector<8x128xf32>
    %459 = arith.addf %456, %458 : vector<8x128xf32>
    %460 = math.tanh %459 : vector<8x128xf32>
    %cst_172 = arith.constant 1.000000e+00 : f32
    %461 = vector.broadcast %cst_172 : f32 to vector<8x128xf32>
    %462 = arith.subf %461, %455 : vector<8x128xf32>
    %463 = arith.mulf %462, %460 : vector<8x128xf32>
    %464 = arith.mulf %455, %382 : vector<8x128xf32>
    %465 = arith.addf %463, %464 : vector<8x128xf32>
    %466 = arith.truncf %465 : vector<8x128xf32> to vector<8x128xbf16>
    %c1_173 = arith.constant 1 : index
    %c0_174 = arith.constant 0 : index
    %c0_175 = arith.constant 0 : index
    %467 = vector.load %arg5[%c1_173, %c0_174, %c0_175] : memref<2x128x384xbf16, #tpu.memory_space<vmem>>, vector<1x128x384xbf16>
    %468 = vector.shape_cast %467 : vector<1x128x384xbf16> to vector<128x384xbf16>
    %cst_176 = arith.constant dense<0.000000e+00> : vector<8x384xf32>
    %469 = tpu.matmul %466, %468, %cst_176 {dimension_numbers = #tpu.dot_dimension_numbers<[1], [0], [0], [1], [0, 0, 1, 1], [], []>} : vector<8x128xbf16>, vector<128x384xbf16>, vector<8x384xf32> -> vector<8x384xf32>
    %c1_177 = arith.constant 1 : index
    %c0_178 = arith.constant 0 : index
    %c0_179 = arith.constant 0 : index
    %470 = vector.load %arg7[%c1_177, %c0_178, %c0_179] : memref<2x1x384xf32, #tpu.memory_space<vmem>>, vector<1x1x384xf32>
    %471 = vector.shape_cast %470 : vector<1x1x384xf32> to vector<1x384xf32>
    %472 = vector.broadcast %471 : vector<1x384xf32> to vector<8x384xf32>
    %473 = arith.addf %469, %472 : vector<8x384xf32>
    %c1_180 = arith.constant 1 : index
    %c0_181 = arith.constant 0 : index
    %c0_182 = arith.constant 0 : index
    %474 = vector.load %arg6[%c1_180, %c0_181, %c0_182] : memref<2x128x384xbf16, #tpu.memory_space<vmem>>, vector<1x128x384xbf16>
    %475 = vector.shape_cast %474 : vector<1x128x384xbf16> to vector<128x384xbf16>
    %c1_183 = arith.constant 1 : index
    %c0_184 = arith.constant 0 : index
    %c0_185 = arith.constant 0 : index
    %476 = vector.load %arg8[%c1_183, %c0_184, %c0_185] : memref<2x1x384xf32, #tpu.memory_space<vmem>>, vector<1x1x384xf32>
    %477 = vector.shape_cast %476 : vector<1x1x384xf32> to vector<1x384xf32>
    %478 = arith.truncf %424 : vector<8x128xf32> to vector<8x128xbf16>
    %cst_186 = arith.constant dense<0.000000e+00> : vector<8x384xf32>
    %479 = tpu.matmul %478, %475, %cst_186 {dimension_numbers = #tpu.dot_dimension_numbers<[1], [0], [0], [1], [0, 0, 1, 1], [], []>} : vector<8x128xbf16>, vector<128x384xbf16>, vector<8x384xf32> -> vector<8x384xf32>
    %480 = vector.broadcast %477 : vector<1x384xf32> to vector<8x384xf32>
    %481 = arith.addf %479, %480 : vector<8x384xf32>
    %482 = vector.extract_strided_slice %473 {offsets = [0, 0], sizes = [8, 128], strides = [1, 1]} : vector<8x384xf32> to vector<8x128xf32>
    %483 = vector.extract_strided_slice %481 {offsets = [0, 0], sizes = [8, 128], strides = [1, 1]} : vector<8x384xf32> to vector<8x128xf32>
    %484 = arith.addf %482, %483 : vector<8x128xf32>
    %485 = arith.negf %484 : vector<8x128xf32>
    %486 = math.exp %485 : vector<8x128xf32>
    %cst_187 = arith.constant 1.000000e+00 : f32
    %487 = vector.broadcast %cst_187 : f32 to vector<8x128xf32>
    %488 = arith.addf %487, %486 : vector<8x128xf32>
    %489 = arith.divf %487, %488 : vector<8x128xf32>
    %490 = vector.extract_strided_slice %473 {offsets = [0, 128], sizes = [8, 128], strides = [1, 1]} : vector<8x384xf32> to vector<8x128xf32>
    %491 = vector.extract_strided_slice %481 {offsets = [0, 128], sizes = [8, 128], strides = [1, 1]} : vector<8x384xf32> to vector<8x128xf32>
    %492 = arith.addf %490, %491 : vector<8x128xf32>
    %493 = arith.negf %492 : vector<8x128xf32>
    %494 = math.exp %493 : vector<8x128xf32>
    %cst_188 = arith.constant 1.000000e+00 : f32
    %495 = vector.broadcast %cst_188 : f32 to vector<8x128xf32>
    %496 = arith.addf %495, %494 : vector<8x128xf32>
    %497 = arith.divf %495, %496 : vector<8x128xf32>
    %498 = vector.extract_strided_slice %473 {offsets = [0, 256], sizes = [8, 128], strides = [1, 1]} : vector<8x384xf32> to vector<8x128xf32>
    %499 = vector.extract_strided_slice %481 {offsets = [0, 256], sizes = [8, 128], strides = [1, 1]} : vector<8x384xf32> to vector<8x128xf32>
    %500 = arith.mulf %489, %499 : vector<8x128xf32>
    %501 = arith.addf %498, %500 : vector<8x128xf32>
    %502 = math.tanh %501 : vector<8x128xf32>
    %cst_189 = arith.constant 1.000000e+00 : f32
    %503 = vector.broadcast %cst_189 : f32 to vector<8x128xf32>
    %504 = arith.subf %503, %497 : vector<8x128xf32>
    %505 = arith.mulf %504, %502 : vector<8x128xf32>
    %506 = arith.mulf %497, %424 : vector<8x128xf32>
    %507 = arith.addf %505, %506 : vector<8x128xf32>
    %508 = arith.index_cast %c4_i32 : i32 to index
    %c0_190 = arith.constant 0 : index
    %c0_191 = arith.constant 0 : index
    %509 = vector.load %arg16[%508, %c0_190, %c0_191] : memref<8x8x128xf32, #tpu.memory_space<vmem>>, vector<1x8x128xf32>
    %510 = vector.shape_cast %509 : vector<1x8x128xf32> to vector<8x128xf32>
    %511 = vector.shape_cast %507 : vector<8x128xf32> to vector<1x8x128xf32>
    tpu.vector_store %arg16[%508, %c0_190, %c0_191], %511 {strides = array<i32>} : memref<8x8x128xf32, #tpu.memory_space<vmem>>, vector<1x8x128xf32>,
    %c5_i32 = arith.constant 5 : i32
    %512 = arith.index_cast %c5_i32 : i32 to index
    %c0_192 = arith.constant 0 : index
    %c0_193 = arith.constant 0 : index
    %513 = vector.load %arg15[%512, %c0_192, %c0_193] : memref<8x8x384xf32, #tpu.memory_space<vmem>>, vector<1x8x384xf32>
    %514 = vector.shape_cast %513 : vector<1x8x384xf32> to vector<8x384xf32>
    %c0_194 = arith.constant 0 : index
    %c0_195 = arith.constant 0 : index
    %c0_196 = arith.constant 0 : index
    %515 = vector.load %arg6[%c0_194, %c0_195, %c0_196] : memref<2x128x384xbf16, #tpu.memory_space<vmem>>, vector<1x128x384xbf16>
    %516 = vector.shape_cast %515 : vector<1x128x384xbf16> to vector<128x384xbf16>
    %c0_197 = arith.constant 0 : index
    %c0_198 = arith.constant 0 : index
    %c0_199 = arith.constant 0 : index
    %517 = vector.load %arg8[%c0_197, %c0_198, %c0_199] : memref<2x1x384xf32, #tpu.memory_space<vmem>>, vector<1x1x384xf32>
    %518 = vector.shape_cast %517 : vector<1x1x384xf32> to vector<1x384xf32>
    %519 = arith.truncf %465 : vector<8x128xf32> to vector<8x128xbf16>
    %cst_200 = arith.constant dense<0.000000e+00> : vector<8x384xf32>
    %520 = tpu.matmul %519, %516, %cst_200 {dimension_numbers = #tpu.dot_dimension_numbers<[1], [0], [0], [1], [0, 0, 1, 1], [], []>} : vector<8x128xbf16>, vector<128x384xbf16>, vector<8x384xf32> -> vector<8x384xf32>
    %521 = vector.broadcast %518 : vector<1x384xf32> to vector<8x384xf32>
    %522 = arith.addf %520, %521 : vector<8x384xf32>
    %523 = vector.extract_strided_slice %514 {offsets = [0, 0], sizes = [8, 128], strides = [1, 1]} : vector<8x384xf32> to vector<8x128xf32>
    %524 = vector.extract_strided_slice %522 {offsets = [0, 0], sizes = [8, 128], strides = [1, 1]} : vector<8x384xf32> to vector<8x128xf32>
    %525 = arith.addf %523, %524 : vector<8x128xf32>
    %526 = arith.negf %525 : vector<8x128xf32>
    %527 = math.exp %526 : vector<8x128xf32>
    %cst_201 = arith.constant 1.000000e+00 : f32
    %528 = vector.broadcast %cst_201 : f32 to vector<8x128xf32>
    %529 = arith.addf %528, %527 : vector<8x128xf32>
    %530 = arith.divf %528, %529 : vector<8x128xf32>
    %531 = vector.extract_strided_slice %514 {offsets = [0, 128], sizes = [8, 128], strides = [1, 1]} : vector<8x384xf32> to vector<8x128xf32>
    %532 = vector.extract_strided_slice %522 {offsets = [0, 128], sizes = [8, 128], strides = [1, 1]} : vector<8x384xf32> to vector<8x128xf32>
    %533 = arith.addf %531, %532 : vector<8x128xf32>
    %534 = arith.negf %533 : vector<8x128xf32>
    %535 = math.exp %534 : vector<8x128xf32>
    %cst_202 = arith.constant 1.000000e+00 : f32
    %536 = vector.broadcast %cst_202 : f32 to vector<8x128xf32>
    %537 = arith.addf %536, %535 : vector<8x128xf32>
    %538 = arith.divf %536, %537 : vector<8x128xf32>
    %539 = vector.extract_strided_slice %514 {offsets = [0, 256], sizes = [8, 128], strides = [1, 1]} : vector<8x384xf32> to vector<8x128xf32>
    %540 = vector.extract_strided_slice %522 {offsets = [0, 256], sizes = [8, 128], strides = [1, 1]} : vector<8x384xf32> to vector<8x128xf32>
    %541 = arith.mulf %530, %540 : vector<8x128xf32>
    %542 = arith.addf %539, %541 : vector<8x128xf32>
    %543 = math.tanh %542 : vector<8x128xf32>
    %cst_203 = arith.constant 1.000000e+00 : f32
    %544 = vector.broadcast %cst_203 : f32 to vector<8x128xf32>
    %545 = arith.subf %544, %538 : vector<8x128xf32>
    %546 = arith.mulf %545, %543 : vector<8x128xf32>
    %547 = arith.mulf %538, %465 : vector<8x128xf32>
    %548 = arith.addf %546, %547 : vector<8x128xf32>
    %549 = arith.truncf %548 : vector<8x128xf32> to vector<8x128xbf16>
    %c1_204 = arith.constant 1 : index
    %c0_205 = arith.constant 0 : index
    %c0_206 = arith.constant 0 : index
    %550 = vector.load %arg5[%c1_204, %c0_205, %c0_206] : memref<2x128x384xbf16, #tpu.memory_space<vmem>>, vector<1x128x384xbf16>
    %551 = vector.shape_cast %550 : vector<1x128x384xbf16> to vector<128x384xbf16>
    %cst_207 = arith.constant dense<0.000000e+00> : vector<8x384xf32>
    %552 = tpu.matmul %549, %551, %cst_207 {dimension_numbers = #tpu.dot_dimension_numbers<[1], [0], [0], [1], [0, 0, 1, 1], [], []>} : vector<8x128xbf16>, vector<128x384xbf16>, vector<8x384xf32> -> vector<8x384xf32>
    %c1_208 = arith.constant 1 : index
    %c0_209 = arith.constant 0 : index
    %c0_210 = arith.constant 0 : index
    %553 = vector.load %arg7[%c1_208, %c0_209, %c0_210] : memref<2x1x384xf32, #tpu.memory_space<vmem>>, vector<1x1x384xf32>
    %554 = vector.shape_cast %553 : vector<1x1x384xf32> to vector<1x384xf32>
    %555 = vector.broadcast %554 : vector<1x384xf32> to vector<8x384xf32>
    %556 = arith.addf %552, %555 : vector<8x384xf32>
    %c1_211 = arith.constant 1 : index
    %c0_212 = arith.constant 0 : index
    %c0_213 = arith.constant 0 : index
    %557 = vector.load %arg6[%c1_211, %c0_212, %c0_213] : memref<2x128x384xbf16, #tpu.memory_space<vmem>>, vector<1x128x384xbf16>
    %558 = vector.shape_cast %557 : vector<1x128x384xbf16> to vector<128x384xbf16>
    %c1_214 = arith.constant 1 : index
    %c0_215 = arith.constant 0 : index
    %c0_216 = arith.constant 0 : index
    %559 = vector.load %arg8[%c1_214, %c0_215, %c0_216] : memref<2x1x384xf32, #tpu.memory_space<vmem>>, vector<1x1x384xf32>
    %560 = vector.shape_cast %559 : vector<1x1x384xf32> to vector<1x384xf32>
    %561 = arith.truncf %507 : vector<8x128xf32> to vector<8x128xbf16>
    %cst_217 = arith.constant dense<0.000000e+00> : vector<8x384xf32>
    %562 = tpu.matmul %561, %558, %cst_217 {dimension_numbers = #tpu.dot_dimension_numbers<[1], [0], [0], [1], [0, 0, 1, 1], [], []>} : vector<8x128xbf16>, vector<128x384xbf16>, vector<8x384xf32> -> vector<8x384xf32>
    %563 = vector.broadcast %560 : vector<1x384xf32> to vector<8x384xf32>
    %564 = arith.addf %562, %563 : vector<8x384xf32>
    %565 = vector.extract_strided_slice %556 {offsets = [0, 0], sizes = [8, 128], strides = [1, 1]} : vector<8x384xf32> to vector<8x128xf32>
    %566 = vector.extract_strided_slice %564 {offsets = [0, 0], sizes = [8, 128], strides = [1, 1]} : vector<8x384xf32> to vector<8x128xf32>
    %567 = arith.addf %565, %566 : vector<8x128xf32>
    %568 = arith.negf %567 : vector<8x128xf32>
    %569 = math.exp %568 : vector<8x128xf32>
    %cst_218 = arith.constant 1.000000e+00 : f32
    %570 = vector.broadcast %cst_218 : f32 to vector<8x128xf32>
    %571 = arith.addf %570, %569 : vector<8x128xf32>
    %572 = arith.divf %570, %571 : vector<8x128xf32>
    %573 = vector.extract_strided_slice %556 {offsets = [0, 128], sizes = [8, 128], strides = [1, 1]} : vector<8x384xf32> to vector<8x128xf32>
    %574 = vector.extract_strided_slice %564 {offsets = [0, 128], sizes = [8, 128], strides = [1, 1]} : vector<8x384xf32> to vector<8x128xf32>
    %575 = arith.addf %573, %574 : vector<8x128xf32>
    %576 = arith.negf %575 : vector<8x128xf32>
    %577 = math.exp %576 : vector<8x128xf32>
    %cst_219 = arith.constant 1.000000e+00 : f32
    %578 = vector.broadcast %cst_219 : f32 to vector<8x128xf32>
    %579 = arith.addf %578, %577 : vector<8x128xf32>
    %580 = arith.divf %578, %579 : vector<8x128xf32>
    %581 = vector.extract_strided_slice %556 {offsets = [0, 256], sizes = [8, 128], strides = [1, 1]} : vector<8x384xf32> to vector<8x128xf32>
    %582 = vector.extract_strided_slice %564 {offsets = [0, 256], sizes = [8, 128], strides = [1, 1]} : vector<8x384xf32> to vector<8x128xf32>
    %583 = arith.mulf %572, %582 : vector<8x128xf32>
    %584 = arith.addf %581, %583 : vector<8x128xf32>
    %585 = math.tanh %584 : vector<8x128xf32>
    %cst_220 = arith.constant 1.000000e+00 : f32
    %586 = vector.broadcast %cst_220 : f32 to vector<8x128xf32>
    %587 = arith.subf %586, %580 : vector<8x128xf32>
    %588 = arith.mulf %587, %585 : vector<8x128xf32>
    %589 = arith.mulf %580, %507 : vector<8x128xf32>
    %590 = arith.addf %588, %589 : vector<8x128xf32>
    %591 = arith.index_cast %c5_i32 : i32 to index
    %c0_221 = arith.constant 0 : index
    %c0_222 = arith.constant 0 : index
    %592 = vector.load %arg16[%591, %c0_221, %c0_222] : memref<8x8x128xf32, #tpu.memory_space<vmem>>, vector<1x8x128xf32>
    %593 = vector.shape_cast %592 : vector<1x8x128xf32> to vector<8x128xf32>
    %594 = vector.shape_cast %590 : vector<8x128xf32> to vector<1x8x128xf32>
    tpu.vector_store %arg16[%591, %c0_221, %c0_222], %594 {strides = array<i32>} : memref<8x8x128xf32, #tpu.memory_space<vmem>>, vector<1x8x128xf32>,
    %c6_i32 = arith.constant 6 : i32
    %595 = arith.index_cast %c6_i32 : i32 to index
    %c0_223 = arith.constant 0 : index
    %c0_224 = arith.constant 0 : index
    %596 = vector.load %arg15[%595, %c0_223, %c0_224] : memref<8x8x384xf32, #tpu.memory_space<vmem>>, vector<1x8x384xf32>
    %597 = vector.shape_cast %596 : vector<1x8x384xf32> to vector<8x384xf32>
    %c0_225 = arith.constant 0 : index
    %c0_226 = arith.constant 0 : index
    %c0_227 = arith.constant 0 : index
    %598 = vector.load %arg6[%c0_225, %c0_226, %c0_227] : memref<2x128x384xbf16, #tpu.memory_space<vmem>>, vector<1x128x384xbf16>
    %599 = vector.shape_cast %598 : vector<1x128x384xbf16> to vector<128x384xbf16>
    %c0_228 = arith.constant 0 : index
    %c0_229 = arith.constant 0 : index
    %c0_230 = arith.constant 0 : index
    %600 = vector.load %arg8[%c0_228, %c0_229, %c0_230] : memref<2x1x384xf32, #tpu.memory_space<vmem>>, vector<1x1x384xf32>
    %601 = vector.shape_cast %600 : vector<1x1x384xf32> to vector<1x384xf32>
    %602 = arith.truncf %548 : vector<8x128xf32> to vector<8x128xbf16>
    %cst_231 = arith.constant dense<0.000000e+00> : vector<8x384xf32>
    %603 = tpu.matmul %602, %599, %cst_231 {dimension_numbers = #tpu.dot_dimension_numbers<[1], [0], [0], [1], [0, 0, 1, 1], [], []>} : vector<8x128xbf16>, vector<128x384xbf16>, vector<8x384xf32> -> vector<8x384xf32>
    %604 = vector.broadcast %601 : vector<1x384xf32> to vector<8x384xf32>
    %605 = arith.addf %603, %604 : vector<8x384xf32>
    %606 = vector.extract_strided_slice %597 {offsets = [0, 0], sizes = [8, 128], strides = [1, 1]} : vector<8x384xf32> to vector<8x128xf32>
    %607 = vector.extract_strided_slice %605 {offsets = [0, 0], sizes = [8, 128], strides = [1, 1]} : vector<8x384xf32> to vector<8x128xf32>
    %608 = arith.addf %606, %607 : vector<8x128xf32>
    %609 = arith.negf %608 : vector<8x128xf32>
    %610 = math.exp %609 : vector<8x128xf32>
    %cst_232 = arith.constant 1.000000e+00 : f32
    %611 = vector.broadcast %cst_232 : f32 to vector<8x128xf32>
    %612 = arith.addf %611, %610 : vector<8x128xf32>
    %613 = arith.divf %611, %612 : vector<8x128xf32>
    %614 = vector.extract_strided_slice %597 {offsets = [0, 128], sizes = [8, 128], strides = [1, 1]} : vector<8x384xf32> to vector<8x128xf32>
    %615 = vector.extract_strided_slice %605 {offsets = [0, 128], sizes = [8, 128], strides = [1, 1]} : vector<8x384xf32> to vector<8x128xf32>
    %616 = arith.addf %614, %615 : vector<8x128xf32>
    %617 = arith.negf %616 : vector<8x128xf32>
    %618 = math.exp %617 : vector<8x128xf32>
    %cst_233 = arith.constant 1.000000e+00 : f32
    %619 = vector.broadcast %cst_233 : f32 to vector<8x128xf32>
    %620 = arith.addf %619, %618 : vector<8x128xf32>
    %621 = arith.divf %619, %620 : vector<8x128xf32>
    %622 = vector.extract_strided_slice %597 {offsets = [0, 256], sizes = [8, 128], strides = [1, 1]} : vector<8x384xf32> to vector<8x128xf32>
    %623 = vector.extract_strided_slice %605 {offsets = [0, 256], sizes = [8, 128], strides = [1, 1]} : vector<8x384xf32> to vector<8x128xf32>
    %624 = arith.mulf %613, %623 : vector<8x128xf32>
    %625 = arith.addf %622, %624 : vector<8x128xf32>
    %626 = math.tanh %625 : vector<8x128xf32>
    %cst_234 = arith.constant 1.000000e+00 : f32
    %627 = vector.broadcast %cst_234 : f32 to vector<8x128xf32>
    %628 = arith.subf %627, %621 : vector<8x128xf32>
    %629 = arith.mulf %628, %626 : vector<8x128xf32>
    %630 = arith.mulf %621, %548 : vector<8x128xf32>
    %631 = arith.addf %629, %630 : vector<8x128xf32>
    %632 = arith.truncf %631 : vector<8x128xf32> to vector<8x128xbf16>
    %c1_235 = arith.constant 1 : index
    %c0_236 = arith.constant 0 : index
    %c0_237 = arith.constant 0 : index
    %633 = vector.load %arg5[%c1_235, %c0_236, %c0_237] : memref<2x128x384xbf16, #tpu.memory_space<vmem>>, vector<1x128x384xbf16>
    %634 = vector.shape_cast %633 : vector<1x128x384xbf16> to vector<128x384xbf16>
    %cst_238 = arith.constant dense<0.000000e+00> : vector<8x384xf32>
    %635 = tpu.matmul %632, %634, %cst_238 {dimension_numbers = #tpu.dot_dimension_numbers<[1], [0], [0], [1], [0, 0, 1, 1], [], []>} : vector<8x128xbf16>, vector<128x384xbf16>, vector<8x384xf32> -> vector<8x384xf32>
    %c1_239 = arith.constant 1 : index
    %c0_240 = arith.constant 0 : index
    %c0_241 = arith.constant 0 : index
    %636 = vector.load %arg7[%c1_239, %c0_240, %c0_241] : memref<2x1x384xf32, #tpu.memory_space<vmem>>, vector<1x1x384xf32>
    %637 = vector.shape_cast %636 : vector<1x1x384xf32> to vector<1x384xf32>
    %638 = vector.broadcast %637 : vector<1x384xf32> to vector<8x384xf32>
    %639 = arith.addf %635, %638 : vector<8x384xf32>
    %c1_242 = arith.constant 1 : index
    %c0_243 = arith.constant 0 : index
    %c0_244 = arith.constant 0 : index
    %640 = vector.load %arg6[%c1_242, %c0_243, %c0_244] : memref<2x128x384xbf16, #tpu.memory_space<vmem>>, vector<1x128x384xbf16>
    %641 = vector.shape_cast %640 : vector<1x128x384xbf16> to vector<128x384xbf16>
    %c1_245 = arith.constant 1 : index
    %c0_246 = arith.constant 0 : index
    %c0_247 = arith.constant 0 : index
    %642 = vector.load %arg8[%c1_245, %c0_246, %c0_247] : memref<2x1x384xf32, #tpu.memory_space<vmem>>, vector<1x1x384xf32>
    %643 = vector.shape_cast %642 : vector<1x1x384xf32> to vector<1x384xf32>
    %644 = arith.truncf %590 : vector<8x128xf32> to vector<8x128xbf16>
    %cst_248 = arith.constant dense<0.000000e+00> : vector<8x384xf32>
    %645 = tpu.matmul %644, %641, %cst_248 {dimension_numbers = #tpu.dot_dimension_numbers<[1], [0], [0], [1], [0, 0, 1, 1], [], []>} : vector<8x128xbf16>, vector<128x384xbf16>, vector<8x384xf32> -> vector<8x384xf32>
    %646 = vector.broadcast %643 : vector<1x384xf32> to vector<8x384xf32>
    %647 = arith.addf %645, %646 : vector<8x384xf32>
    %648 = vector.extract_strided_slice %639 {offsets = [0, 0], sizes = [8, 128], strides = [1, 1]} : vector<8x384xf32> to vector<8x128xf32>
    %649 = vector.extract_strided_slice %647 {offsets = [0, 0], sizes = [8, 128], strides = [1, 1]} : vector<8x384xf32> to vector<8x128xf32>
    %650 = arith.addf %648, %649 : vector<8x128xf32>
    %651 = arith.negf %650 : vector<8x128xf32>
    %652 = math.exp %651 : vector<8x128xf32>
    %cst_249 = arith.constant 1.000000e+00 : f32
    %653 = vector.broadcast %cst_249 : f32 to vector<8x128xf32>
    %654 = arith.addf %653, %652 : vector<8x128xf32>
    %655 = arith.divf %653, %654 : vector<8x128xf32>
    %656 = vector.extract_strided_slice %639 {offsets = [0, 128], sizes = [8, 128], strides = [1, 1]} : vector<8x384xf32> to vector<8x128xf32>
    %657 = vector.extract_strided_slice %647 {offsets = [0, 128], sizes = [8, 128], strides = [1, 1]} : vector<8x384xf32> to vector<8x128xf32>
    %658 = arith.addf %656, %657 : vector<8x128xf32>
    %659 = arith.negf %658 : vector<8x128xf32>
    %660 = math.exp %659 : vector<8x128xf32>
    %cst_250 = arith.constant 1.000000e+00 : f32
    %661 = vector.broadcast %cst_250 : f32 to vector<8x128xf32>
    %662 = arith.addf %661, %660 : vector<8x128xf32>
    %663 = arith.divf %661, %662 : vector<8x128xf32>
    %664 = vector.extract_strided_slice %639 {offsets = [0, 256], sizes = [8, 128], strides = [1, 1]} : vector<8x384xf32> to vector<8x128xf32>
    %665 = vector.extract_strided_slice %647 {offsets = [0, 256], sizes = [8, 128], strides = [1, 1]} : vector<8x384xf32> to vector<8x128xf32>
    %666 = arith.mulf %655, %665 : vector<8x128xf32>
    %667 = arith.addf %664, %666 : vector<8x128xf32>
    %668 = math.tanh %667 : vector<8x128xf32>
    %cst_251 = arith.constant 1.000000e+00 : f32
    %669 = vector.broadcast %cst_251 : f32 to vector<8x128xf32>
    %670 = arith.subf %669, %663 : vector<8x128xf32>
    %671 = arith.mulf %670, %668 : vector<8x128xf32>
    %672 = arith.mulf %663, %590 : vector<8x128xf32>
    %673 = arith.addf %671, %672 : vector<8x128xf32>
    %674 = arith.index_cast %c6_i32 : i32 to index
    %c0_252 = arith.constant 0 : index
    %c0_253 = arith.constant 0 : index
    %675 = vector.load %arg16[%674, %c0_252, %c0_253] : memref<8x8x128xf32, #tpu.memory_space<vmem>>, vector<1x8x128xf32>
    %676 = vector.shape_cast %675 : vector<1x8x128xf32> to vector<8x128xf32>
    %677 = vector.shape_cast %673 : vector<8x128xf32> to vector<1x8x128xf32>
    tpu.vector_store %arg16[%674, %c0_252, %c0_253], %677 {strides = array<i32>} : memref<8x8x128xf32, #tpu.memory_space<vmem>>, vector<1x8x128xf32>,
    %c7_i32 = arith.constant 7 : i32
    %678 = arith.index_cast %c7_i32 : i32 to index
    %c0_254 = arith.constant 0 : index
    %c0_255 = arith.constant 0 : index
    %679 = vector.load %arg15[%678, %c0_254, %c0_255] : memref<8x8x384xf32, #tpu.memory_space<vmem>>, vector<1x8x384xf32>
    %680 = vector.shape_cast %679 : vector<1x8x384xf32> to vector<8x384xf32>
    %c0_256 = arith.constant 0 : index
    %c0_257 = arith.constant 0 : index
    %c0_258 = arith.constant 0 : index
    %681 = vector.load %arg6[%c0_256, %c0_257, %c0_258] : memref<2x128x384xbf16, #tpu.memory_space<vmem>>, vector<1x128x384xbf16>
    %682 = vector.shape_cast %681 : vector<1x128x384xbf16> to vector<128x384xbf16>
    %c0_259 = arith.constant 0 : index
    %c0_260 = arith.constant 0 : index
    %c0_261 = arith.constant 0 : index
    %683 = vector.load %arg8[%c0_259, %c0_260, %c0_261] : memref<2x1x384xf32, #tpu.memory_space<vmem>>, vector<1x1x384xf32>
    %684 = vector.shape_cast %683 : vector<1x1x384xf32> to vector<1x384xf32>
    %685 = arith.truncf %631 : vector<8x128xf32> to vector<8x128xbf16>
    %cst_262 = arith.constant dense<0.000000e+00> : vector<8x384xf32>
    %686 = tpu.matmul %685, %682, %cst_262 {dimension_numbers = #tpu.dot_dimension_numbers<[1], [0], [0], [1], [0, 0, 1, 1], [], []>} : vector<8x128xbf16>, vector<128x384xbf16>, vector<8x384xf32> -> vector<8x384xf32>
    %687 = vector.broadcast %684 : vector<1x384xf32> to vector<8x384xf32>
    %688 = arith.addf %686, %687 : vector<8x384xf32>
    %689 = vector.extract_strided_slice %680 {offsets = [0, 0], sizes = [8, 128], strides = [1, 1]} : vector<8x384xf32> to vector<8x128xf32>
    %690 = vector.extract_strided_slice %688 {offsets = [0, 0], sizes = [8, 128], strides = [1, 1]} : vector<8x384xf32> to vector<8x128xf32>
    %691 = arith.addf %689, %690 : vector<8x128xf32>
    %692 = arith.negf %691 : vector<8x128xf32>
    %693 = math.exp %692 : vector<8x128xf32>
    %cst_263 = arith.constant 1.000000e+00 : f32
    %694 = vector.broadcast %cst_263 : f32 to vector<8x128xf32>
    %695 = arith.addf %694, %693 : vector<8x128xf32>
    %696 = arith.divf %694, %695 : vector<8x128xf32>
    %697 = vector.extract_strided_slice %680 {offsets = [0, 128], sizes = [8, 128], strides = [1, 1]} : vector<8x384xf32> to vector<8x128xf32>
    %698 = vector.extract_strided_slice %688 {offsets = [0, 128], sizes = [8, 128], strides = [1, 1]} : vector<8x384xf32> to vector<8x128xf32>
    %699 = arith.addf %697, %698 : vector<8x128xf32>
    %700 = arith.negf %699 : vector<8x128xf32>
    %701 = math.exp %700 : vector<8x128xf32>
    %cst_264 = arith.constant 1.000000e+00 : f32
    %702 = vector.broadcast %cst_264 : f32 to vector<8x128xf32>
    %703 = arith.addf %702, %701 : vector<8x128xf32>
    %704 = arith.divf %702, %703 : vector<8x128xf32>
    %705 = vector.extract_strided_slice %680 {offsets = [0, 256], sizes = [8, 128], strides = [1, 1]} : vector<8x384xf32> to vector<8x128xf32>
    %706 = vector.extract_strided_slice %688 {offsets = [0, 256], sizes = [8, 128], strides = [1, 1]} : vector<8x384xf32> to vector<8x128xf32>
    %707 = arith.mulf %696, %706 : vector<8x128xf32>
    %708 = arith.addf %705, %707 : vector<8x128xf32>
    %709 = math.tanh %708 : vector<8x128xf32>
    %cst_265 = arith.constant 1.000000e+00 : f32
    %710 = vector.broadcast %cst_265 : f32 to vector<8x128xf32>
    %711 = arith.subf %710, %704 : vector<8x128xf32>
    %712 = arith.mulf %711, %709 : vector<8x128xf32>
    %713 = arith.mulf %704, %631 : vector<8x128xf32>
    %714 = arith.addf %712, %713 : vector<8x128xf32>
    %715 = arith.truncf %714 : vector<8x128xf32> to vector<8x128xbf16>
    %c1_266 = arith.constant 1 : index
    %c0_267 = arith.constant 0 : index
    %c0_268 = arith.constant 0 : index
    %716 = vector.load %arg5[%c1_266, %c0_267, %c0_268] : memref<2x128x384xbf16, #tpu.memory_space<vmem>>, vector<1x128x384xbf16>
    %717 = vector.shape_cast %716 : vector<1x128x384xbf16> to vector<128x384xbf16>
    %cst_269 = arith.constant dense<0.000000e+00> : vector<8x384xf32>
    %718 = tpu.matmul %715, %717, %cst_269 {dimension_numbers = #tpu.dot_dimension_numbers<[1], [0], [0], [1], [0, 0, 1, 1], [], []>} : vector<8x128xbf16>, vector<128x384xbf16>, vector<8x384xf32> -> vector<8x384xf32>
    %c1_270 = arith.constant 1 : index
    %c0_271 = arith.constant 0 : index
    %c0_272 = arith.constant 0 : index
    %719 = vector.load %arg7[%c1_270, %c0_271, %c0_272] : memref<2x1x384xf32, #tpu.memory_space<vmem>>, vector<1x1x384xf32>
    %720 = vector.shape_cast %719 : vector<1x1x384xf32> to vector<1x384xf32>
    %721 = vector.broadcast %720 : vector<1x384xf32> to vector<8x384xf32>
    %722 = arith.addf %718, %721 : vector<8x384xf32>
    %c1_273 = arith.constant 1 : index
    %c0_274 = arith.constant 0 : index
    %c0_275 = arith.constant 0 : index
    %723 = vector.load %arg6[%c1_273, %c0_274, %c0_275] : memref<2x128x384xbf16, #tpu.memory_space<vmem>>, vector<1x128x384xbf16>
    %724 = vector.shape_cast %723 : vector<1x128x384xbf16> to vector<128x384xbf16>
    %c1_276 = arith.constant 1 : index
    %c0_277 = arith.constant 0 : index
    %c0_278 = arith.constant 0 : index
    %725 = vector.load %arg8[%c1_276, %c0_277, %c0_278] : memref<2x1x384xf32, #tpu.memory_space<vmem>>, vector<1x1x384xf32>
    %726 = vector.shape_cast %725 : vector<1x1x384xf32> to vector<1x384xf32>
    %727 = arith.truncf %673 : vector<8x128xf32> to vector<8x128xbf16>
    %cst_279 = arith.constant dense<0.000000e+00> : vector<8x384xf32>
    %728 = tpu.matmul %727, %724, %cst_279 {dimension_numbers = #tpu.dot_dimension_numbers<[1], [0], [0], [1], [0, 0, 1, 1], [], []>} : vector<8x128xbf16>, vector<128x384xbf16>, vector<8x384xf32> -> vector<8x384xf32>
    %729 = vector.broadcast %726 : vector<1x384xf32> to vector<8x384xf32>
    %730 = arith.addf %728, %729 : vector<8x384xf32>
    %731 = vector.extract_strided_slice %722 {offsets = [0, 0], sizes = [8, 128], strides = [1, 1]} : vector<8x384xf32> to vector<8x128xf32>
    %732 = vector.extract_strided_slice %730 {offsets = [0, 0], sizes = [8, 128], strides = [1, 1]} : vector<8x384xf32> to vector<8x128xf32>
    %733 = arith.addf %731, %732 : vector<8x128xf32>
    %734 = arith.negf %733 : vector<8x128xf32>
    %735 = math.exp %734 : vector<8x128xf32>
    %cst_280 = arith.constant 1.000000e+00 : f32
    %736 = vector.broadcast %cst_280 : f32 to vector<8x128xf32>
    %737 = arith.addf %736, %735 : vector<8x128xf32>
    %738 = arith.divf %736, %737 : vector<8x128xf32>
    %739 = vector.extract_strided_slice %722 {offsets = [0, 128], sizes = [8, 128], strides = [1, 1]} : vector<8x384xf32> to vector<8x128xf32>
    %740 = vector.extract_strided_slice %730 {offsets = [0, 128], sizes = [8, 128], strides = [1, 1]} : vector<8x384xf32> to vector<8x128xf32>
    %741 = arith.addf %739, %740 : vector<8x128xf32>
    %742 = arith.negf %741 : vector<8x128xf32>
    %743 = math.exp %742 : vector<8x128xf32>
    %cst_281 = arith.constant 1.000000e+00 : f32
    %744 = vector.broadcast %cst_281 : f32 to vector<8x128xf32>
    %745 = arith.addf %744, %743 : vector<8x128xf32>
    %746 = arith.divf %744, %745 : vector<8x128xf32>
    %747 = vector.extract_strided_slice %722 {offsets = [0, 256], sizes = [8, 128], strides = [1, 1]} : vector<8x384xf32> to vector<8x128xf32>
    %748 = vector.extract_strided_slice %730 {offsets = [0, 256], sizes = [8, 128], strides = [1, 1]} : vector<8x384xf32> to vector<8x128xf32>
    %749 = arith.mulf %738, %748 : vector<8x128xf32>
    %750 = arith.addf %747, %749 : vector<8x128xf32>
    %751 = math.tanh %750 : vector<8x128xf32>
    %cst_282 = arith.constant 1.000000e+00 : f32
    %752 = vector.broadcast %cst_282 : f32 to vector<8x128xf32>
    %753 = arith.subf %752, %746 : vector<8x128xf32>
    %754 = arith.mulf %753, %751 : vector<8x128xf32>
    %755 = arith.mulf %746, %673 : vector<8x128xf32>
    %756 = arith.addf %754, %755 : vector<8x128xf32>
    %757 = arith.index_cast %c7_i32 : i32 to index
    %c0_283 = arith.constant 0 : index
    %c0_284 = arith.constant 0 : index
    %758 = vector.load %arg16[%757, %c0_283, %c0_284] : memref<8x8x128xf32, #tpu.memory_space<vmem>>, vector<1x8x128xf32>
    %759 = vector.shape_cast %758 : vector<1x8x128xf32> to vector<8x128xf32>
    %760 = vector.shape_cast %756 : vector<8x128xf32> to vector<1x8x128xf32>
    tpu.vector_store %arg16[%757, %c0_283, %c0_284], %760 {strides = array<i32>} : memref<8x8x128xf32, #tpu.memory_space<vmem>>, vector<1x8x128xf32>,
    %c8_i32 = arith.constant 8 : i32
    %c0_285 = arith.constant 0 : index
    %c0_286 = arith.constant 0 : index
    %c0_287 = arith.constant 0 : index
    %761 = vector.load %arg16[%c0_285, %c0_286, %c0_287] : memref<8x8x128xf32, #tpu.memory_space<vmem>>, vector<1x8x128xf32>
    %762 = vector.shape_cast %761 : vector<1x8x128xf32> to vector<8x128xf32>
    %c0_288 = arith.constant 0 : index
    %c0_289 = arith.constant 0 : index
    %c0_290 = arith.constant 0 : index
    %763 = vector.load %arg17[%c0_288, %c0_289, %c0_290] : memref<8x8x128xf32, #tpu.memory_space<vmem>>, vector<8x1x128xf32>
    %764 = vector.shape_cast %763 : vector<8x1x128xf32> to vector<8x128xf32>
    %765 = vector.shape_cast %762 : vector<8x128xf32> to vector<8x1x128xf32>
    tpu.vector_store %arg17[%c0_288, %c0_289, %c0_290], %765 {strides = array<i32>} : memref<8x8x128xf32, #tpu.memory_space<vmem>>, vector<8x1x128xf32>,
    %c1_291 = arith.constant 1 : index
    %c0_292 = arith.constant 0 : index
    %c0_293 = arith.constant 0 : index
    %766 = vector.load %arg16[%c1_291, %c0_292, %c0_293] : memref<8x8x128xf32, #tpu.memory_space<vmem>>, vector<1x8x128xf32>
    %767 = vector.shape_cast %766 : vector<1x8x128xf32> to vector<8x128xf32>
    %c0_294 = arith.constant 0 : index
    %c1_295 = arith.constant 1 : index
    %c0_296 = arith.constant 0 : index
    %768 = vector.load %arg17[%c0_294, %c1_295, %c0_296] : memref<8x8x128xf32, #tpu.memory_space<vmem>>, vector<8x1x128xf32>
    %769 = vector.shape_cast %768 : vector<8x1x128xf32> to vector<8x128xf32>
    %770 = vector.shape_cast %767 : vector<8x128xf32> to vector<8x1x128xf32>
    tpu.vector_store %arg17[%c0_294, %c1_295, %c0_296], %770 {strides = array<i32>} : memref<8x8x128xf32, #tpu.memory_space<vmem>>, vector<8x1x128xf32>,
    %c2_297 = arith.constant 2 : index
    %c0_298 = arith.constant 0 : index
    %c0_299 = arith.constant 0 : index
    %771 = vector.load %arg16[%c2_297, %c0_298, %c0_299] : memref<8x8x128xf32, #tpu.memory_space<vmem>>, vector<1x8x128xf32>
    %772 = vector.shape_cast %771 : vector<1x8x128xf32> to vector<8x128xf32>
    %c0_300 = arith.constant 0 : index
    %c2_301 = arith.constant 2 : index
    %c0_302 = arith.constant 0 : index
    %773 = vector.load %arg17[%c0_300, %c2_301, %c0_302] : memref<8x8x128xf32, #tpu.memory_space<vmem>>, vector<8x1x128xf32>
    %774 = vector.shape_cast %773 : vector<8x1x128xf32> to vector<8x128xf32>
    %775 = vector.shape_cast %772 : vector<8x128xf32> to vector<8x1x128xf32>
    tpu.vector_store %arg17[%c0_300, %c2_301, %c0_302], %775 {strides = array<i32>} : memref<8x8x128xf32, #tpu.memory_space<vmem>>, vector<8x1x128xf32>,
    %c3_303 = arith.constant 3 : index
    %c0_304 = arith.constant 0 : index
    %c0_305 = arith.constant 0 : index
    %776 = vector.load %arg16[%c3_303, %c0_304, %c0_305] : memref<8x8x128xf32, #tpu.memory_space<vmem>>, vector<1x8x128xf32>
    %777 = vector.shape_cast %776 : vector<1x8x128xf32> to vector<8x128xf32>
    %c0_306 = arith.constant 0 : index
    %c3_307 = arith.constant 3 : index
    %c0_308 = arith.constant 0 : index
    %778 = vector.load %arg17[%c0_306, %c3_307, %c0_308] : memref<8x8x128xf32, #tpu.memory_space<vmem>>, vector<8x1x128xf32>
    %779 = vector.shape_cast %778 : vector<8x1x128xf32> to vector<8x128xf32>
    %780 = vector.shape_cast %777 : vector<8x128xf32> to vector<8x1x128xf32>
    tpu.vector_store %arg17[%c0_306, %c3_307, %c0_308], %780 {strides = array<i32>} : memref<8x8x128xf32, #tpu.memory_space<vmem>>, vector<8x1x128xf32>,
    %c4 = arith.constant 4 : index
    %c0_309 = arith.constant 0 : index
    %c0_310 = arith.constant 0 : index
    %781 = vector.load %arg16[%c4, %c0_309, %c0_310] : memref<8x8x128xf32, #tpu.memory_space<vmem>>, vector<1x8x128xf32>
    %782 = vector.shape_cast %781 : vector<1x8x128xf32> to vector<8x128xf32>
    %c0_311 = arith.constant 0 : index
    %c4_312 = arith.constant 4 : index
    %c0_313 = arith.constant 0 : index
    %783 = vector.load %arg17[%c0_311, %c4_312, %c0_313] : memref<8x8x128xf32, #tpu.memory_space<vmem>>, vector<8x1x128xf32>
    %784 = vector.shape_cast %783 : vector<8x1x128xf32> to vector<8x128xf32>
    %785 = vector.shape_cast %782 : vector<8x128xf32> to vector<8x1x128xf32>
    tpu.vector_store %arg17[%c0_311, %c4_312, %c0_313], %785 {strides = array<i32>} : memref<8x8x128xf32, #tpu.memory_space<vmem>>, vector<8x1x128xf32>,
    %c5 = arith.constant 5 : index
    %c0_314 = arith.constant 0 : index
    %c0_315 = arith.constant 0 : index
    %786 = vector.load %arg16[%c5, %c0_314, %c0_315] : memref<8x8x128xf32, #tpu.memory_space<vmem>>, vector<1x8x128xf32>
    %787 = vector.shape_cast %786 : vector<1x8x128xf32> to vector<8x128xf32>
    %c0_316 = arith.constant 0 : index
    %c5_317 = arith.constant 5 : index
    %c0_318 = arith.constant 0 : index
    %788 = vector.load %arg17[%c0_316, %c5_317, %c0_318] : memref<8x8x128xf32, #tpu.memory_space<vmem>>, vector<8x1x128xf32>
    %789 = vector.shape_cast %788 : vector<8x1x128xf32> to vector<8x128xf32>
    %790 = vector.shape_cast %787 : vector<8x128xf32> to vector<8x1x128xf32>
    tpu.vector_store %arg17[%c0_316, %c5_317, %c0_318], %790 {strides = array<i32>} : memref<8x8x128xf32, #tpu.memory_space<vmem>>, vector<8x1x128xf32>,
    %c6 = arith.constant 6 : index
    %c0_319 = arith.constant 0 : index
    %c0_320 = arith.constant 0 : index
    %791 = vector.load %arg16[%c6, %c0_319, %c0_320] : memref<8x8x128xf32, #tpu.memory_space<vmem>>, vector<1x8x128xf32>
    %792 = vector.shape_cast %791 : vector<1x8x128xf32> to vector<8x128xf32>
    %c0_321 = arith.constant 0 : index
    %c6_322 = arith.constant 6 : index
    %c0_323 = arith.constant 0 : index
    %793 = vector.load %arg17[%c0_321, %c6_322, %c0_323] : memref<8x8x128xf32, #tpu.memory_space<vmem>>, vector<8x1x128xf32>
    %794 = vector.shape_cast %793 : vector<8x1x128xf32> to vector<8x128xf32>
    %795 = vector.shape_cast %792 : vector<8x128xf32> to vector<8x1x128xf32>
    tpu.vector_store %arg17[%c0_321, %c6_322, %c0_323], %795 {strides = array<i32>} : memref<8x8x128xf32, #tpu.memory_space<vmem>>, vector<8x1x128xf32>,
    %c7 = arith.constant 7 : index
    %c0_324 = arith.constant 0 : index
    %c0_325 = arith.constant 0 : index
    %796 = vector.load %arg16[%c7, %c0_324, %c0_325] : memref<8x8x128xf32, #tpu.memory_space<vmem>>, vector<1x8x128xf32>
    %797 = vector.shape_cast %796 : vector<1x8x128xf32> to vector<8x128xf32>
    %c0_326 = arith.constant 0 : index
    %c7_327 = arith.constant 7 : index
    %c0_328 = arith.constant 0 : index
    %798 = vector.load %arg17[%c0_326, %c7_327, %c0_328] : memref<8x8x128xf32, #tpu.memory_space<vmem>>, vector<8x1x128xf32>
    %799 = vector.shape_cast %798 : vector<8x1x128xf32> to vector<8x128xf32>
    %800 = vector.shape_cast %797 : vector<8x128xf32> to vector<8x1x128xf32>
    tpu.vector_store %arg17[%c0_326, %c7_327, %c0_328], %800 {strides = array<i32>} : memref<8x8x128xf32, #tpu.memory_space<vmem>>, vector<8x1x128xf32>,
    %c0_329 = arith.constant 0 : index
    %c0_330 = arith.constant 0 : index
    %c0_331 = arith.constant 0 : index
    %801 = vector.load %arg17[%c0_329, %c0_330, %c0_331] : memref<8x8x128xf32, #tpu.memory_space<vmem>>, vector<8x8x128xf32>
    %802 = vector.shape_cast %801 : vector<8x8x128xf32> to vector<64x128xf32>
    %c0_332 = arith.constant 0 : index
    %c0_333 = arith.constant 0 : index
    %803 = vector.load %arg3[%c0_332, %c0_333] : memref<8x8xf32, #tpu.memory_space<vmem>>, vector<8x8xf32>
    %cst_334 = arith.constant 1.000000e+00 : f32
    %804 = vector.broadcast %cst_334 : f32 to vector<8x8xf32>
    %805 = arith.subf %804, %803 : vector<8x8xf32>
    %cst_335 = arith.constant -1.000000e+04 : f32
    %806 = vector.broadcast %cst_335 : f32 to vector<8x8xf32>
    %807 = arith.mulf %805, %806 : vector<8x8xf32>
    %808 = vector.shape_cast %807 : vector<8x8xf32> to vector<8x1x8xf32>
    %809 = arith.truncf %802 : vector<64x128xf32> to vector<64x128xbf16>
    %c0_336 = arith.constant 0 : index
    %c0_337 = arith.constant 0 : index
    %810 = vector.load %arg9[%c0_336, %c0_337] : memref<128x768xbf16, #tpu.memory_space<vmem>>, vector<128x768xbf16>
    %cst_338 = arith.constant dense<0.000000e+00> : vector<64x768xf32>
    %811 = tpu.matmul %809, %810, %cst_338 {dimension_numbers = #tpu.dot_dimension_numbers<[1], [0], [0], [1], [0, 0, 1, 1], [], []>} : vector<64x128xbf16>, vector<128x768xbf16>, vector<64x768xf32> -> vector<64x768xf32>
    %c0_339 = arith.constant 0 : index
    %c0_340 = arith.constant 0 : index
    %812 = vector.load %arg10[%c0_339, %c0_340] : memref<1x768xf32, #tpu.memory_space<vmem>>, vector<1x768xf32>
    %813 = vector.broadcast %812 : vector<1x768xf32> to vector<64x768xf32>
    %814 = arith.addf %811, %813 : vector<64x768xf32>
    %815 = vector.shape_cast %814 : vector<64x768xf32> to vector<8x8x768xf32>
    %cst_341 = arith.constant 0.000000e+00 : f32
    %816 = vector.broadcast %cst_341 : f32 to vector<64x128xf32>
    %817 = vector.extract_strided_slice %815 {offsets = [0, 0, 0], sizes = [8, 8, 128], strides = [1, 1, 1]} : vector<8x8x768xf32> to vector<8x8x128xf32>
    %818 = arith.truncf %817 : vector<8x8x128xf32> to vector<8x8x128xbf16>
    %819 = vector.extract_strided_slice %815 {offsets = [0, 0, 128], sizes = [8, 8, 128], strides = [1, 1, 1]} : vector<8x8x768xf32> to vector<8x8x128xf32>
    %820 = arith.truncf %819 : vector<8x8x128xf32> to vector<8x8x128xbf16>
    %821 = vector.extract_strided_slice %815 {offsets = [0, 0, 256], sizes = [8, 8, 128], strides = [1, 1, 1]} : vector<8x8x768xf32> to vector<8x8x128xf32>
    %822 = arith.truncf %821 : vector<8x8x128xf32> to vector<8x8x128xbf16>
    "tpu.trace_start"() <{level = 10 : i32, message = "bqd,bkd->bqk"}> : () -> ()
    %cst_342 = arith.constant dense<0.000000e+00> : vector<8x8x8xf32>
    %823 = tpu.matmul %818, %820, %cst_342 {dimension_numbers = #tpu.dot_dimension_numbers<[2], [2], [1], [1], [0, 0, 0, 1, 1, 1], [0], [0]>} : vector<8x8x128xbf16>, vector<8x8x128xbf16>, vector<8x8x8xf32> -> vector<8x8x8xf32>
    "tpu.trace_stop"() : () -> ()
    %cst_343 = arith.constant 0.176776692 : f32
    %824 = vector.broadcast %cst_343 : f32 to vector<8x8x8xf32>
    %825 = arith.mulf %823, %824 : vector<8x8x8xf32>
    %826 = vector.broadcast %808 : vector<8x1x8xf32> to vector<8x8x8xf32>
    %827 = arith.addf %825, %826 : vector<8x8x8xf32>
    %cst_344 = arith.constant dense<0xFF800000> : vector<8x8xf32>
    %828 = vector.multi_reduction <maximumf>, %827, %cst_344 [2] : vector<8x8x8xf32> to vector<8x8xf32>
    %829 = vector.shape_cast %828 : vector<8x8xf32> to vector<8x8x1xf32>
    %830 = vector.broadcast %829 : vector<8x8x1xf32> to vector<8x8x8xf32>
    %831 = arith.subf %827, %830 : vector<8x8x8xf32>
    %832 = math.exp %831 : vector<8x8x8xf32>
    %cst_345 = arith.constant dense<0.000000e+00> : vector<8x8xf32>
    %833 = vector.multi_reduction <add>, %832, %cst_345 [2] : vector<8x8x8xf32> to vector<8x8xf32>
    %834 = vector.shape_cast %833 : vector<8x8xf32> to vector<8x8x1xf32>
    %835 = tpu.reciprocal %834 {approx = true} : vector<8x8x1xf32> -> vector<8x8x1xf32>
    %836 = vector.broadcast %835 : vector<8x8x1xf32> to vector<8x8x8xf32>
    %837 = arith.mulf %832, %836 : vector<8x8x8xf32>
    %838 = arith.truncf %837 : vector<8x8x8xf32> to vector<8x8x8xbf16>
    "tpu.trace_start"() <{level = 10 : i32, message = "bqk,bkd->bqd"}> : () -> ()
    %cst_346 = arith.constant dense<0.000000e+00> : vector<8x8x128xf32>
    %839 = tpu.matmul %838, %822, %cst_346 {dimension_numbers = #tpu.dot_dimension_numbers<[2], [1], [1], [2], [0, 0, 0, 1, 1, 2], [0], [0]>} : vector<8x8x8xbf16>, vector<8x8x128xbf16>, vector<8x8x128xf32> -> vector<8x8x128xf32>
    "tpu.trace_stop"() : () -> ()
    %840 = vector.shape_cast %839 : vector<8x8x128xf32> to vector<64x128xf32>
    %841 = arith.truncf %840 : vector<64x128xf32> to vector<64x128xbf16>
    %c0_347 = arith.constant 0 : index
    %c0_348 = arith.constant 0 : index
    %c0_349 = arith.constant 0 : index
    %842 = vector.load %arg11[%c0_347, %c0_348, %c0_349] : memref<4x128x128xbf16, #tpu.memory_space<vmem>>, vector<1x128x128xbf16>
    %843 = vector.shape_cast %842 : vector<1x128x128xbf16> to vector<128x128xbf16>
    %cst_350 = arith.constant dense<0.000000e+00> : vector<64x128xf32>
    %844 = tpu.matmul %841, %843, %cst_350 {dimension_numbers = #tpu.dot_dimension_numbers<[1], [0], [0], [1], [0, 0, 1, 1], [], []>} : vector<64x128xbf16>, vector<128x128xbf16>, vector<64x128xf32> -> vector<64x128xf32>
    %845 = arith.addf %816, %844 : vector<64x128xf32>
    %846 = vector.extract_strided_slice %815 {offsets = [0, 0, 384], sizes = [8, 8, 128], strides = [1, 1, 1]} : vector<8x8x768xf32> to vector<8x8x128xf32>
    %847 = arith.truncf %846 : vector<8x8x128xf32> to vector<8x8x128xbf16>
    %848 = vector.extract_strided_slice %815 {offsets = [0, 0, 512], sizes = [8, 8, 128], strides = [1, 1, 1]} : vector<8x8x768xf32> to vector<8x8x128xf32>
    %849 = arith.truncf %848 : vector<8x8x128xf32> to vector<8x8x128xbf16>
    %850 = vector.extract_strided_slice %815 {offsets = [0, 0, 640], sizes = [8, 8, 128], strides = [1, 1, 1]} : vector<8x8x768xf32> to vector<8x8x128xf32>
    %851 = arith.truncf %850 : vector<8x8x128xf32> to vector<8x8x128xbf16>
    "tpu.trace_start"() <{level = 10 : i32, message = "bqd,bkd->bqk"}> : () -> ()
    %cst_351 = arith.constant dense<0.000000e+00> : vector<8x8x8xf32>
    %852 = tpu.matmul %847, %849, %cst_351 {dimension_numbers = #tpu.dot_dimension_numbers<[2], [2], [1], [1], [0, 0, 0, 1, 1, 1], [0], [0]>} : vector<8x8x128xbf16>, vector<8x8x128xbf16>, vector<8x8x8xf32> -> vector<8x8x8xf32>
    "tpu.trace_stop"() : () -> ()
    %cst_352 = arith.constant 0.176776692 : f32
    %853 = vector.broadcast %cst_352 : f32 to vector<8x8x8xf32>
    %854 = arith.mulf %852, %853 : vector<8x8x8xf32>
    %855 = vector.broadcast %808 : vector<8x1x8xf32> to vector<8x8x8xf32>
    %856 = arith.addf %854, %855 : vector<8x8x8xf32>
    %cst_353 = arith.constant dense<0xFF800000> : vector<8x8xf32>
    %857 = vector.multi_reduction <maximumf>, %856, %cst_353 [2] : vector<8x8x8xf32> to vector<8x8xf32>
    %858 = vector.shape_cast %857 : vector<8x8xf32> to vector<8x8x1xf32>
    %859 = vector.broadcast %858 : vector<8x8x1xf32> to vector<8x8x8xf32>
    %860 = arith.subf %856, %859 : vector<8x8x8xf32>
    %861 = math.exp %860 : vector<8x8x8xf32>
    %cst_354 = arith.constant dense<0.000000e+00> : vector<8x8xf32>
    %862 = vector.multi_reduction <add>, %861, %cst_354 [2] : vector<8x8x8xf32> to vector<8x8xf32>
    %863 = vector.shape_cast %862 : vector<8x8xf32> to vector<8x8x1xf32>
    %864 = tpu.reciprocal %863 {approx = true} : vector<8x8x1xf32> -> vector<8x8x1xf32>
    %865 = vector.broadcast %864 : vector<8x8x1xf32> to vector<8x8x8xf32>
    %866 = arith.mulf %861, %865 : vector<8x8x8xf32>
    %867 = arith.truncf %866 : vector<8x8x8xf32> to vector<8x8x8xbf16>
    "tpu.trace_start"() <{level = 10 : i32, message = "bqk,bkd->bqd"}> : () -> ()
    %cst_355 = arith.constant dense<0.000000e+00> : vector<8x8x128xf32>
    %868 = tpu.matmul %867, %851, %cst_355 {dimension_numbers = #tpu.dot_dimension_numbers<[2], [1], [1], [2], [0, 0, 0, 1, 1, 2], [0], [0]>} : vector<8x8x8xbf16>, vector<8x8x128xbf16>, vector<8x8x128xf32> -> vector<8x8x128xf32>
    "tpu.trace_stop"() : () -> ()
    %869 = vector.shape_cast %868 : vector<8x8x128xf32> to vector<64x128xf32>
    %870 = arith.truncf %869 : vector<64x128xf32> to vector<64x128xbf16>
    %c1_356 = arith.constant 1 : index
    %c0_357 = arith.constant 0 : index
    %c0_358 = arith.constant 0 : index
    %871 = vector.load %arg11[%c1_356, %c0_357, %c0_358] : memref<4x128x128xbf16, #tpu.memory_space<vmem>>, vector<1x128x128xbf16>
    %872 = vector.shape_cast %871 : vector<1x128x128xbf16> to vector<128x128xbf16>
    %cst_359 = arith.constant dense<0.000000e+00> : vector<64x128xf32>
    %873 = tpu.matmul %870, %872, %cst_359 {dimension_numbers = #tpu.dot_dimension_numbers<[1], [0], [0], [1], [0, 0, 1, 1], [], []>} : vector<64x128xbf16>, vector<128x128xbf16>, vector<64x128xf32> -> vector<64x128xf32>
    %874 = arith.addf %845, %873 : vector<64x128xf32>
    %c4_360 = arith.constant 4 : index
    %c0_361 = arith.constant 0 : index
    %c0_362 = arith.constant 0 : index
    %875 = vector.load %arg12[%c4_360, %c0_361, %c0_362] : memref<12x1x128xf32, #tpu.memory_space<vmem>>, vector<1x1x128xf32>
    %876 = vector.shape_cast %875 : vector<1x1x128xf32> to vector<1x128xf32>
    %877 = vector.broadcast %876 : vector<1x128xf32> to vector<64x128xf32>
    %878 = arith.addf %874, %877 : vector<64x128xf32>
    %879 = arith.addf %878, %802 : vector<64x128xf32>
    %c5_363 = arith.constant 5 : index
    %c0_364 = arith.constant 0 : index
    %c0_365 = arith.constant 0 : index
    %880 = vector.load %arg12[%c5_363, %c0_364, %c0_365] : memref<12x1x128xf32, #tpu.memory_space<vmem>>, vector<1x1x128xf32>
    %881 = vector.shape_cast %880 : vector<1x1x128xf32> to vector<1x128xf32>
    %c6_366 = arith.constant 6 : index
    %c0_367 = arith.constant 0 : index
    %c0_368 = arith.constant 0 : index
    %882 = vector.load %arg12[%c6_366, %c0_367, %c0_368] : memref<12x1x128xf32, #tpu.memory_space<vmem>>, vector<1x1x128xf32>
    %883 = vector.shape_cast %882 : vector<1x1x128xf32> to vector<1x128xf32>
    %884 = vector.broadcast %15 : vector<1x128xf32> to vector<64x128xf32>
    %885 = arith.mulf %879, %884 : vector<64x128xf32>
    %cst_369 = arith.constant dense<0.000000e+00> : vector<64xf32>
    %886 = vector.multi_reduction <add>, %885, %cst_369 [1] : vector<64x128xf32> to vector<64xf32>
    %887 = vector.shape_cast %886 : vector<64xf32> to vector<64x1xf32>
    %cst_370 = arith.constant 1.562500e-02 : f32
    %888 = vector.broadcast %cst_370 : f32 to vector<64x1xf32>
    %889 = arith.mulf %887, %888 : vector<64x1xf32>
    %890 = vector.broadcast %889 : vector<64x1xf32> to vector<64x128xf32>
    %891 = arith.subf %879, %890 : vector<64x128xf32>
    %892 = vector.broadcast %15 : vector<1x128xf32> to vector<64x128xf32>
    %893 = arith.mulf %891, %892 : vector<64x128xf32>
    %894 = arith.mulf %893, %893 : vector<64x128xf32>
    %cst_371 = arith.constant dense<0.000000e+00> : vector<64xf32>
    %895 = vector.multi_reduction <add>, %894, %cst_371 [1] : vector<64x128xf32> to vector<64xf32>
    %896 = vector.shape_cast %895 : vector<64xf32> to vector<64x1xf32>
    %cst_372 = arith.constant 1.562500e-02 : f32
    %897 = vector.broadcast %cst_372 : f32 to vector<64x1xf32>
    %898 = arith.mulf %896, %897 : vector<64x1xf32>
    %cst_373 = arith.constant 9.99999996E-13 : f32
    %899 = vector.broadcast %cst_373 : f32 to vector<64x1xf32>
    %900 = arith.addf %898, %899 : vector<64x1xf32>
    %901 = math.rsqrt %900 : vector<64x1xf32>
    %902 = vector.broadcast %901 : vector<64x1xf32> to vector<64x128xf32>
    %903 = arith.mulf %893, %902 : vector<64x128xf32>
    %904 = vector.broadcast %881 : vector<1x128xf32> to vector<64x128xf32>
    %905 = arith.mulf %903, %904 : vector<64x128xf32>
    %906 = vector.broadcast %883 : vector<1x128xf32> to vector<64x128xf32>
    %907 = arith.addf %905, %906 : vector<64x128xf32>
    %908 = arith.truncf %907 : vector<64x128xf32> to vector<64x128xbf16>
    %c2_374 = arith.constant 2 : index
    %c0_375 = arith.constant 0 : index
    %c0_376 = arith.constant 0 : index
    %909 = vector.load %arg11[%c2_374, %c0_375, %c0_376] : memref<4x128x128xbf16, #tpu.memory_space<vmem>>, vector<1x128x128xbf16>
    %910 = vector.shape_cast %909 : vector<1x128x128xbf16> to vector<128x128xbf16>
    %cst_377 = arith.constant dense<0.000000e+00> : vector<64x128xf32>
    %911 = tpu.matmul %908, %910, %cst_377 {dimension_numbers = #tpu.dot_dimension_numbers<[1], [0], [0], [1], [0, 0, 1, 1], [], []>} : vector<64x128xbf16>, vector<128x128xbf16>, vector<64x128xf32> -> vector<64x128xf32>
    %c7_378 = arith.constant 7 : index
    %c0_379 = arith.constant 0 : index
    %c0_380 = arith.constant 0 : index
    %912 = vector.load %arg12[%c7_378, %c0_379, %c0_380] : memref<12x1x128xf32, #tpu.memory_space<vmem>>, vector<1x1x128xf32>
    %913 = vector.shape_cast %912 : vector<1x1x128xf32> to vector<1x128xf32>
    %914 = vector.broadcast %913 : vector<1x128xf32> to vector<64x128xf32>
    %915 = arith.addf %911, %914 : vector<64x128xf32>
    %916 = arith.mulf %915, %915 : vector<64x128xf32>
    %917 = arith.mulf %915, %916 : vector<64x128xf32>
    %cst_381 = arith.constant 4.471500e-02 : f32
    %918 = vector.broadcast %cst_381 : f32 to vector<64x128xf32>
    %919 = arith.mulf %918, %917 : vector<64x128xf32>
    %920 = arith.addf %915, %919 : vector<64x128xf32>
    %cst_382 = arith.constant 0.797884583 : f32
    %921 = vector.broadcast %cst_382 : f32 to vector<64x128xf32>
    %922 = arith.mulf %921, %920 : vector<64x128xf32>
    %923 = math.tanh %922 : vector<64x128xf32>
    %cst_383 = arith.constant 1.000000e+00 : f32
    %924 = vector.broadcast %cst_383 : f32 to vector<64x128xf32>
    %925 = arith.addf %924, %923 : vector<64x128xf32>
    %cst_384 = arith.constant 5.000000e-01 : f32
    %926 = vector.broadcast %cst_384 : f32 to vector<64x128xf32>
    %927 = arith.mulf %926, %925 : vector<64x128xf32>
    %928 = arith.mulf %915, %927 : vector<64x128xf32>
    %929 = arith.truncf %928 : vector<64x128xf32> to vector<64x128xbf16>
    %c3_385 = arith.constant 3 : index
    %c0_386 = arith.constant 0 : index
    %c0_387 = arith.constant 0 : index
    %930 = vector.load %arg11[%c3_385, %c0_386, %c0_387] : memref<4x128x128xbf16, #tpu.memory_space<vmem>>, vector<1x128x128xbf16>
    %931 = vector.shape_cast %930 : vector<1x128x128xbf16> to vector<128x128xbf16>
    %cst_388 = arith.constant dense<0.000000e+00> : vector<64x128xf32>
    %932 = tpu.matmul %929, %931, %cst_388 {dimension_numbers = #tpu.dot_dimension_numbers<[1], [0], [0], [1], [0, 0, 1, 1], [], []>} : vector<64x128xbf16>, vector<128x128xbf16>, vector<64x128xf32> -> vector<64x128xf32>
    %c8 = arith.constant 8 : index
    %c0_389 = arith.constant 0 : index
    %c0_390 = arith.constant 0 : index
    %933 = vector.load %arg12[%c8, %c0_389, %c0_390] : memref<12x1x128xf32, #tpu.memory_space<vmem>>, vector<1x1x128xf32>
    %934 = vector.shape_cast %933 : vector<1x1x128xf32> to vector<1x128xf32>
    %935 = vector.broadcast %934 : vector<1x128xf32> to vector<64x128xf32>
    %936 = arith.addf %932, %935 : vector<64x128xf32>
    %937 = arith.addf %936, %907 : vector<64x128xf32>
    %c9 = arith.constant 9 : index
    %c0_391 = arith.constant 0 : index
    %c0_392 = arith.constant 0 : index
    %938 = vector.load %arg12[%c9, %c0_391, %c0_392] : memref<12x1x128xf32, #tpu.memory_space<vmem>>, vector<1x1x128xf32>
    %939 = vector.shape_cast %938 : vector<1x1x128xf32> to vector<1x128xf32>
    %c10 = arith.constant 10 : index
    %c0_393 = arith.constant 0 : index
    %c0_394 = arith.constant 0 : index
    %940 = vector.load %arg12[%c10, %c0_393, %c0_394] : memref<12x1x128xf32, #tpu.memory_space<vmem>>, vector<1x1x128xf32>
    %941 = vector.shape_cast %940 : vector<1x1x128xf32> to vector<1x128xf32>
    %942 = vector.broadcast %15 : vector<1x128xf32> to vector<64x128xf32>
    %943 = arith.mulf %937, %942 : vector<64x128xf32>
    %cst_395 = arith.constant dense<0.000000e+00> : vector<64xf32>
    %944 = vector.multi_reduction <add>, %943, %cst_395 [1] : vector<64x128xf32> to vector<64xf32>
    %945 = vector.shape_cast %944 : vector<64xf32> to vector<64x1xf32>
    %cst_396 = arith.constant 1.562500e-02 : f32
    %946 = vector.broadcast %cst_396 : f32 to vector<64x1xf32>
    %947 = arith.mulf %945, %946 : vector<64x1xf32>
    %948 = vector.broadcast %947 : vector<64x1xf32> to vector<64x128xf32>
    %949 = arith.subf %937, %948 : vector<64x128xf32>
    %950 = vector.broadcast %15 : vector<1x128xf32> to vector<64x128xf32>
    %951 = arith.mulf %949, %950 : vector<64x128xf32>
    %952 = arith.mulf %951, %951 : vector<64x128xf32>
    %cst_397 = arith.constant dense<0.000000e+00> : vector<64xf32>
    %953 = vector.multi_reduction <add>, %952, %cst_397 [1] : vector<64x128xf32> to vector<64xf32>
    %954 = vector.shape_cast %953 : vector<64xf32> to vector<64x1xf32>
    %cst_398 = arith.constant 1.562500e-02 : f32
    %955 = vector.broadcast %cst_398 : f32 to vector<64x1xf32>
    %956 = arith.mulf %954, %955 : vector<64x1xf32>
    %cst_399 = arith.constant 9.99999996E-13 : f32
    %957 = vector.broadcast %cst_399 : f32 to vector<64x1xf32>
    %958 = arith.addf %956, %957 : vector<64x1xf32>
    %959 = math.rsqrt %958 : vector<64x1xf32>
    %960 = vector.broadcast %959 : vector<64x1xf32> to vector<64x128xf32>
    %961 = arith.mulf %951, %960 : vector<64x128xf32>
    %962 = vector.broadcast %939 : vector<1x128xf32> to vector<64x128xf32>
    %963 = arith.mulf %961, %962 : vector<64x128xf32>
    %964 = vector.broadcast %941 : vector<1x128xf32> to vector<64x128xf32>
    %965 = arith.addf %963, %964 : vector<64x128xf32>
    %966 = vector.shape_cast %965 : vector<64x128xf32> to vector<8x8x128xf32>
    %c11 = arith.constant 11 : index
    %c0_400 = arith.constant 0 : index
    %c0_401 = arith.constant 0 : index
    %967 = vector.load %arg12[%c11, %c0_400, %c0_401] : memref<12x1x128xf32, #tpu.memory_space<vmem>>, vector<1x1x128xf32>
    %968 = vector.shape_cast %967 : vector<1x1x128xf32> to vector<1x128xf32>
    %969 = vector.shape_cast %968 : vector<1x128xf32> to vector<1x1x128xf32>
    %970 = vector.broadcast %969 : vector<1x1x128xf32> to vector<8x8x128xf32>
    %971 = arith.mulf %966, %970 : vector<8x8x128xf32>
    %cst_402 = arith.constant dense<0.000000e+00> : vector<8x8xf32>
    %972 = vector.multi_reduction <add>, %971, %cst_402 [2] : vector<8x8x128xf32> to vector<8x8xf32>
    %c0_403 = arith.constant 0 : index
    %c0_404 = arith.constant 0 : index
    %973 = vector.load %arg13[%c0_403, %c0_404] : memref<1x1xf32, #tpu.memory_space<vmem>>, vector<1x1xf32>
    %974 = vector.broadcast %973 : vector<1x1xf32> to vector<8x8xf32>
    %975 = arith.addf %972, %974 : vector<8x8xf32>
    %c0_405 = arith.constant 0 : index
    %c0_406 = arith.constant 0 : index
    %976 = vector.load %arg14[%c0_405, %c0_406] : memref<8x8xf32, #tpu.memory_space<vmem>>, vector<8x8xf32>
    tpu.vector_store %arg14[%c0_405, %c0_406], %975 {strides = array<i32>} : memref<8x8xf32, #tpu.memory_space<vmem>>, vector<8x8xf32>,
    return
  }
  func.func @transform_0(%arg0: i32) -> (i32, i32, i32) {
    %c0_i32 = arith.constant 0 : i32
    %c0_i32_0 = arith.constant 0 : i32
    %c0_i32_1 = arith.constant 0 : i32
    return %c0_i32, %arg0, %c0_i32_0 : i32, i32, i32
  }
  func.func @transform_1(%arg0: i32) -> (i32, i32, i32) {
    %c0_i32 = arith.constant 0 : i32
    %c0_i32_0 = arith.constant 0 : i32
    %c0_i32_1 = arith.constant 0 : i32
    return %c0_i32, %arg0, %c0_i32_0 : i32, i32, i32
  }
  func.func @transform_2(%arg0: i32) -> (i32, i32) {
    %c0_i32 = arith.constant 0 : i32
    %c0_i32_0 = arith.constant 0 : i32
    return %arg0, %c0_i32 : i32, i32
  }
  func.func @transform_3(%arg0: i32) -> (i32, i32) {
    %c0_i32 = arith.constant 0 : i32
    %c0_i32_0 = arith.constant 0 : i32
    %c0_i32_1 = arith.constant 0 : i32
    return %c0_i32, %c0_i32_0 : i32, i32
  }
  func.func @transform_4(%arg0: i32) -> (i32, i32, i32) {
    %c0_i32 = arith.constant 0 : i32
    %c0_i32_0 = arith.constant 0 : i32
    %c0_i32_1 = arith.constant 0 : i32
    %c0_i32_2 = arith.constant 0 : i32
    return %c0_i32, %c0_i32_0, %c0_i32_1 : i32, i32, i32
  }
  func.func @transform_5(%arg0: i32) -> (i32, i32, i32) {
    %c0_i32 = arith.constant 0 : i32
    %c0_i32_0 = arith.constant 0 : i32
    %c0_i32_1 = arith.constant 0 : i32
    %c0_i32_2 = arith.constant 0 : i32
    return %c0_i32, %c0_i32_0, %c0_i32_1 : i32, i32, i32
  }
  func.func @transform_6(%arg0: i32) -> (i32, i32, i32) {
    %c0_i32 = arith.constant 0 : i32
    %c0_i32_0 = arith.constant 0 : i32
    %c0_i32_1 = arith.constant 0 : i32
    %c0_i32_2 = arith.constant 0 : i32
    return %c0_i32, %c0_i32_0, %c0_i32_1 : i32, i32, i32
  }
  func.func @transform_7(%arg0: i32) -> (i32, i32, i32) {
    %c0_i32 = arith.constant 0 : i32
    %c0_i32_0 = arith.constant 0 : i32
    %c0_i32_1 = arith.constant 0 : i32
    %c0_i32_2 = arith.constant 0 : i32
    return %c0_i32, %c0_i32_0, %c0_i32_1 : i32, i32, i32
  }
  func.func @transform_8(%arg0: i32) -> (i32, i32) {
    %c0_i32 = arith.constant 0 : i32
    %c0_i32_0 = arith.constant 0 : i32
    %c0_i32_1 = arith.constant 0 : i32
    return %c0_i32, %c0_i32_0 : i32, i32
  }
  func.func @transform_9(%arg0: i32) -> (i32, i32) {
    %c0_i32 = arith.constant 0 : i32
    %c0_i32_0 = arith.constant 0 : i32
    %c0_i32_1 = arith.constant 0 : i32
    return %c0_i32, %c0_i32_0 : i32, i32
  }
  func.func @transform_10(%arg0: i32) -> (i32, i32, i32) {
    %c0_i32 = arith.constant 0 : i32
    %c0_i32_0 = arith.constant 0 : i32
    %c0_i32_1 = arith.constant 0 : i32
    %c0_i32_2 = arith.constant 0 : i32
    return %c0_i32, %c0_i32_0, %c0_i32_1 : i32, i32, i32
  }
  func.func @transform_11(%arg0: i32) -> (i32, i32, i32) {
    %c0_i32 = arith.constant 0 : i32
    %c0_i32_0 = arith.constant 0 : i32
    %c0_i32_1 = arith.constant 0 : i32
    %c0_i32_2 = arith.constant 0 : i32
    return %c0_i32, %c0_i32_0, %c0_i32_1 : i32, i32, i32
  }
  func.func @transform_12(%arg0: i32) -> (i32, i32) {
    %c0_i32 = arith.constant 0 : i32
    %c0_i32_0 = arith.constant 0 : i32
    %c0_i32_1 = arith.constant 0 : i32
    return %c0_i32, %c0_i32_0 : i32, i32
  }
  func.func @transform_13(%arg0: i32) -> (i32, i32) {
    %c0_i32 = arith.constant 0 : i32
    %c0_i32_0 = arith.constant 0 : i32
    return %arg0, %c0_i32 : i32, i32
  }
}

</mosaic_0001>

<llo_original>
// kernel: _lambda_.1
$region0: #{_lambda_.1}
  #allocation0 [shape = 'u32[]', space=smem, size = 0x4, offset = 0x4, fixed_abs, tag = 'smem constant byte address 0x4 - core index']
  #allocation1 [shape = 'u32[72,128]{1,0:T(1,128)}', space=vmem, size = 0x9000, scoped, tag = 'internal scratch']
  #allocation2 [shape = 'f32[8,8,384]{2,1,0:T(8,128)}', space=vmem, size = 0x18000, scoped, tag = 'scratch operand']
  #allocation3 [shape = 'f32[8,8,128]{2,1,0:T(8,128)}', space=vmem, size = 0x8000, scoped, tag = 'scratch operand']
  #allocation4 [shape = 'f32[8,8,128]{2,1,0:T(8,128)}', space=vmem, size = 0x8000, scoped, tag = 'scratch operand']
  #allocation5 [shape = 'f32[1,1]{1,0:T(1,128)S(1)}', space=vmem, size = 0x200, scoped, tag = 'scoped memory for _lambda_.1']
  %s0 = inlined_call_operand.vmem [shape: f32[8,8,128], index: 0, kind: input, shape index: {}]
  %s1 = inlined_call_operand.vmem [shape: f32[8,8,1], index: 1, kind: input, shape index: {}]
  %s2 = inlined_call_operand.vmem [shape: f32[8,8], index: 2, kind: input, shape index: {}]
  %s3 = inlined_call_operand.vmem [shape: bf16[128,128], index: 3, kind: input, shape index: {}]
  %s4 = inlined_call_operand.vmem [shape: bf16[2,128,384], index: 4, kind: input, shape index: {}]
  %s5 = inlined_call_operand.vmem [shape: bf16[2,128,384], index: 5, kind: input, shape index: {}]
  %s6 = inlined_call_operand.vmem [shape: f32[2,1,384], index: 6, kind: input, shape index: {}]
  %s7 = inlined_call_operand.vmem [shape: f32[2,1,384], index: 7, kind: input, shape index: {}]
  %s8 = inlined_call_operand.vmem [shape: bf16[128,768], index: 8, kind: input, shape index: {}]
  %s9 = inlined_call_operand.vmem [shape: f32[1,768], index: 9, kind: input, shape index: {}]
  %s10 = inlined_call_operand.vmem [shape: bf16[4,128,128], index: 10, kind: input, shape index: {}]
  %s11 = inlined_call_operand.vmem [shape: f32[12,1,128], index: 11, kind: input, shape index: {}]
  %s12 = inlined_call_operand.<no memory space> [shape: f32[1,1], index: 12, kind: input, shape index: {}]
  %s13 = inlined_call_operand.vmem [shape: f32[8,8], index: 13, kind: output, shape index: {}]
  %s14 = sld [smem:[#allocation0]]
  $region62: #{_lambda_.1} parent=0
    _
  %s16 = ssub.s32 1, %s14
  %s17 = scalar_select 0, %s16, %s14
  %v18 = vstv %s12
  %19 = vst [vmem:[#allocation5] sm:$0x1] %v18
  // Predicated region
  $region2: #{_lambda_.1} parent=0 // pred_check
    _
  $region3: #{_lambda_.1} parent=0 // pred_check_branch
    %21 = sbr.rel (0) target = $region5
  $region4: #{_lambda_.1} parent=0 // pred_region
    _
  $region5: #{_lambda_.1} parent=0 // pred_fallthru
    _
  // Predicated region
  $region6: #{_lambda_.1} parent=0 // pred_check
    _
  $region7: #{_lambda_.1} parent=0 // pred_check_branch
    %23 = sbr.rel (0) target = $region9
  $region8: #{_lambda_.1} parent=0 // pred_region
    _
  $region9: #{_lambda_.1} parent=0 // pred_fallthru
    _
  // Predicated region
  $region10: #{_lambda_.1} parent=0 // pred_check
    _
  $region11: #{_lambda_.1} parent=0 // pred_check_branch
    %25 = sbr.rel (0) target = $region13
  $region12: #{_lambda_.1} parent=0 // pred_region
    _
  $region13: #{_lambda_.1} parent=0 // pred_fallthru
    _
  // Predicated region
  $region14: #{_lambda_.1} parent=0 // pred_check
    _
  $region15: #{_lambda_.1} parent=0 // pred_check_branch
    %27 = sbr.rel (0) target = $region17
  $region16: #{_lambda_.1} parent=0 // pred_region
    _
  $region17: #{_lambda_.1} parent=0 // pred_fallthru
    _
  // Predicated region
  $region18: #{_lambda_.1} parent=0 // pred_check
    _
  $region19: #{_lambda_.1} parent=0 // pred_check_branch
    %29 = sbr.rel (0) target = $region21
  $region20: #{_lambda_.1} parent=0 // pred_region
    _
  $region21: #{_lambda_.1} parent=0 // pred_fallthru
    _
  // Predicated region
  $region22: #{_lambda_.1} parent=0 // pred_check
    _
  $region23: #{_lambda_.1} parent=0 // pred_check_branch
    %31 = sbr.rel (0) target = $region25
  $region24: #{_lambda_.1} parent=0 // pred_region
    _
  $region25: #{_lambda_.1} parent=0 // pred_fallthru
    _
  // Predicated region
  $region26: #{_lambda_.1} parent=0 // pred_check
    _
  $region27: #{_lambda_.1} parent=0 // pred_check_branch
    %33 = sbr.rel (0) target = $region29
  $region28: #{_lambda_.1} parent=0 // pred_region
    _
  $region29: #{_lambda_.1} parent=0 // pred_fallthru
    _
  // Predicated region
  $region30: #{_lambda_.1} parent=0 // pred_check
    _
  $region31: #{_lambda_.1} parent=0 // pred_check_branch
    %35 = sbr.rel (0) target = $region33
  $region32: #{_lambda_.1} parent=0 // pred_region
    _
  $region33: #{_lambda_.1} parent=0 // pred_fallthru
    _
  // Predicated region
  $region34: #{_lambda_.1} parent=0 // pred_check
    _
  $region35: #{_lambda_.1} parent=0 // pred_check_branch
    %37 = sbr.rel (0) target = $region37
  $region36: #{_lambda_.1} parent=0 // pred_region
    _
  $region37: #{_lambda_.1} parent=0 // pred_fallthru
    _
  // Predicated region
  $region38: #{_lambda_.1} parent=0 // pred_check
    _
  $region39: #{_lambda_.1} parent=0 // pred_check_branch
    %39 = sbr.rel (0) target = $region41
  $region40: #{_lambda_.1} parent=0 // pred_region
    _
  $region41: #{_lambda_.1} parent=0 // pred_fallthru
    _
  // Predicated region
  $region42: #{_lambda_.1} parent=0 // pred_check
    _
  $region43: #{_lambda_.1} parent=0 // pred_check_branch
    %41 = sbr.rel (0) target = $region45
  $region44: #{_lambda_.1} parent=0 // pred_region
    _
  $region45: #{_lambda_.1} parent=0 // pred_fallthru
    _
  // Predicated region
  $region46: #{_lambda_.1} parent=0 // pred_check
    _
  $region47: #{_lambda_.1} parent=0 // pred_check_branch
    %43 = sbr.rel (0) target = $region49
  $region48: #{_lambda_.1} parent=0 // pred_region
    _
  $region49: #{_lambda_.1} parent=0 // pred_fallthru
    _
  // Predicated region
  $region50: #{_lambda_.1} parent=0 // pred_check
    _
  $region51: #{_lambda_.1} parent=0 // pred_check_branch
    %45 = sbr.rel (0) target = $region53
  $region52: #{_lambda_.1} parent=0 // pred_region
    _
  $region53: #{_lambda_.1} parent=0 // pred_fallthru
    _
  %v47 = vlaneseq
  %v48 = vand.u32 %v47, 127
  %vm49 = vcmp.lt.s32.totalorder %v48, 32
  %v50 = vsel %vm49, 1, 0
  %v51 = vcvt.s32.f32 %v50
  %vm52 = vcmp.ge.s32.totalorder %v48, 32
  %vm53 = vcmp.lt.s32.totalorder %v48, 64
  %vm54 = vmand %vm52, %vm53
  %v55 = vsel %vm54, 1, 0
  %v56 = vcvt.s32.f32 %v55
  %v57 = vsel %vm53, 1, 0
  %v58 = vcvt.s32.f32 %v57
  %v59 = vld [vmem:[%s0] sm:$0xff]
  %v60 = vld [vmem:[%s0 + $0x8] sm:$0xff]
  %v61 = vld [vmem:[%s0 + $0x10] sm:$0xff]
  %v62 = vld [vmem:[%s0 + $0x18] sm:$0xff]
  %v63 = vld [vmem:[%s0 + $0x20] sm:$0xff]
  %v64 = vld [vmem:[%s0 + $0x28] sm:$0xff]
  %v65 = vld [vmem:[%s0 + $0x30] sm:$0xff]
  %v66 = vld [vmem:[%s0 + $0x38] sm:$0xff]
  %v67 = vpack.c.bf16 %v60, %v59
  %v68 = vpack.c.bf16 %v62, %v61
  %v69 = vpack.c.bf16 %v64, %v63
  %v70 = vpack.c.bf16 %v66, %v65
  %v71 = vld [vmem:[%s3] sm:$0xf]
  %v72 = vld [vmem:[%s3 + $0x4] sm:$0xf]
  %v73 = vld [vmem:[%s3 + $0x8] sm:$0xf]
  %v74 = vld [vmem:[%s3 + $0xc] sm:$0xf]
  %v75 = vld [vmem:[%s3 + $0x10] sm:$0xf]
  %v76 = vld [vmem:[%s3 + $0x14] sm:$0xf]
  %v77 = vld [vmem:[%s3 + $0x18] sm:$0xf]
  %v78 = vld [vmem:[%s3 + $0x1c] sm:$0xf]
  %v79 = vld [vmem:[%s3 + $0x20] sm:$0xf]
  %v80 = vld [vmem:[%s3 + $0x24] sm:$0xf]
  %v81 = vld [vmem:[%s3 + $0x28] sm:$0xf]
  %v82 = vld [vmem:[%s3 + $0x2c] sm:$0xf]
  %v83 = vld [vmem:[%s3 + $0x30] sm:$0xf]
  %v84 = vld [vmem:[%s3 + $0x34] sm:$0xf]
  %v85 = vld [vmem:[%s3 + $0x38] sm:$0xf]
  %v86 = vld [vmem:[%s3 + $0x3c] sm:$0xf]
  %v87 = vld [vmem:[%s1] sm:$0xff]
  %v88 = vld [vmem:[%s1 + $0x8] sm:$0xff]
  %v89 = vld [vmem:[%s1 + $0x10] sm:$0xff]
  %v90 = vld [vmem:[%s1 + $0x18] sm:$0xff]
  %v91 = vld [vmem:[%s1 + $0x20] sm:$0xff]
  %v92 = vld [vmem:[%s1 + $0x28] sm:$0xff]
  %v93 = vld [vmem:[%s1 + $0x30] sm:$0xff]
  %v94 = vld [vmem:[%s1 + $0x38] sm:$0xff]
  %s95 = scalar_lea.vmem %s11, 1
  %v96 = vld [vmem:[%s95] sm:$0x1]
  %98 = vset.pattern.permute.xlu0 0
  %99 = vperm.xlu0 %98, %v87
  %v100 = vpop.permute.xlu0 %99
  %103 = vset.pattern.permute.xlu0 0
  %104 = vperm.xlu0 %103, %v88
  %v105 = vpop.permute.xlu0 %104
  %108 = vset.pattern.permute.xlu0 0
  %109 = vperm.xlu0 %108, %v89
  %v110 = vpop.permute.xlu0 %109
  %113 = vset.pattern.permute.xlu0 0
  %114 = vperm.xlu0 %113, %v90
  %v115 = vpop.permute.xlu0 %114
  %118 = vset.pattern.permute.xlu0 0
  %119 = vperm.xlu0 %118, %v91
  %v120 = vpop.permute.xlu0 %119
  %123 = vset.pattern.permute.xlu0 0
  %124 = vperm.xlu0 %123, %v92
  %v125 = vpop.permute.xlu0 %124
  %128 = vset.pattern.permute.xlu0 0
  %129 = vperm.xlu0 %128, %v93
  %v130 = vpop.permute.xlu0 %129
  %133 = vset.pattern.permute.xlu0 0
  %134 = vperm.xlu0 %133, %v94
  %v135 = vpop.permute.xlu0 %134
  %v138 = vperm.slane %v96, 0
  %v140 = vmul.f32 %v100, %v138
  %v141 = vmul.f32 %v105, %v138
  %v142 = vmul.f32 %v110, %v138
  %v143 = vmul.f32 %v115, %v138
  %v144 = vmul.f32 %v120, %v138
  %v145 = vmul.f32 %v125, %v138
  %v146 = vmul.f32 %v130, %v138
  %v147 = vmul.f32 %v135, %v138
  %v164 = vunpack.c.l.b16 %v71
  %v165 = vunpack.c.l.b16 %v72
  %v166 = vunpack.c.l.b16 %v73
  %v167 = vunpack.c.l.b16 %v74
  %v168 = vunpack.c.l.b16 %v75
  %v169 = vunpack.c.l.b16 %v76
  %v170 = vunpack.c.l.b16 %v77
  %v171 = vunpack.c.l.b16 %v78
  %v172 = vunpack.c.l.b16 %v79
  %v173 = vunpack.c.l.b16 %v80
  %v174 = vunpack.c.l.b16 %v81
  %v175 = vunpack.c.l.b16 %v82
  %v176 = vunpack.c.l.b16 %v83
  %v177 = vunpack.c.l.b16 %v84
  %v178 = vunpack.c.l.b16 %v85
  %v179 = vunpack.c.l.b16 %v86
  %v180 = vpack.c.b16 %v165, %v164
  %v181 = vpack.c.b16 %v167, %v166
  %v182 = vpack.c.b16 %v169, %v168
  %v183 = vpack.c.b16 %v171, %v170
  %v184 = vpack.c.b16 %v173, %v172
  %v185 = vpack.c.b16 %v175, %v174
  %v186 = vpack.c.b16 %v177, %v176
  %v187 = vpack.c.b16 %v179, %v178
  %196 = vmatpush.bf16.msra.mxu0 %v187
  %197 = vmatpush.bf16.msra.mxu0 %v186
  %198 = vmatpush.bf16.msra.mxu0 %v185
  %199 = vmatpush.bf16.msra.mxu0 %v184
  %200 = vmatpush.bf16.msra.mxu0 %v183
  %201 = vmatpush.bf16.msra.mxu0 %v182
  %202 = vmatpush.bf16.msra.mxu0 %v181
  %203 = vmatpush.bf16.msra.mxu0 %v180
  %204 = vmatmul.bf16.gmra.mxu0 %v67
  %v205 = vpop.f32.mrf.mxu0
  %v206 = vadd.f32 %v140, %v205
  %v207 = vpop.f32.mrf.mxu0
  %v208 = vadd.f32 %v141, %v207
  %209 = vmatmul.bf16.gmra.mxu0 %v68
  %v210 = vpop.f32.mrf.mxu0
  %v211 = vadd.f32 %v142, %v210
  %v212 = vpop.f32.mrf.mxu0
  %v213 = vadd.f32 %v143, %v212
  %214 = vmatmul.bf16.gmra.mxu0 %v69
  %v215 = vpop.f32.mrf.mxu0
  %v216 = vadd.f32 %v144, %v215
  %v217 = vpop.f32.mrf.mxu0
  %v218 = vadd.f32 %v145, %v217
  %219 = vmatmul.bf16.gmra.mxu0 %v70
  %v220 = vpop.f32.mrf.mxu0
  %v221 = vadd.f32 %v146, %v220
  %v222 = vpop.f32.mrf.mxu0
  %v223 = vadd.f32 %v147, %v222
  %224 = vdwg.mxu0
  %v225 = vld [vmem:[%s11] sm:$0x1]
  %v227 = vperm.slane %v225, 0
  %v229 = vadd.f32 %v206, %v227
  %v230 = vadd.f32 %v208, %v227
  %v231 = vadd.f32 %v211, %v227
  %v232 = vadd.f32 %v213, %v227
  %v233 = vadd.f32 %v216, %v227
  %v234 = vadd.f32 %v218, %v227
  %v235 = vadd.f32 %v221, %v227
  %v236 = vadd.f32 %v223, %v227
  %v237 = vmul.f32 %v229, %v51
  %v238 = vmul.f32 %v230, %v51
  %v239 = vmul.f32 %v231, %v51
  %v240 = vmul.f32 %v232, %v51
  %v241 = vmul.f32 %v233, %v51
  %v242 = vmul.f32 %v234, %v51
  %v243 = vmul.f32 %v235, %v51
  %v244 = vmul.f32 %v236, %v51
  %245 = vadd.xlane.f32.xlu0 %v237
  %v246 = vpop.xlane.xlu0 %245
  %247 = vadd.xlane.f32.xlu0 %v238
  %v248 = vpop.xlane.xlu0 %247
  %249 = vadd.xlane.f32.xlu0 %v239
  %v250 = vpop.xlane.xlu0 %249
  %251 = vadd.xlane.f32.xlu0 %v240
  %v252 = vpop.xlane.xlu0 %251
  %253 = vadd.xlane.f32.xlu0 %v241
  %v254 = vpop.xlane.xlu0 %253
  %255 = vadd.xlane.f32.xlu0 %v242
  %v256 = vpop.xlane.xlu0 %255
  %257 = vadd.xlane.f32.xlu0 %v243
  %v258 = vpop.xlane.xlu0 %257
  %259 = vadd.xlane.f32.xlu0 %v244
  %v260 = vpop.xlane.xlu0 %259
  %v261 = vmul.f32 %v246, %v51
  %v262 = vmul.f32 %v248, %v51
  %v263 = vmul.f32 %v250, %v51
  %v264 = vmul.f32 %v252, %v51
  %v265 = vmul.f32 %v254, %v51
  %v266 = vmul.f32 %v256, %v51
  %v267 = vmul.f32 %v258, %v51
  %v268 = vmul.f32 %v260, %v51
  %v269 = vmul.f32 %v229, %v56
  %v270 = vmul.f32 %v230, %v56
  %v271 = vmul.f32 %v231, %v56
  %v272 = vmul.f32 %v232, %v56
  %v273 = vmul.f32 %v233, %v56
  %v274 = vmul.f32 %v234, %v56
  %v275 = vmul.f32 %v235, %v56
  %v276 = vmul.f32 %v236, %v56
  %277 = vadd.xlane.f32.xlu0 %v269
  %v278 = vpop.xlane.xlu0 %277
  %279 = vadd.xlane.f32.xlu0 %v270
  %v280 = vpop.xlane.xlu0 %279
  %281 = vadd.xlane.f32.xlu0 %v271
  %v282 = vpop.xlane.xlu0 %281
  %283 = vadd.xlane.f32.xlu0 %v272
  %v284 = vpop.xlane.xlu0 %283
  %285 = vadd.xlane.f32.xlu0 %v273
  %v286 = vpop.xlane.xlu0 %285
  %287 = vadd.xlane.f32.xlu0 %v274
  %v288 = vpop.xlane.xlu0 %287
  %289 = vadd.xlane.f32.xlu0 %v275
  %v290 = vpop.xlane.xlu0 %289
  %291 = vadd.xlane.f32.xlu0 %v276
  %v292 = vpop.xlane.xlu0 %291
  %v293 = vmul.f32 %v278, %v56
  %v294 = vmul.f32 %v280, %v56
  %v295 = vmul.f32 %v282, %v56
  %v296 = vmul.f32 %v284, %v56
  %v297 = vmul.f32 %v286, %v56
  %v298 = vmul.f32 %v288, %v56
  %v299 = vmul.f32 %v290, %v56
  %v300 = vmul.f32 %v292, %v56
  %v301 = vadd.f32 %v261, %v293
  %v302 = vadd.f32 %v262, %v294
  %v303 = vadd.f32 %v263, %v295
  %v304 = vadd.f32 %v264, %v296
  %v305 = vadd.f32 %v265, %v297
  %v306 = vadd.f32 %v266, %v298
  %v307 = vadd.f32 %v267, %v299
  %v308 = vadd.f32 %v268, %v300
  %v309 = vmul.f32 %v301, 0.03125
  %v310 = vmul.f32 %v302, 0.03125
  %v311 = vmul.f32 %v303, 0.03125
  %v312 = vmul.f32 %v304, 0.03125
  %v313 = vmul.f32 %v305, 0.03125
  %v314 = vmul.f32 %v306, 0.03125
  %v315 = vmul.f32 %v307, 0.03125
  %v316 = vmul.f32 %v308, 0.03125
  %v317 = vsub.f32 %v229, %v309
  %v318 = vsub.f32 %v230, %v310
  %v319 = vsub.f32 %v231, %v311
  %v320 = vsub.f32 %v232, %v312
  %v321 = vsub.f32 %v233, %v313
  %v322 = vsub.f32 %v234, %v314
  %v323 = vsub.f32 %v235, %v315
  %v324 = vsub.f32 %v236, %v316
  %v325 = vadd.f32 %v51, %v56
  %v326 = vmul.f32 %v317, %v325
  %v327 = vmul.f32 %v318, %v325
  %v328 = vmul.f32 %v319, %v325
  %v329 = vmul.f32 %v320, %v325
  %v330 = vmul.f32 %v321, %v325
  %v331 = vmul.f32 %v322, %v325
  %v332 = vmul.f32 %v323, %v325
  %v333 = vmul.f32 %v324, %v325
  %v334 = vmul.f32 %v326, %v326
  %v335 = vmul.f32 %v327, %v327
  %v336 = vmul.f32 %v328, %v328
  %v337 = vmul.f32 %v329, %v329
  %v338 = vmul.f32 %v330, %v330
  %v339 = vmul.f32 %v331, %v331
  %v340 = vmul.f32 %v332, %v332
  %v341 = vmul.f32 %v333, %v333
  %v342 = vmul.f32 %v334, %v51
  %v343 = vmul.f32 %v335, %v51
  %v344 = vmul.f32 %v336, %v51
  %v345 = vmul.f32 %v337, %v51
  %v346 = vmul.f32 %v338, %v51
  %v347 = vmul.f32 %v339, %v51
  %v348 = vmul.f32 %v340, %v51
  %v349 = vmul.f32 %v341, %v51
  %350 = vadd.xlane.f32.xlu0 %v342
  %v351 = vpop.xlane.xlu0 %350
  %352 = vadd.xlane.f32.xlu0 %v343
  %v353 = vpop.xlane.xlu0 %352
  %354 = vadd.xlane.f32.xlu0 %v344
  %v355 = vpop.xlane.xlu0 %354
  %356 = vadd.xlane.f32.xlu0 %v345
  %v357 = vpop.xlane.xlu0 %356
  %358 = vadd.xlane.f32.xlu0 %v346
  %v359 = vpop.xlane.xlu0 %358
  %360 = vadd.xlane.f32.xlu0 %v347
  %v361 = vpop.xlane.xlu0 %360
  %362 = vadd.xlane.f32.xlu0 %v348
  %v363 = vpop.xlane.xlu0 %362
  %364 = vadd.xlane.f32.xlu0 %v349
  %v365 = vpop.xlane.xlu0 %364
  %v366 = vmul.f32 %v351, %v51
  %v367 = vmul.f32 %v353, %v51
  %v368 = vmul.f32 %v355, %v51
  %v369 = vmul.f32 %v357, %v51
  %v370 = vmul.f32 %v359, %v51
  %v371 = vmul.f32 %v361, %v51
  %v372 = vmul.f32 %v363, %v51
  %v373 = vmul.f32 %v365, %v51
  %v374 = vmul.f32 %v334, %v56
  %v375 = vmul.f32 %v335, %v56
  %v376 = vmul.f32 %v336, %v56
  %v377 = vmul.f32 %v337, %v56
  %v378 = vmul.f32 %v338, %v56
  %v379 = vmul.f32 %v339, %v56
  %v380 = vmul.f32 %v340, %v56
  %v381 = vmul.f32 %v341, %v56
  %382 = vadd.xlane.f32.xlu0 %v374
  %v383 = vpop.xlane.xlu0 %382
  %384 = vadd.xlane.f32.xlu0 %v375
  %v385 = vpop.xlane.xlu0 %384
  %386 = vadd.xlane.f32.xlu0 %v376
  %v387 = vpop.xlane.xlu0 %386
  %388 = vadd.xlane.f32.xlu0 %v377
  %v389 = vpop.xlane.xlu0 %388
  %390 = vadd.xlane.f32.xlu0 %v378
  %v391 = vpop.xlane.xlu0 %390
  %392 = vadd.xlane.f32.xlu0 %v379
  %v393 = vpop.xlane.xlu0 %392
  %394 = vadd.xlane.f32.xlu0 %v380
  %v395 = vpop.xlane.xlu0 %394
  %396 = vadd.xlane.f32.xlu0 %v381
  %v397 = vpop.xlane.xlu0 %396
  %v398 = vmul.f32 %v383, %v56
  %v399 = vmul.f32 %v385, %v56
  %v400 = vmul.f32 %v387, %v56
  %v401 = vmul.f32 %v389, %v56
  %v402 = vmul.f32 %v391, %v56
  %v403 = vmul.f32 %v393, %v56
  %v404 = vmul.f32 %v395, %v56
  %v405 = vmul.f32 %v397, %v56
  %v406 = vadd.f32 %v366, %v398
  %v407 = vadd.f32 %v367, %v399
  %v408 = vadd.f32 %v368, %v400
  %v409 = vadd.f32 %v369, %v401
  %v410 = vadd.f32 %v370, %v402
  %v411 = vadd.f32 %v371, %v403
  %v412 = vadd.f32 %v372, %v404
  %v413 = vadd.f32 %v373, %v405
  %v414 = vmul.f32 %v406, 0.03125
  %v415 = vmul.f32 %v407, 0.03125
  %v416 = vmul.f32 %v408, 0.03125
  %v417 = vmul.f32 %v409, 0.03125
  %v418 = vmul.f32 %v410, 0.03125
  %v419 = vmul.f32 %v411, 0.03125
  %v420 = vmul.f32 %v412, 0.03125
  %v421 = vmul.f32 %v413, 0.03125
  %v422 = vadd.f32 %v414, 1e-05
  %v423 = vadd.f32 %v415, 1e-05
  %v424 = vadd.f32 %v416, 1e-05
  %v425 = vadd.f32 %v417, 1e-05
  %v426 = vadd.f32 %v418, 1e-05
  %v427 = vadd.f32 %v419, 1e-05
  %v428 = vadd.f32 %v420, 1e-05
  %v429 = vadd.f32 %v421, 1e-05
  %v430 = vrsqrt.pop %v422
  %v431 = vmul.f32 %v430, %v422
  %v432 = vmul.f32 %v431, %v430
  %v433 = vmul.f32 0.5, %v432
  %v434 = vsub.f32 1.5, %v433
  %v435 = vmul.f32 %v430, %v434
  %vm436 = vweird.f32 %v422
  %vm437 = vweird.f32 %v430
  %vm438 = vmor %vm436, %vm437
  %v439 = vsel %vm438, %v430, %v435
  %v440 = vrsqrt.pop %v423
  %v441 = vmul.f32 %v440, %v423
  %v442 = vmul.f32 %v441, %v440
  %v443 = vmul.f32 0.5, %v442
  %v444 = vsub.f32 1.5, %v443
  %v445 = vmul.f32 %v440, %v444
  %vm446 = vweird.f32 %v423
  %vm447 = vweird.f32 %v440
  %vm448 = vmor %vm446, %vm447
  %v449 = vsel %vm448, %v440, %v445
  %v450 = vrsqrt.pop %v424
  %v451 = vmul.f32 %v450, %v424
  %v452 = vmul.f32 %v451, %v450
  %v453 = vmul.f32 0.5, %v452
  %v454 = vsub.f32 1.5, %v453
  %v455 = vmul.f32 %v450, %v454
  %vm456 = vweird.f32 %v424
  %vm457 = vweird.f32 %v450
  %vm458 = vmor %vm456, %vm457
  %v459 = vsel %vm458, %v450, %v455
  %v460 = vrsqrt.pop %v425
  %v461 = vmul.f32 %v460, %v425
  %v462 = vmul.f32 %v461, %v460
  %v463 = vmul.f32 0.5, %v462
  %v464 = vsub.f32 1.5, %v463
  %v465 = vmul.f32 %v460, %v464
  %vm466 = vweird.f32 %v425
  %vm467 = vweird.f32 %v460
  %vm468 = vmor %vm466, %vm467
  %v469 = vsel %vm468, %v460, %v465
  %v470 = vrsqrt.pop %v426
  %v471 = vmul.f32 %v470, %v426
  %v472 = vmul.f32 %v471, %v470
  %v473 = vmul.f32 0.5, %v472
  %v474 = vsub.f32 1.5, %v473
  %v475 = vmul.f32 %v470, %v474
  %vm476 = vweird.f32 %v426
  %vm477 = vweird.f32 %v470
  %vm478 = vmor %vm476, %vm477
  %v479 = vsel %vm478, %v470, %v475
  %v480 = vrsqrt.pop %v427
  %v481 = vmul.f32 %v480, %v427
  %v482 = vmul.f32 %v481, %v480
  %v483 = vmul.f32 0.5, %v482
  %v484 = vsub.f32 1.5, %v483
  %v485 = vmul.f32 %v480, %v484
  %vm486 = vweird.f32 %v427
  %vm487 = vweird.f32 %v480
  %vm488 = vmor %vm486, %vm487
  %v489 = vsel %vm488, %v480, %v485
  %v490 = vrsqrt.pop %v428
  %v491 = vmul.f32 %v490, %v428
  %v492 = vmul.f32 %v491, %v490
  %v493 = vmul.f32 0.5, %v492
  %v494 = vsub.f32 1.5, %v493
  %v495 = vmul.f32 %v490, %v494
  %vm496 = vweird.f32 %v428
  %vm497 = vweird.f32 %v490
  %vm498 = vmor %vm496, %vm497
  %v499 = vsel %vm498, %v490, %v495
  %v500 = vrsqrt.pop %v429
  %v501 = vmul.f32 %v500, %v429
  %v502 = vmul.f32 %v501, %v500
  %v503 = vmul.f32 0.5, %v502
  %v504 = vsub.f32 1.5, %v503
  %v505 = vmul.f32 %v500, %v504
  %vm506 = vweird.f32 %v429
  %vm507 = vweird.f32 %v500
  %vm508 = vmor %vm506, %vm507
  %v509 = vsel %vm508, %v500, %v505
  %v510 = vmul.f32 %v326, %v439
  %v511 = vmul.f32 %v327, %v449
  %v512 = vmul.f32 %v328, %v459
  %v513 = vmul.f32 %v329, %v469
  %v514 = vmul.f32 %v330, %v479
  %v515 = vmul.f32 %v331, %v489
  %v516 = vmul.f32 %v332, %v499
  %v517 = vmul.f32 %v333, %v509
  %s518 = scalar_lea.vmem %s11, 2
  %v519 = vld [vmem:[%s518] sm:$0x1]
  %v521 = vperm.slane %v519, 0
  %v523 = vmul.f32 %v510, %v521
  %v524 = vmul.f32 %v511, %v521
  %v525 = vmul.f32 %v512, %v521
  %v526 = vmul.f32 %v513, %v521
  %v527 = vmul.f32 %v514, %v521
  %v528 = vmul.f32 %v515, %v521
  %v529 = vmul.f32 %v516, %v521
  %v530 = vmul.f32 %v517, %v521
  %s531 = scalar_lea.vmem %s11, 3
  %v532 = vld [vmem:[%s531] sm:$0x1]
  %v534 = vperm.slane %v532, 0
  %v536 = vadd.f32 %v523, %v534
  %v537 = vadd.f32 %v524, %v534
  %v538 = vadd.f32 %v525, %v534
  %v539 = vadd.f32 %v526, %v534
  %v540 = vadd.f32 %v527, %v534
  %v541 = vadd.f32 %v528, %v534
  %v542 = vadd.f32 %v529, %v534
  %v543 = vadd.f32 %v530, %v534
  %v544 = vpack.c.bf16 %v537, %v536
  %v545 = vpack.c.bf16 %v539, %v538
  %v546 = vpack.c.bf16 %v541, %v540
  %v547 = vpack.c.bf16 %v543, %v542
  %v548 = vld [vmem:[%s4] sm:$0xff]
  %v549 = vld [vmem:[%s4 + $0x8] sm:$0xf]
  %v550 = vld [vmem:[%s4 + $0xc] sm:$0xff]
  %v551 = vld [vmem:[%s4 + $0x14] sm:$0xf]
  %v552 = vld [vmem:[%s4 + $0x18] sm:$0xff]
  %v553 = vld [vmem:[%s4 + $0x20] sm:$0xf]
  %v554 = vld [vmem:[%s4 + $0x24] sm:$0xff]
  %v555 = vld [vmem:[%s4 + $0x2c] sm:$0xf]
  %v556 = vld [vmem:[%s4 + $0x30] sm:$0xff]
  %v557 = vld [vmem:[%s4 + $0x38] sm:$0xf]
  %v558 = vld [vmem:[%s4 + $0x3c] sm:$0xff]
  %v559 = vld [vmem:[%s4 + $0x44] sm:$0xf]
  %v560 = vld [vmem:[%s4 + $0x48] sm:$0xff]
  %v561 = vld [vmem:[%s4 + $0x50] sm:$0xf]
  %v562 = vld [vmem:[%s4 + $0x54] sm:$0xff]
  %v563 = vld [vmem:[%s4 + $0x5c] sm:$0xf]
  %v564 = vld [vmem:[%s4 + $0x60] sm:$0xff]
  %v565 = vld [vmem:[%s4 + $0x68] sm:$0xf]
  %v566 = vld [vmem:[%s4 + $0x6c] sm:$0xff]
  %v567 = vld [vmem:[%s4 + $0x74] sm:$0xf]
  %v568 = vld [vmem:[%s4 + $0x78] sm:$0xff]
  %v569 = vld [vmem:[%s4 + $0x80] sm:$0xf]
  %v570 = vld [vmem:[%s4 + $0x84] sm:$0xff]
  %v571 = vld [vmem:[%s4 + $0x8c] sm:$0xf]
  %v572 = vld [vmem:[%s4 + $0x90] sm:$0xff]
  %v573 = vld [vmem:[%s4 + $0x98] sm:$0xf]
  %v574 = vld [vmem:[%s4 + $0x9c] sm:$0xff]
  %v575 = vld [vmem:[%s4 + $0xa4] sm:$0xf]
  %v576 = vld [vmem:[%s4 + $0xa8] sm:$0xff]
  %v577 = vld [vmem:[%s4 + $0xb0] sm:$0xf]
  %v578 = vld [vmem:[%s4 + $0xb4] sm:$0xff]
  %v579 = vld [vmem:[%s4 + $0xbc] sm:$0xf]
  %v580 = vld [vmem:[%s6] sm:$0x7]
  %v582 = vperm.slane %v580, 0
  %v583 = vperm.slane %v580, 1
  %v584 = vperm.slane %v580, 2
  %v620 = vunpack.c.l.b16 %v548
  %v621 = vunpack.c.h.b16 %v548
  %v622 = vunpack.c.l.b16 %v549
  %v623 = vunpack.c.l.b16 %v550
  %v624 = vunpack.c.h.b16 %v550
  %v625 = vunpack.c.l.b16 %v551
  %v626 = vunpack.c.l.b16 %v552
  %v627 = vunpack.c.h.b16 %v552
  %v628 = vunpack.c.l.b16 %v553
  %v629 = vunpack.c.l.b16 %v554
  %v630 = vunpack.c.h.b16 %v554
  %v631 = vunpack.c.l.b16 %v555
  %v632 = vunpack.c.l.b16 %v556
  %v633 = vunpack.c.h.b16 %v556
  %v634 = vunpack.c.l.b16 %v557
  %v635 = vunpack.c.l.b16 %v558
  %v636 = vunpack.c.h.b16 %v558
  %v637 = vunpack.c.l.b16 %v559
  %v638 = vunpack.c.l.b16 %v560
  %v639 = vunpack.c.h.b16 %v560
  %v640 = vunpack.c.l.b16 %v561
  %v641 = vunpack.c.l.b16 %v562
  %v642 = vunpack.c.h.b16 %v562
  %v643 = vunpack.c.l.b16 %v563
  %v644 = vunpack.c.l.b16 %v564
  %v645 = vunpack.c.h.b16 %v564
  %v646 = vunpack.c.l.b16 %v565
  %v647 = vunpack.c.l.b16 %v566
  %v648 = vunpack.c.h.b16 %v566
  %v649 = vunpack.c.l.b16 %v567
  %v650 = vunpack.c.l.b16 %v568
  %v651 = vunpack.c.h.b16 %v568
  %v652 = vunpack.c.l.b16 %v569
  %v653 = vunpack.c.l.b16 %v570
  %v654 = vunpack.c.h.b16 %v570
  %v655 = vunpack.c.l.b16 %v571
  %v656 = vunpack.c.l.b16 %v572
  %v657 = vunpack.c.h.b16 %v572
  %v658 = vunpack.c.l.b16 %v573
  %v659 = vunpack.c.l.b16 %v574
  %v660 = vunpack.c.h.b16 %v574
  %v661 = vunpack.c.l.b16 %v575
  %v662 = vunpack.c.l.b16 %v576
  %v663 = vunpack.c.h.b16 %v576
  %v664 = vunpack.c.l.b16 %v577
  %v665 = vunpack.c.l.b16 %v578
  %v666 = vunpack.c.h.b16 %v578
  %v667 = vunpack.c.l.b16 %v579
  %v668 = vpack.c.b16 %v623, %v620
  %v669 = vpack.c.b16 %v624, %v621
  %v670 = vpack.c.b16 %v625, %v622
  %v671 = vpack.c.b16 %v629, %v626
  %v672 = vpack.c.b16 %v630, %v627
  %v673 = vpack.c.b16 %v631, %v628
  %v674 = vpack.c.b16 %v635, %v632
  %v675 = vpack.c.b16 %v636, %v633
  %v676 = vpack.c.b16 %v637, %v634
  %v677 = vpack.c.b16 %v641, %v638
  %v678 = vpack.c.b16 %v642, %v639
  %v679 = vpack.c.b16 %v643, %v640
  %v680 = vpack.c.b16 %v647, %v644
  %v681 = vpack.c.b16 %v648, %v645
  %v682 = vpack.c.b16 %v649, %v646
  %v683 = vpack.c.b16 %v653, %v650
  %v684 = vpack.c.b16 %v654, %v651
  %v685 = vpack.c.b16 %v655, %v652
  %v686 = vpack.c.b16 %v659, %v656
  %v687 = vpack.c.b16 %v660, %v657
  %v688 = vpack.c.b16 %v661, %v658
  %v689 = vpack.c.b16 %v665, %v662
  %v690 = vpack.c.b16 %v666, %v663
  %v691 = vpack.c.b16 %v667, %v664
  %716 = vmatpush.bf16.msra.mxu0 %v689
  %717 = vmatpush.bf16.msra.mxu0 %v686
  %718 = vmatpush.bf16.msra.mxu0 %v683
  %719 = vmatpush.bf16.msra.mxu0 %v680
  %720 = vmatpush.bf16.msra.mxu0 %v677
  %721 = vmatpush.bf16.msra.mxu0 %v674
  %722 = vmatpush.bf16.msra.mxu0 %v671
  %723 = vmatpush.bf16.msra.mxu0 %v668
  %724 = vmatmul.bf16.gmra.mxu0 %v544
  %v725 = vpop.f32.mrf.mxu0
  %v726 = vadd.f32 %v582, %v725
  %v727 = vpop.f32.mrf.mxu0
  %v728 = vadd.f32 %v582, %v727
  %729 = vmatmul.bf16.gmra.mxu0 %v545
  %v730 = vpop.f32.mrf.mxu0
  %v731 = vadd.f32 %v582, %v730
  %v732 = vpop.f32.mrf.mxu0
  %v733 = vadd.f32 %v582, %v732
  %734 = vmatmul.bf16.gmra.mxu0 %v546
  %v735 = vpop.f32.mrf.mxu0
  %v736 = vadd.f32 %v582, %v735
  %v737 = vpop.f32.mrf.mxu0
  %v738 = vadd.f32 %v582, %v737
  %739 = vmatmul.bf16.gmra.mxu0 %v547
  %v740 = vpop.f32.mrf.mxu0
  %v741 = vadd.f32 %v582, %v740
  %v742 = vpop.f32.mrf.mxu0
  %v743 = vadd.f32 %v582, %v742
  %744 = vdwg.mxu0
  %745 = vmatpush.bf16.msra.mxu0 %v690
  %746 = vmatpush.bf16.msra.mxu0 %v687
  %747 = vmatpush.bf16.msra.mxu0 %v684
  %748 = vmatpush.bf16.msra.mxu0 %v681
  %749 = vmatpush.bf16.msra.mxu0 %v678
  %750 = vmatpush.bf16.msra.mxu0 %v675
  %751 = vmatpush.bf16.msra.mxu0 %v672
  %752 = vmatpush.bf16.msra.mxu0 %v669
  %753 = vmatmul.bf16.gmra.mxu0 %v544
  %v754 = vpop.f32.mrf.mxu0
  %v755 = vadd.f32 %v583, %v754
  %v756 = vpop.f32.mrf.mxu0
  %v757 = vadd.f32 %v583, %v756
  %758 = vmatmul.bf16.gmra.mxu0 %v545
  %v759 = vpop.f32.mrf.mxu0
  %v760 = vadd.f32 %v583, %v759
  %v761 = vpop.f32.mrf.mxu0
  %v762 = vadd.f32 %v583, %v761
  %763 = vmatmul.bf16.gmra.mxu0 %v546
  %v764 = vpop.f32.mrf.mxu0
  %v765 = vadd.f32 %v583, %v764
  %v766 = vpop.f32.mrf.mxu0
  %v767 = vadd.f32 %v583, %v766
  %768 = vmatmul.bf16.gmra.mxu0 %v547
  %v769 = vpop.f32.mrf.mxu0
  %v770 = vadd.f32 %v583, %v769
  %v771 = vpop.f32.mrf.mxu0
  %v772 = vadd.f32 %v583, %v771
  %773 = vdwg.mxu0
  %774 = vmatpush.bf16.msra.mxu0 %v691
  %775 = vmatpush.bf16.msra.mxu0 %v688
  %776 = vmatpush.bf16.msra.mxu0 %v685
  %777 = vmatpush.bf16.msra.mxu0 %v682
  %778 = vmatpush.bf16.msra.mxu0 %v679
  %779 = vmatpush.bf16.msra.mxu0 %v676
  %780 = vmatpush.bf16.msra.mxu0 %v673
  %781 = vmatpush.bf16.msra.mxu0 %v670
  %782 = vmatmul.bf16.gmra.mxu0 %v544
  %v783 = vpop.f32.mrf.mxu0
  %v784 = vadd.f32 %v584, %v783
  %v785 = vpop.f32.mrf.mxu0
  %v786 = vadd.f32 %v584, %v785
  %787 = vmatmul.bf16.gmra.mxu0 %v545
  %v788 = vpop.f32.mrf.mxu0
  %v789 = vadd.f32 %v584, %v788
  %v790 = vpop.f32.mrf.mxu0
  %v791 = vadd.f32 %v584, %v790
  %792 = vmatmul.bf16.gmra.mxu0 %v546
  %v793 = vpop.f32.mrf.mxu0
  %v794 = vadd.f32 %v584, %v793
  %v795 = vpop.f32.mrf.mxu0
  %v796 = vadd.f32 %v584, %v795
  %797 = vmatmul.bf16.gmra.mxu0 %v547
  %v798 = vpop.f32.mrf.mxu0
  %v799 = vadd.f32 %v584, %v798
  %v800 = vpop.f32.mrf.mxu0
  %v801 = vadd.f32 %v584, %v800
  %802 = vdwg.mxu0
  %803 = vst [vmem:[#allocation2] sm:$0xff] %v726
  %804 = vst [vmem:[#allocation2 + $0x8] sm:$0xff] %v755
  %805 = vst [vmem:[#allocation2 + $0x10] sm:$0xff] %v784
  %806 = vst [vmem:[#allocation2 + $0x18] sm:$0xff] %v728
  %807 = vst [vmem:[#allocation2 + $0x20] sm:$0xff] %v757
  %808 = vst [vmem:[#allocation2 + $0x28] sm:$0xff] %v786
  %809 = vst [vmem:[#allocation2 + $0x30] sm:$0xff] %v731
  %810 = vst [vmem:[#allocation2 + $0x38] sm:$0xff] %v760
  %811 = vst [vmem:[#allocation2 + $0x40] sm:$0xff] %v789
  %812 = vst [vmem:[#allocation2 + $0x48] sm:$0xff] %v733
  %813 = vst [vmem:[#allocation2 + $0x50] sm:$0xff] %v762
  %814 = vst [vmem:[#allocation2 + $0x58] sm:$0xff] %v791
  %815 = vst [vmem:[#allocation2 + $0x60] sm:$0xff] %v736
  %816 = vst [vmem:[#allocation2 + $0x68] sm:$0xff] %v765
  %817 = vst [vmem:[#allocation2 + $0x70] sm:$0xff] %v794
  %818 = vst [vmem:[#allocation2 + $0x78] sm:$0xff] %v738
  %819 = vst [vmem:[#allocation2 + $0x80] sm:$0xff] %v767
  %820 = vst [vmem:[#allocation2 + $0x88] sm:$0xff] %v796
  %821 = vst [vmem:[#allocation2 + $0x90] sm:$0xff] %v741
  %822 = vst [vmem:[#allocation2 + $0x98] sm:$0xff] %v770
  %823 = vst [vmem:[#allocation2 + $0xa0] sm:$0xff] %v799
  %824 = vst [vmem:[#allocation2 + $0xa8] sm:$0xff] %v743
  %825 = vst [vmem:[#allocation2 + $0xb0] sm:$0xff] %v772
  %826 = vst [vmem:[#allocation2 + $0xb8] sm:$0xff] %v801
  %v827 = vld [vmem:[#allocation2] sm:$0xff]
  %v828 = vld [vmem:[#allocation2 + $0x8] sm:$0xff]
  %v829 = vld [vmem:[#allocation2 + $0x10] sm:$0xff]
  %v830 = vld [vmem:[%s5] sm:$0xff]
  %v831 = vld [vmem:[%s5 + $0x8] sm:$0xf]
  %v832 = vld [vmem:[%s5 + $0xc] sm:$0xff]
  %v833 = vld [vmem:[%s5 + $0x14] sm:$0xf]
  %v834 = vld [vmem:[%s5 + $0x18] sm:$0xff]
  %v835 = vld [vmem:[%s5 + $0x20] sm:$0xf]
  %v836 = vld [vmem:[%s5 + $0x24] sm:$0xff]
  %v837 = vld [vmem:[%s5 + $0x2c] sm:$0xf]
  %v838 = vld [vmem:[%s5 + $0x30] sm:$0xff]
  %v839 = vld [vmem:[%s5 + $0x38] sm:$0xf]
  %v840 = vld [vmem:[%s5 + $0x3c] sm:$0xff]
  %v841 = vld [vmem:[%s5 + $0x44] sm:$0xf]
  %v842 = vld [vmem:[%s5 + $0x48] sm:$0xff]
  %v843 = vld [vmem:[%s5 + $0x50] sm:$0xf]
  %v844 = vld [vmem:[%s5 + $0x54] sm:$0xff]
  %v845 = vld [vmem:[%s5 + $0x5c] sm:$0xf]
  %v846 = vld [vmem:[%s5 + $0x60] sm:$0xff]
  %v847 = vld [vmem:[%s5 + $0x68] sm:$0xf]
  %v848 = vld [vmem:[%s5 + $0x6c] sm:$0xff]
  %v849 = vld [vmem:[%s5 + $0x74] sm:$0xf]
  %v850 = vld [vmem:[%s5 + $0x78] sm:$0xff]
  %v851 = vld [vmem:[%s5 + $0x80] sm:$0xf]
  %v852 = vld [vmem:[%s5 + $0x84] sm:$0xff]
  %v853 = vld [vmem:[%s5 + $0x8c] sm:$0xf]
  %v854 = vld [vmem:[%s5 + $0x90] sm:$0xff]
  %v855 = vld [vmem:[%s5 + $0x98] sm:$0xf]
  %v856 = vld [vmem:[%s5 + $0x9c] sm:$0xff]
  %v857 = vld [vmem:[%s5 + $0xa4] sm:$0xf]
  %v858 = vld [vmem:[%s5 + $0xa8] sm:$0xff]
  %v859 = vld [vmem:[%s5 + $0xb0] sm:$0xf]
  %v860 = vld [vmem:[%s5 + $0xb4] sm:$0xff]
  %v861 = vld [vmem:[%s5 + $0xbc] sm:$0xf]
  %v862 = vld [vmem:[%s7] sm:$0x7]
  %v864 = vperm.slane %v862, 0
  %v865 = vperm.slane %v862, 1
  %v866 = vperm.slane %v862, 2
  %v902 = vunpack.c.l.b16 %v830
  %v903 = vunpack.c.h.b16 %v830
  %v904 = vunpack.c.l.b16 %v831
  %v905 = vunpack.c.l.b16 %v832
  %v906 = vunpack.c.h.b16 %v832
  %v907 = vunpack.c.l.b16 %v833
  %v908 = vunpack.c.l.b16 %v834
  %v909 = vunpack.c.h.b16 %v834
  %v910 = vunpack.c.l.b16 %v835
  %v911 = vunpack.c.l.b16 %v836
  %v912 = vunpack.c.h.b16 %v836
  %v913 = vunpack.c.l.b16 %v837
  %v914 = vunpack.c.l.b16 %v838
  %v915 = vunpack.c.h.b16 %v838
  %v916 = vunpack.c.l.b16 %v839
  %v917 = vunpack.c.l.b16 %v840
  %v918 = vunpack.c.h.b16 %v840
  %v919 = vunpack.c.l.b16 %v841
  %v920 = vunpack.c.l.b16 %v842
  %v921 = vunpack.c.h.b16 %v842
  %v922 = vunpack.c.l.b16 %v843
  %v923 = vunpack.c.l.b16 %v844
  %v924 = vunpack.c.h.b16 %v844
  %v925 = vunpack.c.l.b16 %v845
  %v926 = vunpack.c.l.b16 %v846
  %v927 = vunpack.c.h.b16 %v846
  %v928 = vunpack.c.l.b16 %v847
  %v929 = vunpack.c.l.b16 %v848
  %v930 = vunpack.c.h.b16 %v848
  %v931 = vunpack.c.l.b16 %v849
  %v932 = vunpack.c.l.b16 %v850
  %v933 = vunpack.c.h.b16 %v850
  %v934 = vunpack.c.l.b16 %v851
  %v935 = vunpack.c.l.b16 %v852
  %v936 = vunpack.c.h.b16 %v852
  %v937 = vunpack.c.l.b16 %v853
  %v938 = vunpack.c.l.b16 %v854
  %v939 = vunpack.c.h.b16 %v854
  %v940 = vunpack.c.l.b16 %v855
  %v941 = vunpack.c.l.b16 %v856
  %v942 = vunpack.c.h.b16 %v856
  %v943 = vunpack.c.l.b16 %v857
  %v944 = vunpack.c.l.b16 %v858
  %v945 = vunpack.c.h.b16 %v858
  %v946 = vunpack.c.l.b16 %v859
  %v947 = vunpack.c.l.b16 %v860
  %v948 = vunpack.c.h.b16 %v860
  %v949 = vunpack.c.l.b16 %v861
  %v950 = vpack.c.b16 %v905, %v902
  %v951 = vpack.c.b16 %v906, %v903
  %v952 = vpack.c.b16 %v907, %v904
  %v953 = vpack.c.b16 %v911, %v908
  %v954 = vpack.c.b16 %v912, %v909
  %v955 = vpack.c.b16 %v913, %v910
  %v956 = vpack.c.b16 %v917, %v914
  %v957 = vpack.c.b16 %v918, %v915
  %v958 = vpack.c.b16 %v919, %v916
  %v959 = vpack.c.b16 %v923, %v920
  %v960 = vpack.c.b16 %v924, %v921
  %v961 = vpack.c.b16 %v925, %v922
  %v962 = vpack.c.b16 %v929, %v926
  %v963 = vpack.c.b16 %v930, %v927
  %v964 = vpack.c.b16 %v931, %v928
  %v965 = vpack.c.b16 %v935, %v932
  %v966 = vpack.c.b16 %v936, %v933
  %v967 = vpack.c.b16 %v937, %v934
  %v968 = vpack.c.b16 %v941, %v938
  %v969 = vpack.c.b16 %v942, %v939
  %v970 = vpack.c.b16 %v943, %v940
  %v971 = vpack.c.b16 %v947, %v944
  %v972 = vpack.c.b16 %v948, %v945
  %v973 = vpack.c.b16 %v949, %v946
  %998 = vmatpush.bf16.msra.mxu0 %v971
  %999 = vmatpush.bf16.msra.mxu0 %v968
  %1000 = vmatpush.bf16.msra.mxu0 %v965
  %1001 = vmatpush.bf16.msra.mxu0 %v962
  %1002 = vmatpush.bf16.msra.mxu0 %v959
  %1003 = vmatpush.bf16.msra.mxu0 %v956
  %1004 = vmatpush.bf16.msra.mxu0 %v953
  %1005 = vmatpush.bf16.msra.mxu0 %v950
  %1006 = vmatmul.bf16.gmra.mxu0 0
  %v1007 = vpop.f32.mrf.mxu0
  %v1008 = vadd.f32 %v864, %v1007
  %v1009 = vpop.f32.mrf.mxu0
  %1010 = vdwg.mxu0
  %1011 = vmatpush.bf16.msra.mxu0 %v972
  %1012 = vmatpush.bf16.msra.mxu0 %v969
  %1013 = vmatpush.bf16.msra.mxu0 %v966
  %1014 = vmatpush.bf16.msra.mxu0 %v963
  %1015 = vmatpush.bf16.msra.mxu0 %v960
  %1016 = vmatpush.bf16.msra.mxu0 %v957
  %1017 = vmatpush.bf16.msra.mxu0 %v954
  %1018 = vmatpush.bf16.msra.mxu0 %v951
  %1019 = vmatmul.bf16.gmra.mxu0 0
  %v1020 = vpop.f32.mrf.mxu0
  %v1021 = vadd.f32 %v865, %v1020
  %v1022 = vpop.f32.mrf.mxu0
  %1023 = vdwg.mxu0
  %1024 = vmatpush.bf16.msra.mxu0 %v973
  %1025 = vmatpush.bf16.msra.mxu0 %v970
  %1026 = vmatpush.bf16.msra.mxu0 %v967
  %1027 = vmatpush.bf16.msra.mxu0 %v964
  %1028 = vmatpush.bf16.msra.mxu0 %v961
  %1029 = vmatpush.bf16.msra.mxu0 %v958
  %1030 = vmatpush.bf16.msra.mxu0 %v955
  %1031 = vmatpush.bf16.msra.mxu0 %v952
  %1032 = vmatmul.bf16.gmra.mxu0 0
  %v1033 = vpop.f32.mrf.mxu0
  %v1034 = vadd.f32 %v866, %v1033
  %v1035 = vpop.f32.mrf.mxu0
  %1036 = vdwg.mxu0
  %v1037 = vadd.f32 %v827, %v1008
  %v1038 = vxor.u32 %v1037, 2147483648
  %v1039 = vmul.f32 %v1038, 1.442695
  %v1040 = vpow.pop %v1039
  %v1041 = vadd.f32 %v1040, 1.0
  %v1042 = vrcp.pop %v1041
  %v1043 = vmul.f32 %v1041, %v1042
  %v1044 = vsub.f32 1.0, %v1043
  %v1045 = vmul.f32 %v1042, %v1044
  %v1046 = vadd.f32 %v1042, %v1045
  %vm1047 = vweird.f32 %v1041
  %vm1048 = vweird.f32 %v1042
  %vm1049 = vmor %vm1047, %vm1048
  %v1050 = vsel %vm1049, %v1042, %v1046
  %v1051 = vand.u32 2147483647, %v1041
  %vm1052 = vcmp.eq.f32.partialorder %v1051, 8.507059e+37
  %v1053 = vand.u32 %v1041, 2147483648
  %v1054 = vor.u32 1.1754944e-38, %v1053
  %v1055 = vsel %vm1052, %v1054, %v1050
  %v1056 = vmul.f32 1.0, %v1055
  %v1057 = vadd.f32 %v828, %v1021
  %v1058 = vxor.u32 %v1057, 2147483648
  %v1059 = vmul.f32 %v1058, 1.442695
  %v1060 = vpow.pop %v1059
  %v1061 = vadd.f32 %v1060, 1.0
  %v1062 = vrcp.pop %v1061
  %v1063 = vmul.f32 %v1061, %v1062
  %v1064 = vsub.f32 1.0, %v1063
  %v1065 = vmul.f32 %v1062, %v1064
  %v1066 = vadd.f32 %v1062, %v1065
  %vm1067 = vweird.f32 %v1061
  %vm1068 = vweird.f32 %v1062
  %vm1069 = vmor %vm1067, %vm1068
  %v1070 = vsel %vm1069, %v1062, %v1066
  %v1071 = vand.u32 2147483647, %v1061
  %vm1072 = vcmp.eq.f32.partialorder %v1071, 8.507059e+37
  %v1073 = vand.u32 %v1061, 2147483648
  %v1074 = vor.u32 1.1754944e-38, %v1073
  %v1075 = vsel %vm1072, %v1074, %v1070
  %v1076 = vmul.f32 1.0, %v1075
  %v1077 = vmul.f32 %v1056, %v1034
  %v1078 = vadd.f32 %v829, %v1077
  %v1079 = vtanh.pop %v1078
  %v1080 = vsub.f32 1.0, %v1076
  %v1081 = vmul.f32 %v1080, %v1079
  %v1082 = vmul.f32 %v1076, 0.0
  %v1083 = vadd.f32 %v1081, %v1082
  %v1084 = vpack.c.bf16 %v1083, %v1083
  %s1085 = scalar_lea.vmem %s4, 192
  %v1086 = vld [vmem:[%s1085] sm:$0xff]
  %v1087 = vld [vmem:[%s1085 + $0x8] sm:$0xf]
  %v1088 = vld [vmem:[%s1085 + $0xc] sm:$0xff]
  %v1089 = vld [vmem:[%s1085 + $0x14] sm:$0xf]
  %v1090 = vld [vmem:[%s1085 + $0x18] sm:$0xff]
  %v1091 = vld [vmem:[%s1085 + $0x20] sm:$0xf]
  %v1092 = vld [vmem:[%s1085 + $0x24] sm:$0xff]
  %v1093 = vld [vmem:[%s1085 + $0x2c] sm:$0xf]
  %v1094 = vld [vmem:[%s1085 + $0x30] sm:$0xff]
  %v1095 = vld [vmem:[%s1085 + $0x38] sm:$0xf]
  %v1096 = vld [vmem:[%s1085 + $0x3c] sm:$0xff]
  %v1097 = vld [vmem:[%s1085 + $0x44] sm:$0xf]
  %v1098 = vld [vmem:[%s1085 + $0x48] sm:$0xff]
  %v1099 = vld [vmem:[%s1085 + $0x50] sm:$0xf]
  %v1100 = vld [vmem:[%s1085 + $0x54] sm:$0xff]
  %v1101 = vld [vmem:[%s1085 + $0x5c] sm:$0xf]
  %v1102 = vld [vmem:[%s1085 + $0x60] sm:$0xff]
  %v1103 = vld [vmem:[%s1085 + $0x68] sm:$0xf]
  %v1104 = vld [vmem:[%s1085 + $0x6c] sm:$0xff]
  %v1105 = vld [vmem:[%s1085 + $0x74] sm:$0xf]
  %v1106 = vld [vmem:[%s1085 + $0x78] sm:$0xff]
  %v1107 = vld [vmem:[%s1085 + $0x80] sm:$0xf]
  %v1108 = vld [vmem:[%s1085 + $0x84] sm:$0xff]
  %v1109 = vld [vmem:[%s1085 + $0x8c] sm:$0xf]
  %v1110 = vld [vmem:[%s1085 + $0x90] sm:$0xff]
  %v1111 = vld [vmem:[%s1085 + $0x98] sm:$0xf]
  %v1112 = vld [vmem:[%s1085 + $0x9c] sm:$0xff]
  %v1113 = vld [vmem:[%s1085 + $0xa4] sm:$0xf]
  %v1114 = vld [vmem:[%s1085 + $0xa8] sm:$0xff]
  %v1115 = vld [vmem:[%s1085 + $0xb0] sm:$0xf]
  %v1116 = vld [vmem:[%s1085 + $0xb4] sm:$0xff]
  %v1117 = vld [vmem:[%s1085 + $0xbc] sm:$0xf]
  %s1118 = scalar_lea.vmem %s6, 3
  %v1119 = vld [vmem:[%s1118] sm:$0x7]
  %v1121 = vperm.slane %v1119, 0
  %v1122 = vperm.slane %v1119, 1
  %v1123 = vperm.slane %v1119, 2
  %v1159 = vunpack.c.l.b16 %v1086
  %v1160 = vunpack.c.h.b16 %v1086
  %v1161 = vunpack.c.l.b16 %v1087
  %v1162 = vunpack.c.l.b16 %v1088
  %v1163 = vunpack.c.h.b16 %v1088
  %v1164 = vunpack.c.l.b16 %v1089
  %v1165 = vunpack.c.l.b16 %v1090
  %v1166 = vunpack.c.h.b16 %v1090
  %v1167 = vunpack.c.l.b16 %v1091
  %v1168 = vunpack.c.l.b16 %v1092
  %v1169 = vunpack.c.h.b16 %v1092
  %v1170 = vunpack.c.l.b16 %v1093
  %v1171 = vunpack.c.l.b16 %v1094
  %v1172 = vunpack.c.h.b16 %v1094
  %v1173 = vunpack.c.l.b16 %v1095
  %v1174 = vunpack.c.l.b16 %v1096
  %v1175 = vunpack.c.h.b16 %v1096
  %v1176 = vunpack.c.l.b16 %v1097
  %v1177 = vunpack.c.l.b16 %v1098
  %v1178 = vunpack.c.h.b16 %v1098
  %v1179 = vunpack.c.l.b16 %v1099
  %v1180 = vunpack.c.l.b16 %v1100
  %v1181 = vunpack.c.h.b16 %v1100
  %v1182 = vunpack.c.l.b16 %v1101
  %v1183 = vunpack.c.l.b16 %v1102
  %v1184 = vunpack.c.h.b16 %v1102
  %v1185 = vunpack.c.l.b16 %v1103
  %v1186 = vunpack.c.l.b16 %v1104
  %v1187 = vunpack.c.h.b16 %v1104
  %v1188 = vunpack.c.l.b16 %v1105
  %v1189 = vunpack.c.l.b16 %v1106
  %v1190 = vunpack.c.h.b16 %v1106
  %v1191 = vunpack.c.l.b16 %v1107
  %v1192 = vunpack.c.l.b16 %v1108
  %v1193 = vunpack.c.h.b16 %v1108
  %v1194 = vunpack.c.l.b16 %v1109
  %v1195 = vunpack.c.l.b16 %v1110
  %v1196 = vunpack.c.h.b16 %v1110
  %v1197 = vunpack.c.l.b16 %v1111
  %v1198 = vunpack.c.l.b16 %v1112
  %v1199 = vunpack.c.h.b16 %v1112
  %v1200 = vunpack.c.l.b16 %v1113
  %v1201 = vunpack.c.l.b16 %v1114
  %v1202 = vunpack.c.h.b16 %v1114
  %v1203 = vunpack.c.l.b16 %v1115
  %v1204 = vunpack.c.l.b16 %v1116
  %v1205 = vunpack.c.h.b16 %v1116
  %v1206 = vunpack.c.l.b16 %v1117
  %v1207 = vpack.c.b16 %v1162, %v1159
  %v1208 = vpack.c.b16 %v1163, %v1160
  %v1209 = vpack.c.b16 %v1164, %v1161
  %v1210 = vpack.c.b16 %v1168, %v1165
  %v1211 = vpack.c.b16 %v1169, %v1166
  %v1212 = vpack.c.b16 %v1170, %v1167
  %v1213 = vpack.c.b16 %v1174, %v1171
  %v1214 = vpack.c.b16 %v1175, %v1172
  %v1215 = vpack.c.b16 %v1176, %v1173
  %v1216 = vpack.c.b16 %v1180, %v1177
  %v1217 = vpack.c.b16 %v1181, %v1178
  %v1218 = vpack.c.b16 %v1182, %v1179
  %v1219 = vpack.c.b16 %v1186, %v1183
  %v1220 = vpack.c.b16 %v1187, %v1184
  %v1221 = vpack.c.b16 %v1188, %v1185
  %v1222 = vpack.c.b16 %v1192, %v1189
  %v1223 = vpack.c.b16 %v1193, %v1190
  %v1224 = vpack.c.b16 %v1194, %v1191
  %v1225 = vpack.c.b16 %v1198, %v1195
  %v1226 = vpack.c.b16 %v1199, %v1196
  %v1227 = vpack.c.b16 %v1200, %v1197
  %v1228 = vpack.c.b16 %v1204, %v1201
  %v1229 = vpack.c.b16 %v1205, %v1202
  %v1230 = vpack.c.b16 %v1206, %v1203
  %1255 = vmatpush.bf16.msra.mxu0 %v1228
  %1256 = vmatpush.bf16.msra.mxu0 %v1225
  %1257 = vmatpush.bf16.msra.mxu0 %v1222
  %1258 = vmatpush.bf16.msra.mxu0 %v1219
  %1259 = vmatpush.bf16.msra.mxu0 %v1216
  %1260 = vmatpush.bf16.msra.mxu0 %v1213
  %1261 = vmatpush.bf16.msra.mxu0 %v1210
  %1262 = vmatpush.bf16.msra.mxu0 %v1207
  %1263 = vmatmul.bf16.gmra.mxu0 %v1084
  %v1264 = vpop.f32.mrf.mxu0
  %v1265 = vadd.f32 %v1121, %v1264
  %v1266 = vpop.f32.mrf.mxu0
  %1267 = vdwg.mxu0
  %1268 = vmatpush.bf16.msra.mxu0 %v1229
  %1269 = vmatpush.bf16.msra.mxu0 %v1226
  %1270 = vmatpush.bf16.msra.mxu0 %v1223
  %1271 = vmatpush.bf16.msra.mxu0 %v1220
  %1272 = vmatpush.bf16.msra.mxu0 %v1217
  %1273 = vmatpush.bf16.msra.mxu0 %v1214
  %1274 = vmatpush.bf16.msra.mxu0 %v1211
  %1275 = vmatpush.bf16.msra.mxu0 %v1208
  %1276 = vmatmul.bf16.gmra.mxu0 %v1084
  %v1277 = vpop.f32.mrf.mxu0
  %v1278 = vadd.f32 %v1122, %v1277
  %v1279 = vpop.f32.mrf.mxu0
  %1280 = vdwg.mxu0
  %1281 = vmatpush.bf16.msra.mxu0 %v1230
  %1282 = vmatpush.bf16.msra.mxu0 %v1227
  %1283 = vmatpush.bf16.msra.mxu0 %v1224
  %1284 = vmatpush.bf16.msra.mxu0 %v1221
  %1285 = vmatpush.bf16.msra.mxu0 %v1218
  %1286 = vmatpush.bf16.msra.mxu0 %v1215
  %1287 = vmatpush.bf16.msra.mxu0 %v1212
  %1288 = vmatpush.bf16.msra.mxu0 %v1209
  %1289 = vmatmul.bf16.gmra.mxu0 %v1084
  %v1290 = vpop.f32.mrf.mxu0
  %v1291 = vadd.f32 %v1123, %v1290
  %v1292 = vpop.f32.mrf.mxu0
  %1293 = vdwg.mxu0
  %s1294 = scalar_lea.vmem %s5, 192
  %v1295 = vld [vmem:[%s1294] sm:$0xff]
  %v1296 = vld [vmem:[%s1294 + $0x8] sm:$0xf]
  %v1297 = vld [vmem:[%s1294 + $0xc] sm:$0xff]
  %v1298 = vld [vmem:[%s1294 + $0x14] sm:$0xf]
  %v1299 = vld [vmem:[%s1294 + $0x18] sm:$0xff]
  %v1300 = vld [vmem:[%s1294 + $0x20] sm:$0xf]
  %v1301 = vld [vmem:[%s1294 + $0x24] sm:$0xff]
  %v1302 = vld [vmem:[%s1294 + $0x2c] sm:$0xf]
  %v1303 = vld [vmem:[%s1294 + $0x30] sm:$0xff]
  %v1304 = vld [vmem:[%s1294 + $0x38] sm:$0xf]
  %v1305 = vld [vmem:[%s1294 + $0x3c] sm:$0xff]
  %v1306 = vld [vmem:[%s1294 + $0x44] sm:$0xf]
  %v1307 = vld [vmem:[%s1294 + $0x48] sm:$0xff]
  %v1308 = vld [vmem:[%s1294 + $0x50] sm:$0xf]
  %v1309 = vld [vmem:[%s1294 + $0x54] sm:$0xff]
  %v1310 = vld [vmem:[%s1294 + $0x5c] sm:$0xf]
  %v1311 = vld [vmem:[%s1294 + $0x60] sm:$0xff]
  %v1312 = vld [vmem:[%s1294 + $0x68] sm:$0xf]
  %v1313 = vld [vmem:[%s1294 + $0x6c] sm:$0xff]
  %v1314 = vld [vmem:[%s1294 + $0x74] sm:$0xf]
  %v1315 = vld [vmem:[%s1294 + $0x78] sm:$0xff]
  %v1316 = vld [vmem:[%s1294 + $0x80] sm:$0xf]
  %v1317 = vld [vmem:[%s1294 + $0x84] sm:$0xff]
  %v1318 = vld [vmem:[%s1294 + $0x8c] sm:$0xf]
  %v1319 = vld [vmem:[%s1294 + $0x90] sm:$0xff]
  %v1320 = vld [vmem:[%s1294 + $0x98] sm:$0xf]
  %v1321 = vld [vmem:[%s1294 + $0x9c] sm:$0xff]
  %v1322 = vld [vmem:[%s1294 + $0xa4] sm:$0xf]
  %v1323 = vld [vmem:[%s1294 + $0xa8] sm:$0xff]
  %v1324 = vld [vmem:[%s1294 + $0xb0] sm:$0xf]
  %v1325 = vld [vmem:[%s1294 + $0xb4] sm:$0xff]
  %v1326 = vld [vmem:[%s1294 + $0xbc] sm:$0xf]
  %s1327 = scalar_lea.vmem %s7, 3
  %v1328 = vld [vmem:[%s1327] sm:$0x7]
  %v1330 = vperm.slane %v1328, 0
  %v1331 = vperm.slane %v1328, 1
  %v1332 = vperm.slane %v1328, 2
  %v1368 = vunpack.c.l.b16 %v1295
  %v1369 = vunpack.c.h.b16 %v1295
  %v1370 = vunpack.c.l.b16 %v1296
  %v1371 = vunpack.c.l.b16 %v1297
  %v1372 = vunpack.c.h.b16 %v1297
  %v1373 = vunpack.c.l.b16 %v1298
  %v1374 = vunpack.c.l.b16 %v1299
  %v1375 = vunpack.c.h.b16 %v1299
  %v1376 = vunpack.c.l.b16 %v1300
  %v1377 = vunpack.c.l.b16 %v1301
  %v1378 = vunpack.c.h.b16 %v1301
  %v1379 = vunpack.c.l.b16 %v1302
  %v1380 = vunpack.c.l.b16 %v1303
  %v1381 = vunpack.c.h.b16 %v1303
  %v1382 = vunpack.c.l.b16 %v1304
  %v1383 = vunpack.c.l.b16 %v1305
  %v1384 = vunpack.c.h.b16 %v1305
  %v1385 = vunpack.c.l.b16 %v1306
  %v1386 = vunpack.c.l.b16 %v1307
  %v1387 = vunpack.c.h.b16 %v1307
  %v1388 = vunpack.c.l.b16 %v1308
  %v1389 = vunpack.c.l.b16 %v1309
  %v1390 = vunpack.c.h.b16 %v1309
  %v1391 = vunpack.c.l.b16 %v1310
  %v1392 = vunpack.c.l.b16 %v1311
  %v1393 = vunpack.c.h.b16 %v1311
  %v1394 = vunpack.c.l.b16 %v1312
  %v1395 = vunpack.c.l.b16 %v1313
  %v1396 = vunpack.c.h.b16 %v1313
  %v1397 = vunpack.c.l.b16 %v1314
  %v1398 = vunpack.c.l.b16 %v1315
  %v1399 = vunpack.c.h.b16 %v1315
  %v1400 = vunpack.c.l.b16 %v1316
  %v1401 = vunpack.c.l.b16 %v1317
  %v1402 = vunpack.c.h.b16 %v1317
  %v1403 = vunpack.c.l.b16 %v1318
  %v1404 = vunpack.c.l.b16 %v1319
  %v1405 = vunpack.c.h.b16 %v1319
  %v1406 = vunpack.c.l.b16 %v1320
  %v1407 = vunpack.c.l.b16 %v1321
  %v1408 = vunpack.c.h.b16 %v1321
  %v1409 = vunpack.c.l.b16 %v1322
  %v1410 = vunpack.c.l.b16 %v1323
  %v1411 = vunpack.c.h.b16 %v1323
  %v1412 = vunpack.c.l.b16 %v1324
  %v1413 = vunpack.c.l.b16 %v1325
  %v1414 = vunpack.c.h.b16 %v1325
  %v1415 = vunpack.c.l.b16 %v1326
  %v1416 = vpack.c.b16 %v1371, %v1368
  %v1417 = vpack.c.b16 %v1372, %v1369
  %v1418 = vpack.c.b16 %v1373, %v1370
  %v1419 = vpack.c.b16 %v1377, %v1374
  %v1420 = vpack.c.b16 %v1378, %v1375
  %v1421 = vpack.c.b16 %v1379, %v1376
  %v1422 = vpack.c.b16 %v1383, %v1380
  %v1423 = vpack.c.b16 %v1384, %v1381
  %v1424 = vpack.c.b16 %v1385, %v1382
  %v1425 = vpack.c.b16 %v1389, %v1386
  %v1426 = vpack.c.b16 %v1390, %v1387
  %v1427 = vpack.c.b16 %v1391, %v1388
  %v1428 = vpack.c.b16 %v1395, %v1392
  %v1429 = vpack.c.b16 %v1396, %v1393
  %v1430 = vpack.c.b16 %v1397, %v1394
  %v1431 = vpack.c.b16 %v1401, %v1398
  %v1432 = vpack.c.b16 %v1402, %v1399
  %v1433 = vpack.c.b16 %v1403, %v1400
  %v1434 = vpack.c.b16 %v1407, %v1404
  %v1435 = vpack.c.b16 %v1408, %v1405
  %v1436 = vpack.c.b16 %v1409, %v1406
  %v1437 = vpack.c.b16 %v1413, %v1410
  %v1438 = vpack.c.b16 %v1414, %v1411
  %v1439 = vpack.c.b16 %v1415, %v1412
  %1464 = vmatpush.bf16.msra.mxu0 %v1437
  %1465 = vmatpush.bf16.msra.mxu0 %v1434
  %1466 = vmatpush.bf16.msra.mxu0 %v1431
  %1467 = vmatpush.bf16.msra.mxu0 %v1428
  %1468 = vmatpush.bf16.msra.mxu0 %v1425
  %1469 = vmatpush.bf16.msra.mxu0 %v1422
  %1470 = vmatpush.bf16.msra.mxu0 %v1419
  %1471 = vmatpush.bf16.msra.mxu0 %v1416
  %1472 = vmatmul.bf16.gmra.mxu0 0
  %v1473 = vpop.f32.mrf.mxu0
  %v1474 = vadd.f32 %v1330, %v1473
  %v1475 = vpop.f32.mrf.mxu0
  %1476 = vdwg.mxu0
  %1477 = vmatpush.bf16.msra.mxu0 %v1438
  %1478 = vmatpush.bf16.msra.mxu0 %v1435
  %1479 = vmatpush.bf16.msra.mxu0 %v1432
  %1480 = vmatpush.bf16.msra.mxu0 %v1429
  %1481 = vmatpush.bf16.msra.mxu0 %v1426
  %1482 = vmatpush.bf16.msra.mxu0 %v1423
  %1483 = vmatpush.bf16.msra.mxu0 %v1420
  %1484 = vmatpush.bf16.msra.mxu0 %v1417
  %1485 = vmatmul.bf16.gmra.mxu0 0
  %v1486 = vpop.f32.mrf.mxu0
  %v1487 = vadd.f32 %v1331, %v1486
  %v1488 = vpop.f32.mrf.mxu0
  %1489 = vdwg.mxu0
  %1490 = vmatpush.bf16.msra.mxu0 %v1439
  %1491 = vmatpush.bf16.msra.mxu0 %v1436
  %1492 = vmatpush.bf16.msra.mxu0 %v1433
  %1493 = vmatpush.bf16.msra.mxu0 %v1430
  %1494 = vmatpush.bf16.msra.mxu0 %v1427
  %1495 = vmatpush.bf16.msra.mxu0 %v1424
  %1496 = vmatpush.bf16.msra.mxu0 %v1421
  %1497 = vmatpush.bf16.msra.mxu0 %v1418
  %1498 = vmatmul.bf16.gmra.mxu0 0
  %v1499 = vpop.f32.mrf.mxu0
  %v1500 = vadd.f32 %v1332, %v1499
  %v1501 = vpop.f32.mrf.mxu0
  %1502 = vdwg.mxu0
  %v1503 = vadd.f32 %v1265, %v1474
  %v1504 = vxor.u32 %v1503, 2147483648
  %v1505 = vmul.f32 %v1504, 1.442695
  %v1506 = vpow.pop %v1505
  %v1507 = vadd.f32 %v1506, 1.0
  %v1508 = vrcp.pop %v1507
  %v1509 = vmul.f32 %v1507, %v1508
  %v1510 = vsub.f32 1.0, %v1509
  %v1511 = vmul.f32 %v1508, %v1510
  %v1512 = vadd.f32 %v1508, %v1511
  %vm1513 = vweird.f32 %v1507
  %vm1514 = vweird.f32 %v1508
  %vm1515 = vmor %vm1513, %vm1514
  %v1516 = vsel %vm1515, %v1508, %v1512
  %v1517 = vand.u32 2147483647, %v1507
  %vm1518 = vcmp.eq.f32.partialorder %v1517, 8.507059e+37
  %v1519 = vand.u32 %v1507, 2147483648
  %v1520 = vor.u32 1.1754944e-38, %v1519
  %v1521 = vsel %vm1518, %v1520, %v1516
  %v1522 = vmul.f32 1.0, %v1521
  %v1523 = vadd.f32 %v1278, %v1487
  %v1524 = vxor.u32 %v1523, 2147483648
  %v1525 = vmul.f32 %v1524, 1.442695
  %v1526 = vpow.pop %v1525
  %v1527 = vadd.f32 %v1526, 1.0
  %v1528 = vrcp.pop %v1527
  %v1529 = vmul.f32 %v1527, %v1528
  %v1530 = vsub.f32 1.0, %v1529
  %v1531 = vmul.f32 %v1528, %v1530
  %v1532 = vadd.f32 %v1528, %v1531
  %vm1533 = vweird.f32 %v1527
  %vm1534 = vweird.f32 %v1528
  %vm1535 = vmor %vm1533, %vm1534
  %v1536 = vsel %vm1535, %v1528, %v1532
  %v1537 = vand.u32 2147483647, %v1527
  %vm1538 = vcmp.eq.f32.partialorder %v1537, 8.507059e+37
  %v1539 = vand.u32 %v1527, 2147483648
  %v1540 = vor.u32 1.1754944e-38, %v1539
  %v1541 = vsel %vm1538, %v1540, %v1536
  %v1542 = vmul.f32 1.0, %v1541
  %v1543 = vmul.f32 %v1522, %v1500
  %v1544 = vadd.f32 %v1291, %v1543
  %v1545 = vtanh.pop %v1544
  %v1546 = vsub.f32 1.0, %v1542
  %v1547 = vmul.f32 %v1546, %v1545
  %v1548 = vmul.f32 %v1542, 0.0
  %v1549 = vadd.f32 %v1547, %v1548
  %1550 = vst [vmem:[#allocation3] sm:$0xff] %v1549
  %s1551 = scalar_lea.vmem [#allocation2], 24
  %v1552 = vld [vmem:[%s1551] sm:$0xff]
  %v1553 = vld [vmem:[%s1551 + $0x8] sm:$0xff]
  %v1554 = vld [vmem:[%s1551 + $0x10] sm:$0xff]
  %v1555 = vld [vmem:[%s5] sm:$0xff]
  %v1556 = vld [vmem:[%s5 + $0x8] sm:$0xf]
  %v1557 = vld [vmem:[%s5 + $0xc] sm:$0xff]
  %v1558 = vld [vmem:[%s5 + $0x14] sm:$0xf]
  %v1559 = vld [vmem:[%s5 + $0x18] sm:$0xff]
  %v1560 = vld [vmem:[%s5 + $0x20] sm:$0xf]
  %v1561 = vld [vmem:[%s5 + $0x24] sm:$0xff]
  %v1562 = vld [vmem:[%s5 + $0x2c] sm:$0xf]
  %v1563 = vld [vmem:[%s5 + $0x30] sm:$0xff]
  %v1564 = vld [vmem:[%s5 + $0x38] sm:$0xf]
  %v1565 = vld [vmem:[%s5 + $0x3c] sm:$0xff]
  %v1566 = vld [vmem:[%s5 + $0x44] sm:$0xf]
  %v1567 = vld [vmem:[%s5 + $0x48] sm:$0xff]
  %v1568 = vld [vmem:[%s5 + $0x50] sm:$0xf]
  %v1569 = vld [vmem:[%s5 + $0x54] sm:$0xff]
  %v1570 = vld [vmem:[%s5 + $0x5c] sm:$0xf]
  %v1571 = vld [vmem:[%s5 + $0x60] sm:$0xff]
  %v1572 = vld [vmem:[%s5 + $0x68] sm:$0xf]
  %v1573 = vld [vmem:[%s5 + $0x6c] sm:$0xff]
  %v1574 = vld [vmem:[%s5 + $0x74] sm:$0xf]
  %v1575 = vld [vmem:[%s5 + $0x78] sm:$0xff]
  %v1576 = vld [vmem:[%s5 + $0x80] sm:$0xf]
  %v1577 = vld [vmem:[%s5 + $0x84] sm:$0xff]
  %v1578 = vld [vmem:[%s5 + $0x8c] sm:$0xf]
  %v1579 = vld [vmem:[%s5 + $0x90] sm:$0xff]
  %v1580 = vld [vmem:[%s5 + $0x98] sm:$0xf]
  %v1581 = vld [vmem:[%s5 + $0x9c] sm:$0xff]
  %v1582 = vld [vmem:[%s5 + $0xa4] sm:$0xf]
  %v1583 = vld [vmem:[%s5 + $0xa8] sm:$0xff]
  %v1584 = vld [vmem:[%s5 + $0xb0] sm:$0xf]
  %v1585 = vld [vmem:[%s5 + $0xb4] sm:$0xff]
  %v1586 = vld [vmem:[%s5 + $0xbc] sm:$0xf]
  %v1587 = vld [vmem:[%s7] sm:$0x7]
  %v1589 = vperm.slane %v1587, 0
  %v1590 = vperm.slane %v1587, 1
  %v1591 = vperm.slane %v1587, 2
  %v1627 = vunpack.c.l.b16 %v1555
  %v1628 = vunpack.c.h.b16 %v1555
  %v1629 = vunpack.c.l.b16 %v1556
  %v1630 = vunpack.c.l.b16 %v1557
  %v1631 = vunpack.c.h.b16 %v1557
  %v1632 = vunpack.c.l.b16 %v1558
  %v1633 = vunpack.c.l.b16 %v1559
  %v1634 = vunpack.c.h.b16 %v1559
  %v1635 = vunpack.c.l.b16 %v1560
  %v1636 = vunpack.c.l.b16 %v1561
  %v1637 = vunpack.c.h.b16 %v1561
  %v1638 = vunpack.c.l.b16 %v1562
  %v1639 = vunpack.c.l.b16 %v1563
  %v1640 = vunpack.c.h.b16 %v1563
  %v1641 = vunpack.c.l.b16 %v1564
  %v1642 = vunpack.c.l.b16 %v1565
  %v1643 = vunpack.c.h.b16 %v1565
  %v1644 = vunpack.c.l.b16 %v1566
  %v1645 = vunpack.c.l.b16 %v1567
  %v1646 = vunpack.c.h.b16 %v1567
  %v1647 = vunpack.c.l.b16 %v1568
  %v1648 = vunpack.c.l.b16 %v1569
  %v1649 = vunpack.c.h.b16 %v1569
  %v1650 = vunpack.c.l.b16 %v1570
  %v1651 = vunpack.c.l.b16 %v1571
  %v1652 = vunpack.c.h.b16 %v1571
  %v1653 = vunpack.c.l.b16 %v1572
  %v1654 = vunpack.c.l.b16 %v1573
  %v1655 = vunpack.c.h.b16 %v1573
  %v1656 = vunpack.c.l.b16 %v1574
  %v1657 = vunpack.c.l.b16 %v1575
  %v1658 = vunpack.c.h.b16 %v1575
  %v1659 = vunpack.c.l.b16 %v1576
  %v1660 = vunpack.c.l.b16 %v1577
  %v1661 = vunpack.c.h.b16 %v1577
  %v1662 = vunpack.c.l.b16 %v1578
  %v1663 = vunpack.c.l.b16 %v1579
  %v1664 = vunpack.c.h.b16 %v1579
  %v1665 = vunpack.c.l.b16 %v1580
  %v1666 = vunpack.c.l.b16 %v1581
  %v1667 = vunpack.c.h.b16 %v1581
  %v1668 = vunpack.c.l.b16 %v1582
  %v1669 = vunpack.c.l.b16 %v1583
  %v1670 = vunpack.c.h.b16 %v1583
  %v1671 = vunpack.c.l.b16 %v1584
  %v1672 = vunpack.c.l.b16 %v1585
  %v1673 = vunpack.c.h.b16 %v1585
  %v1674 = vunpack.c.l.b16 %v1586
  %v1675 = vpack.c.b16 %v1630, %v1627
  %v1676 = vpack.c.b16 %v1631, %v1628
  %v1677 = vpack.c.b16 %v1632, %v1629
  %v1678 = vpack.c.b16 %v1636, %v1633
  %v1679 = vpack.c.b16 %v1637, %v1634
  %v1680 = vpack.c.b16 %v1638, %v1635
  %v1681 = vpack.c.b16 %v1642, %v1639
  %v1682 = vpack.c.b16 %v1643, %v1640
  %v1683 = vpack.c.b16 %v1644, %v1641
  %v1684 = vpack.c.b16 %v1648, %v1645
  %v1685 = vpack.c.b16 %v1649, %v1646
  %v1686 = vpack.c.b16 %v1650, %v1647
  %v1687 = vpack.c.b16 %v1654, %v1651
  %v1688 = vpack.c.b16 %v1655, %v1652
  %v1689 = vpack.c.b16 %v1656, %v1653
  %v1690 = vpack.c.b16 %v1660, %v1657
  %v1691 = vpack.c.b16 %v1661, %v1658
  %v1692 = vpack.c.b16 %v1662, %v1659
  %v1693 = vpack.c.b16 %v1666, %v1663
  %v1694 = vpack.c.b16 %v1667, %v1664
  %v1695 = vpack.c.b16 %v1668, %v1665
  %v1696 = vpack.c.b16 %v1672, %v1669
  %v1697 = vpack.c.b16 %v1673, %v1670
  %v1698 = vpack.c.b16 %v1674, %v1671
  %1723 = vmatpush.bf16.msra.mxu0 %v1696
  %1724 = vmatpush.bf16.msra.mxu0 %v1693
  %1725 = vmatpush.bf16.msra.mxu0 %v1690
  %1726 = vmatpush.bf16.msra.mxu0 %v1687
  %1727 = vmatpush.bf16.msra.mxu0 %v1684
  %1728 = vmatpush.bf16.msra.mxu0 %v1681
  %1729 = vmatpush.bf16.msra.mxu0 %v1678
  %1730 = vmatpush.bf16.msra.mxu0 %v1675
  %1731 = vmatmul.bf16.gmra.mxu0 %v1084
  %v1732 = vpop.f32.mrf.mxu0
  %v1733 = vadd.f32 %v1589, %v1732
  %v1734 = vpop.f32.mrf.mxu0
  %1735 = vdwg.mxu0
  %1736 = vmatpush.bf16.msra.mxu0 %v1697
  %1737 = vmatpush.bf16.msra.mxu0 %v1694
  %1738 = vmatpush.bf16.msra.mxu0 %v1691
  %1739 = vmatpush.bf16.msra.mxu0 %v1688
  %1740 = vmatpush.bf16.msra.mxu0 %v1685
  %1741 = vmatpush.bf16.msra.mxu0 %v1682
  %1742 = vmatpush.bf16.msra.mxu0 %v1679
  %1743 = vmatpush.bf16.msra.mxu0 %v1676
  %1744 = vmatmul.bf16.gmra.mxu0 %v1084
  %v1745 = vpop.f32.mrf.mxu0
  %v1746 = vadd.f32 %v1590, %v1745
  %v1747 = vpop.f32.mrf.mxu0
  %1748 = vdwg.mxu0
  %1749 = vmatpush.bf16.msra.mxu0 %v1698
  %1750 = vmatpush.bf16.msra.mxu0 %v1695
  %1751 = vmatpush.bf16.msra.mxu0 %v1692
  %1752 = vmatpush.bf16.msra.mxu0 %v1689
  %1753 = vmatpush.bf16.msra.mxu0 %v1686
  %1754 = vmatpush.bf16.msra.mxu0 %v1683
  %1755 = vmatpush.bf16.msra.mxu0 %v1680
  %1756 = vmatpush.bf16.msra.mxu0 %v1677
  %1757 = vmatmul.bf16.gmra.mxu0 %v1084
  %v1758 = vpop.f32.mrf.mxu0
  %v1759 = vadd.f32 %v1591, %v1758
  %v1760 = vpop.f32.mrf.mxu0
  %1761 = vdwg.mxu0
  %v1762 = vadd.f32 %v1552, %v1733
  %v1763 = vxor.u32 %v1762, 2147483648
  %v1764 = vmul.f32 %v1763, 1.442695
  %v1765 = vpow.pop %v1764
  %v1766 = vadd.f32 %v1765, 1.0
  %v1767 = vrcp.pop %v1766
  %v1768 = vmul.f32 %v1766, %v1767
  %v1769 = vsub.f32 1.0, %v1768
  %v1770 = vmul.f32 %v1767, %v1769
  %v1771 = vadd.f32 %v1767, %v1770
  %vm1772 = vweird.f32 %v1766
  %vm1773 = vweird.f32 %v1767
  %vm1774 = vmor %vm1772, %vm1773
  %v1775 = vsel %vm1774, %v1767, %v1771
  %v1776 = vand.u32 2147483647, %v1766
  %vm1777 = vcmp.eq.f32.partialorder %v1776, 8.507059e+37
  %v1778 = vand.u32 %v1766, 2147483648
  %v1779 = vor.u32 1.1754944e-38, %v1778
  %v1780 = vsel %vm1777, %v1779, %v1775
  %v1781 = vmul.f32 1.0, %v1780
  %v1782 = vadd.f32 %v1553, %v1746
  %v1783 = vxor.u32 %v1782, 2147483648
  %v1784 = vmul.f32 %v1783, 1.442695
  %v1785 = vpow.pop %v1784
  %v1786 = vadd.f32 %v1785, 1.0
  %v1787 = vrcp.pop %v1786
  %v1788 = vmul.f32 %v1786, %v1787
  %v1789 = vsub.f32 1.0, %v1788
  %v1790 = vmul.f32 %v1787, %v1789
  %v1791 = vadd.f32 %v1787, %v1790
  %vm1792 = vweird.f32 %v1786
  %vm1793 = vweird.f32 %v1787
  %vm1794 = vmor %vm1792, %vm1793
  %v1795 = vsel %vm1794, %v1787, %v1791
  %v1796 = vand.u32 2147483647, %v1786
  %vm1797 = vcmp.eq.f32.partialorder %v1796, 8.507059e+37
  %v1798 = vand.u32 %v1786, 2147483648
  %v1799 = vor.u32 1.1754944e-38, %v1798
  %v1800 = vsel %vm1797, %v1799, %v1795
  %v1801 = vmul.f32 1.0, %v1800
  %v1802 = vmul.f32 %v1781, %v1759
  %v1803 = vadd.f32 %v1554, %v1802
  %v1804 = vtanh.pop %v1803
  %v1805 = vsub.f32 1.0, %v1801
  %v1806 = vmul.f32 %v1805, %v1804
  %v1807 = vmul.f32 %v1801, %v1083
  %v1808 = vadd.f32 %v1806, %v1807
  %v1809 = vpack.c.bf16 %v1808, %v1808
  %v1810 = vld [vmem:[%s1085] sm:$0xff]
  %v1811 = vld [vmem:[%s1085 + $0x8] sm:$0xf]
  %v1812 = vld [vmem:[%s1085 + $0xc] sm:$0xff]
  %v1813 = vld [vmem:[%s1085 + $0x14] sm:$0xf]
  %v1814 = vld [vmem:[%s1085 + $0x18] sm:$0xff]
  %v1815 = vld [vmem:[%s1085 + $0x20] sm:$0xf]
  %v1816 = vld [vmem:[%s1085 + $0x24] sm:$0xff]
  %v1817 = vld [vmem:[%s1085 + $0x2c] sm:$0xf]
  %v1818 = vld [vmem:[%s1085 + $0x30] sm:$0xff]
  %v1819 = vld [vmem:[%s1085 + $0x38] sm:$0xf]
  %v1820 = vld [vmem:[%s1085 + $0x3c] sm:$0xff]
  %v1821 = vld [vmem:[%s1085 + $0x44] sm:$0xf]
  %v1822 = vld [vmem:[%s1085 + $0x48] sm:$0xff]
  %v1823 = vld [vmem:[%s1085 + $0x50] sm:$0xf]
  %v1824 = vld [vmem:[%s1085 + $0x54] sm:$0xff]
  %v1825 = vld [vmem:[%s1085 + $0x5c] sm:$0xf]
  %v1826 = vld [vmem:[%s1085 + $0x60] sm:$0xff]
  %v1827 = vld [vmem:[%s1085 + $0x68] sm:$0xf]
  %v1828 = vld [vmem:[%s1085 + $0x6c] sm:$0xff]
  %v1829 = vld [vmem:[%s1085 + $0x74] sm:$0xf]
  %v1830 = vld [vmem:[%s1085 + $0x78] sm:$0xff]
  %v1831 = vld [vmem:[%s1085 + $0x80] sm:$0xf]
  %v1832 = vld [vmem:[%s1085 + $0x84] sm:$0xff]
  %v1833 = vld [vmem:[%s1085 + $0x8c] sm:$0xf]
  %v1834 = vld [vmem:[%s1085 + $0x90] sm:$0xff]
  %v1835 = vld [vmem:[%s1085 + $0x98] sm:$0xf]
  %v1836 = vld [vmem:[%s1085 + $0x9c] sm:$0xff]
  %v1837 = vld [vmem:[%s1085 + $0xa4] sm:$0xf]
  %v1838 = vld [vmem:[%s1085 + $0xa8] sm:$0xff]
  %v1839 = vld [vmem:[%s1085 + $0xb0] sm:$0xf]
  %v1840 = vld [vmem:[%s1085 + $0xb4] sm:$0xff]
  %v1841 = vld [vmem:[%s1085 + $0xbc] sm:$0xf]
  %v1842 = vld [vmem:[%s1118] sm:$0x7]
  %v1844 = vperm.slane %v1842, 0
  %v1845 = vperm.slane %v1842, 1
  %v1846 = vperm.slane %v1842, 2
  %v1882 = vunpack.c.l.b16 %v1810
  %v1883 = vunpack.c.h.b16 %v1810
  %v1884 = vunpack.c.l.b16 %v1811
  %v1885 = vunpack.c.l.b16 %v1812
  %v1886 = vunpack.c.h.b16 %v1812
  %v1887 = vunpack.c.l.b16 %v1813
  %v1888 = vunpack.c.l.b16 %v1814
  %v1889 = vunpack.c.h.b16 %v1814
  %v1890 = vunpack.c.l.b16 %v1815
  %v1891 = vunpack.c.l.b16 %v1816
  %v1892 = vunpack.c.h.b16 %v1816
  %v1893 = vunpack.c.l.b16 %v1817
  %v1894 = vunpack.c.l.b16 %v1818
  %v1895 = vunpack.c.h.b16 %v1818
  %v1896 = vunpack.c.l.b16 %v1819
  %v1897 = vunpack.c.l.b16 %v1820
  %v1898 = vunpack.c.h.b16 %v1820
  %v1899 = vunpack.c.l.b16 %v1821
  %v1900 = vunpack.c.l.b16 %v1822
  %v1901 = vunpack.c.h.b16 %v1822
  %v1902 = vunpack.c.l.b16 %v1823
  %v1903 = vunpack.c.l.b16 %v1824
  %v1904 = vunpack.c.h.b16 %v1824
  %v1905 = vunpack.c.l.b16 %v1825
  %v1906 = vunpack.c.l.b16 %v1826
  %v1907 = vunpack.c.h.b16 %v1826
  %v1908 = vunpack.c.l.b16 %v1827
  %v1909 = vunpack.c.l.b16 %v1828
  %v1910 = vunpack.c.h.b16 %v1828
  %v1911 = vunpack.c.l.b16 %v1829
  %v1912 = vunpack.c.l.b16 %v1830
  %v1913 = vunpack.c.h.b16 %v1830
  %v1914 = vunpack.c.l.b16 %v1831
  %v1915 = vunpack.c.l.b16 %v1832
  %v1916 = vunpack.c.h.b16 %v1832
  %v1917 = vunpack.c.l.b16 %v1833
  %v1918 = vunpack.c.l.b16 %v1834
  %v1919 = vunpack.c.h.b16 %v1834
  %v1920 = vunpack.c.l.b16 %v1835
  %v1921 = vunpack.c.l.b16 %v1836
  %v1922 = vunpack.c.h.b16 %v1836
  %v1923 = vunpack.c.l.b16 %v1837
  %v1924 = vunpack.c.l.b16 %v1838
  %v1925 = vunpack.c.h.b16 %v1838
  %v1926 = vunpack.c.l.b16 %v1839
  %v1927 = vunpack.c.l.b16 %v1840
  %v1928 = vunpack.c.h.b16 %v1840
  %v1929 = vunpack.c.l.b16 %v1841
  %v1930 = vpack.c.b16 %v1885, %v1882
  %v1931 = vpack.c.b16 %v1886, %v1883
  %v1932 = vpack.c.b16 %v1887, %v1884
  %v1933 = vpack.c.b16 %v1891, %v1888
  %v1934 = vpack.c.b16 %v1892, %v1889
  %v1935 = vpack.c.b16 %v1893, %v1890
  %v1936 = vpack.c.b16 %v1897, %v1894
  %v1937 = vpack.c.b16 %v1898, %v1895
  %v1938 = vpack.c.b16 %v1899, %v1896
  %v1939 = vpack.c.b16 %v1903, %v1900
  %v1940 = vpack.c.b16 %v1904, %v1901
  %v1941 = vpack.c.b16 %v1905, %v1902
  %v1942 = vpack.c.b16 %v1909, %v1906
  %v1943 = vpack.c.b16 %v1910, %v1907
  %v1944 = vpack.c.b16 %v1911, %v1908
  %v1945 = vpack.c.b16 %v1915, %v1912
  %v1946 = vpack.c.b16 %v1916, %v1913
  %v1947 = vpack.c.b16 %v1917, %v1914
  %v1948 = vpack.c.b16 %v1921, %v1918
  %v1949 = vpack.c.b16 %v1922, %v1919
  %v1950 = vpack.c.b16 %v1923, %v1920
  %v1951 = vpack.c.b16 %v1927, %v1924
  %v1952 = vpack.c.b16 %v1928, %v1925
  %v1953 = vpack.c.b16 %v1929, %v1926
  %1978 = vmatpush.bf16.msra.mxu0 %v1951
  %1979 = vmatpush.bf16.msra.mxu0 %v1948
  %1980 = vmatpush.bf16.msra.mxu0 %v1945
  %1981 = vmatpush.bf16.msra.mxu0 %v1942
  %1982 = vmatpush.bf16.msra.mxu0 %v1939
  %1983 = vmatpush.bf16.msra.mxu0 %v1936
  %1984 = vmatpush.bf16.msra.mxu0 %v1933
  %1985 = vmatpush.bf16.msra.mxu0 %v1930
  %1986 = vmatmul.bf16.gmra.mxu0 %v1809
  %v1987 = vpop.f32.mrf.mxu0
  %v1988 = vadd.f32 %v1844, %v1987
  %v1989 = vpop.f32.mrf.mxu0
  %1990 = vdwg.mxu0
  %1991 = vmatpush.bf16.msra.mxu0 %v1952
  %1992 = vmatpush.bf16.msra.mxu0 %v1949
  %1993 = vmatpush.bf16.msra.mxu0 %v1946
  %1994 = vmatpush.bf16.msra.mxu0 %v1943
  %1995 = vmatpush.bf16.msra.mxu0 %v1940
  %1996 = vmatpush.bf16.msra.mxu0 %v1937
  %1997 = vmatpush.bf16.msra.mxu0 %v1934
  %1998 = vmatpush.bf16.msra.mxu0 %v1931
  %1999 = vmatmul.bf16.gmra.mxu0 %v1809
  %v2000 = vpop.f32.mrf.mxu0
  %v2001 = vadd.f32 %v1845, %v2000
  %v2002 = vpop.f32.mrf.mxu0
  %2003 = vdwg.mxu0
  %2004 = vmatpush.bf16.msra.mxu0 %v1953
  %2005 = vmatpush.bf16.msra.mxu0 %v1950
  %2006 = vmatpush.bf16.msra.mxu0 %v1947
  %2007 = vmatpush.bf16.msra.mxu0 %v1944
  %2008 = vmatpush.bf16.msra.mxu0 %v1941
  %2009 = vmatpush.bf16.msra.mxu0 %v1938
  %2010 = vmatpush.bf16.msra.mxu0 %v1935
  %2011 = vmatpush.bf16.msra.mxu0 %v1932
  %2012 = vmatmul.bf16.gmra.mxu0 %v1809
  %v2013 = vpop.f32.mrf.mxu0
  %v2014 = vadd.f32 %v1846, %v2013
  %v2015 = vpop.f32.mrf.mxu0
  %2016 = vdwg.mxu0
  %v2017 = vld [vmem:[%s1294] sm:$0xff]
  %v2018 = vld [vmem:[%s1294 + $0x8] sm:$0xf]
  %v2019 = vld [vmem:[%s1294 + $0xc] sm:$0xff]
  %v2020 = vld [vmem:[%s1294 + $0x14] sm:$0xf]
  %v2021 = vld [vmem:[%s1294 + $0x18] sm:$0xff]
  %v2022 = vld [vmem:[%s1294 + $0x20] sm:$0xf]
  %v2023 = vld [vmem:[%s1294 + $0x24] sm:$0xff]
  %v2024 = vld [vmem:[%s1294 + $0x2c] sm:$0xf]
  %v2025 = vld [vmem:[%s1294 + $0x30] sm:$0xff]
  %v2026 = vld [vmem:[%s1294 + $0x38] sm:$0xf]
  %v2027 = vld [vmem:[%s1294 + $0x3c] sm:$0xff]
  %v2028 = vld [vmem:[%s1294 + $0x44] sm:$0xf]
  %v2029 = vld [vmem:[%s1294 + $0x48] sm:$0xff]
  %v2030 = vld [vmem:[%s1294 + $0x50] sm:$0xf]
  %v2031 = vld [vmem:[%s1294 + $0x54] sm:$0xff]
  %v2032 = vld [vmem:[%s1294 + $0x5c] sm:$0xf]
  %v2033 = vld [vmem:[%s1294 + $0x60] sm:$0xff]
  %v2034 = vld [vmem:[%s1294 + $0x68] sm:$0xf]
  %v2035 = vld [vmem:[%s1294 + $0x6c] sm:$0xff]
  %v2036 = vld [vmem:[%s1294 + $0x74] sm:$0xf]
  %v2037 = vld [vmem:[%s1294 + $0x78] sm:$0xff]
  %v2038 = vld [vmem:[%s1294 + $0x80] sm:$0xf]
  %v2039 = vld [vmem:[%s1294 + $0x84] sm:$0xff]
  %v2040 = vld [vmem:[%s1294 + $0x8c] sm:$0xf]
  %v2041 = vld [vmem:[%s1294 + $0x90] sm:$0xff]
  %v2042 = vld [vmem:[%s1294 + $0x98] sm:$0xf]
  %v2043 = vld [vmem:[%s1294 + $0x9c] sm:$0xff]
  %v2044 = vld [vmem:[%s1294 + $0xa4] sm:$0xf]
  %v2045 = vld [vmem:[%s1294 + $0xa8] sm:$0xff]
  %v2046 = vld [vmem:[%s1294 + $0xb0] sm:$0xf]
  %v2047 = vld [vmem:[%s1294 + $0xb4] sm:$0xff]
  %v2048 = vld [vmem:[%s1294 + $0xbc] sm:$0xf]
  %v2049 = vld [vmem:[%s1327] sm:$0x7]
  %v2050 = vpack.c.bf16 %v1549, %v1549
  %v2052 = vperm.slane %v2049, 0
  %v2053 = vperm.slane %v2049, 1
  %v2054 = vperm.slane %v2049, 2
  %v2090 = vunpack.c.l.b16 %v2017
  %v2091 = vunpack.c.h.b16 %v2017
  %v2092 = vunpack.c.l.b16 %v2018
  %v2093 = vunpack.c.l.b16 %v2019
  %v2094 = vunpack.c.h.b16 %v2019
  %v2095 = vunpack.c.l.b16 %v2020
  %v2096 = vunpack.c.l.b16 %v2021
  %v2097 = vunpack.c.h.b16 %v2021
  %v2098 = vunpack.c.l.b16 %v2022
  %v2099 = vunpack.c.l.b16 %v2023
  %v2100 = vunpack.c.h.b16 %v2023
  %v2101 = vunpack.c.l.b16 %v2024
  %v2102 = vunpack.c.l.b16 %v2025
  %v2103 = vunpack.c.h.b16 %v2025
  %v2104 = vunpack.c.l.b16 %v2026
  %v2105 = vunpack.c.l.b16 %v2027
  %v2106 = vunpack.c.h.b16 %v2027
  %v2107 = vunpack.c.l.b16 %v2028
  %v2108 = vunpack.c.l.b16 %v2029
  %v2109 = vunpack.c.h.b16 %v2029
  %v2110 = vunpack.c.l.b16 %v2030
  %v2111 = vunpack.c.l.b16 %v2031
  %v2112 = vunpack.c.h.b16 %v2031
  %v2113 = vunpack.c.l.b16 %v2032
  %v2114 = vunpack.c.l.b16 %v2033
  %v2115 = vunpack.c.h.b16 %v2033
  %v2116 = vunpack.c.l.b16 %v2034
  %v2117 = vunpack.c.l.b16 %v2035
  %v2118 = vunpack.c.h.b16 %v2035
  %v2119 = vunpack.c.l.b16 %v2036
  %v2120 = vunpack.c.l.b16 %v2037
  %v2121 = vunpack.c.h.b16 %v2037
  %v2122 = vunpack.c.l.b16 %v2038
  %v2123 = vunpack.c.l.b16 %v2039
  %v2124 = vunpack.c.h.b16 %v2039
  %v2125 = vunpack.c.l.b16 %v2040
  %v2126 = vunpack.c.l.b16 %v2041
  %v2127 = vunpack.c.h.b16 %v2041
  %v2128 = vunpack.c.l.b16 %v2042
  %v2129 = vunpack.c.l.b16 %v2043
  %v2130 = vunpack.c.h.b16 %v2043
  %v2131 = vunpack.c.l.b16 %v2044
  %v2132 = vunpack.c.l.b16 %v2045
  %v2133 = vunpack.c.h.b16 %v2045
  %v2134 = vunpack.c.l.b16 %v2046
  %v2135 = vunpack.c.l.b16 %v2047
  %v2136 = vunpack.c.h.b16 %v2047
  %v2137 = vunpack.c.l.b16 %v2048
  %v2138 = vpack.c.b16 %v2093, %v2090
  %v2139 = vpack.c.b16 %v2094, %v2091
  %v2140 = vpack.c.b16 %v2095, %v2092
  %v2141 = vpack.c.b16 %v2099, %v2096
  %v2142 = vpack.c.b16 %v2100, %v2097
  %v2143 = vpack.c.b16 %v2101, %v2098
  %v2144 = vpack.c.b16 %v2105, %v2102
  %v2145 = vpack.c.b16 %v2106, %v2103
  %v2146 = vpack.c.b16 %v2107, %v2104
  %v2147 = vpack.c.b16 %v2111, %v2108
  %v2148 = vpack.c.b16 %v2112, %v2109
  %v2149 = vpack.c.b16 %v2113, %v2110
  %v2150 = vpack.c.b16 %v2117, %v2114
  %v2151 = vpack.c.b16 %v2118, %v2115
  %v2152 = vpack.c.b16 %v2119, %v2116
  %v2153 = vpack.c.b16 %v2123, %v2120
  %v2154 = vpack.c.b16 %v2124, %v2121
  %v2155 = vpack.c.b16 %v2125, %v2122
  %v2156 = vpack.c.b16 %v2129, %v2126
  %v2157 = vpack.c.b16 %v2130, %v2127
  %v2158 = vpack.c.b16 %v2131, %v2128
  %v2159 = vpack.c.b16 %v2135, %v2132
  %v2160 = vpack.c.b16 %v2136, %v2133
  %v2161 = vpack.c.b16 %v2137, %v2134
  %2186 = vmatpush.bf16.msra.mxu0 %v2159
  %2187 = vmatpush.bf16.msra.mxu0 %v2156
  %2188 = vmatpush.bf16.msra.mxu0 %v2153
  %2189 = vmatpush.bf16.msra.mxu0 %v2150
  %2190 = vmatpush.bf16.msra.mxu0 %v2147
  %2191 = vmatpush.bf16.msra.mxu0 %v2144
  %2192 = vmatpush.bf16.msra.mxu0 %v2141
  %2193 = vmatpush.bf16.msra.mxu0 %v2138
  %2194 = vmatmul.bf16.gmra.mxu0 %v2050
  %v2195 = vpop.f32.mrf.mxu0
  %v2196 = vadd.f32 %v2052, %v2195
  %v2197 = vpop.f32.mrf.mxu0
  %2198 = vdwg.mxu0
  %2199 = vmatpush.bf16.msra.mxu0 %v2160
  %2200 = vmatpush.bf16.msra.mxu0 %v2157
  %2201 = vmatpush.bf16.msra.mxu0 %v2154
  %2202 = vmatpush.bf16.msra.mxu0 %v2151
  %2203 = vmatpush.bf16.msra.mxu0 %v2148
  %2204 = vmatpush.bf16.msra.mxu0 %v2145
  %2205 = vmatpush.bf16.msra.mxu0 %v2142
  %2206 = vmatpush.bf16.msra.mxu0 %v2139
  %2207 = vmatmul.bf16.gmra.mxu0 %v2050
  %v2208 = vpop.f32.mrf.mxu0
  %v2209 = vadd.f32 %v2053, %v2208
  %v2210 = vpop.f32.mrf.mxu0
  %2211 = vdwg.mxu0
  %2212 = vmatpush.bf16.msra.mxu0 %v2161
  %2213 = vmatpush.bf16.msra.mxu0 %v2158
  %2214 = vmatpush.bf16.msra.mxu0 %v2155
  %2215 = vmatpush.bf16.msra.mxu0 %v2152
  %2216 = vmatpush.bf16.msra.mxu0 %v2149
  %2217 = vmatpush.bf16.msra.mxu0 %v2146
  %2218 = vmatpush.bf16.msra.mxu0 %v2143
  %2219 = vmatpush.bf16.msra.mxu0 %v2140
  %2220 = vmatmul.bf16.gmra.mxu0 %v2050
  %v2221 = vpop.f32.mrf.mxu0
  %v2222 = vadd.f32 %v2054, %v2221
  %v2223 = vpop.f32.mrf.mxu0
  %2224 = vdwg.mxu0
  %v2225 = vadd.f32 %v1988, %v2196
  %v2226 = vxor.u32 %v2225, 2147483648
  %v2227 = vmul.f32 %v2226, 1.442695
  %v2228 = vpow.pop %v2227
  %v2229 = vadd.f32 %v2228, 1.0
  %v2230 = vrcp.pop %v2229
  %v2231 = vmul.f32 %v2229, %v2230
  %v2232 = vsub.f32 1.0, %v2231
  %v2233 = vmul.f32 %v2230, %v2232
  %v2234 = vadd.f32 %v2230, %v2233
  %vm2235 = vweird.f32 %v2229
  %vm2236 = vweird.f32 %v2230
  %vm2237 = vmor %vm2235, %vm2236
  %v2238 = vsel %vm2237, %v2230, %v2234
  %v2239 = vand.u32 2147483647, %v2229
  %vm2240 = vcmp.eq.f32.partialorder %v2239, 8.507059e+37
  %v2241 = vand.u32 %v2229, 2147483648
  %v2242 = vor.u32 1.1754944e-38, %v2241
  %v2243 = vsel %vm2240, %v2242, %v2238
  %v2244 = vmul.f32 1.0, %v2243
  %v2245 = vadd.f32 %v2001, %v2209
  %v2246 = vxor.u32 %v2245, 2147483648
  %v2247 = vmul.f32 %v2246, 1.442695
  %v2248 = vpow.pop %v2247
  %v2249 = vadd.f32 %v2248, 1.0
  %v2250 = vrcp.pop %v2249
  %v2251 = vmul.f32 %v2249, %v2250
  %v2252 = vsub.f32 1.0, %v2251
  %v2253 = vmul.f32 %v2250, %v2252
  %v2254 = vadd.f32 %v2250, %v2253
  %vm2255 = vweird.f32 %v2249
  %vm2256 = vweird.f32 %v2250
  %vm2257 = vmor %vm2255, %vm2256
  %v2258 = vsel %vm2257, %v2250, %v2254
  %v2259 = vand.u32 2147483647, %v2249
  %vm2260 = vcmp.eq.f32.partialorder %v2259, 8.507059e+37
  %v2261 = vand.u32 %v2249, 2147483648
  %v2262 = vor.u32 1.1754944e-38, %v2261
  %v2263 = vsel %vm2260, %v2262, %v2258
  %v2264 = vmul.f32 1.0, %v2263
  %v2265 = vmul.f32 %v2244, %v2222
  %v2266 = vadd.f32 %v2014, %v2265
  %v2267 = vtanh.pop %v2266
  %v2268 = vsub.f32 1.0, %v2264
  %v2269 = vmul.f32 %v2268, %v2267
  %v2270 = vmul.f32 %v2264, %v1549
  %v2271 = vadd.f32 %v2269, %v2270
  %s2272 = scalar_lea.vmem [#allocation3], 8
  %2273 = vst [vmem:[%s2272] sm:$0xff] %v2271
  %s2274 = scalar_lea.vmem [#allocation2], 48
  %v2275 = vld [vmem:[%s2274] sm:$0xff]
  %v2276 = vld [vmem:[%s2274 + $0x8] sm:$0xff]
  %v2277 = vld [vmem:[%s2274 + $0x10] sm:$0xff]
  %v2278 = vld [vmem:[%s5] sm:$0xff]
  %v2279 = vld [vmem:[%s5 + $0x8] sm:$0xf]
  %v2280 = vld [vmem:[%s5 + $0xc] sm:$0xff]
  %v2281 = vld [vmem:[%s5 + $0x14] sm:$0xf]
  %v2282 = vld [vmem:[%s5 + $0x18] sm:$0xff]
  %v2283 = vld [vmem:[%s5 + $0x20] sm:$0xf]
  %v2284 = vld [vmem:[%s5 + $0x24] sm:$0xff]
  %v2285 = vld [vmem:[%s5 + $0x2c] sm:$0xf]
  %v2286 = vld [vmem:[%s5 + $0x30] sm:$0xff]
  %v2287 = vld [vmem:[%s5 + $0x38] sm:$0xf]
  %v2288 = vld [vmem:[%s5 + $0x3c] sm:$0xff]
  %v2289 = vld [vmem:[%s5 + $0x44] sm:$0xf]
  %v2290 = vld [vmem:[%s5 + $0x48] sm:$0xff]
  %v2291 = vld [vmem:[%s5 + $0x50] sm:$0xf]
  %v2292 = vld [vmem:[%s5 + $0x54] sm:$0xff]
  %v2293 = vld [vmem:[%s5 + $0x5c] sm:$0xf]
  %v2294 = vld [vmem:[%s5 + $0x60] sm:$0xff]
  %v2295 = vld [vmem:[%s5 + $0x68] sm:$0xf]
  %v2296 = vld [vmem:[%s5 + $0x6c] sm:$0xff]
  %v2297 = vld [vmem:[%s5 + $0x74] sm:$0xf]
  %v2298 = vld [vmem:[%s5 + $0x78] sm:$0xff]
  %v2299 = vld [vmem:[%s5 + $0x80] sm:$0xf]
  %v2300 = vld [vmem:[%s5 + $0x84] sm:$0xff]
  %v2301 = vld [vmem:[%s5 + $0x8c] sm:$0xf]
  %v2302 = vld [vmem:[%s5 + $0x90] sm:$0xff]
  %v2303 = vld [vmem:[%s5 + $0x98] sm:$0xf]
  %v2304 = vld [vmem:[%s5 + $0x9c] sm:$0xff]
  %v2305 = vld [vmem:[%s5 + $0xa4] sm:$0xf]
  %v2306 = vld [vmem:[%s5 + $0xa8] sm:$0xff]
  %v2307 = vld [vmem:[%s5 + $0xb0] sm:$0xf]
  %v2308 = vld [vmem:[%s5 + $0xb4] sm:$0xff]
  %v2309 = vld [vmem:[%s5 + $0xbc] sm:$0xf]
  %v2310 = vld [vmem:[%s7] sm:$0x7]
  %v2312 = vperm.slane %v2310, 0
  %v2313 = vperm.slane %v2310, 1
  %v2314 = vperm.slane %v2310, 2
  %v2350 = vunpack.c.l.b16 %v2278
  %v2351 = vunpack.c.h.b16 %v2278
  %v2352 = vunpack.c.l.b16 %v2279
  %v2353 = vunpack.c.l.b16 %v2280
  %v2354 = vunpack.c.h.b16 %v2280
  %v2355 = vunpack.c.l.b16 %v2281
  %v2356 = vunpack.c.l.b16 %v2282
  %v2357 = vunpack.c.h.b16 %v2282
  %v2358 = vunpack.c.l.b16 %v2283
  %v2359 = vunpack.c.l.b16 %v2284
  %v2360 = vunpack.c.h.b16 %v2284
  %v2361 = vunpack.c.l.b16 %v2285
  %v2362 = vunpack.c.l.b16 %v2286
  %v2363 = vunpack.c.h.b16 %v2286
  %v2364 = vunpack.c.l.b16 %v2287
  %v2365 = vunpack.c.l.b16 %v2288
  %v2366 = vunpack.c.h.b16 %v2288
  %v2367 = vunpack.c.l.b16 %v2289
  %v2368 = vunpack.c.l.b16 %v2290
  %v2369 = vunpack.c.h.b16 %v2290
  %v2370 = vunpack.c.l.b16 %v2291
  %v2371 = vunpack.c.l.b16 %v2292
  %v2372 = vunpack.c.h.b16 %v2292
  %v2373 = vunpack.c.l.b16 %v2293
  %v2374 = vunpack.c.l.b16 %v2294
  %v2375 = vunpack.c.h.b16 %v2294
  %v2376 = vunpack.c.l.b16 %v2295
  %v2377 = vunpack.c.l.b16 %v2296
  %v2378 = vunpack.c.h.b16 %v2296
  %v2379 = vunpack.c.l.b16 %v2297
  %v2380 = vunpack.c.l.b16 %v2298
  %v2381 = vunpack.c.h.b16 %v2298
  %v2382 = vunpack.c.l.b16 %v2299
  %v2383 = vunpack.c.l.b16 %v2300
  %v2384 = vunpack.c.h.b16 %v2300
  %v2385 = vunpack.c.l.b16 %v2301
  %v2386 = vunpack.c.l.b16 %v2302
  %v2387 = vunpack.c.h.b16 %v2302
  %v2388 = vunpack.c.l.b16 %v2303
  %v2389 = vunpack.c.l.b16 %v2304
  %v2390 = vunpack.c.h.b16 %v2304
  %v2391 = vunpack.c.l.b16 %v2305
  %v2392 = vunpack.c.l.b16 %v2306
  %v2393 = vunpack.c.h.b16 %v2306
  %v2394 = vunpack.c.l.b16 %v2307
  %v2395 = vunpack.c.l.b16 %v2308
  %v2396 = vunpack.c.h.b16 %v2308
  %v2397 = vunpack.c.l.b16 %v2309
  %v2398 = vpack.c.b16 %v2353, %v2350
  %v2399 = vpack.c.b16 %v2354, %v2351
  %v2400 = vpack.c.b16 %v2355, %v2352
  %v2401 = vpack.c.b16 %v2359, %v2356
  %v2402 = vpack.c.b16 %v2360, %v2357
  %v2403 = vpack.c.b16 %v2361, %v2358
  %v2404 = vpack.c.b16 %v2365, %v2362
  %v2405 = vpack.c.b16 %v2366, %v2363
  %v2406 = vpack.c.b16 %v2367, %v2364
  %v2407 = vpack.c.b16 %v2371, %v2368
  %v2408 = vpack.c.b16 %v2372, %v2369
  %v2409 = vpack.c.b16 %v2373, %v2370
  %v2410 = vpack.c.b16 %v2377, %v2374
  %v2411 = vpack.c.b16 %v2378, %v2375
  %v2412 = vpack.c.b16 %v2379, %v2376
  %v2413 = vpack.c.b16 %v2383, %v2380
  %v2414 = vpack.c.b16 %v2384, %v2381
  %v2415 = vpack.c.b16 %v2385, %v2382
  %v2416 = vpack.c.b16 %v2389, %v2386
  %v2417 = vpack.c.b16 %v2390, %v2387
  %v2418 = vpack.c.b16 %v2391, %v2388
  %v2419 = vpack.c.b16 %v2395, %v2392
  %v2420 = vpack.c.b16 %v2396, %v2393
  %v2421 = vpack.c.b16 %v2397, %v2394
  %2446 = vmatpush.bf16.msra.mxu0 %v2419
  %2447 = vmatpush.bf16.msra.mxu0 %v2416
  %2448 = vmatpush.bf16.msra.mxu0 %v2413
  %2449 = vmatpush.bf16.msra.mxu0 %v2410
  %2450 = vmatpush.bf16.msra.mxu0 %v2407
  %2451 = vmatpush.bf16.msra.mxu0 %v2404
  %2452 = vmatpush.bf16.msra.mxu0 %v2401
  %2453 = vmatpush.bf16.msra.mxu0 %v2398
  %2454 = vmatmul.bf16.gmra.mxu0 %v1809
  %v2455 = vpop.f32.mrf.mxu0
  %v2456 = vadd.f32 %v2312, %v2455
  %v2457 = vpop.f32.mrf.mxu0
  %2458 = vdwg.mxu0
  %2459 = vmatpush.bf16.msra.mxu0 %v2420
  %2460 = vmatpush.bf16.msra.mxu0 %v2417
  %2461 = vmatpush.bf16.msra.mxu0 %v2414
  %2462 = vmatpush.bf16.msra.mxu0 %v2411
  %2463 = vmatpush.bf16.msra.mxu0 %v2408
  %2464 = vmatpush.bf16.msra.mxu0 %v2405
  %2465 = vmatpush.bf16.msra.mxu0 %v2402
  %2466 = vmatpush.bf16.msra.mxu0 %v2399
  %2467 = vmatmul.bf16.gmra.mxu0 %v1809
  %v2468 = vpop.f32.mrf.mxu0
  %v2469 = vadd.f32 %v2313, %v2468
  %v2470 = vpop.f32.mrf.mxu0
  %2471 = vdwg.mxu0
  %2472 = vmatpush.bf16.msra.mxu0 %v2421
  %2473 = vmatpush.bf16.msra.mxu0 %v2418
  %2474 = vmatpush.bf16.msra.mxu0 %v2415
  %2475 = vmatpush.bf16.msra.mxu0 %v2412
  %2476 = vmatpush.bf16.msra.mxu0 %v2409
  %2477 = vmatpush.bf16.msra.mxu0 %v2406
  %2478 = vmatpush.bf16.msra.mxu0 %v2403
  %2479 = vmatpush.bf16.msra.mxu0 %v2400
  %2480 = vmatmul.bf16.gmra.mxu0 %v1809
  %v2481 = vpop.f32.mrf.mxu0
  %v2482 = vadd.f32 %v2314, %v2481
  %v2483 = vpop.f32.mrf.mxu0
  %2484 = vdwg.mxu0
  %v2485 = vadd.f32 %v2275, %v2456
  %v2486 = vxor.u32 %v2485, 2147483648
  %v2487 = vmul.f32 %v2486, 1.442695
  %v2488 = vpow.pop %v2487
  %v2489 = vadd.f32 %v2488, 1.0
  %v2490 = vrcp.pop %v2489
  %v2491 = vmul.f32 %v2489, %v2490
  %v2492 = vsub.f32 1.0, %v2491
  %v2493 = vmul.f32 %v2490, %v2492
  %v2494 = vadd.f32 %v2490, %v2493
  %vm2495 = vweird.f32 %v2489
  %vm2496 = vweird.f32 %v2490
  %vm2497 = vmor %vm2495, %vm2496
  %v2498 = vsel %vm2497, %v2490, %v2494
  %v2499 = vand.u32 2147483647, %v2489
  %vm2500 = vcmp.eq.f32.partialorder %v2499, 8.507059e+37
  %v2501 = vand.u32 %v2489, 2147483648
  %v2502 = vor.u32 1.1754944e-38, %v2501
  %v2503 = vsel %vm2500, %v2502, %v2498
  %v2504 = vmul.f32 1.0, %v2503
  %v2505 = vadd.f32 %v2276, %v2469
  %v2506 = vxor.u32 %v2505, 2147483648
  %v2507 = vmul.f32 %v2506, 1.442695
  %v2508 = vpow.pop %v2507
  %v2509 = vadd.f32 %v2508, 1.0
  %v2510 = vrcp.pop %v2509
  %v2511 = vmul.f32 %v2509, %v2510
  %v2512 = vsub.f32 1.0, %v2511
  %v2513 = vmul.f32 %v2510, %v2512
  %v2514 = vadd.f32 %v2510, %v2513
  %vm2515 = vweird.f32 %v2509
  %vm2516 = vweird.f32 %v2510
  %vm2517 = vmor %vm2515, %vm2516
  %v2518 = vsel %vm2517, %v2510, %v2514
  %v2519 = vand.u32 2147483647, %v2509
  %vm2520 = vcmp.eq.f32.partialorder %v2519, 8.507059e+37
  %v2521 = vand.u32 %v2509, 2147483648
  %v2522 = vor.u32 1.1754944e-38, %v2521
  %v2523 = vsel %vm2520, %v2522, %v2518
  %v2524 = vmul.f32 1.0, %v2523
  %v2525 = vmul.f32 %v2504, %v2482
  %v2526 = vadd.f32 %v2277, %v2525
  %v2527 = vtanh.pop %v2526
  %v2528 = vsub.f32 1.0, %v2524
  %v2529 = vmul.f32 %v2528, %v2527
  %v2530 = vmul.f32 %v2524, %v1808
  %v2531 = vadd.f32 %v2529, %v2530
  %v2532 = vpack.c.bf16 %v2531, %v2531
  %v2533 = vld [vmem:[%s1085] sm:$0xff]
  %v2534 = vld [vmem:[%s1085 + $0x8] sm:$0xf]
  %v2535 = vld [vmem:[%s1085 + $0xc] sm:$0xff]
  %v2536 = vld [vmem:[%s1085 + $0x14] sm:$0xf]
  %v2537 = vld [vmem:[%s1085 + $0x18] sm:$0xff]
  %v2538 = vld [vmem:[%s1085 + $0x20] sm:$0xf]
  %v2539 = vld [vmem:[%s1085 + $0x24] sm:$0xff]
  %v2540 = vld [vmem:[%s1085 + $0x2c] sm:$0xf]
  %v2541 = vld [vmem:[%s1085 + $0x30] sm:$0xff]
  %v2542 = vld [vmem:[%s1085 + $0x38] sm:$0xf]
  %v2543 = vld [vmem:[%s1085 + $0x3c] sm:$0xff]
  %v2544 = vld [vmem:[%s1085 + $0x44] sm:$0xf]
  %v2545 = vld [vmem:[%s1085 + $0x48] sm:$0xff]
  %v2546 = vld [vmem:[%s1085 + $0x50] sm:$0xf]
  %v2547 = vld [vmem:[%s1085 + $0x54] sm:$0xff]
  %v2548 = vld [vmem:[%s1085 + $0x5c] sm:$0xf]
  %v2549 = vld [vmem:[%s1085 + $0x60] sm:$0xff]
  %v2550 = vld [vmem:[%s1085 + $0x68] sm:$0xf]
  %v2551 = vld [vmem:[%s1085 + $0x6c] sm:$0xff]
  %v2552 = vld [vmem:[%s1085 + $0x74] sm:$0xf]
  %v2553 = vld [vmem:[%s1085 + $0x78] sm:$0xff]
  %v2554 = vld [vmem:[%s1085 + $0x80] sm:$0xf]
  %v2555 = vld [vmem:[%s1085 + $0x84] sm:$0xff]
  %v2556 = vld [vmem:[%s1085 + $0x8c] sm:$0xf]
  %v2557 = vld [vmem:[%s1085 + $0x90] sm:$0xff]
  %v2558 = vld [vmem:[%s1085 + $0x98] sm:$0xf]
  %v2559 = vld [vmem:[%s1085 + $0x9c] sm:$0xff]
  %v2560 = vld [vmem:[%s1085 + $0xa4] sm:$0xf]
  %v2561 = vld [vmem:[%s1085 + $0xa8] sm:$0xff]
  %v2562 = vld [vmem:[%s1085 + $0xb0] sm:$0xf]
  %v2563 = vld [vmem:[%s1085 + $0xb4] sm:$0xff]
  %v2564 = vld [vmem:[%s1085 + $0xbc] sm:$0xf]
  %v2565 = vld [vmem:[%s1118] sm:$0x7]
  %v2567 = vperm.slane %v2565, 0
  %v2568 = vperm.slane %v2565, 1
  %v2569 = vperm.slane %v2565, 2
  %v2605 = vunpack.c.l.b16 %v2533
  %v2606 = vunpack.c.h.b16 %v2533
  %v2607 = vunpack.c.l.b16 %v2534
  %v2608 = vunpack.c.l.b16 %v2535
  %v2609 = vunpack.c.h.b16 %v2535
  %v2610 = vunpack.c.l.b16 %v2536
  %v2611 = vunpack.c.l.b16 %v2537
  %v2612 = vunpack.c.h.b16 %v2537
  %v2613 = vunpack.c.l.b16 %v2538
  %v2614 = vunpack.c.l.b16 %v2539
  %v2615 = vunpack.c.h.b16 %v2539
  %v2616 = vunpack.c.l.b16 %v2540
  %v2617 = vunpack.c.l.b16 %v2541
  %v2618 = vunpack.c.h.b16 %v2541
  %v2619 = vunpack.c.l.b16 %v2542
  %v2620 = vunpack.c.l.b16 %v2543
  %v2621 = vunpack.c.h.b16 %v2543
  %v2622 = vunpack.c.l.b16 %v2544
  %v2623 = vunpack.c.l.b16 %v2545
  %v2624 = vunpack.c.h.b16 %v2545
  %v2625 = vunpack.c.l.b16 %v2546
  %v2626 = vunpack.c.l.b16 %v2547
  %v2627 = vunpack.c.h.b16 %v2547
  %v2628 = vunpack.c.l.b16 %v2548
  %v2629 = vunpack.c.l.b16 %v2549
  %v2630 = vunpack.c.h.b16 %v2549
  %v2631 = vunpack.c.l.b16 %v2550
  %v2632 = vunpack.c.l.b16 %v2551
  %v2633 = vunpack.c.h.b16 %v2551
  %v2634 = vunpack.c.l.b16 %v2552
  %v2635 = vunpack.c.l.b16 %v2553
  %v2636 = vunpack.c.h.b16 %v2553
  %v2637 = vunpack.c.l.b16 %v2554
  %v2638 = vunpack.c.l.b16 %v2555
  %v2639 = vunpack.c.h.b16 %v2555
  %v2640 = vunpack.c.l.b16 %v2556
  %v2641 = vunpack.c.l.b16 %v2557
  %v2642 = vunpack.c.h.b16 %v2557
  %v2643 = vunpack.c.l.b16 %v2558
  %v2644 = vunpack.c.l.b16 %v2559
  %v2645 = vunpack.c.h.b16 %v2559
  %v2646 = vunpack.c.l.b16 %v2560
  %v2647 = vunpack.c.l.b16 %v2561
  %v2648 = vunpack.c.h.b16 %v2561
  %v2649 = vunpack.c.l.b16 %v2562
  %v2650 = vunpack.c.l.b16 %v2563
  %v2651 = vunpack.c.h.b16 %v2563
  %v2652 = vunpack.c.l.b16 %v2564
  %v2653 = vpack.c.b16 %v2608, %v2605
  %v2654 = vpack.c.b16 %v2609, %v2606
  %v2655 = vpack.c.b16 %v2610, %v2607
  %v2656 = vpack.c.b16 %v2614, %v2611
  %v2657 = vpack.c.b16 %v2615, %v2612
  %v2658 = vpack.c.b16 %v2616, %v2613
  %v2659 = vpack.c.b16 %v2620, %v2617
  %v2660 = vpack.c.b16 %v2621, %v2618
  %v2661 = vpack.c.b16 %v2622, %v2619
  %v2662 = vpack.c.b16 %v2626, %v2623
  %v2663 = vpack.c.b16 %v2627, %v2624
  %v2664 = vpack.c.b16 %v2628, %v2625
  %v2665 = vpack.c.b16 %v2632, %v2629
  %v2666 = vpack.c.b16 %v2633, %v2630
  %v2667 = vpack.c.b16 %v2634, %v2631
  %v2668 = vpack.c.b16 %v2638, %v2635
  %v2669 = vpack.c.b16 %v2639, %v2636
  %v2670 = vpack.c.b16 %v2640, %v2637
  %v2671 = vpack.c.b16 %v2644, %v2641
  %v2672 = vpack.c.b16 %v2645, %v2642
  %v2673 = vpack.c.b16 %v2646, %v2643
  %v2674 = vpack.c.b16 %v2650, %v2647
  %v2675 = vpack.c.b16 %v2651, %v2648
  %v2676 = vpack.c.b16 %v2652, %v2649
  %2701 = vmatpush.bf16.msra.mxu0 %v2674
  %2702 = vmatpush.bf16.msra.mxu0 %v2671
  %2703 = vmatpush.bf16.msra.mxu0 %v2668
  %2704 = vmatpush.bf16.msra.mxu0 %v2665
  %2705 = vmatpush.bf16.msra.mxu0 %v2662
  %2706 = vmatpush.bf16.msra.mxu0 %v2659
  %2707 = vmatpush.bf16.msra.mxu0 %v2656
  %2708 = vmatpush.bf16.msra.mxu0 %v2653
  %2709 = vmatmul.bf16.gmra.mxu0 %v2532
  %v2710 = vpop.f32.mrf.mxu0
  %v2711 = vadd.f32 %v2567, %v2710
  %v2712 = vpop.f32.mrf.mxu0
  %2713 = vdwg.mxu0
  %2714 = vmatpush.bf16.msra.mxu0 %v2675
  %2715 = vmatpush.bf16.msra.mxu0 %v2672
  %2716 = vmatpush.bf16.msra.mxu0 %v2669
  %2717 = vmatpush.bf16.msra.mxu0 %v2666
  %2718 = vmatpush.bf16.msra.mxu0 %v2663
  %2719 = vmatpush.bf16.msra.mxu0 %v2660
  %2720 = vmatpush.bf16.msra.mxu0 %v2657
  %2721 = vmatpush.bf16.msra.mxu0 %v2654
  %2722 = vmatmul.bf16.gmra.mxu0 %v2532
  %v2723 = vpop.f32.mrf.mxu0
  %v2724 = vadd.f32 %v2568, %v2723
  %v2725 = vpop.f32.mrf.mxu0
  %2726 = vdwg.mxu0
  %2727 = vmatpush.bf16.msra.mxu0 %v2676
  %2728 = vmatpush.bf16.msra.mxu0 %v2673
  %2729 = vmatpush.bf16.msra.mxu0 %v2670
  %2730 = vmatpush.bf16.msra.mxu0 %v2667
  %2731 = vmatpush.bf16.msra.mxu0 %v2664
  %2732 = vmatpush.bf16.msra.mxu0 %v2661
  %2733 = vmatpush.bf16.msra.mxu0 %v2658
  %2734 = vmatpush.bf16.msra.mxu0 %v2655
  %2735 = vmatmul.bf16.gmra.mxu0 %v2532
  %v2736 = vpop.f32.mrf.mxu0
  %v2737 = vadd.f32 %v2569, %v2736
  %v2738 = vpop.f32.mrf.mxu0
  %2739 = vdwg.mxu0
  %v2740 = vld [vmem:[%s1294] sm:$0xff]
  %v2741 = vld [vmem:[%s1294 + $0x8] sm:$0xf]
  %v2742 = vld [vmem:[%s1294 + $0xc] sm:$0xff]
  %v2743 = vld [vmem:[%s1294 + $0x14] sm:$0xf]
  %v2744 = vld [vmem:[%s1294 + $0x18] sm:$0xff]
  %v2745 = vld [vmem:[%s1294 + $0x20] sm:$0xf]
  %v2746 = vld [vmem:[%s1294 + $0x24] sm:$0xff]
  %v2747 = vld [vmem:[%s1294 + $0x2c] sm:$0xf]
  %v2748 = vld [vmem:[%s1294 + $0x30] sm:$0xff]
  %v2749 = vld [vmem:[%s1294 + $0x38] sm:$0xf]
  %v2750 = vld [vmem:[%s1294 + $0x3c] sm:$0xff]
  %v2751 = vld [vmem:[%s1294 + $0x44] sm:$0xf]
  %v2752 = vld [vmem:[%s1294 + $0x48] sm:$0xff]
  %v2753 = vld [vmem:[%s1294 + $0x50] sm:$0xf]
  %v2754 = vld [vmem:[%s1294 + $0x54] sm:$0xff]
  %v2755 = vld [vmem:[%s1294 + $0x5c] sm:$0xf]
  %v2756 = vld [vmem:[%s1294 + $0x60] sm:$0xff]
  %v2757 = vld [vmem:[%s1294 + $0x68] sm:$0xf]
  %v2758 = vld [vmem:[%s1294 + $0x6c] sm:$0xff]
  %v2759 = vld [vmem:[%s1294 + $0x74] sm:$0xf]
  %v2760 = vld [vmem:[%s1294 + $0x78] sm:$0xff]
  %v2761 = vld [vmem:[%s1294 + $0x80] sm:$0xf]
  %v2762 = vld [vmem:[%s1294 + $0x84] sm:$0xff]
  %v2763 = vld [vmem:[%s1294 + $0x8c] sm:$0xf]
  %v2764 = vld [vmem:[%s1294 + $0x90] sm:$0xff]
  %v2765 = vld [vmem:[%s1294 + $0x98] sm:$0xf]
  %v2766 = vld [vmem:[%s1294 + $0x9c] sm:$0xff]
  %v2767 = vld [vmem:[%s1294 + $0xa4] sm:$0xf]
  %v2768 = vld [vmem:[%s1294 + $0xa8] sm:$0xff]
  %v2769 = vld [vmem:[%s1294 + $0xb0] sm:$0xf]
  %v2770 = vld [vmem:[%s1294 + $0xb4] sm:$0xff]
  %v2771 = vld [vmem:[%s1294 + $0xbc] sm:$0xf]
  %v2772 = vld [vmem:[%s1327] sm:$0x7]
  %v2773 = vpack.c.bf16 %v2271, %v2271
  %v2775 = vperm.slane %v2772, 0
  %v2776 = vperm.slane %v2772, 1
  %v2777 = vperm.slane %v2772, 2
  %v2813 = vunpack.c.l.b16 %v2740
  %v2814 = vunpack.c.h.b16 %v2740
  %v2815 = vunpack.c.l.b16 %v2741
  %v2816 = vunpack.c.l.b16 %v2742
  %v2817 = vunpack.c.h.b16 %v2742
  %v2818 = vunpack.c.l.b16 %v2743
  %v2819 = vunpack.c.l.b16 %v2744
  %v2820 = vunpack.c.h.b16 %v2744
  %v2821 = vunpack.c.l.b16 %v2745
  %v2822 = vunpack.c.l.b16 %v2746
  %v2823 = vunpack.c.h.b16 %v2746
  %v2824 = vunpack.c.l.b16 %v2747
  %v2825 = vunpack.c.l.b16 %v2748
  %v2826 = vunpack.c.h.b16 %v2748
  %v2827 = vunpack.c.l.b16 %v2749
  %v2828 = vunpack.c.l.b16 %v2750
  %v2829 = vunpack.c.h.b16 %v2750
  %v2830 = vunpack.c.l.b16 %v2751
  %v2831 = vunpack.c.l.b16 %v2752
  %v2832 = vunpack.c.h.b16 %v2752
  %v2833 = vunpack.c.l.b16 %v2753
  %v2834 = vunpack.c.l.b16 %v2754
  %v2835 = vunpack.c.h.b16 %v2754
  %v2836 = vunpack.c.l.b16 %v2755
  %v2837 = vunpack.c.l.b16 %v2756
  %v2838 = vunpack.c.h.b16 %v2756
  %v2839 = vunpack.c.l.b16 %v2757
  %v2840 = vunpack.c.l.b16 %v2758
  %v2841 = vunpack.c.h.b16 %v2758
  %v2842 = vunpack.c.l.b16 %v2759
  %v2843 = vunpack.c.l.b16 %v2760
  %v2844 = vunpack.c.h.b16 %v2760
  %v2845 = vunpack.c.l.b16 %v2761
  %v2846 = vunpack.c.l.b16 %v2762
  %v2847 = vunpack.c.h.b16 %v2762
  %v2848 = vunpack.c.l.b16 %v2763
  %v2849 = vunpack.c.l.b16 %v2764
  %v2850 = vunpack.c.h.b16 %v2764
  %v2851 = vunpack.c.l.b16 %v2765
  %v2852 = vunpack.c.l.b16 %v2766
  %v2853 = vunpack.c.h.b16 %v2766
  %v2854 = vunpack.c.l.b16 %v2767
  %v2855 = vunpack.c.l.b16 %v2768
  %v2856 = vunpack.c.h.b16 %v2768
  %v2857 = vunpack.c.l.b16 %v2769
  %v2858 = vunpack.c.l.b16 %v2770
  %v2859 = vunpack.c.h.b16 %v2770
  %v2860 = vunpack.c.l.b16 %v2771
  %v2861 = vpack.c.b16 %v2816, %v2813
  %v2862 = vpack.c.b16 %v2817, %v2814
  %v2863 = vpack.c.b16 %v2818, %v2815
  %v2864 = vpack.c.b16 %v2822, %v2819
  %v2865 = vpack.c.b16 %v2823, %v2820
  %v2866 = vpack.c.b16 %v2824, %v2821
  %v2867 = vpack.c.b16 %v2828, %v2825
  %v2868 = vpack.c.b16 %v2829, %v2826
  %v2869 = vpack.c.b16 %v2830, %v2827
  %v2870 = vpack.c.b16 %v2834, %v2831
  %v2871 = vpack.c.b16 %v2835, %v2832
  %v2872 = vpack.c.b16 %v2836, %v2833
  %v2873 = vpack.c.b16 %v2840, %v2837
  %v2874 = vpack.c.b16 %v2841, %v2838
  %v2875 = vpack.c.b16 %v2842, %v2839
  %v2876 = vpack.c.b16 %v2846, %v2843
  %v2877 = vpack.c.b16 %v2847, %v2844
  %v2878 = vpack.c.b16 %v2848, %v2845
  %v2879 = vpack.c.b16 %v2852, %v2849
  %v2880 = vpack.c.b16 %v2853, %v2850
  %v2881 = vpack.c.b16 %v2854, %v2851
  %v2882 = vpack.c.b16 %v2858, %v2855
  %v2883 = vpack.c.b16 %v2859, %v2856
  %v2884 = vpack.c.b16 %v2860, %v2857
  %2909 = vmatpush.bf16.msra.mxu0 %v2882
  %2910 = vmatpush.bf16.msra.mxu0 %v2879
  %2911 = vmatpush.bf16.msra.mxu0 %v2876
  %2912 = vmatpush.bf16.msra.mxu0 %v2873
  %2913 = vmatpush.bf16.msra.mxu0 %v2870
  %2914 = vmatpush.bf16.msra.mxu0 %v2867
  %2915 = vmatpush.bf16.msra.mxu0 %v2864
  %2916 = vmatpush.bf16.msra.mxu0 %v2861
  %2917 = vmatmul.bf16.gmra.mxu0 %v2773
  %v2918 = vpop.f32.mrf.mxu0
  %v2919 = vadd.f32 %v2775, %v2918
  %v2920 = vpop.f32.mrf.mxu0
  %2921 = vdwg.mxu0
  %2922 = vmatpush.bf16.msra.mxu0 %v2883
  %2923 = vmatpush.bf16.msra.mxu0 %v2880
  %2924 = vmatpush.bf16.msra.mxu0 %v2877
  %2925 = vmatpush.bf16.msra.mxu0 %v2874
  %2926 = vmatpush.bf16.msra.mxu0 %v2871
  %2927 = vmatpush.bf16.msra.mxu0 %v2868
  %2928 = vmatpush.bf16.msra.mxu0 %v2865
  %2929 = vmatpush.bf16.msra.mxu0 %v2862
  %2930 = vmatmul.bf16.gmra.mxu0 %v2773
  %v2931 = vpop.f32.mrf.mxu0
  %v2932 = vadd.f32 %v2776, %v2931
  %v2933 = vpop.f32.mrf.mxu0
  %2934 = vdwg.mxu0
  %2935 = vmatpush.bf16.msra.mxu0 %v2884
  %2936 = vmatpush.bf16.msra.mxu0 %v2881
  %2937 = vmatpush.bf16.msra.mxu0 %v2878
  %2938 = vmatpush.bf16.msra.mxu0 %v2875
  %2939 = vmatpush.bf16.msra.mxu0 %v2872
  %2940 = vmatpush.bf16.msra.mxu0 %v2869
  %2941 = vmatpush.bf16.msra.mxu0 %v2866
  %2942 = vmatpush.bf16.msra.mxu0 %v2863
  %2943 = vmatmul.bf16.gmra.mxu0 %v2773
  %v2944 = vpop.f32.mrf.mxu0
  %v2945 = vadd.f32 %v2777, %v2944
  %v2946 = vpop.f32.mrf.mxu0
  %2947 = vdwg.mxu0
  %v2948 = vadd.f32 %v2711, %v2919
  %v2949 = vxor.u32 %v2948, 2147483648
  %v2950 = vmul.f32 %v2949, 1.442695
  %v2951 = vpow.pop %v2950
  %v2952 = vadd.f32 %v2951, 1.0
  %v2953 = vrcp.pop %v2952
  %v2954 = vmul.f32 %v2952, %v2953
  %v2955 = vsub.f32 1.0, %v2954
  %v2956 = vmul.f32 %v2953, %v2955
  %v2957 = vadd.f32 %v2953, %v2956
  %vm2958 = vweird.f32 %v2952
  %vm2959 = vweird.f32 %v2953
  %vm2960 = vmor %vm2958, %vm2959
  %v2961 = vsel %vm2960, %v2953, %v2957
  %v2962 = vand.u32 2147483647, %v2952
  %vm2963 = vcmp.eq.f32.partialorder %v2962, 8.507059e+37
  %v2964 = vand.u32 %v2952, 2147483648
  %v2965 = vor.u32 1.1754944e-38, %v2964
  %v2966 = vsel %vm2963, %v2965, %v2961
  %v2967 = vmul.f32 1.0, %v2966
  %v2968 = vadd.f32 %v2724, %v2932
  %v2969 = vxor.u32 %v2968, 2147483648
  %v2970 = vmul.f32 %v2969, 1.442695
  %v2971 = vpow.pop %v2970
  %v2972 = vadd.f32 %v2971, 1.0
  %v2973 = vrcp.pop %v2972
  %v2974 = vmul.f32 %v2972, %v2973
  %v2975 = vsub.f32 1.0, %v2974
  %v2976 = vmul.f32 %v2973, %v2975
  %v2977 = vadd.f32 %v2973, %v2976
  %vm2978 = vweird.f32 %v2972
  %vm2979 = vweird.f32 %v2973
  %vm2980 = vmor %vm2978, %vm2979
  %v2981 = vsel %vm2980, %v2973, %v2977
  %v2982 = vand.u32 2147483647, %v2972
  %vm2983 = vcmp.eq.f32.partialorder %v2982, 8.507059e+37
  %v2984 = vand.u32 %v2972, 2147483648
  %v2985 = vor.u32 1.1754944e-38, %v2984
  %v2986 = vsel %vm2983, %v2985, %v2981
  %v2987 = vmul.f32 1.0, %v2986
  %v2988 = vmul.f32 %v2967, %v2945
  %v2989 = vadd.f32 %v2737, %v2988
  %v2990 = vtanh.pop %v2989
  %v2991 = vsub.f32 1.0, %v2987
  %v2992 = vmul.f32 %v2991, %v2990
  %v2993 = vmul.f32 %v2987, %v2271
  %v2994 = vadd.f32 %v2992, %v2993
  %s2995 = scalar_lea.vmem [#allocation3], 16
  %2996 = vst [vmem:[%s2995] sm:$0xff] %v2994
  %s2997 = scalar_lea.vmem [#allocation2], 72
  %v2998 = vld [vmem:[%s2997] sm:$0xff]
  %v2999 = vld [vmem:[%s2997 + $0x8] sm:$0xff]
  %v3000 = vld [vmem:[%s2997 + $0x10] sm:$0xff]
  %v3001 = vld [vmem:[%s5] sm:$0xff]
  %v3002 = vld [vmem:[%s5 + $0x8] sm:$0xf]
  %v3003 = vld [vmem:[%s5 + $0xc] sm:$0xff]
  %v3004 = vld [vmem:[%s5 + $0x14] sm:$0xf]
  %v3005 = vld [vmem:[%s5 + $0x18] sm:$0xff]
  %v3006 = vld [vmem:[%s5 + $0x20] sm:$0xf]
  %v3007 = vld [vmem:[%s5 + $0x24] sm:$0xff]
  %v3008 = vld [vmem:[%s5 + $0x2c] sm:$0xf]
  %v3009 = vld [vmem:[%s5 + $0x30] sm:$0xff]
  %v3010 = vld [vmem:[%s5 + $0x38] sm:$0xf]
  %v3011 = vld [vmem:[%s5 + $0x3c] sm:$0xff]
  %v3012 = vld [vmem:[%s5 + $0x44] sm:$0xf]
  %v3013 = vld [vmem:[%s5 + $0x48] sm:$0xff]
  %v3014 = vld [vmem:[%s5 + $0x50] sm:$0xf]
  %v3015 = vld [vmem:[%s5 + $0x54] sm:$0xff]
  %v3016 = vld [vmem:[%s5 + $0x5c] sm:$0xf]
  %v3017 = vld [vmem:[%s5 + $0x60] sm:$0xff]
  %v3018 = vld [vmem:[%s5 + $0x68] sm:$0xf]
  %v3019 = vld [vmem:[%s5 + $0x6c] sm:$0xff]
  %v3020 = vld [vmem:[%s5 + $0x74] sm:$0xf]
  %v3021 = vld [vmem:[%s5 + $0x78] sm:$0xff]
  %v3022 = vld [vmem:[%s5 + $0x80] sm:$0xf]
  %v3023 = vld [vmem:[%s5 + $0x84] sm:$0xff]
  %v3024 = vld [vmem:[%s5 + $0x8c] sm:$0xf]
  %v3025 = vld [vmem:[%s5 + $0x90] sm:$0xff]
  %v3026 = vld [vmem:[%s5 + $0x98] sm:$0xf]
  %v3027 = vld [vmem:[%s5 + $0x9c] sm:$0xff]
  %v3028 = vld [vmem:[%s5 + $0xa4] sm:$0xf]
  %v3029 = vld [vmem:[%s5 + $0xa8] sm:$0xff]
  %v3030 = vld [vmem:[%s5 + $0xb0] sm:$0xf]
  %v3031 = vld [vmem:[%s5 + $0xb4] sm:$0xff]
  %v3032 = vld [vmem:[%s5 + $0xbc] sm:$0xf]
  %v3033 = vld [vmem:[%s7] sm:$0x7]
  %v3035 = vperm.slane %v3033, 0
  %v3036 = vperm.slane %v3033, 1
  %v3037 = vperm.slane %v3033, 2
  %v3073 = vunpack.c.l.b16 %v3001
  %v3074 = vunpack.c.h.b16 %v3001
  %v3075 = vunpack.c.l.b16 %v3002
  %v3076 = vunpack.c.l.b16 %v3003
  %v3077 = vunpack.c.h.b16 %v3003
  %v3078 = vunpack.c.l.b16 %v3004
  %v3079 = vunpack.c.l.b16 %v3005
  %v3080 = vunpack.c.h.b16 %v3005
  %v3081 = vunpack.c.l.b16 %v3006
  %v3082 = vunpack.c.l.b16 %v3007
  %v3083 = vunpack.c.h.b16 %v3007
  %v3084 = vunpack.c.l.b16 %v3008
  %v3085 = vunpack.c.l.b16 %v3009
  %v3086 = vunpack.c.h.b16 %v3009
  %v3087 = vunpack.c.l.b16 %v3010
  %v3088 = vunpack.c.l.b16 %v3011
  %v3089 = vunpack.c.h.b16 %v3011
  %v3090 = vunpack.c.l.b16 %v3012
  %v3091 = vunpack.c.l.b16 %v3013
  %v3092 = vunpack.c.h.b16 %v3013
  %v3093 = vunpack.c.l.b16 %v3014
  %v3094 = vunpack.c.l.b16 %v3015
  %v3095 = vunpack.c.h.b16 %v3015
  %v3096 = vunpack.c.l.b16 %v3016
  %v3097 = vunpack.c.l.b16 %v3017
  %v3098 = vunpack.c.h.b16 %v3017
  %v3099 = vunpack.c.l.b16 %v3018
  %v3100 = vunpack.c.l.b16 %v3019
  %v3101 = vunpack.c.h.b16 %v3019
  %v3102 = vunpack.c.l.b16 %v3020
  %v3103 = vunpack.c.l.b16 %v3021
  %v3104 = vunpack.c.h.b16 %v3021
  %v3105 = vunpack.c.l.b16 %v3022
  %v3106 = vunpack.c.l.b16 %v3023
  %v3107 = vunpack.c.h.b16 %v3023
  %v3108 = vunpack.c.l.b16 %v3024
  %v3109 = vunpack.c.l.b16 %v3025
  %v3110 = vunpack.c.h.b16 %v3025
  %v3111 = vunpack.c.l.b16 %v3026
  %v3112 = vunpack.c.l.b16 %v3027
  %v3113 = vunpack.c.h.b16 %v3027
  %v3114 = vunpack.c.l.b16 %v3028
  %v3115 = vunpack.c.l.b16 %v3029
  %v3116 = vunpack.c.h.b16 %v3029
  %v3117 = vunpack.c.l.b16 %v3030
  %v3118 = vunpack.c.l.b16 %v3031
  %v3119 = vunpack.c.h.b16 %v3031
  %v3120 = vunpack.c.l.b16 %v3032
  %v3121 = vpack.c.b16 %v3076, %v3073
  %v3122 = vpack.c.b16 %v3077, %v3074
  %v3123 = vpack.c.b16 %v3078, %v3075
  %v3124 = vpack.c.b16 %v3082, %v3079
  %v3125 = vpack.c.b16 %v3083, %v3080
  %v3126 = vpack.c.b16 %v3084, %v3081
  %v3127 = vpack.c.b16 %v3088, %v3085
  %v3128 = vpack.c.b16 %v3089, %v3086
  %v3129 = vpack.c.b16 %v3090, %v3087
  %v3130 = vpack.c.b16 %v3094, %v3091
  %v3131 = vpack.c.b16 %v3095, %v3092
  %v3132 = vpack.c.b16 %v3096, %v3093
  %v3133 = vpack.c.b16 %v3100, %v3097
  %v3134 = vpack.c.b16 %v3101, %v3098
  %v3135 = vpack.c.b16 %v3102, %v3099
  %v3136 = vpack.c.b16 %v3106, %v3103
  %v3137 = vpack.c.b16 %v3107, %v3104
  %v3138 = vpack.c.b16 %v3108, %v3105
  %v3139 = vpack.c.b16 %v3112, %v3109
  %v3140 = vpack.c.b16 %v3113, %v3110
  %v3141 = vpack.c.b16 %v3114, %v3111
  %v3142 = vpack.c.b16 %v3118, %v3115
  %v3143 = vpack.c.b16 %v3119, %v3116
  %v3144 = vpack.c.b16 %v3120, %v3117
  %3169 = vmatpush.bf16.msra.mxu0 %v3142
  %3170 = vmatpush.bf16.msra.mxu0 %v3139
  %3171 = vmatpush.bf16.msra.mxu0 %v3136
  %3172 = vmatpush.bf16.msra.mxu0 %v3133
  %3173 = vmatpush.bf16.msra.mxu0 %v3130
  %3174 = vmatpush.bf16.msra.mxu0 %v3127
  %3175 = vmatpush.bf16.msra.mxu0 %v3124
  %3176 = vmatpush.bf16.msra.mxu0 %v3121
  %3177 = vmatmul.bf16.gmra.mxu0 %v2532
  %v3178 = vpop.f32.mrf.mxu0
  %v3179 = vadd.f32 %v3035, %v3178
  %v3180 = vpop.f32.mrf.mxu0
  %3181 = vdwg.mxu0
  %3182 = vmatpush.bf16.msra.mxu0 %v3143
  %3183 = vmatpush.bf16.msra.mxu0 %v3140
  %3184 = vmatpush.bf16.msra.mxu0 %v3137
  %3185 = vmatpush.bf16.msra.mxu0 %v3134
  %3186 = vmatpush.bf16.msra.mxu0 %v3131
  %3187 = vmatpush.bf16.msra.mxu0 %v3128
  %3188 = vmatpush.bf16.msra.mxu0 %v3125
  %3189 = vmatpush.bf16.msra.mxu0 %v3122
  %3190 = vmatmul.bf16.gmra.mxu0 %v2532
  %v3191 = vpop.f32.mrf.mxu0
  %v3192 = vadd.f32 %v3036, %v3191
  %v3193 = vpop.f32.mrf.mxu0
  %3194 = vdwg.mxu0
  %3195 = vmatpush.bf16.msra.mxu0 %v3144
  %3196 = vmatpush.bf16.msra.mxu0 %v3141
  %3197 = vmatpush.bf16.msra.mxu0 %v3138
  %3198 = vmatpush.bf16.msra.mxu0 %v3135
  %3199 = vmatpush.bf16.msra.mxu0 %v3132
  %3200 = vmatpush.bf16.msra.mxu0 %v3129
  %3201 = vmatpush.bf16.msra.mxu0 %v3126
  %3202 = vmatpush.bf16.msra.mxu0 %v3123
  %3203 = vmatmul.bf16.gmra.mxu0 %v2532
  %v3204 = vpop.f32.mrf.mxu0
  %v3205 = vadd.f32 %v3037, %v3204
  %v3206 = vpop.f32.mrf.mxu0
  %3207 = vdwg.mxu0
  %v3208 = vadd.f32 %v2998, %v3179
  %v3209 = vxor.u32 %v3208, 2147483648
  %v3210 = vmul.f32 %v3209, 1.442695
  %v3211 = vpow.pop %v3210
  %v3212 = vadd.f32 %v3211, 1.0
  %v3213 = vrcp.pop %v3212
  %v3214 = vmul.f32 %v3212, %v3213
  %v3215 = vsub.f32 1.0, %v3214
  %v3216 = vmul.f32 %v3213, %v3215
  %v3217 = vadd.f32 %v3213, %v3216
  %vm3218 = vweird.f32 %v3212
  %vm3219 = vweird.f32 %v3213
  %vm3220 = vmor %vm3218, %vm3219
  %v3221 = vsel %vm3220, %v3213, %v3217
  %v3222 = vand.u32 2147483647, %v3212
  %vm3223 = vcmp.eq.f32.partialorder %v3222, 8.507059e+37
  %v3224 = vand.u32 %v3212, 2147483648
  %v3225 = vor.u32 1.1754944e-38, %v3224
  %v3226 = vsel %vm3223, %v3225, %v3221
  %v3227 = vmul.f32 1.0, %v3226
  %v3228 = vadd.f32 %v2999, %v3192
  %v3229 = vxor.u32 %v3228, 2147483648
  %v3230 = vmul.f32 %v3229, 1.442695
  %v3231 = vpow.pop %v3230
  %v3232 = vadd.f32 %v3231, 1.0
  %v3233 = vrcp.pop %v3232
  %v3234 = vmul.f32 %v3232, %v3233
  %v3235 = vsub.f32 1.0, %v3234
  %v3236 = vmul.f32 %v3233, %v3235
  %v3237 = vadd.f32 %v3233, %v3236
  %vm3238 = vweird.f32 %v3232
  %vm3239 = vweird.f32 %v3233
  %vm3240 = vmor %vm3238, %vm3239
  %v3241 = vsel %vm3240, %v3233, %v3237
  %v3242 = vand.u32 2147483647, %v3232
  %vm3243 = vcmp.eq.f32.partialorder %v3242, 8.507059e+37
  %v3244 = vand.u32 %v3232, 2147483648
  %v3245 = vor.u32 1.1754944e-38, %v3244
  %v3246 = vsel %vm3243, %v3245, %v3241
  %v3247 = vmul.f32 1.0, %v3246
  %v3248 = vmul.f32 %v3227, %v3205
  %v3249 = vadd.f32 %v3000, %v3248
  %v3250 = vtanh.pop %v3249
  %v3251 = vsub.f32 1.0, %v3247
  %v3252 = vmul.f32 %v3251, %v3250
  %v3253 = vmul.f32 %v3247, %v2531
  %v3254 = vadd.f32 %v3252, %v3253
  %v3255 = vpack.c.bf16 %v3254, %v3254
  %v3256 = vld [vmem:[%s1085] sm:$0xff]
  %v3257 = vld [vmem:[%s1085 + $0x8] sm:$0xf]
  %v3258 = vld [vmem:[%s1085 + $0xc] sm:$0xff]
  %v3259 = vld [vmem:[%s1085 + $0x14] sm:$0xf]
  %v3260 = vld [vmem:[%s1085 + $0x18] sm:$0xff]
  %v3261 = vld [vmem:[%s1085 + $0x20] sm:$0xf]
  %v3262 = vld [vmem:[%s1085 + $0x24] sm:$0xff]
  %v3263 = vld [vmem:[%s1085 + $0x2c] sm:$0xf]
  %v3264 = vld [vmem:[%s1085 + $0x30] sm:$0xff]
  %v3265 = vld [vmem:[%s1085 + $0x38] sm:$0xf]
  %v3266 = vld [vmem:[%s1085 + $0x3c] sm:$0xff]
  %v3267 = vld [vmem:[%s1085 + $0x44] sm:$0xf]
  %v3268 = vld [vmem:[%s1085 + $0x48] sm:$0xff]
  %v3269 = vld [vmem:[%s1085 + $0x50] sm:$0xf]
  %v3270 = vld [vmem:[%s1085 + $0x54] sm:$0xff]
  %v3271 = vld [vmem:[%s1085 + $0x5c] sm:$0xf]
  %v3272 = vld [vmem:[%s1085 + $0x60] sm:$0xff]
  %v3273 = vld [vmem:[%s1085 + $0x68] sm:$0xf]
  %v3274 = vld [vmem:[%s1085 + $0x6c] sm:$0xff]
  %v3275 = vld [vmem:[%s1085 + $0x74] sm:$0xf]
  %v3276 = vld [vmem:[%s1085 + $0x78] sm:$0xff]
  %v3277 = vld [vmem:[%s1085 + $0x80] sm:$0xf]
  %v3278 = vld [vmem:[%s1085 + $0x84] sm:$0xff]
  %v3279 = vld [vmem:[%s1085 + $0x8c] sm:$0xf]
  %v3280 = vld [vmem:[%s1085 + $0x90] sm:$0xff]
  %v3281 = vld [vmem:[%s1085 + $0x98] sm:$0xf]
  %v3282 = vld [vmem:[%s1085 + $0x9c] sm:$0xff]
  %v3283 = vld [vmem:[%s1085 + $0xa4] sm:$0xf]
  %v3284 = vld [vmem:[%s1085 + $0xa8] sm:$0xff]
  %v3285 = vld [vmem:[%s1085 + $0xb0] sm:$0xf]
  %v3286 = vld [vmem:[%s1085 + $0xb4] sm:$0xff]
  %v3287 = vld [vmem:[%s1085 + $0xbc] sm:$0xf]
  %v3288 = vld [vmem:[%s1118] sm:$0x7]
  %v3290 = vperm.slane %v3288, 0
  %v3291 = vperm.slane %v3288, 1
  %v3292 = vperm.slane %v3288, 2
  %v3328 = vunpack.c.l.b16 %v3256
  %v3329 = vunpack.c.h.b16 %v3256
  %v3330 = vunpack.c.l.b16 %v3257
  %v3331 = vunpack.c.l.b16 %v3258
  %v3332 = vunpack.c.h.b16 %v3258
  %v3333 = vunpack.c.l.b16 %v3259
  %v3334 = vunpack.c.l.b16 %v3260
  %v3335 = vunpack.c.h.b16 %v3260
  %v3336 = vunpack.c.l.b16 %v3261
  %v3337 = vunpack.c.l.b16 %v3262
  %v3338 = vunpack.c.h.b16 %v3262
  %v3339 = vunpack.c.l.b16 %v3263
  %v3340 = vunpack.c.l.b16 %v3264
  %v3341 = vunpack.c.h.b16 %v3264
  %v3342 = vunpack.c.l.b16 %v3265
  %v3343 = vunpack.c.l.b16 %v3266
  %v3344 = vunpack.c.h.b16 %v3266
  %v3345 = vunpack.c.l.b16 %v3267
  %v3346 = vunpack.c.l.b16 %v3268
  %v3347 = vunpack.c.h.b16 %v3268
  %v3348 = vunpack.c.l.b16 %v3269
  %v3349 = vunpack.c.l.b16 %v3270
  %v3350 = vunpack.c.h.b16 %v3270
  %v3351 = vunpack.c.l.b16 %v3271
  %v3352 = vunpack.c.l.b16 %v3272
  %v3353 = vunpack.c.h.b16 %v3272
  %v3354 = vunpack.c.l.b16 %v3273
  %v3355 = vunpack.c.l.b16 %v3274
  %v3356 = vunpack.c.h.b16 %v3274
  %v3357 = vunpack.c.l.b16 %v3275
  %v3358 = vunpack.c.l.b16 %v3276
  %v3359 = vunpack.c.h.b16 %v3276
  %v3360 = vunpack.c.l.b16 %v3277
  %v3361 = vunpack.c.l.b16 %v3278
  %v3362 = vunpack.c.h.b16 %v3278
  %v3363 = vunpack.c.l.b16 %v3279
  %v3364 = vunpack.c.l.b16 %v3280
  %v3365 = vunpack.c.h.b16 %v3280
  %v3366 = vunpack.c.l.b16 %v3281
  %v3367 = vunpack.c.l.b16 %v3282
  %v3368 = vunpack.c.h.b16 %v3282
  %v3369 = vunpack.c.l.b16 %v3283
  %v3370 = vunpack.c.l.b16 %v3284
  %v3371 = vunpack.c.h.b16 %v3284
  %v3372 = vunpack.c.l.b16 %v3285
  %v3373 = vunpack.c.l.b16 %v3286
  %v3374 = vunpack.c.h.b16 %v3286
  %v3375 = vunpack.c.l.b16 %v3287
  %v3376 = vpack.c.b16 %v3331, %v3328
  %v3377 = vpack.c.b16 %v3332, %v3329
  %v3378 = vpack.c.b16 %v3333, %v3330
  %v3379 = vpack.c.b16 %v3337, %v3334
  %v3380 = vpack.c.b16 %v3338, %v3335
  %v3381 = vpack.c.b16 %v3339, %v3336
  %v3382 = vpack.c.b16 %v3343, %v3340
  %v3383 = vpack.c.b16 %v3344, %v3341
  %v3384 = vpack.c.b16 %v3345, %v3342
  %v3385 = vpack.c.b16 %v3349, %v3346
  %v3386 = vpack.c.b16 %v3350, %v3347
  %v3387 = vpack.c.b16 %v3351, %v3348
  %v3388 = vpack.c.b16 %v3355, %v3352
  %v3389 = vpack.c.b16 %v3356, %v3353
  %v3390 = vpack.c.b16 %v3357, %v3354
  %v3391 = vpack.c.b16 %v3361, %v3358
  %v3392 = vpack.c.b16 %v3362, %v3359
  %v3393 = vpack.c.b16 %v3363, %v3360
  %v3394 = vpack.c.b16 %v3367, %v3364
  %v3395 = vpack.c.b16 %v3368, %v3365
  %v3396 = vpack.c.b16 %v3369, %v3366
  %v3397 = vpack.c.b16 %v3373, %v3370
  %v3398 = vpack.c.b16 %v3374, %v3371
  %v3399 = vpack.c.b16 %v3375, %v3372
  %3424 = vmatpush.bf16.msra.mxu0 %v3397
  %3425 = vmatpush.bf16.msra.mxu0 %v3394
  %3426 = vmatpush.bf16.msra.mxu0 %v3391
  %3427 = vmatpush.bf16.msra.mxu0 %v3388
  %3428 = vmatpush.bf16.msra.mxu0 %v3385
  %3429 = vmatpush.bf16.msra.mxu0 %v3382
  %3430 = vmatpush.bf16.msra.mxu0 %v3379
  %3431 = vmatpush.bf16.msra.mxu0 %v3376
  %3432 = vmatmul.bf16.gmra.mxu0 %v3255
  %v3433 = vpop.f32.mrf.mxu0
  %v3434 = vadd.f32 %v3290, %v3433
  %v3435 = vpop.f32.mrf.mxu0
  %3436 = vdwg.mxu0
  %3437 = vmatpush.bf16.msra.mxu0 %v3398
  %3438 = vmatpush.bf16.msra.mxu0 %v3395
  %3439 = vmatpush.bf16.msra.mxu0 %v3392
  %3440 = vmatpush.bf16.msra.mxu0 %v3389
  %3441 = vmatpush.bf16.msra.mxu0 %v3386
  %3442 = vmatpush.bf16.msra.mxu0 %v3383
  %3443 = vmatpush.bf16.msra.mxu0 %v3380
  %3444 = vmatpush.bf16.msra.mxu0 %v3377
  %3445 = vmatmul.bf16.gmra.mxu0 %v3255
  %v3446 = vpop.f32.mrf.mxu0
  %v3447 = vadd.f32 %v3291, %v3446
  %v3448 = vpop.f32.mrf.mxu0
  %3449 = vdwg.mxu0
  %3450 = vmatpush.bf16.msra.mxu0 %v3399
  %3451 = vmatpush.bf16.msra.mxu0 %v3396
  %3452 = vmatpush.bf16.msra.mxu0 %v3393
  %3453 = vmatpush.bf16.msra.mxu0 %v3390
  %3454 = vmatpush.bf16.msra.mxu0 %v3387
  %3455 = vmatpush.bf16.msra.mxu0 %v3384
  %3456 = vmatpush.bf16.msra.mxu0 %v3381
  %3457 = vmatpush.bf16.msra.mxu0 %v3378
  %3458 = vmatmul.bf16.gmra.mxu0 %v3255
  %v3459 = vpop.f32.mrf.mxu0
  %v3460 = vadd.f32 %v3292, %v3459
  %v3461 = vpop.f32.mrf.mxu0
  %3462 = vdwg.mxu0
  %v3463 = vld [vmem:[%s1294] sm:$0xff]
  %v3464 = vld [vmem:[%s1294 + $0x8] sm:$0xf]
  %v3465 = vld [vmem:[%s1294 + $0xc] sm:$0xff]
  %v3466 = vld [vmem:[%s1294 + $0x14] sm:$0xf]
  %v3467 = vld [vmem:[%s1294 + $0x18] sm:$0xff]
  %v3468 = vld [vmem:[%s1294 + $0x20] sm:$0xf]
  %v3469 = vld [vmem:[%s1294 + $0x24] sm:$0xff]
  %v3470 = vld [vmem:[%s1294 + $0x2c] sm:$0xf]
  %v3471 = vld [vmem:[%s1294 + $0x30] sm:$0xff]
  %v3472 = vld [vmem:[%s1294 + $0x38] sm:$0xf]
  %v3473 = vld [vmem:[%s1294 + $0x3c] sm:$0xff]
  %v3474 = vld [vmem:[%s1294 + $0x44] sm:$0xf]
  %v3475 = vld [vmem:[%s1294 + $0x48] sm:$0xff]
  %v3476 = vld [vmem:[%s1294 + $0x50] sm:$0xf]
  %v3477 = vld [vmem:[%s1294 + $0x54] sm:$0xff]
  %v3478 = vld [vmem:[%s1294 + $0x5c] sm:$0xf]
  %v3479 = vld [vmem:[%s1294 + $0x60] sm:$0xff]
  %v3480 = vld [vmem:[%s1294 + $0x68] sm:$0xf]
  %v3481 = vld [vmem:[%s1294 + $0x6c] sm:$0xff]
  %v3482 = vld [vmem:[%s1294 + $0x74] sm:$0xf]
  %v3483 = vld [vmem:[%s1294 + $0x78] sm:$0xff]
  %v3484 = vld [vmem:[%s1294 + $0x80] sm:$0xf]
  %v3485 = vld [vmem:[%s1294 + $0x84] sm:$0xff]
  %v3486 = vld [vmem:[%s1294 + $0x8c] sm:$0xf]
  %v3487 = vld [vmem:[%s1294 + $0x90] sm:$0xff]
  %v3488 = vld [vmem:[%s1294 + $0x98] sm:$0xf]
  %v3489 = vld [vmem:[%s1294 + $0x9c] sm:$0xff]
  %v3490 = vld [vmem:[%s1294 + $0xa4] sm:$0xf]
  %v3491 = vld [vmem:[%s1294 + $0xa8] sm:$0xff]
  %v3492 = vld [vmem:[%s1294 + $0xb0] sm:$0xf]
  %v3493 = vld [vmem:[%s1294 + $0xb4] sm:$0xff]
  %v3494 = vld [vmem:[%s1294 + $0xbc] sm:$0xf]
  %v3495 = vld [vmem:[%s1327] sm:$0x7]
  %v3496 = vpack.c.bf16 %v2994, %v2994
  %v3498 = vperm.slane %v3495, 0
  %v3499 = vperm.slane %v3495, 1
  %v3500 = vperm.slane %v3495, 2
  %v3536 = vunpack.c.l.b16 %v3463
  %v3537 = vunpack.c.h.b16 %v3463
  %v3538 = vunpack.c.l.b16 %v3464
  %v3539 = vunpack.c.l.b16 %v3465
  %v3540 = vunpack.c.h.b16 %v3465
  %v3541 = vunpack.c.l.b16 %v3466
  %v3542 = vunpack.c.l.b16 %v3467
  %v3543 = vunpack.c.h.b16 %v3467
  %v3544 = vunpack.c.l.b16 %v3468
  %v3545 = vunpack.c.l.b16 %v3469
  %v3546 = vunpack.c.h.b16 %v3469
  %v3547 = vunpack.c.l.b16 %v3470
  %v3548 = vunpack.c.l.b16 %v3471
  %v3549 = vunpack.c.h.b16 %v3471
  %v3550 = vunpack.c.l.b16 %v3472
  %v3551 = vunpack.c.l.b16 %v3473
  %v3552 = vunpack.c.h.b16 %v3473
  %v3553 = vunpack.c.l.b16 %v3474
  %v3554 = vunpack.c.l.b16 %v3475
  %v3555 = vunpack.c.h.b16 %v3475
  %v3556 = vunpack.c.l.b16 %v3476
  %v3557 = vunpack.c.l.b16 %v3477
  %v3558 = vunpack.c.h.b16 %v3477
  %v3559 = vunpack.c.l.b16 %v3478
  %v3560 = vunpack.c.l.b16 %v3479
  %v3561 = vunpack.c.h.b16 %v3479
  %v3562 = vunpack.c.l.b16 %v3480
  %v3563 = vunpack.c.l.b16 %v3481
  %v3564 = vunpack.c.h.b16 %v3481
  %v3565 = vunpack.c.l.b16 %v3482
  %v3566 = vunpack.c.l.b16 %v3483
  %v3567 = vunpack.c.h.b16 %v3483
  %v3568 = vunpack.c.l.b16 %v3484
  %v3569 = vunpack.c.l.b16 %v3485
  %v3570 = vunpack.c.h.b16 %v3485
  %v3571 = vunpack.c.l.b16 %v3486
  %v3572 = vunpack.c.l.b16 %v3487
  %v3573 = vunpack.c.h.b16 %v3487
  %v3574 = vunpack.c.l.b16 %v3488
  %v3575 = vunpack.c.l.b16 %v3489
  %v3576 = vunpack.c.h.b16 %v3489
  %v3577 = vunpack.c.l.b16 %v3490
  %v3578 = vunpack.c.l.b16 %v3491
  %v3579 = vunpack.c.h.b16 %v3491
  %v3580 = vunpack.c.l.b16 %v3492
  %v3581 = vunpack.c.l.b16 %v3493
  %v3582 = vunpack.c.h.b16 %v3493
  %v3583 = vunpack.c.l.b16 %v3494
  %v3584 = vpack.c.b16 %v3539, %v3536
  %v3585 = vpack.c.b16 %v3540, %v3537
  %v3586 = vpack.c.b16 %v3541, %v3538
  %v3587 = vpack.c.b16 %v3545, %v3542
  %v3588 = vpack.c.b16 %v3546, %v3543
  %v3589 = vpack.c.b16 %v3547, %v3544
  %v3590 = vpack.c.b16 %v3551, %v3548
  %v3591 = vpack.c.b16 %v3552, %v3549
  %v3592 = vpack.c.b16 %v3553, %v3550
  %v3593 = vpack.c.b16 %v3557, %v3554
  %v3594 = vpack.c.b16 %v3558, %v3555
  %v3595 = vpack.c.b16 %v3559, %v3556
  %v3596 = vpack.c.b16 %v3563, %v3560
  %v3597 = vpack.c.b16 %v3564, %v3561
  %v3598 = vpack.c.b16 %v3565, %v3562
  %v3599 = vpack.c.b16 %v3569, %v3566
  %v3600 = vpack.c.b16 %v3570, %v3567
  %v3601 = vpack.c.b16 %v3571, %v3568
  %v3602 = vpack.c.b16 %v3575, %v3572
  %v3603 = vpack.c.b16 %v3576, %v3573
  %v3604 = vpack.c.b16 %v3577, %v3574
  %v3605 = vpack.c.b16 %v3581, %v3578
  %v3606 = vpack.c.b16 %v3582, %v3579
  %v3607 = vpack.c.b16 %v3583, %v3580
  %3632 = vmatpush.bf16.msra.mxu0 %v3605
  %3633 = vmatpush.bf16.msra.mxu0 %v3602
  %3634 = vmatpush.bf16.msra.mxu0 %v3599
  %3635 = vmatpush.bf16.msra.mxu0 %v3596
  %3636 = vmatpush.bf16.msra.mxu0 %v3593
  %3637 = vmatpush.bf16.msra.mxu0 %v3590
  %3638 = vmatpush.bf16.msra.mxu0 %v3587
  %3639 = vmatpush.bf16.msra.mxu0 %v3584
  %3640 = vmatmul.bf16.gmra.mxu0 %v3496
  %v3641 = vpop.f32.mrf.mxu0
  %v3642 = vadd.f32 %v3498, %v3641
  %v3643 = vpop.f32.mrf.mxu0
  %3644 = vdwg.mxu0
  %3645 = vmatpush.bf16.msra.mxu0 %v3606
  %3646 = vmatpush.bf16.msra.mxu0 %v3603
  %3647 = vmatpush.bf16.msra.mxu0 %v3600
  %3648 = vmatpush.bf16.msra.mxu0 %v3597
  %3649 = vmatpush.bf16.msra.mxu0 %v3594
  %3650 = vmatpush.bf16.msra.mxu0 %v3591
  %3651 = vmatpush.bf16.msra.mxu0 %v3588
  %3652 = vmatpush.bf16.msra.mxu0 %v3585
  %3653 = vmatmul.bf16.gmra.mxu0 %v3496
  %v3654 = vpop.f32.mrf.mxu0
  %v3655 = vadd.f32 %v3499, %v3654
  %v3656 = vpop.f32.mrf.mxu0
  %3657 = vdwg.mxu0
  %3658 = vmatpush.bf16.msra.mxu0 %v3607
  %3659 = vmatpush.bf16.msra.mxu0 %v3604
  %3660 = vmatpush.bf16.msra.mxu0 %v3601
  %3661 = vmatpush.bf16.msra.mxu0 %v3598
  %3662 = vmatpush.bf16.msra.mxu0 %v3595
  %3663 = vmatpush.bf16.msra.mxu0 %v3592
  %3664 = vmatpush.bf16.msra.mxu0 %v3589
  %3665 = vmatpush.bf16.msra.mxu0 %v3586
  %3666 = vmatmul.bf16.gmra.mxu0 %v3496
  %v3667 = vpop.f32.mrf.mxu0
  %v3668 = vadd.f32 %v3500, %v3667
  %v3669 = vpop.f32.mrf.mxu0
  %3670 = vdwg.mxu0
  %v3671 = vadd.f32 %v3434, %v3642
  %v3672 = vxor.u32 %v3671, 2147483648
  %v3673 = vmul.f32 %v3672, 1.442695
  %v3674 = vpow.pop %v3673
  %v3675 = vadd.f32 %v3674, 1.0
  %v3676 = vrcp.pop %v3675
  %v3677 = vmul.f32 %v3675, %v3676
  %v3678 = vsub.f32 1.0, %v3677
  %v3679 = vmul.f32 %v3676, %v3678
  %v3680 = vadd.f32 %v3676, %v3679
  %vm3681 = vweird.f32 %v3675
  %vm3682 = vweird.f32 %v3676
  %vm3683 = vmor %vm3681, %vm3682
  %v3684 = vsel %vm3683, %v3676, %v3680
  %v3685 = vand.u32 2147483647, %v3675
  %vm3686 = vcmp.eq.f32.partialorder %v3685, 8.507059e+37
  %v3687 = vand.u32 %v3675, 2147483648
  %v3688 = vor.u32 1.1754944e-38, %v3687
  %v3689 = vsel %vm3686, %v3688, %v3684
  %v3690 = vmul.f32 1.0, %v3689
  %v3691 = vadd.f32 %v3447, %v3655
  %v3692 = vxor.u32 %v3691, 2147483648
  %v3693 = vmul.f32 %v3692, 1.442695
  %v3694 = vpow.pop %v3693
  %v3695 = vadd.f32 %v3694, 1.0
  %v3696 = vrcp.pop %v3695
  %v3697 = vmul.f32 %v3695, %v3696
  %v3698 = vsub.f32 1.0, %v3697
  %v3699 = vmul.f32 %v3696, %v3698
  %v3700 = vadd.f32 %v3696, %v3699
  %vm3701 = vweird.f32 %v3695
  %vm3702 = vweird.f32 %v3696
  %vm3703 = vmor %vm3701, %vm3702
  %v3704 = vsel %vm3703, %v3696, %v3700
  %v3705 = vand.u32 2147483647, %v3695
  %vm3706 = vcmp.eq.f32.partialorder %v3705, 8.507059e+37
  %v3707 = vand.u32 %v3695, 2147483648
  %v3708 = vor.u32 1.1754944e-38, %v3707
  %v3709 = vsel %vm3706, %v3708, %v3704
  %v3710 = vmul.f32 1.0, %v3709
  %v3711 = vmul.f32 %v3690, %v3668
  %v3712 = vadd.f32 %v3460, %v3711
  %v3713 = vtanh.pop %v3712
  %v3714 = vsub.f32 1.0, %v3710
  %v3715 = vmul.f32 %v3714, %v3713
  %v3716 = vmul.f32 %v3710, %v2994
  %v3717 = vadd.f32 %v3715, %v3716
  %s3718 = scalar_lea.vmem [#allocation3], 24
  %3719 = vst [vmem:[%s3718] sm:$0xff] %v3717
  %s3720 = scalar_lea.vmem [#allocation2], 96
  %v3721 = vld [vmem:[%s3720] sm:$0xff]
  %v3722 = vld [vmem:[%s3720 + $0x8] sm:$0xff]
  %v3723 = vld [vmem:[%s3720 + $0x10] sm:$0xff]
  %v3724 = vld [vmem:[%s5] sm:$0xff]
  %v3725 = vld [vmem:[%s5 + $0x8] sm:$0xf]
  %v3726 = vld [vmem:[%s5 + $0xc] sm:$0xff]
  %v3727 = vld [vmem:[%s5 + $0x14] sm:$0xf]
  %v3728 = vld [vmem:[%s5 + $0x18] sm:$0xff]
  %v3729 = vld [vmem:[%s5 + $0x20] sm:$0xf]
  %v3730 = vld [vmem:[%s5 + $0x24] sm:$0xff]
  %v3731 = vld [vmem:[%s5 + $0x2c] sm:$0xf]
  %v3732 = vld [vmem:[%s5 + $0x30] sm:$0xff]
  %v3733 = vld [vmem:[%s5 + $0x38] sm:$0xf]
  %v3734 = vld [vmem:[%s5 + $0x3c] sm:$0xff]
  %v3735 = vld [vmem:[%s5 + $0x44] sm:$0xf]
  %v3736 = vld [vmem:[%s5 + $0x48] sm:$0xff]
  %v3737 = vld [vmem:[%s5 + $0x50] sm:$0xf]
  %v3738 = vld [vmem:[%s5 + $0x54] sm:$0xff]
  %v3739 = vld [vmem:[%s5 + $0x5c] sm:$0xf]
  %v3740 = vld [vmem:[%s5 + $0x60] sm:$0xff]
  %v3741 = vld [vmem:[%s5 + $0x68] sm:$0xf]
  %v3742 = vld [vmem:[%s5 + $0x6c] sm:$0xff]
  %v3743 = vld [vmem:[%s5 + $0x74] sm:$0xf]
  %v3744 = vld [vmem:[%s5 + $0x78] sm:$0xff]
  %v3745 = vld [vmem:[%s5 + $0x80] sm:$0xf]
  %v3746 = vld [vmem:[%s5 + $0x84] sm:$0xff]
  %v3747 = vld [vmem:[%s5 + $0x8c] sm:$0xf]
  %v3748 = vld [vmem:[%s5 + $0x90] sm:$0xff]
  %v3749 = vld [vmem:[%s5 + $0x98] sm:$0xf]
  %v3750 = vld [vmem:[%s5 + $0x9c] sm:$0xff]
  %v3751 = vld [vmem:[%s5 + $0xa4] sm:$0xf]
  %v3752 = vld [vmem:[%s5 + $0xa8] sm:$0xff]
  %v3753 = vld [vmem:[%s5 + $0xb0] sm:$0xf]
  %v3754 = vld [vmem:[%s5 + $0xb4] sm:$0xff]
  %v3755 = vld [vmem:[%s5 + $0xbc] sm:$0xf]
  %v3756 = vld [vmem:[%s7] sm:$0x7]
  %v3758 = vperm.slane %v3756, 0
  %v3759 = vperm.slane %v3756, 1
  %v3760 = vperm.slane %v3756, 2
  %v3796 = vunpack.c.l.b16 %v3724
  %v3797 = vunpack.c.h.b16 %v3724
  %v3798 = vunpack.c.l.b16 %v3725
  %v3799 = vunpack.c.l.b16 %v3726
  %v3800 = vunpack.c.h.b16 %v3726
  %v3801 = vunpack.c.l.b16 %v3727
  %v3802 = vunpack.c.l.b16 %v3728
  %v3803 = vunpack.c.h.b16 %v3728
  %v3804 = vunpack.c.l.b16 %v3729
  %v3805 = vunpack.c.l.b16 %v3730
  %v3806 = vunpack.c.h.b16 %v3730
  %v3807 = vunpack.c.l.b16 %v3731
  %v3808 = vunpack.c.l.b16 %v3732
  %v3809 = vunpack.c.h.b16 %v3732
  %v3810 = vunpack.c.l.b16 %v3733
  %v3811 = vunpack.c.l.b16 %v3734
  %v3812 = vunpack.c.h.b16 %v3734
  %v3813 = vunpack.c.l.b16 %v3735
  %v3814 = vunpack.c.l.b16 %v3736
  %v3815 = vunpack.c.h.b16 %v3736
  %v3816 = vunpack.c.l.b16 %v3737
  %v3817 = vunpack.c.l.b16 %v3738
  %v3818 = vunpack.c.h.b16 %v3738
  %v3819 = vunpack.c.l.b16 %v3739
  %v3820 = vunpack.c.l.b16 %v3740
  %v3821 = vunpack.c.h.b16 %v3740
  %v3822 = vunpack.c.l.b16 %v3741
  %v3823 = vunpack.c.l.b16 %v3742
  %v3824 = vunpack.c.h.b16 %v3742
  %v3825 = vunpack.c.l.b16 %v3743
  %v3826 = vunpack.c.l.b16 %v3744
  %v3827 = vunpack.c.h.b16 %v3744
  %v3828 = vunpack.c.l.b16 %v3745
  %v3829 = vunpack.c.l.b16 %v3746
  %v3830 = vunpack.c.h.b16 %v3746
  %v3831 = vunpack.c.l.b16 %v3747
  %v3832 = vunpack.c.l.b16 %v3748
  %v3833 = vunpack.c.h.b16 %v3748
  %v3834 = vunpack.c.l.b16 %v3749
  %v3835 = vunpack.c.l.b16 %v3750
  %v3836 = vunpack.c.h.b16 %v3750
  %v3837 = vunpack.c.l.b16 %v3751
  %v3838 = vunpack.c.l.b16 %v3752
  %v3839 = vunpack.c.h.b16 %v3752
  %v3840 = vunpack.c.l.b16 %v3753
  %v3841 = vunpack.c.l.b16 %v3754
  %v3842 = vunpack.c.h.b16 %v3754
  %v3843 = vunpack.c.l.b16 %v3755
  %v3844 = vpack.c.b16 %v3799, %v3796
  %v3845 = vpack.c.b16 %v3800, %v3797
  %v3846 = vpack.c.b16 %v3801, %v3798
  %v3847 = vpack.c.b16 %v3805, %v3802
  %v3848 = vpack.c.b16 %v3806, %v3803
  %v3849 = vpack.c.b16 %v3807, %v3804
  %v3850 = vpack.c.b16 %v3811, %v3808
  %v3851 = vpack.c.b16 %v3812, %v3809
  %v3852 = vpack.c.b16 %v3813, %v3810
  %v3853 = vpack.c.b16 %v3817, %v3814
  %v3854 = vpack.c.b16 %v3818, %v3815
  %v3855 = vpack.c.b16 %v3819, %v3816
  %v3856 = vpack.c.b16 %v3823, %v3820
  %v3857 = vpack.c.b16 %v3824, %v3821
  %v3858 = vpack.c.b16 %v3825, %v3822
  %v3859 = vpack.c.b16 %v3829, %v3826
  %v3860 = vpack.c.b16 %v3830, %v3827
  %v3861 = vpack.c.b16 %v3831, %v3828
  %v3862 = vpack.c.b16 %v3835, %v3832
  %v3863 = vpack.c.b16 %v3836, %v3833
  %v3864 = vpack.c.b16 %v3837, %v3834
  %v3865 = vpack.c.b16 %v3841, %v3838
  %v3866 = vpack.c.b16 %v3842, %v3839
  %v3867 = vpack.c.b16 %v3843, %v3840
  %3892 = vmatpush.bf16.msra.mxu0 %v3865
  %3893 = vmatpush.bf16.msra.mxu0 %v3862
  %3894 = vmatpush.bf16.msra.mxu0 %v3859
  %3895 = vmatpush.bf16.msra.mxu0 %v3856
  %3896 = vmatpush.bf16.msra.mxu0 %v3853
  %3897 = vmatpush.bf16.msra.mxu0 %v3850
  %3898 = vmatpush.bf16.msra.mxu0 %v3847
  %3899 = vmatpush.bf16.msra.mxu0 %v3844
  %3900 = vmatmul.bf16.gmra.mxu0 %v3255
  %v3901 = vpop.f32.mrf.mxu0
  %v3902 = vadd.f32 %v3758, %v3901
  %v3903 = vpop.f32.mrf.mxu0
  %3904 = vdwg.mxu0
  %3905 = vmatpush.bf16.msra.mxu0 %v3866
  %3906 = vmatpush.bf16.msra.mxu0 %v3863
  %3907 = vmatpush.bf16.msra.mxu0 %v3860
  %3908 = vmatpush.bf16.msra.mxu0 %v3857
  %3909 = vmatpush.bf16.msra.mxu0 %v3854
  %3910 = vmatpush.bf16.msra.mxu0 %v3851
  %3911 = vmatpush.bf16.msra.mxu0 %v3848
  %3912 = vmatpush.bf16.msra.mxu0 %v3845
  %3913 = vmatmul.bf16.gmra.mxu0 %v3255
  %v3914 = vpop.f32.mrf.mxu0
  %v3915 = vadd.f32 %v3759, %v3914
  %v3916 = vpop.f32.mrf.mxu0
  %3917 = vdwg.mxu0
  %3918 = vmatpush.bf16.msra.mxu0 %v3867
  %3919 = vmatpush.bf16.msra.mxu0 %v3864
  %3920 = vmatpush.bf16.msra.mxu0 %v3861
  %3921 = vmatpush.bf16.msra.mxu0 %v3858
  %3922 = vmatpush.bf16.msra.mxu0 %v3855
  %3923 = vmatpush.bf16.msra.mxu0 %v3852
  %3924 = vmatpush.bf16.msra.mxu0 %v3849
  %3925 = vmatpush.bf16.msra.mxu0 %v3846
  %3926 = vmatmul.bf16.gmra.mxu0 %v3255
  %v3927 = vpop.f32.mrf.mxu0
  %v3928 = vadd.f32 %v3760, %v3927
  %v3929 = vpop.f32.mrf.mxu0
  %3930 = vdwg.mxu0
  %v3931 = vadd.f32 %v3721, %v3902
  %v3932 = vxor.u32 %v3931, 2147483648
  %v3933 = vmul.f32 %v3932, 1.442695
  %v3934 = vpow.pop %v3933
  %v3935 = vadd.f32 %v3934, 1.0
  %v3936 = vrcp.pop %v3935
  %v3937 = vmul.f32 %v3935, %v3936
  %v3938 = vsub.f32 1.0, %v3937
  %v3939 = vmul.f32 %v3936, %v3938
  %v3940 = vadd.f32 %v3936, %v3939
  %vm3941 = vweird.f32 %v3935
  %vm3942 = vweird.f32 %v3936
  %vm3943 = vmor %vm3941, %vm3942
  %v3944 = vsel %vm3943, %v3936, %v3940
  %v3945 = vand.u32 2147483647, %v3935
  %vm3946 = vcmp.eq.f32.partialorder %v3945, 8.507059e+37
  %v3947 = vand.u32 %v3935, 2147483648
  %v3948 = vor.u32 1.1754944e-38, %v3947
  %v3949 = vsel %vm3946, %v3948, %v3944
  %v3950 = vmul.f32 1.0, %v3949
  %v3951 = vadd.f32 %v3722, %v3915
  %v3952 = vxor.u32 %v3951, 2147483648
  %v3953 = vmul.f32 %v3952, 1.442695
  %v3954 = vpow.pop %v3953
  %v3955 = vadd.f32 %v3954, 1.0
  %v3956 = vrcp.pop %v3955
  %v3957 = vmul.f32 %v3955, %v3956
  %v3958 = vsub.f32 1.0, %v3957
  %v3959 = vmul.f32 %v3956, %v3958
  %v3960 = vadd.f32 %v3956, %v3959
  %vm3961 = vweird.f32 %v3955
  %vm3962 = vweird.f32 %v3956
  %vm3963 = vmor %vm3961, %vm3962
  %v3964 = vsel %vm3963, %v3956, %v3960
  %v3965 = vand.u32 2147483647, %v3955
  %vm3966 = vcmp.eq.f32.partialorder %v3965, 8.507059e+37
  %v3967 = vand.u32 %v3955, 2147483648
  %v3968 = vor.u32 1.1754944e-38, %v3967
  %v3969 = vsel %vm3966, %v3968, %v3964
  %v3970 = vmul.f32 1.0, %v3969
  %v3971 = vmul.f32 %v3950, %v3928
  %v3972 = vadd.f32 %v3723, %v3971
  %v3973 = vtanh.pop %v3972
  %v3974 = vsub.f32 1.0, %v3970
  %v3975 = vmul.f32 %v3974, %v3973
  %v3976 = vmul.f32 %v3970, %v3254
  %v3977 = vadd.f32 %v3975, %v3976
  %v3978 = vpack.c.bf16 %v3977, %v3977
  %v3979 = vld [vmem:[%s1085] sm:$0xff]
  %v3980 = vld [vmem:[%s1085 + $0x8] sm:$0xf]
  %v3981 = vld [vmem:[%s1085 + $0xc] sm:$0xff]
  %v3982 = vld [vmem:[%s1085 + $0x14] sm:$0xf]
  %v3983 = vld [vmem:[%s1085 + $0x18] sm:$0xff]
  %v3984 = vld [vmem:[%s1085 + $0x20] sm:$0xf]
  %v3985 = vld [vmem:[%s1085 + $0x24] sm:$0xff]
  %v3986 = vld [vmem:[%s1085 + $0x2c] sm:$0xf]
  %v3987 = vld [vmem:[%s1085 + $0x30] sm:$0xff]
  %v3988 = vld [vmem:[%s1085 + $0x38] sm:$0xf]
  %v3989 = vld [vmem:[%s1085 + $0x3c] sm:$0xff]
  %v3990 = vld [vmem:[%s1085 + $0x44] sm:$0xf]
  %v3991 = vld [vmem:[%s1085 + $0x48] sm:$0xff]
  %v3992 = vld [vmem:[%s1085 + $0x50] sm:$0xf]
  %v3993 = vld [vmem:[%s1085 + $0x54] sm:$0xff]
  %v3994 = vld [vmem:[%s1085 + $0x5c] sm:$0xf]
  %v3995 = vld [vmem:[%s1085 + $0x60] sm:$0xff]
  %v3996 = vld [vmem:[%s1085 + $0x68] sm:$0xf]
  %v3997 = vld [vmem:[%s1085 + $0x6c] sm:$0xff]
  %v3998 = vld [vmem:[%s1085 + $0x74] sm:$0xf]
  %v3999 = vld [vmem:[%s1085 + $0x78] sm:$0xff]
  %v4000 = vld [vmem:[%s1085 + $0x80] sm:$0xf]
  %v4001 = vld [vmem:[%s1085 + $0x84] sm:$0xff]
  %v4002 = vld [vmem:[%s1085 + $0x8c] sm:$0xf]
  %v4003 = vld [vmem:[%s1085 + $0x90] sm:$0xff]
  %v4004 = vld [vmem:[%s1085 + $0x98] sm:$0xf]
  %v4005 = vld [vmem:[%s1085 + $0x9c] sm:$0xff]
  %v4006 = vld [vmem:[%s1085 + $0xa4] sm:$0xf]
  %v4007 = vld [vmem:[%s1085 + $0xa8] sm:$0xff]
  %v4008 = vld [vmem:[%s1085 + $0xb0] sm:$0xf]
  %v4009 = vld [vmem:[%s1085 + $0xb4] sm:$0xff]
  %v4010 = vld [vmem:[%s1085 + $0xbc] sm:$0xf]
  %v4011 = vld [vmem:[%s1118] sm:$0x7]
  %v4013 = vperm.slane %v4011, 0
  %v4014 = vperm.slane %v4011, 1
  %v4015 = vperm.slane %v4011, 2
  %v4051 = vunpack.c.l.b16 %v3979
  %v4052 = vunpack.c.h.b16 %v3979
  %v4053 = vunpack.c.l.b16 %v3980
  %v4054 = vunpack.c.l.b16 %v3981
  %v4055 = vunpack.c.h.b16 %v3981
  %v4056 = vunpack.c.l.b16 %v3982
  %v4057 = vunpack.c.l.b16 %v3983
  %v4058 = vunpack.c.h.b16 %v3983
  %v4059 = vunpack.c.l.b16 %v3984
  %v4060 = vunpack.c.l.b16 %v3985
  %v4061 = vunpack.c.h.b16 %v3985
  %v4062 = vunpack.c.l.b16 %v3986
  %v4063 = vunpack.c.l.b16 %v3987
  %v4064 = vunpack.c.h.b16 %v3987
  %v4065 = vunpack.c.l.b16 %v3988
  %v4066 = vunpack.c.l.b16 %v3989
  %v4067 = vunpack.c.h.b16 %v3989
  %v4068 = vunpack.c.l.b16 %v3990
  %v4069 = vunpack.c.l.b16 %v3991
  %v4070 = vunpack.c.h.b16 %v3991
  %v4071 = vunpack.c.l.b16 %v3992
  %v4072 = vunpack.c.l.b16 %v3993
  %v4073 = vunpack.c.h.b16 %v3993
  %v4074 = vunpack.c.l.b16 %v3994
  %v4075 = vunpack.c.l.b16 %v3995
  %v4076 = vunpack.c.h.b16 %v3995
  %v4077 = vunpack.c.l.b16 %v3996
  %v4078 = vunpack.c.l.b16 %v3997
  %v4079 = vunpack.c.h.b16 %v3997
  %v4080 = vunpack.c.l.b16 %v3998
  %v4081 = vunpack.c.l.b16 %v3999
  %v4082 = vunpack.c.h.b16 %v3999
  %v4083 = vunpack.c.l.b16 %v4000
  %v4084 = vunpack.c.l.b16 %v4001
  %v4085 = vunpack.c.h.b16 %v4001
  %v4086 = vunpack.c.l.b16 %v4002
  %v4087 = vunpack.c.l.b16 %v4003
  %v4088 = vunpack.c.h.b16 %v4003
  %v4089 = vunpack.c.l.b16 %v4004
  %v4090 = vunpack.c.l.b16 %v4005
  %v4091 = vunpack.c.h.b16 %v4005
  %v4092 = vunpack.c.l.b16 %v4006
  %v4093 = vunpack.c.l.b16 %v4007
  %v4094 = vunpack.c.h.b16 %v4007
  %v4095 = vunpack.c.l.b16 %v4008
  %v4096 = vunpack.c.l.b16 %v4009
  %v4097 = vunpack.c.h.b16 %v4009
  %v4098 = vunpack.c.l.b16 %v4010
  %v4099 = vpack.c.b16 %v4054, %v4051
  %v4100 = vpack.c.b16 %v4055, %v4052
  %v4101 = vpack.c.b16 %v4056, %v4053
  %v4102 = vpack.c.b16 %v4060, %v4057
  %v4103 = vpack.c.b16 %v4061, %v4058
  %v4104 = vpack.c.b16 %v4062, %v4059
  %v4105 = vpack.c.b16 %v4066, %v4063
  %v4106 = vpack.c.b16 %v4067, %v4064
  %v4107 = vpack.c.b16 %v4068, %v4065
  %v4108 = vpack.c.b16 %v4072, %v4069
  %v4109 = vpack.c.b16 %v4073, %v4070
  %v4110 = vpack.c.b16 %v4074, %v4071
  %v4111 = vpack.c.b16 %v4078, %v4075
  %v4112 = vpack.c.b16 %v4079, %v4076
  %v4113 = vpack.c.b16 %v4080, %v4077
  %v4114 = vpack.c.b16 %v4084, %v4081
  %v4115 = vpack.c.b16 %v4085, %v4082
  %v4116 = vpack.c.b16 %v4086, %v4083
  %v4117 = vpack.c.b16 %v4090, %v4087
  %v4118 = vpack.c.b16 %v4091, %v4088
  %v4119 = vpack.c.b16 %v4092, %v4089
  %v4120 = vpack.c.b16 %v4096, %v4093
  %v4121 = vpack.c.b16 %v4097, %v4094
  %v4122 = vpack.c.b16 %v4098, %v4095
  %4147 = vmatpush.bf16.msra.mxu0 %v4120
  %4148 = vmatpush.bf16.msra.mxu0 %v4117
  %4149 = vmatpush.bf16.msra.mxu0 %v4114
  %4150 = vmatpush.bf16.msra.mxu0 %v4111
  %4151 = vmatpush.bf16.msra.mxu0 %v4108
  %4152 = vmatpush.bf16.msra.mxu0 %v4105
  %4153 = vmatpush.bf16.msra.mxu0 %v4102
  %4154 = vmatpush.bf16.msra.mxu0 %v4099
  %4155 = vmatmul.bf16.gmra.mxu0 %v3978
  %v4156 = vpop.f32.mrf.mxu0
  %v4157 = vadd.f32 %v4013, %v4156
  %v4158 = vpop.f32.mrf.mxu0
  %4159 = vdwg.mxu0
  %4160 = vmatpush.bf16.msra.mxu0 %v4121
  %4161 = vmatpush.bf16.msra.mxu0 %v4118
  %4162 = vmatpush.bf16.msra.mxu0 %v4115
  %4163 = vmatpush.bf16.msra.mxu0 %v4112
  %4164 = vmatpush.bf16.msra.mxu0 %v4109
  %4165 = vmatpush.bf16.msra.mxu0 %v4106
  %4166 = vmatpush.bf16.msra.mxu0 %v4103
  %4167 = vmatpush.bf16.msra.mxu0 %v4100
  %4168 = vmatmul.bf16.gmra.mxu0 %v3978
  %v4169 = vpop.f32.mrf.mxu0
  %v4170 = vadd.f32 %v4014, %v4169
  %v4171 = vpop.f32.mrf.mxu0
  %4172 = vdwg.mxu0
  %4173 = vmatpush.bf16.msra.mxu0 %v4122
  %4174 = vmatpush.bf16.msra.mxu0 %v4119
  %4175 = vmatpush.bf16.msra.mxu0 %v4116
  %4176 = vmatpush.bf16.msra.mxu0 %v4113
  %4177 = vmatpush.bf16.msra.mxu0 %v4110
  %4178 = vmatpush.bf16.msra.mxu0 %v4107
  %4179 = vmatpush.bf16.msra.mxu0 %v4104
  %4180 = vmatpush.bf16.msra.mxu0 %v4101
  %4181 = vmatmul.bf16.gmra.mxu0 %v3978
  %v4182 = vpop.f32.mrf.mxu0
  %v4183 = vadd.f32 %v4015, %v4182
  %v4184 = vpop.f32.mrf.mxu0
  %4185 = vdwg.mxu0
  %v4186 = vld [vmem:[%s1294] sm:$0xff]
  %v4187 = vld [vmem:[%s1294 + $0x8] sm:$0xf]
  %v4188 = vld [vmem:[%s1294 + $0xc] sm:$0xff]
  %v4189 = vld [vmem:[%s1294 + $0x14] sm:$0xf]
  %v4190 = vld [vmem:[%s1294 + $0x18] sm:$0xff]
  %v4191 = vld [vmem:[%s1294 + $0x20] sm:$0xf]
  %v4192 = vld [vmem:[%s1294 + $0x24] sm:$0xff]
  %v4193 = vld [vmem:[%s1294 + $0x2c] sm:$0xf]
  %v4194 = vld [vmem:[%s1294 + $0x30] sm:$0xff]
  %v4195 = vld [vmem:[%s1294 + $0x38] sm:$0xf]
  %v4196 = vld [vmem:[%s1294 + $0x3c] sm:$0xff]
  %v4197 = vld [vmem:[%s1294 + $0x44] sm:$0xf]
  %v4198 = vld [vmem:[%s1294 + $0x48] sm:$0xff]
  %v4199 = vld [vmem:[%s1294 + $0x50] sm:$0xf]
  %v4200 = vld [vmem:[%s1294 + $0x54] sm:$0xff]
  %v4201 = vld [vmem:[%s1294 + $0x5c] sm:$0xf]
  %v4202 = vld [vmem:[%s1294 + $0x60] sm:$0xff]
  %v4203 = vld [vmem:[%s1294 + $0x68] sm:$0xf]
  %v4204 = vld [vmem:[%s1294 + $0x6c] sm:$0xff]
  %v4205 = vld [vmem:[%s1294 + $0x74] sm:$0xf]
  %v4206 = vld [vmem:[%s1294 + $0x78] sm:$0xff]
  %v4207 = vld [vmem:[%s1294 + $0x80] sm:$0xf]
  %v4208 = vld [vmem:[%s1294 + $0x84] sm:$0xff]
  %v4209 = vld [vmem:[%s1294 + $0x8c] sm:$0xf]
  %v4210 = vld [vmem:[%s1294 + $0x90] sm:$0xff]
  %v4211 = vld [vmem:[%s1294 + $0x98] sm:$0xf]
  %v4212 = vld [vmem:[%s1294 + $0x9c] sm:$0xff]
  %v4213 = vld [vmem:[%s1294 + $0xa4] sm:$0xf]
  %v4214 = vld [vmem:[%s1294 + $0xa8] sm:$0xff]
  %v4215 = vld [vmem:[%s1294 + $0xb0] sm:$0xf]
  %v4216 = vld [vmem:[%s1294 + $0xb4] sm:$0xff]
  %v4217 = vld [vmem:[%s1294 + $0xbc] sm:$0xf]
  %v4218 = vld [vmem:[%s1327] sm:$0x7]
  %v4219 = vpack.c.bf16 %v3717, %v3717
  %v4221 = vperm.slane %v4218, 0
  %v4222 = vperm.slane %v4218, 1
  %v4223 = vperm.slane %v4218, 2
  %v4259 = vunpack.c.l.b16 %v4186
  %v4260 = vunpack.c.h.b16 %v4186
  %v4261 = vunpack.c.l.b16 %v4187
  %v4262 = vunpack.c.l.b16 %v4188
  %v4263 = vunpack.c.h.b16 %v4188
  %v4264 = vunpack.c.l.b16 %v4189
  %v4265 = vunpack.c.l.b16 %v4190
  %v4266 = vunpack.c.h.b16 %v4190
  %v4267 = vunpack.c.l.b16 %v4191
  %v4268 = vunpack.c.l.b16 %v4192
  %v4269 = vunpack.c.h.b16 %v4192
  %v4270 = vunpack.c.l.b16 %v4193
  %v4271 = vunpack.c.l.b16 %v4194
  %v4272 = vunpack.c.h.b16 %v4194
  %v4273 = vunpack.c.l.b16 %v4195
  %v4274 = vunpack.c.l.b16 %v4196
  %v4275 = vunpack.c.h.b16 %v4196
  %v4276 = vunpack.c.l.b16 %v4197
  %v4277 = vunpack.c.l.b16 %v4198
  %v4278 = vunpack.c.h.b16 %v4198
  %v4279 = vunpack.c.l.b16 %v4199
  %v4280 = vunpack.c.l.b16 %v4200
  %v4281 = vunpack.c.h.b16 %v4200
  %v4282 = vunpack.c.l.b16 %v4201
  %v4283 = vunpack.c.l.b16 %v4202
  %v4284 = vunpack.c.h.b16 %v4202
  %v4285 = vunpack.c.l.b16 %v4203
  %v4286 = vunpack.c.l.b16 %v4204
  %v4287 = vunpack.c.h.b16 %v4204
  %v4288 = vunpack.c.l.b16 %v4205
  %v4289 = vunpack.c.l.b16 %v4206
  %v4290 = vunpack.c.h.b16 %v4206
  %v4291 = vunpack.c.l.b16 %v4207
  %v4292 = vunpack.c.l.b16 %v4208
  %v4293 = vunpack.c.h.b16 %v4208
  %v4294 = vunpack.c.l.b16 %v4209
  %v4295 = vunpack.c.l.b16 %v4210
  %v4296 = vunpack.c.h.b16 %v4210
  %v4297 = vunpack.c.l.b16 %v4211
  %v4298 = vunpack.c.l.b16 %v4212
  %v4299 = vunpack.c.h.b16 %v4212
  %v4300 = vunpack.c.l.b16 %v4213
  %v4301 = vunpack.c.l.b16 %v4214
  %v4302 = vunpack.c.h.b16 %v4214
  %v4303 = vunpack.c.l.b16 %v4215
  %v4304 = vunpack.c.l.b16 %v4216
  %v4305 = vunpack.c.h.b16 %v4216
  %v4306 = vunpack.c.l.b16 %v4217
  %v4307 = vpack.c.b16 %v4262, %v4259
  %v4308 = vpack.c.b16 %v4263, %v4260
  %v4309 = vpack.c.b16 %v4264, %v4261
  %v4310 = vpack.c.b16 %v4268, %v4265
  %v4311 = vpack.c.b16 %v4269, %v4266
  %v4312 = vpack.c.b16 %v4270, %v4267
  %v4313 = vpack.c.b16 %v4274, %v4271
  %v4314 = vpack.c.b16 %v4275, %v4272
  %v4315 = vpack.c.b16 %v4276, %v4273
  %v4316 = vpack.c.b16 %v4280, %v4277
  %v4317 = vpack.c.b16 %v4281, %v4278
  %v4318 = vpack.c.b16 %v4282, %v4279
  %v4319 = vpack.c.b16 %v4286, %v4283
  %v4320 = vpack.c.b16 %v4287, %v4284
  %v4321 = vpack.c.b16 %v4288, %v4285
  %v4322 = vpack.c.b16 %v4292, %v4289
  %v4323 = vpack.c.b16 %v4293, %v4290
  %v4324 = vpack.c.b16 %v4294, %v4291
  %v4325 = vpack.c.b16 %v4298, %v4295
  %v4326 = vpack.c.b16 %v4299, %v4296
  %v4327 = vpack.c.b16 %v4300, %v4297
  %v4328 = vpack.c.b16 %v4304, %v4301
  %v4329 = vpack.c.b16 %v4305, %v4302
  %v4330 = vpack.c.b16 %v4306, %v4303
  %4355 = vmatpush.bf16.msra.mxu0 %v4328
  %4356 = vmatpush.bf16.msra.mxu0 %v4325
  %4357 = vmatpush.bf16.msra.mxu0 %v4322
  %4358 = vmatpush.bf16.msra.mxu0 %v4319
  %4359 = vmatpush.bf16.msra.mxu0 %v4316
  %4360 = vmatpush.bf16.msra.mxu0 %v4313
  %4361 = vmatpush.bf16.msra.mxu0 %v4310
  %4362 = vmatpush.bf16.msra.mxu0 %v4307
  %4363 = vmatmul.bf16.gmra.mxu0 %v4219
  %v4364 = vpop.f32.mrf.mxu0
  %v4365 = vadd.f32 %v4221, %v4364
  %v4366 = vpop.f32.mrf.mxu0
  %4367 = vdwg.mxu0
  %4368 = vmatpush.bf16.msra.mxu0 %v4329
  %4369 = vmatpush.bf16.msra.mxu0 %v4326
  %4370 = vmatpush.bf16.msra.mxu0 %v4323
  %4371 = vmatpush.bf16.msra.mxu0 %v4320
  %4372 = vmatpush.bf16.msra.mxu0 %v4317
  %4373 = vmatpush.bf16.msra.mxu0 %v4314
  %4374 = vmatpush.bf16.msra.mxu0 %v4311
  %4375 = vmatpush.bf16.msra.mxu0 %v4308
  %4376 = vmatmul.bf16.gmra.mxu0 %v4219
  %v4377 = vpop.f32.mrf.mxu0
  %v4378 = vadd.f32 %v4222, %v4377
  %v4379 = vpop.f32.mrf.mxu0
  %4380 = vdwg.mxu0
  %4381 = vmatpush.bf16.msra.mxu0 %v4330
  %4382 = vmatpush.bf16.msra.mxu0 %v4327
  %4383 = vmatpush.bf16.msra.mxu0 %v4324
  %4384 = vmatpush.bf16.msra.mxu0 %v4321
  %4385 = vmatpush.bf16.msra.mxu0 %v4318
  %4386 = vmatpush.bf16.msra.mxu0 %v4315
  %4387 = vmatpush.bf16.msra.mxu0 %v4312
  %4388 = vmatpush.bf16.msra.mxu0 %v4309
  %4389 = vmatmul.bf16.gmra.mxu0 %v4219
  %v4390 = vpop.f32.mrf.mxu0
  %v4391 = vadd.f32 %v4223, %v4390
  %v4392 = vpop.f32.mrf.mxu0
  %4393 = vdwg.mxu0
  %v4394 = vadd.f32 %v4157, %v4365
  %v4395 = vxor.u32 %v4394, 2147483648
  %v4396 = vmul.f32 %v4395, 1.442695
  %v4397 = vpow.pop %v4396
  %v4398 = vadd.f32 %v4397, 1.0
  %v4399 = vrcp.pop %v4398
  %v4400 = vmul.f32 %v4398, %v4399
  %v4401 = vsub.f32 1.0, %v4400
  %v4402 = vmul.f32 %v4399, %v4401
  %v4403 = vadd.f32 %v4399, %v4402
  %vm4404 = vweird.f32 %v4398
  %vm4405 = vweird.f32 %v4399
  %vm4406 = vmor %vm4404, %vm4405
  %v4407 = vsel %vm4406, %v4399, %v4403
  %v4408 = vand.u32 2147483647, %v4398
  %vm4409 = vcmp.eq.f32.partialorder %v4408, 8.507059e+37
  %v4410 = vand.u32 %v4398, 2147483648
  %v4411 = vor.u32 1.1754944e-38, %v4410
  %v4412 = vsel %vm4409, %v4411, %v4407
  %v4413 = vmul.f32 1.0, %v4412
  %v4414 = vadd.f32 %v4170, %v4378
  %v4415 = vxor.u32 %v4414, 2147483648
  %v4416 = vmul.f32 %v4415, 1.442695
  %v4417 = vpow.pop %v4416
  %v4418 = vadd.f32 %v4417, 1.0
  %v4419 = vrcp.pop %v4418
  %v4420 = vmul.f32 %v4418, %v4419
  %v4421 = vsub.f32 1.0, %v4420
  %v4422 = vmul.f32 %v4419, %v4421
  %v4423 = vadd.f32 %v4419, %v4422
  %vm4424 = vweird.f32 %v4418
  %vm4425 = vweird.f32 %v4419
  %vm4426 = vmor %vm4424, %vm4425
  %v4427 = vsel %vm4426, %v4419, %v4423
  %v4428 = vand.u32 2147483647, %v4418
  %vm4429 = vcmp.eq.f32.partialorder %v4428, 8.507059e+37
  %v4430 = vand.u32 %v4418, 2147483648
  %v4431 = vor.u32 1.1754944e-38, %v4430
  %v4432 = vsel %vm4429, %v4431, %v4427
  %v4433 = vmul.f32 1.0, %v4432
  %v4434 = vmul.f32 %v4413, %v4391
  %v4435 = vadd.f32 %v4183, %v4434
  %v4436 = vtanh.pop %v4435
  %v4437 = vsub.f32 1.0, %v4433
  %v4438 = vmul.f32 %v4437, %v4436
  %v4439 = vmul.f32 %v4433, %v3717
  %v4440 = vadd.f32 %v4438, %v4439
  %s4441 = scalar_lea.vmem [#allocation3], 32
  %4442 = vst [vmem:[%s4441] sm:$0xff] %v4440
  %s4443 = scalar_lea.vmem [#allocation2], 120
  %v4444 = vld [vmem:[%s4443] sm:$0xff]
  %v4445 = vld [vmem:[%s4443 + $0x8] sm:$0xff]
  %v4446 = vld [vmem:[%s4443 + $0x10] sm:$0xff]
  %v4447 = vld [vmem:[%s5] sm:$0xff]
  %v4448 = vld [vmem:[%s5 + $0x8] sm:$0xf]
  %v4449 = vld [vmem:[%s5 + $0xc] sm:$0xff]
  %v4450 = vld [vmem:[%s5 + $0x14] sm:$0xf]
  %v4451 = vld [vmem:[%s5 + $0x18] sm:$0xff]
  %v4452 = vld [vmem:[%s5 + $0x20] sm:$0xf]
  %v4453 = vld [vmem:[%s5 + $0x24] sm:$0xff]
  %v4454 = vld [vmem:[%s5 + $0x2c] sm:$0xf]
  %v4455 = vld [vmem:[%s5 + $0x30] sm:$0xff]
  %v4456 = vld [vmem:[%s5 + $0x38] sm:$0xf]
  %v4457 = vld [vmem:[%s5 + $0x3c] sm:$0xff]
  %v4458 = vld [vmem:[%s5 + $0x44] sm:$0xf]
  %v4459 = vld [vmem:[%s5 + $0x48] sm:$0xff]
  %v4460 = vld [vmem:[%s5 + $0x50] sm:$0xf]
  %v4461 = vld [vmem:[%s5 + $0x54] sm:$0xff]
  %v4462 = vld [vmem:[%s5 + $0x5c] sm:$0xf]
  %v4463 = vld [vmem:[%s5 + $0x60] sm:$0xff]
  %v4464 = vld [vmem:[%s5 + $0x68] sm:$0xf]
  %v4465 = vld [vmem:[%s5 + $0x6c] sm:$0xff]
  %v4466 = vld [vmem:[%s5 + $0x74] sm:$0xf]
  %v4467 = vld [vmem:[%s5 + $0x78] sm:$0xff]
  %v4468 = vld [vmem:[%s5 + $0x80] sm:$0xf]
  %v4469 = vld [vmem:[%s5 + $0x84] sm:$0xff]
  %v4470 = vld [vmem:[%s5 + $0x8c] sm:$0xf]
  %v4471 = vld [vmem:[%s5 + $0x90] sm:$0xff]
  %v4472 = vld [vmem:[%s5 + $0x98] sm:$0xf]
  %v4473 = vld [vmem:[%s5 + $0x9c] sm:$0xff]
  %v4474 = vld [vmem:[%s5 + $0xa4] sm:$0xf]
  %v4475 = vld [vmem:[%s5 + $0xa8] sm:$0xff]
  %v4476 = vld [vmem:[%s5 + $0xb0] sm:$0xf]
  %v4477 = vld [vmem:[%s5 + $0xb4] sm:$0xff]
  %v4478 = vld [vmem:[%s5 + $0xbc] sm:$0xf]
  %v4479 = vld [vmem:[%s7] sm:$0x7]
  %v4481 = vperm.slane %v4479, 0
  %v4482 = vperm.slane %v4479, 1
  %v4483 = vperm.slane %v4479, 2
  %v4519 = vunpack.c.l.b16 %v4447
  %v4520 = vunpack.c.h.b16 %v4447
  %v4521 = vunpack.c.l.b16 %v4448
  %v4522 = vunpack.c.l.b16 %v4449
  %v4523 = vunpack.c.h.b16 %v4449
  %v4524 = vunpack.c.l.b16 %v4450
  %v4525 = vunpack.c.l.b16 %v4451
  %v4526 = vunpack.c.h.b16 %v4451
  %v4527 = vunpack.c.l.b16 %v4452
  %v4528 = vunpack.c.l.b16 %v4453
  %v4529 = vunpack.c.h.b16 %v4453
  %v4530 = vunpack.c.l.b16 %v4454
  %v4531 = vunpack.c.l.b16 %v4455
  %v4532 = vunpack.c.h.b16 %v4455
  %v4533 = vunpack.c.l.b16 %v4456
  %v4534 = vunpack.c.l.b16 %v4457
  %v4535 = vunpack.c.h.b16 %v4457
  %v4536 = vunpack.c.l.b16 %v4458
  %v4537 = vunpack.c.l.b16 %v4459
  %v4538 = vunpack.c.h.b16 %v4459
  %v4539 = vunpack.c.l.b16 %v4460
  %v4540 = vunpack.c.l.b16 %v4461
  %v4541 = vunpack.c.h.b16 %v4461
  %v4542 = vunpack.c.l.b16 %v4462
  %v4543 = vunpack.c.l.b16 %v4463
  %v4544 = vunpack.c.h.b16 %v4463
  %v4545 = vunpack.c.l.b16 %v4464
  %v4546 = vunpack.c.l.b16 %v4465
  %v4547 = vunpack.c.h.b16 %v4465
  %v4548 = vunpack.c.l.b16 %v4466
  %v4549 = vunpack.c.l.b16 %v4467
  %v4550 = vunpack.c.h.b16 %v4467
  %v4551 = vunpack.c.l.b16 %v4468
  %v4552 = vunpack.c.l.b16 %v4469
  %v4553 = vunpack.c.h.b16 %v4469
  %v4554 = vunpack.c.l.b16 %v4470
  %v4555 = vunpack.c.l.b16 %v4471
  %v4556 = vunpack.c.h.b16 %v4471
  %v4557 = vunpack.c.l.b16 %v4472
  %v4558 = vunpack.c.l.b16 %v4473
  %v4559 = vunpack.c.h.b16 %v4473
  %v4560 = vunpack.c.l.b16 %v4474
  %v4561 = vunpack.c.l.b16 %v4475
  %v4562 = vunpack.c.h.b16 %v4475
  %v4563 = vunpack.c.l.b16 %v4476
  %v4564 = vunpack.c.l.b16 %v4477
  %v4565 = vunpack.c.h.b16 %v4477
  %v4566 = vunpack.c.l.b16 %v4478
  %v4567 = vpack.c.b16 %v4522, %v4519
  %v4568 = vpack.c.b16 %v4523, %v4520
  %v4569 = vpack.c.b16 %v4524, %v4521
  %v4570 = vpack.c.b16 %v4528, %v4525
  %v4571 = vpack.c.b16 %v4529, %v4526
  %v4572 = vpack.c.b16 %v4530, %v4527
  %v4573 = vpack.c.b16 %v4534, %v4531
  %v4574 = vpack.c.b16 %v4535, %v4532
  %v4575 = vpack.c.b16 %v4536, %v4533
  %v4576 = vpack.c.b16 %v4540, %v4537
  %v4577 = vpack.c.b16 %v4541, %v4538
  %v4578 = vpack.c.b16 %v4542, %v4539
  %v4579 = vpack.c.b16 %v4546, %v4543
  %v4580 = vpack.c.b16 %v4547, %v4544
  %v4581 = vpack.c.b16 %v4548, %v4545
  %v4582 = vpack.c.b16 %v4552, %v4549
  %v4583 = vpack.c.b16 %v4553, %v4550
  %v4584 = vpack.c.b16 %v4554, %v4551
  %v4585 = vpack.c.b16 %v4558, %v4555
  %v4586 = vpack.c.b16 %v4559, %v4556
  %v4587 = vpack.c.b16 %v4560, %v4557
  %v4588 = vpack.c.b16 %v4564, %v4561
  %v4589 = vpack.c.b16 %v4565, %v4562
  %v4590 = vpack.c.b16 %v4566, %v4563
  %4615 = vmatpush.bf16.msra.mxu0 %v4588
  %4616 = vmatpush.bf16.msra.mxu0 %v4585
  %4617 = vmatpush.bf16.msra.mxu0 %v4582
  %4618 = vmatpush.bf16.msra.mxu0 %v4579
  %4619 = vmatpush.bf16.msra.mxu0 %v4576
  %4620 = vmatpush.bf16.msra.mxu0 %v4573
  %4621 = vmatpush.bf16.msra.mxu0 %v4570
  %4622 = vmatpush.bf16.msra.mxu0 %v4567
  %4623 = vmatmul.bf16.gmra.mxu0 %v3978
  %v4624 = vpop.f32.mrf.mxu0
  %v4625 = vadd.f32 %v4481, %v4624
  %v4626 = vpop.f32.mrf.mxu0
  %4627 = vdwg.mxu0
  %4628 = vmatpush.bf16.msra.mxu0 %v4589
  %4629 = vmatpush.bf16.msra.mxu0 %v4586
  %4630 = vmatpush.bf16.msra.mxu0 %v4583
  %4631 = vmatpush.bf16.msra.mxu0 %v4580
  %4632 = vmatpush.bf16.msra.mxu0 %v4577
  %4633 = vmatpush.bf16.msra.mxu0 %v4574
  %4634 = vmatpush.bf16.msra.mxu0 %v4571
  %4635 = vmatpush.bf16.msra.mxu0 %v4568
  %4636 = vmatmul.bf16.gmra.mxu0 %v3978
  %v4637 = vpop.f32.mrf.mxu0
  %v4638 = vadd.f32 %v4482, %v4637
  %v4639 = vpop.f32.mrf.mxu0
  %4640 = vdwg.mxu0
  %4641 = vmatpush.bf16.msra.mxu0 %v4590
  %4642 = vmatpush.bf16.msra.mxu0 %v4587
  %4643 = vmatpush.bf16.msra.mxu0 %v4584
  %4644 = vmatpush.bf16.msra.mxu0 %v4581
  %4645 = vmatpush.bf16.msra.mxu0 %v4578
  %4646 = vmatpush.bf16.msra.mxu0 %v4575
  %4647 = vmatpush.bf16.msra.mxu0 %v4572
  %4648 = vmatpush.bf16.msra.mxu0 %v4569
  %4649 = vmatmul.bf16.gmra.mxu0 %v3978
  %v4650 = vpop.f32.mrf.mxu0
  %v4651 = vadd.f32 %v4483, %v4650
  %v4652 = vpop.f32.mrf.mxu0
  %4653 = vdwg.mxu0
  %v4654 = vadd.f32 %v4444, %v4625
  %v4655 = vxor.u32 %v4654, 2147483648
  %v4656 = vmul.f32 %v4655, 1.442695
  %v4657 = vpow.pop %v4656
  %v4658 = vadd.f32 %v4657, 1.0
  %v4659 = vrcp.pop %v4658
  %v4660 = vmul.f32 %v4658, %v4659
  %v4661 = vsub.f32 1.0, %v4660
  %v4662 = vmul.f32 %v4659, %v4661
  %v4663 = vadd.f32 %v4659, %v4662
  %vm4664 = vweird.f32 %v4658
  %vm4665 = vweird.f32 %v4659
  %vm4666 = vmor %vm4664, %vm4665
  %v4667 = vsel %vm4666, %v4659, %v4663
  %v4668 = vand.u32 2147483647, %v4658
  %vm4669 = vcmp.eq.f32.partialorder %v4668, 8.507059e+37
  %v4670 = vand.u32 %v4658, 2147483648
  %v4671 = vor.u32 1.1754944e-38, %v4670
  %v4672 = vsel %vm4669, %v4671, %v4667
  %v4673 = vmul.f32 1.0, %v4672
  %v4674 = vadd.f32 %v4445, %v4638
  %v4675 = vxor.u32 %v4674, 2147483648
  %v4676 = vmul.f32 %v4675, 1.442695
  %v4677 = vpow.pop %v4676
  %v4678 = vadd.f32 %v4677, 1.0
  %v4679 = vrcp.pop %v4678
  %v4680 = vmul.f32 %v4678, %v4679
  %v4681 = vsub.f32 1.0, %v4680
  %v4682 = vmul.f32 %v4679, %v4681
  %v4683 = vadd.f32 %v4679, %v4682
  %vm4684 = vweird.f32 %v4678
  %vm4685 = vweird.f32 %v4679
  %vm4686 = vmor %vm4684, %vm4685
  %v4687 = vsel %vm4686, %v4679, %v4683
  %v4688 = vand.u32 2147483647, %v4678
  %vm4689 = vcmp.eq.f32.partialorder %v4688, 8.507059e+37
  %v4690 = vand.u32 %v4678, 2147483648
  %v4691 = vor.u32 1.1754944e-38, %v4690
  %v4692 = vsel %vm4689, %v4691, %v4687
  %v4693 = vmul.f32 1.0, %v4692
  %v4694 = vmul.f32 %v4673, %v4651
  %v4695 = vadd.f32 %v4446, %v4694
  %v4696 = vtanh.pop %v4695
  %v4697 = vsub.f32 1.0, %v4693
  %v4698 = vmul.f32 %v4697, %v4696
  %v4699 = vmul.f32 %v4693, %v3977
  %v4700 = vadd.f32 %v4698, %v4699
  %v4701 = vpack.c.bf16 %v4700, %v4700
  %v4702 = vld [vmem:[%s1085] sm:$0xff]
  %v4703 = vld [vmem:[%s1085 + $0x8] sm:$0xf]
  %v4704 = vld [vmem:[%s1085 + $0xc] sm:$0xff]
  %v4705 = vld [vmem:[%s1085 + $0x14] sm:$0xf]
  %v4706 = vld [vmem:[%s1085 + $0x18] sm:$0xff]
  %v4707 = vld [vmem:[%s1085 + $0x20] sm:$0xf]
  %v4708 = vld [vmem:[%s1085 + $0x24] sm:$0xff]
  %v4709 = vld [vmem:[%s1085 + $0x2c] sm:$0xf]
  %v4710 = vld [vmem:[%s1085 + $0x30] sm:$0xff]
  %v4711 = vld [vmem:[%s1085 + $0x38] sm:$0xf]
  %v4712 = vld [vmem:[%s1085 + $0x3c] sm:$0xff]
  %v4713 = vld [vmem:[%s1085 + $0x44] sm:$0xf]
  %v4714 = vld [vmem:[%s1085 + $0x48] sm:$0xff]
  %v4715 = vld [vmem:[%s1085 + $0x50] sm:$0xf]
  %v4716 = vld [vmem:[%s1085 + $0x54] sm:$0xff]
  %v4717 = vld [vmem:[%s1085 + $0x5c] sm:$0xf]
  %v4718 = vld [vmem:[%s1085 + $0x60] sm:$0xff]
  %v4719 = vld [vmem:[%s1085 + $0x68] sm:$0xf]
  %v4720 = vld [vmem:[%s1085 + $0x6c] sm:$0xff]
  %v4721 = vld [vmem:[%s1085 + $0x74] sm:$0xf]
  %v4722 = vld [vmem:[%s1085 + $0x78] sm:$0xff]
  %v4723 = vld [vmem:[%s1085 + $0x80] sm:$0xf]
  %v4724 = vld [vmem:[%s1085 + $0x84] sm:$0xff]
  %v4725 = vld [vmem:[%s1085 + $0x8c] sm:$0xf]
  %v4726 = vld [vmem:[%s1085 + $0x90] sm:$0xff]
  %v4727 = vld [vmem:[%s1085 + $0x98] sm:$0xf]
  %v4728 = vld [vmem:[%s1085 + $0x9c] sm:$0xff]
  %v4729 = vld [vmem:[%s1085 + $0xa4] sm:$0xf]
  %v4730 = vld [vmem:[%s1085 + $0xa8] sm:$0xff]
  %v4731 = vld [vmem:[%s1085 + $0xb0] sm:$0xf]
  %v4732 = vld [vmem:[%s1085 + $0xb4] sm:$0xff]
  %v4733 = vld [vmem:[%s1085 + $0xbc] sm:$0xf]
  %v4734 = vld [vmem:[%s1118] sm:$0x7]
  %v4736 = vperm.slane %v4734, 0
  %v4737 = vperm.slane %v4734, 1
  %v4738 = vperm.slane %v4734, 2
  %v4774 = vunpack.c.l.b16 %v4702
  %v4775 = vunpack.c.h.b16 %v4702
  %v4776 = vunpack.c.l.b16 %v4703
  %v4777 = vunpack.c.l.b16 %v4704
  %v4778 = vunpack.c.h.b16 %v4704
  %v4779 = vunpack.c.l.b16 %v4705
  %v4780 = vunpack.c.l.b16 %v4706
  %v4781 = vunpack.c.h.b16 %v4706
  %v4782 = vunpack.c.l.b16 %v4707
  %v4783 = vunpack.c.l.b16 %v4708
  %v4784 = vunpack.c.h.b16 %v4708
  %v4785 = vunpack.c.l.b16 %v4709
  %v4786 = vunpack.c.l.b16 %v4710
  %v4787 = vunpack.c.h.b16 %v4710
  %v4788 = vunpack.c.l.b16 %v4711
  %v4789 = vunpack.c.l.b16 %v4712
  %v4790 = vunpack.c.h.b16 %v4712
  %v4791 = vunpack.c.l.b16 %v4713
  %v4792 = vunpack.c.l.b16 %v4714
  %v4793 = vunpack.c.h.b16 %v4714
  %v4794 = vunpack.c.l.b16 %v4715
  %v4795 = vunpack.c.l.b16 %v4716
  %v4796 = vunpack.c.h.b16 %v4716
  %v4797 = vunpack.c.l.b16 %v4717
  %v4798 = vunpack.c.l.b16 %v4718
  %v4799 = vunpack.c.h.b16 %v4718
  %v4800 = vunpack.c.l.b16 %v4719
  %v4801 = vunpack.c.l.b16 %v4720
  %v4802 = vunpack.c.h.b16 %v4720
  %v4803 = vunpack.c.l.b16 %v4721
  %v4804 = vunpack.c.l.b16 %v4722
  %v4805 = vunpack.c.h.b16 %v4722
  %v4806 = vunpack.c.l.b16 %v4723
  %v4807 = vunpack.c.l.b16 %v4724
  %v4808 = vunpack.c.h.b16 %v4724
  %v4809 = vunpack.c.l.b16 %v4725
  %v4810 = vunpack.c.l.b16 %v4726
  %v4811 = vunpack.c.h.b16 %v4726
  %v4812 = vunpack.c.l.b16 %v4727
  %v4813 = vunpack.c.l.b16 %v4728
  %v4814 = vunpack.c.h.b16 %v4728
  %v4815 = vunpack.c.l.b16 %v4729
  %v4816 = vunpack.c.l.b16 %v4730
  %v4817 = vunpack.c.h.b16 %v4730
  %v4818 = vunpack.c.l.b16 %v4731
  %v4819 = vunpack.c.l.b16 %v4732
  %v4820 = vunpack.c.h.b16 %v4732
  %v4821 = vunpack.c.l.b16 %v4733
  %v4822 = vpack.c.b16 %v4777, %v4774
  %v4823 = vpack.c.b16 %v4778, %v4775
  %v4824 = vpack.c.b16 %v4779, %v4776
  %v4825 = vpack.c.b16 %v4783, %v4780
  %v4826 = vpack.c.b16 %v4784, %v4781
  %v4827 = vpack.c.b16 %v4785, %v4782
  %v4828 = vpack.c.b16 %v4789, %v4786
  %v4829 = vpack.c.b16 %v4790, %v4787
  %v4830 = vpack.c.b16 %v4791, %v4788
  %v4831 = vpack.c.b16 %v4795, %v4792
  %v4832 = vpack.c.b16 %v4796, %v4793
  %v4833 = vpack.c.b16 %v4797, %v4794
  %v4834 = vpack.c.b16 %v4801, %v4798
  %v4835 = vpack.c.b16 %v4802, %v4799
  %v4836 = vpack.c.b16 %v4803, %v4800
  %v4837 = vpack.c.b16 %v4807, %v4804
  %v4838 = vpack.c.b16 %v4808, %v4805
  %v4839 = vpack.c.b16 %v4809, %v4806
  %v4840 = vpack.c.b16 %v4813, %v4810
  %v4841 = vpack.c.b16 %v4814, %v4811
  %v4842 = vpack.c.b16 %v4815, %v4812
  %v4843 = vpack.c.b16 %v4819, %v4816
  %v4844 = vpack.c.b16 %v4820, %v4817
  %v4845 = vpack.c.b16 %v4821, %v4818
  %4870 = vmatpush.bf16.msra.mxu0 %v4843
  %4871 = vmatpush.bf16.msra.mxu0 %v4840
  %4872 = vmatpush.bf16.msra.mxu0 %v4837
  %4873 = vmatpush.bf16.msra.mxu0 %v4834
  %4874 = vmatpush.bf16.msra.mxu0 %v4831
  %4875 = vmatpush.bf16.msra.mxu0 %v4828
  %4876 = vmatpush.bf16.msra.mxu0 %v4825
  %4877 = vmatpush.bf16.msra.mxu0 %v4822
  %4878 = vmatmul.bf16.gmra.mxu0 %v4701
  %v4879 = vpop.f32.mrf.mxu0
  %v4880 = vadd.f32 %v4736, %v4879
  %v4881 = vpop.f32.mrf.mxu0
  %4882 = vdwg.mxu0
  %4883 = vmatpush.bf16.msra.mxu0 %v4844
  %4884 = vmatpush.bf16.msra.mxu0 %v4841
  %4885 = vmatpush.bf16.msra.mxu0 %v4838
  %4886 = vmatpush.bf16.msra.mxu0 %v4835
  %4887 = vmatpush.bf16.msra.mxu0 %v4832
  %4888 = vmatpush.bf16.msra.mxu0 %v4829
  %4889 = vmatpush.bf16.msra.mxu0 %v4826
  %4890 = vmatpush.bf16.msra.mxu0 %v4823
  %4891 = vmatmul.bf16.gmra.mxu0 %v4701
  %v4892 = vpop.f32.mrf.mxu0
  %v4893 = vadd.f32 %v4737, %v4892
  %v4894 = vpop.f32.mrf.mxu0
  %4895 = vdwg.mxu0
  %4896 = vmatpush.bf16.msra.mxu0 %v4845
  %4897 = vmatpush.bf16.msra.mxu0 %v4842
  %4898 = vmatpush.bf16.msra.mxu0 %v4839
  %4899 = vmatpush.bf16.msra.mxu0 %v4836
  %4900 = vmatpush.bf16.msra.mxu0 %v4833
  %4901 = vmatpush.bf16.msra.mxu0 %v4830
  %4902 = vmatpush.bf16.msra.mxu0 %v4827
  %4903 = vmatpush.bf16.msra.mxu0 %v4824
  %4904 = vmatmul.bf16.gmra.mxu0 %v4701
  %v4905 = vpop.f32.mrf.mxu0
  %v4906 = vadd.f32 %v4738, %v4905
  %v4907 = vpop.f32.mrf.mxu0
  %4908 = vdwg.mxu0
  %v4909 = vld [vmem:[%s1294] sm:$0xff]
  %v4910 = vld [vmem:[%s1294 + $0x8] sm:$0xf]
  %v4911 = vld [vmem:[%s1294 + $0xc] sm:$0xff]
  %v4912 = vld [vmem:[%s1294 + $0x14] sm:$0xf]
  %v4913 = vld [vmem:[%s1294 + $0x18] sm:$0xff]
  %v4914 = vld [vmem:[%s1294 + $0x20] sm:$0xf]
  %v4915 = vld [vmem:[%s1294 + $0x24] sm:$0xff]
  %v4916 = vld [vmem:[%s1294 + $0x2c] sm:$0xf]
  %v4917 = vld [vmem:[%s1294 + $0x30] sm:$0xff]
  %v4918 = vld [vmem:[%s1294 + $0x38] sm:$0xf]
  %v4919 = vld [vmem:[%s1294 + $0x3c] sm:$0xff]
  %v4920 = vld [vmem:[%s1294 + $0x44] sm:$0xf]
  %v4921 = vld [vmem:[%s1294 + $0x48] sm:$0xff]
  %v4922 = vld [vmem:[%s1294 + $0x50] sm:$0xf]
  %v4923 = vld [vmem:[%s1294 + $0x54] sm:$0xff]
  %v4924 = vld [vmem:[%s1294 + $0x5c] sm:$0xf]
  %v4925 = vld [vmem:[%s1294 + $0x60] sm:$0xff]
  %v4926 = vld [vmem:[%s1294 + $0x68] sm:$0xf]
  %v4927 = vld [vmem:[%s1294 + $0x6c] sm:$0xff]
  %v4928 = vld [vmem:[%s1294 + $0x74] sm:$0xf]
  %v4929 = vld [vmem:[%s1294 + $0x78] sm:$0xff]
  %v4930 = vld [vmem:[%s1294 + $0x80] sm:$0xf]
  %v4931 = vld [vmem:[%s1294 + $0x84] sm:$0xff]
  %v4932 = vld [vmem:[%s1294 + $0x8c] sm:$0xf]
  %v4933 = vld [vmem:[%s1294 + $0x90] sm:$0xff]
  %v4934 = vld [vmem:[%s1294 + $0x98] sm:$0xf]
  %v4935 = vld [vmem:[%s1294 + $0x9c] sm:$0xff]
  %v4936 = vld [vmem:[%s1294 + $0xa4] sm:$0xf]
  %v4937 = vld [vmem:[%s1294 + $0xa8] sm:$0xff]
  %v4938 = vld [vmem:[%s1294 + $0xb0] sm:$0xf]
  %v4939 = vld [vmem:[%s1294 + $0xb4] sm:$0xff]
  %v4940 = vld [vmem:[%s1294 + $0xbc] sm:$0xf]
  %v4941 = vld [vmem:[%s1327] sm:$0x7]
  %v4942 = vpack.c.bf16 %v4440, %v4440
  %v4944 = vperm.slane %v4941, 0
  %v4945 = vperm.slane %v4941, 1
  %v4946 = vperm.slane %v4941, 2
  %v4982 = vunpack.c.l.b16 %v4909
  %v4983 = vunpack.c.h.b16 %v4909
  %v4984 = vunpack.c.l.b16 %v4910
  %v4985 = vunpack.c.l.b16 %v4911
  %v4986 = vunpack.c.h.b16 %v4911
  %v4987 = vunpack.c.l.b16 %v4912
  %v4988 = vunpack.c.l.b16 %v4913
  %v4989 = vunpack.c.h.b16 %v4913
  %v4990 = vunpack.c.l.b16 %v4914
  %v4991 = vunpack.c.l.b16 %v4915
  %v4992 = vunpack.c.h.b16 %v4915
  %v4993 = vunpack.c.l.b16 %v4916
  %v4994 = vunpack.c.l.b16 %v4917
  %v4995 = vunpack.c.h.b16 %v4917
  %v4996 = vunpack.c.l.b16 %v4918
  %v4997 = vunpack.c.l.b16 %v4919
  %v4998 = vunpack.c.h.b16 %v4919
  %v4999 = vunpack.c.l.b16 %v4920
  %v5000 = vunpack.c.l.b16 %v4921
  %v5001 = vunpack.c.h.b16 %v4921
  %v5002 = vunpack.c.l.b16 %v4922
  %v5003 = vunpack.c.l.b16 %v4923
  %v5004 = vunpack.c.h.b16 %v4923
  %v5005 = vunpack.c.l.b16 %v4924
  %v5006 = vunpack.c.l.b16 %v4925
  %v5007 = vunpack.c.h.b16 %v4925
  %v5008 = vunpack.c.l.b16 %v4926
  %v5009 = vunpack.c.l.b16 %v4927
  %v5010 = vunpack.c.h.b16 %v4927
  %v5011 = vunpack.c.l.b16 %v4928
  %v5012 = vunpack.c.l.b16 %v4929
  %v5013 = vunpack.c.h.b16 %v4929
  %v5014 = vunpack.c.l.b16 %v4930
  %v5015 = vunpack.c.l.b16 %v4931
  %v5016 = vunpack.c.h.b16 %v4931
  %v5017 = vunpack.c.l.b16 %v4932
  %v5018 = vunpack.c.l.b16 %v4933
  %v5019 = vunpack.c.h.b16 %v4933
  %v5020 = vunpack.c.l.b16 %v4934
  %v5021 = vunpack.c.l.b16 %v4935
  %v5022 = vunpack.c.h.b16 %v4935
  %v5023 = vunpack.c.l.b16 %v4936
  %v5024 = vunpack.c.l.b16 %v4937
  %v5025 = vunpack.c.h.b16 %v4937
  %v5026 = vunpack.c.l.b16 %v4938
  %v5027 = vunpack.c.l.b16 %v4939
  %v5028 = vunpack.c.h.b16 %v4939
  %v5029 = vunpack.c.l.b16 %v4940
  %v5030 = vpack.c.b16 %v4985, %v4982
  %v5031 = vpack.c.b16 %v4986, %v4983
  %v5032 = vpack.c.b16 %v4987, %v4984
  %v5033 = vpack.c.b16 %v4991, %v4988
  %v5034 = vpack.c.b16 %v4992, %v4989
  %v5035 = vpack.c.b16 %v4993, %v4990
  %v5036 = vpack.c.b16 %v4997, %v4994
  %v5037 = vpack.c.b16 %v4998, %v4995
  %v5038 = vpack.c.b16 %v4999, %v4996
  %v5039 = vpack.c.b16 %v5003, %v5000
  %v5040 = vpack.c.b16 %v5004, %v5001
  %v5041 = vpack.c.b16 %v5005, %v5002
  %v5042 = vpack.c.b16 %v5009, %v5006
  %v5043 = vpack.c.b16 %v5010, %v5007
  %v5044 = vpack.c.b16 %v5011, %v5008
  %v5045 = vpack.c.b16 %v5015, %v5012
  %v5046 = vpack.c.b16 %v5016, %v5013
  %v5047 = vpack.c.b16 %v5017, %v5014
  %v5048 = vpack.c.b16 %v5021, %v5018
  %v5049 = vpack.c.b16 %v5022, %v5019
  %v5050 = vpack.c.b16 %v5023, %v5020
  %v5051 = vpack.c.b16 %v5027, %v5024
  %v5052 = vpack.c.b16 %v5028, %v5025
  %v5053 = vpack.c.b16 %v5029, %v5026
  %5078 = vmatpush.bf16.msra.mxu0 %v5051
  %5079 = vmatpush.bf16.msra.mxu0 %v5048
  %5080 = vmatpush.bf16.msra.mxu0 %v5045
  %5081 = vmatpush.bf16.msra.mxu0 %v5042
  %5082 = vmatpush.bf16.msra.mxu0 %v5039
  %5083 = vmatpush.bf16.msra.mxu0 %v5036
  %5084 = vmatpush.bf16.msra.mxu0 %v5033
  %5085 = vmatpush.bf16.msra.mxu0 %v5030
  %5086 = vmatmul.bf16.gmra.mxu0 %v4942
  %v5087 = vpop.f32.mrf.mxu0
  %v5088 = vadd.f32 %v4944, %v5087
  %v5089 = vpop.f32.mrf.mxu0
  %5090 = vdwg.mxu0
  %5091 = vmatpush.bf16.msra.mxu0 %v5052
  %5092 = vmatpush.bf16.msra.mxu0 %v5049
  %5093 = vmatpush.bf16.msra.mxu0 %v5046
  %5094 = vmatpush.bf16.msra.mxu0 %v5043
  %5095 = vmatpush.bf16.msra.mxu0 %v5040
  %5096 = vmatpush.bf16.msra.mxu0 %v5037
  %5097 = vmatpush.bf16.msra.mxu0 %v5034
  %5098 = vmatpush.bf16.msra.mxu0 %v5031
  %5099 = vmatmul.bf16.gmra.mxu0 %v4942
  %v5100 = vpop.f32.mrf.mxu0
  %v5101 = vadd.f32 %v4945, %v5100
  %v5102 = vpop.f32.mrf.mxu0
  %5103 = vdwg.mxu0
  %5104 = vmatpush.bf16.msra.mxu0 %v5053
  %5105 = vmatpush.bf16.msra.mxu0 %v5050
  %5106 = vmatpush.bf16.msra.mxu0 %v5047
  %5107 = vmatpush.bf16.msra.mxu0 %v5044
  %5108 = vmatpush.bf16.msra.mxu0 %v5041
  %5109 = vmatpush.bf16.msra.mxu0 %v5038
  %5110 = vmatpush.bf16.msra.mxu0 %v5035
  %5111 = vmatpush.bf16.msra.mxu0 %v5032
  %5112 = vmatmul.bf16.gmra.mxu0 %v4942
  %v5113 = vpop.f32.mrf.mxu0
  %v5114 = vadd.f32 %v4946, %v5113
  %v5115 = vpop.f32.mrf.mxu0
  %5116 = vdwg.mxu0
  %v5117 = vadd.f32 %v4880, %v5088
  %v5118 = vxor.u32 %v5117, 2147483648
  %v5119 = vmul.f32 %v5118, 1.442695
  %v5120 = vpow.pop %v5119
  %v5121 = vadd.f32 %v5120, 1.0
  %v5122 = vrcp.pop %v5121
  %v5123 = vmul.f32 %v5121, %v5122
  %v5124 = vsub.f32 1.0, %v5123
  %v5125 = vmul.f32 %v5122, %v5124
  %v5126 = vadd.f32 %v5122, %v5125
  %vm5127 = vweird.f32 %v5121
  %vm5128 = vweird.f32 %v5122
  %vm5129 = vmor %vm5127, %vm5128
  %v5130 = vsel %vm5129, %v5122, %v5126
  %v5131 = vand.u32 2147483647, %v5121
  %vm5132 = vcmp.eq.f32.partialorder %v5131, 8.507059e+37
  %v5133 = vand.u32 %v5121, 2147483648
  %v5134 = vor.u32 1.1754944e-38, %v5133
  %v5135 = vsel %vm5132, %v5134, %v5130
  %v5136 = vmul.f32 1.0, %v5135
  %v5137 = vadd.f32 %v4893, %v5101
  %v5138 = vxor.u32 %v5137, 2147483648
  %v5139 = vmul.f32 %v5138, 1.442695
  %v5140 = vpow.pop %v5139
  %v5141 = vadd.f32 %v5140, 1.0
  %v5142 = vrcp.pop %v5141
  %v5143 = vmul.f32 %v5141, %v5142
  %v5144 = vsub.f32 1.0, %v5143
  %v5145 = vmul.f32 %v5142, %v5144
  %v5146 = vadd.f32 %v5142, %v5145
  %vm5147 = vweird.f32 %v5141
  %vm5148 = vweird.f32 %v5142
  %vm5149 = vmor %vm5147, %vm5148
  %v5150 = vsel %vm5149, %v5142, %v5146
  %v5151 = vand.u32 2147483647, %v5141
  %vm5152 = vcmp.eq.f32.partialorder %v5151, 8.507059e+37
  %v5153 = vand.u32 %v5141, 2147483648
  %v5154 = vor.u32 1.1754944e-38, %v5153
  %v5155 = vsel %vm5152, %v5154, %v5150
  %v5156 = vmul.f32 1.0, %v5155
  %v5157 = vmul.f32 %v5136, %v5114
  %v5158 = vadd.f32 %v4906, %v5157
  %v5159 = vtanh.pop %v5158
  %v5160 = vsub.f32 1.0, %v5156
  %v5161 = vmul.f32 %v5160, %v5159
  %v5162 = vmul.f32 %v5156, %v4440
  %v5163 = vadd.f32 %v5161, %v5162
  %s5164 = scalar_lea.vmem [#allocation3], 40
  %5165 = vst [vmem:[%s5164] sm:$0xff] %v5163
  %s5166 = scalar_lea.vmem [#allocation2], 144
  %v5167 = vld [vmem:[%s5166] sm:$0xff]
  %v5168 = vld [vmem:[%s5166 + $0x8] sm:$0xff]
  %v5169 = vld [vmem:[%s5166 + $0x10] sm:$0xff]
  %v5170 = vld [vmem:[%s5] sm:$0xff]
  %v5171 = vld [vmem:[%s5 + $0x8] sm:$0xf]
  %v5172 = vld [vmem:[%s5 + $0xc] sm:$0xff]
  %v5173 = vld [vmem:[%s5 + $0x14] sm:$0xf]
  %v5174 = vld [vmem:[%s5 + $0x18] sm:$0xff]
  %v5175 = vld [vmem:[%s5 + $0x20] sm:$0xf]
  %v5176 = vld [vmem:[%s5 + $0x24] sm:$0xff]
  %v5177 = vld [vmem:[%s5 + $0x2c] sm:$0xf]
  %v5178 = vld [vmem:[%s5 + $0x30] sm:$0xff]
  %v5179 = vld [vmem:[%s5 + $0x38] sm:$0xf]
  %v5180 = vld [vmem:[%s5 + $0x3c] sm:$0xff]
  %v5181 = vld [vmem:[%s5 + $0x44] sm:$0xf]
  %v5182 = vld [vmem:[%s5 + $0x48] sm:$0xff]
  %v5183 = vld [vmem:[%s5 + $0x50] sm:$0xf]
  %v5184 = vld [vmem:[%s5 + $0x54] sm:$0xff]
  %v5185 = vld [vmem:[%s5 + $0x5c] sm:$0xf]
  %v5186 = vld [vmem:[%s5 + $0x60] sm:$0xff]
  %v5187 = vld [vmem:[%s5 + $0x68] sm:$0xf]
  %v5188 = vld [vmem:[%s5 + $0x6c] sm:$0xff]
  %v5189 = vld [vmem:[%s5 + $0x74] sm:$0xf]
  %v5190 = vld [vmem:[%s5 + $0x78] sm:$0xff]
  %v5191 = vld [vmem:[%s5 + $0x80] sm:$0xf]
  %v5192 = vld [vmem:[%s5 + $0x84] sm:$0xff]
  %v5193 = vld [vmem:[%s5 + $0x8c] sm:$0xf]
  %v5194 = vld [vmem:[%s5 + $0x90] sm:$0xff]
  %v5195 = vld [vmem:[%s5 + $0x98] sm:$0xf]
  %v5196 = vld [vmem:[%s5 + $0x9c] sm:$0xff]
  %v5197 = vld [vmem:[%s5 + $0xa4] sm:$0xf]
  %v5198 = vld [vmem:[%s5 + $0xa8] sm:$0xff]
  %v5199 = vld [vmem:[%s5 + $0xb0] sm:$0xf]
  %v5200 = vld [vmem:[%s5 + $0xb4] sm:$0xff]
  %v5201 = vld [vmem:[%s5 + $0xbc] sm:$0xf]
  %v5202 = vld [vmem:[%s7] sm:$0x7]
  %v5204 = vperm.slane %v5202, 0
  %v5205 = vperm.slane %v5202, 1
  %v5206 = vperm.slane %v5202, 2
  %v5242 = vunpack.c.l.b16 %v5170
  %v5243 = vunpack.c.h.b16 %v5170
  %v5244 = vunpack.c.l.b16 %v5171
  %v5245 = vunpack.c.l.b16 %v5172
  %v5246 = vunpack.c.h.b16 %v5172
  %v5247 = vunpack.c.l.b16 %v5173
  %v5248 = vunpack.c.l.b16 %v5174
  %v5249 = vunpack.c.h.b16 %v5174
  %v5250 = vunpack.c.l.b16 %v5175
  %v5251 = vunpack.c.l.b16 %v5176
  %v5252 = vunpack.c.h.b16 %v5176
  %v5253 = vunpack.c.l.b16 %v5177
  %v5254 = vunpack.c.l.b16 %v5178
  %v5255 = vunpack.c.h.b16 %v5178
  %v5256 = vunpack.c.l.b16 %v5179
  %v5257 = vunpack.c.l.b16 %v5180
  %v5258 = vunpack.c.h.b16 %v5180
  %v5259 = vunpack.c.l.b16 %v5181
  %v5260 = vunpack.c.l.b16 %v5182
  %v5261 = vunpack.c.h.b16 %v5182
  %v5262 = vunpack.c.l.b16 %v5183
  %v5263 = vunpack.c.l.b16 %v5184
  %v5264 = vunpack.c.h.b16 %v5184
  %v5265 = vunpack.c.l.b16 %v5185
  %v5266 = vunpack.c.l.b16 %v5186
  %v5267 = vunpack.c.h.b16 %v5186
  %v5268 = vunpack.c.l.b16 %v5187
  %v5269 = vunpack.c.l.b16 %v5188
  %v5270 = vunpack.c.h.b16 %v5188
  %v5271 = vunpack.c.l.b16 %v5189
  %v5272 = vunpack.c.l.b16 %v5190
  %v5273 = vunpack.c.h.b16 %v5190
  %v5274 = vunpack.c.l.b16 %v5191
  %v5275 = vunpack.c.l.b16 %v5192
  %v5276 = vunpack.c.h.b16 %v5192
  %v5277 = vunpack.c.l.b16 %v5193
  %v5278 = vunpack.c.l.b16 %v5194
  %v5279 = vunpack.c.h.b16 %v5194
  %v5280 = vunpack.c.l.b16 %v5195
  %v5281 = vunpack.c.l.b16 %v5196
  %v5282 = vunpack.c.h.b16 %v5196
  %v5283 = vunpack.c.l.b16 %v5197
  %v5284 = vunpack.c.l.b16 %v5198
  %v5285 = vunpack.c.h.b16 %v5198
  %v5286 = vunpack.c.l.b16 %v5199
  %v5287 = vunpack.c.l.b16 %v5200
  %v5288 = vunpack.c.h.b16 %v5200
  %v5289 = vunpack.c.l.b16 %v5201
  %v5290 = vpack.c.b16 %v5245, %v5242
  %v5291 = vpack.c.b16 %v5246, %v5243
  %v5292 = vpack.c.b16 %v5247, %v5244
  %v5293 = vpack.c.b16 %v5251, %v5248
  %v5294 = vpack.c.b16 %v5252, %v5249
  %v5295 = vpack.c.b16 %v5253, %v5250
  %v5296 = vpack.c.b16 %v5257, %v5254
  %v5297 = vpack.c.b16 %v5258, %v5255
  %v5298 = vpack.c.b16 %v5259, %v5256
  %v5299 = vpack.c.b16 %v5263, %v5260
  %v5300 = vpack.c.b16 %v5264, %v5261
  %v5301 = vpack.c.b16 %v5265, %v5262
  %v5302 = vpack.c.b16 %v5269, %v5266
  %v5303 = vpack.c.b16 %v5270, %v5267
  %v5304 = vpack.c.b16 %v5271, %v5268
  %v5305 = vpack.c.b16 %v5275, %v5272
  %v5306 = vpack.c.b16 %v5276, %v5273
  %v5307 = vpack.c.b16 %v5277, %v5274
  %v5308 = vpack.c.b16 %v5281, %v5278
  %v5309 = vpack.c.b16 %v5282, %v5279
  %v5310 = vpack.c.b16 %v5283, %v5280
  %v5311 = vpack.c.b16 %v5287, %v5284
  %v5312 = vpack.c.b16 %v5288, %v5285
  %v5313 = vpack.c.b16 %v5289, %v5286
  %5338 = vmatpush.bf16.msra.mxu0 %v5311
  %5339 = vmatpush.bf16.msra.mxu0 %v5308
  %5340 = vmatpush.bf16.msra.mxu0 %v5305
  %5341 = vmatpush.bf16.msra.mxu0 %v5302
  %5342 = vmatpush.bf16.msra.mxu0 %v5299
  %5343 = vmatpush.bf16.msra.mxu0 %v5296
  %5344 = vmatpush.bf16.msra.mxu0 %v5293
  %5345 = vmatpush.bf16.msra.mxu0 %v5290
  %5346 = vmatmul.bf16.gmra.mxu0 %v4701
  %v5347 = vpop.f32.mrf.mxu0
  %v5348 = vadd.f32 %v5204, %v5347
  %v5349 = vpop.f32.mrf.mxu0
  %5350 = vdwg.mxu0
  %5351 = vmatpush.bf16.msra.mxu0 %v5312
  %5352 = vmatpush.bf16.msra.mxu0 %v5309
  %5353 = vmatpush.bf16.msra.mxu0 %v5306
  %5354 = vmatpush.bf16.msra.mxu0 %v5303
  %5355 = vmatpush.bf16.msra.mxu0 %v5300
  %5356 = vmatpush.bf16.msra.mxu0 %v5297
  %5357 = vmatpush.bf16.msra.mxu0 %v5294
  %5358 = vmatpush.bf16.msra.mxu0 %v5291
  %5359 = vmatmul.bf16.gmra.mxu0 %v4701
  %v5360 = vpop.f32.mrf.mxu0
  %v5361 = vadd.f32 %v5205, %v5360
  %v5362 = vpop.f32.mrf.mxu0
  %5363 = vdwg.mxu0
  %5364 = vmatpush.bf16.msra.mxu0 %v5313
  %5365 = vmatpush.bf16.msra.mxu0 %v5310
  %5366 = vmatpush.bf16.msra.mxu0 %v5307
  %5367 = vmatpush.bf16.msra.mxu0 %v5304
  %5368 = vmatpush.bf16.msra.mxu0 %v5301
  %5369 = vmatpush.bf16.msra.mxu0 %v5298
  %5370 = vmatpush.bf16.msra.mxu0 %v5295
  %5371 = vmatpush.bf16.msra.mxu0 %v5292
  %5372 = vmatmul.bf16.gmra.mxu0 %v4701
  %v5373 = vpop.f32.mrf.mxu0
  %v5374 = vadd.f32 %v5206, %v5373
  %v5375 = vpop.f32.mrf.mxu0
  %5376 = vdwg.mxu0
  %v5377 = vadd.f32 %v5167, %v5348
  %v5378 = vxor.u32 %v5377, 2147483648
  %v5379 = vmul.f32 %v5378, 1.442695
  %v5380 = vpow.pop %v5379
  %v5381 = vadd.f32 %v5380, 1.0
  %v5382 = vrcp.pop %v5381
  %v5383 = vmul.f32 %v5381, %v5382
  %v5384 = vsub.f32 1.0, %v5383
  %v5385 = vmul.f32 %v5382, %v5384
  %v5386 = vadd.f32 %v5382, %v5385
  %vm5387 = vweird.f32 %v5381
  %vm5388 = vweird.f32 %v5382
  %vm5389 = vmor %vm5387, %vm5388
  %v5390 = vsel %vm5389, %v5382, %v5386
  %v5391 = vand.u32 2147483647, %v5381
  %vm5392 = vcmp.eq.f32.partialorder %v5391, 8.507059e+37
  %v5393 = vand.u32 %v5381, 2147483648
  %v5394 = vor.u32 1.1754944e-38, %v5393
  %v5395 = vsel %vm5392, %v5394, %v5390
  %v5396 = vmul.f32 1.0, %v5395
  %v5397 = vadd.f32 %v5168, %v5361
  %v5398 = vxor.u32 %v5397, 2147483648
  %v5399 = vmul.f32 %v5398, 1.442695
  %v5400 = vpow.pop %v5399
  %v5401 = vadd.f32 %v5400, 1.0
  %v5402 = vrcp.pop %v5401
  %v5403 = vmul.f32 %v5401, %v5402
  %v5404 = vsub.f32 1.0, %v5403
  %v5405 = vmul.f32 %v5402, %v5404
  %v5406 = vadd.f32 %v5402, %v5405
  %vm5407 = vweird.f32 %v5401
  %vm5408 = vweird.f32 %v5402
  %vm5409 = vmor %vm5407, %vm5408
  %v5410 = vsel %vm5409, %v5402, %v5406
  %v5411 = vand.u32 2147483647, %v5401
  %vm5412 = vcmp.eq.f32.partialorder %v5411, 8.507059e+37
  %v5413 = vand.u32 %v5401, 2147483648
  %v5414 = vor.u32 1.1754944e-38, %v5413
  %v5415 = vsel %vm5412, %v5414, %v5410
  %v5416 = vmul.f32 1.0, %v5415
  %v5417 = vmul.f32 %v5396, %v5374
  %v5418 = vadd.f32 %v5169, %v5417
  %v5419 = vtanh.pop %v5418
  %v5420 = vsub.f32 1.0, %v5416
  %v5421 = vmul.f32 %v5420, %v5419
  %v5422 = vmul.f32 %v5416, %v4700
  %v5423 = vadd.f32 %v5421, %v5422
  %v5424 = vpack.c.bf16 %v5423, %v5423
  %v5425 = vld [vmem:[%s1085] sm:$0xff]
  %v5426 = vld [vmem:[%s1085 + $0x8] sm:$0xf]
  %v5427 = vld [vmem:[%s1085 + $0xc] sm:$0xff]
  %v5428 = vld [vmem:[%s1085 + $0x14] sm:$0xf]
  %v5429 = vld [vmem:[%s1085 + $0x18] sm:$0xff]
  %v5430 = vld [vmem:[%s1085 + $0x20] sm:$0xf]
  %v5431 = vld [vmem:[%s1085 + $0x24] sm:$0xff]
  %v5432 = vld [vmem:[%s1085 + $0x2c] sm:$0xf]
  %v5433 = vld [vmem:[%s1085 + $0x30] sm:$0xff]
  %v5434 = vld [vmem:[%s1085 + $0x38] sm:$0xf]
  %v5435 = vld [vmem:[%s1085 + $0x3c] sm:$0xff]
  %v5436 = vld [vmem:[%s1085 + $0x44] sm:$0xf]
  %v5437 = vld [vmem:[%s1085 + $0x48] sm:$0xff]
  %v5438 = vld [vmem:[%s1085 + $0x50] sm:$0xf]
  %v5439 = vld [vmem:[%s1085 + $0x54] sm:$0xff]
  %v5440 = vld [vmem:[%s1085 + $0x5c] sm:$0xf]
  %v5441 = vld [vmem:[%s1085 + $0x60] sm:$0xff]
  %v5442 = vld [vmem:[%s1085 + $0x68] sm:$0xf]
  %v5443 = vld [vmem:[%s1085 + $0x6c] sm:$0xff]
  %v5444 = vld [vmem:[%s1085 + $0x74] sm:$0xf]
  %v5445 = vld [vmem:[%s1085 + $0x78] sm:$0xff]
  %v5446 = vld [vmem:[%s1085 + $0x80] sm:$0xf]
  %v5447 = vld [vmem:[%s1085 + $0x84] sm:$0xff]
  %v5448 = vld [vmem:[%s1085 + $0x8c] sm:$0xf]
  %v5449 = vld [vmem:[%s1085 + $0x90] sm:$0xff]
  %v5450 = vld [vmem:[%s1085 + $0x98] sm:$0xf]
  %v5451 = vld [vmem:[%s1085 + $0x9c] sm:$0xff]
  %v5452 = vld [vmem:[%s1085 + $0xa4] sm:$0xf]
  %v5453 = vld [vmem:[%s1085 + $0xa8] sm:$0xff]
  %v5454 = vld [vmem:[%s1085 + $0xb0] sm:$0xf]
  %v5455 = vld [vmem:[%s1085 + $0xb4] sm:$0xff]
  %v5456 = vld [vmem:[%s1085 + $0xbc] sm:$0xf]
  %v5457 = vld [vmem:[%s1118] sm:$0x7]
  %v5459 = vperm.slane %v5457, 0
  %v5460 = vperm.slane %v5457, 1
  %v5461 = vperm.slane %v5457, 2
  %v5497 = vunpack.c.l.b16 %v5425
  %v5498 = vunpack.c.h.b16 %v5425
  %v5499 = vunpack.c.l.b16 %v5426
  %v5500 = vunpack.c.l.b16 %v5427
  %v5501 = vunpack.c.h.b16 %v5427
  %v5502 = vunpack.c.l.b16 %v5428
  %v5503 = vunpack.c.l.b16 %v5429
  %v5504 = vunpack.c.h.b16 %v5429
  %v5505 = vunpack.c.l.b16 %v5430
  %v5506 = vunpack.c.l.b16 %v5431
  %v5507 = vunpack.c.h.b16 %v5431
  %v5508 = vunpack.c.l.b16 %v5432
  %v5509 = vunpack.c.l.b16 %v5433
  %v5510 = vunpack.c.h.b16 %v5433
  %v5511 = vunpack.c.l.b16 %v5434
  %v5512 = vunpack.c.l.b16 %v5435
  %v5513 = vunpack.c.h.b16 %v5435
  %v5514 = vunpack.c.l.b16 %v5436
  %v5515 = vunpack.c.l.b16 %v5437
  %v5516 = vunpack.c.h.b16 %v5437
  %v5517 = vunpack.c.l.b16 %v5438
  %v5518 = vunpack.c.l.b16 %v5439
  %v5519 = vunpack.c.h.b16 %v5439
  %v5520 = vunpack.c.l.b16 %v5440
  %v5521 = vunpack.c.l.b16 %v5441
  %v5522 = vunpack.c.h.b16 %v5441
  %v5523 = vunpack.c.l.b16 %v5442
  %v5524 = vunpack.c.l.b16 %v5443
  %v5525 = vunpack.c.h.b16 %v5443
  %v5526 = vunpack.c.l.b16 %v5444
  %v5527 = vunpack.c.l.b16 %v5445
  %v5528 = vunpack.c.h.b16 %v5445
  %v5529 = vunpack.c.l.b16 %v5446
  %v5530 = vunpack.c.l.b16 %v5447
  %v5531 = vunpack.c.h.b16 %v5447
  %v5532 = vunpack.c.l.b16 %v5448
  %v5533 = vunpack.c.l.b16 %v5449
  %v5534 = vunpack.c.h.b16 %v5449
  %v5535 = vunpack.c.l.b16 %v5450
  %v5536 = vunpack.c.l.b16 %v5451
  %v5537 = vunpack.c.h.b16 %v5451
  %v5538 = vunpack.c.l.b16 %v5452
  %v5539 = vunpack.c.l.b16 %v5453
  %v5540 = vunpack.c.h.b16 %v5453
  %v5541 = vunpack.c.l.b16 %v5454
  %v5542 = vunpack.c.l.b16 %v5455
  %v5543 = vunpack.c.h.b16 %v5455
  %v5544 = vunpack.c.l.b16 %v5456
  %v5545 = vpack.c.b16 %v5500, %v5497
  %v5546 = vpack.c.b16 %v5501, %v5498
  %v5547 = vpack.c.b16 %v5502, %v5499
  %v5548 = vpack.c.b16 %v5506, %v5503
  %v5549 = vpack.c.b16 %v5507, %v5504
  %v5550 = vpack.c.b16 %v5508, %v5505
  %v5551 = vpack.c.b16 %v5512, %v5509
  %v5552 = vpack.c.b16 %v5513, %v5510
  %v5553 = vpack.c.b16 %v5514, %v5511
  %v5554 = vpack.c.b16 %v5518, %v5515
  %v5555 = vpack.c.b16 %v5519, %v5516
  %v5556 = vpack.c.b16 %v5520, %v5517
  %v5557 = vpack.c.b16 %v5524, %v5521
  %v5558 = vpack.c.b16 %v5525, %v5522
  %v5559 = vpack.c.b16 %v5526, %v5523
  %v5560 = vpack.c.b16 %v5530, %v5527
  %v5561 = vpack.c.b16 %v5531, %v5528
  %v5562 = vpack.c.b16 %v5532, %v5529
  %v5563 = vpack.c.b16 %v5536, %v5533
  %v5564 = vpack.c.b16 %v5537, %v5534
  %v5565 = vpack.c.b16 %v5538, %v5535
  %v5566 = vpack.c.b16 %v5542, %v5539
  %v5567 = vpack.c.b16 %v5543, %v5540
  %v5568 = vpack.c.b16 %v5544, %v5541
  %5593 = vmatpush.bf16.msra.mxu0 %v5566
  %5594 = vmatpush.bf16.msra.mxu0 %v5563
  %5595 = vmatpush.bf16.msra.mxu0 %v5560
  %5596 = vmatpush.bf16.msra.mxu0 %v5557
  %5597 = vmatpush.bf16.msra.mxu0 %v5554
  %5598 = vmatpush.bf16.msra.mxu0 %v5551
  %5599 = vmatpush.bf16.msra.mxu0 %v5548
  %5600 = vmatpush.bf16.msra.mxu0 %v5545
  %5601 = vmatmul.bf16.gmra.mxu0 %v5424
  %v5602 = vpop.f32.mrf.mxu0
  %v5603 = vadd.f32 %v5459, %v5602
  %v5604 = vpop.f32.mrf.mxu0
  %5605 = vdwg.mxu0
  %5606 = vmatpush.bf16.msra.mxu0 %v5567
  %5607 = vmatpush.bf16.msra.mxu0 %v5564
  %5608 = vmatpush.bf16.msra.mxu0 %v5561
  %5609 = vmatpush.bf16.msra.mxu0 %v5558
  %5610 = vmatpush.bf16.msra.mxu0 %v5555
  %5611 = vmatpush.bf16.msra.mxu0 %v5552
  %5612 = vmatpush.bf16.msra.mxu0 %v5549
  %5613 = vmatpush.bf16.msra.mxu0 %v5546
  %5614 = vmatmul.bf16.gmra.mxu0 %v5424
  %v5615 = vpop.f32.mrf.mxu0
  %v5616 = vadd.f32 %v5460, %v5615
  %v5617 = vpop.f32.mrf.mxu0
  %5618 = vdwg.mxu0
  %5619 = vmatpush.bf16.msra.mxu0 %v5568
  %5620 = vmatpush.bf16.msra.mxu0 %v5565
  %5621 = vmatpush.bf16.msra.mxu0 %v5562
  %5622 = vmatpush.bf16.msra.mxu0 %v5559
  %5623 = vmatpush.bf16.msra.mxu0 %v5556
  %5624 = vmatpush.bf16.msra.mxu0 %v5553
  %5625 = vmatpush.bf16.msra.mxu0 %v5550
  %5626 = vmatpush.bf16.msra.mxu0 %v5547
  %5627 = vmatmul.bf16.gmra.mxu0 %v5424
  %v5628 = vpop.f32.mrf.mxu0
  %v5629 = vadd.f32 %v5461, %v5628
  %v5630 = vpop.f32.mrf.mxu0
  %5631 = vdwg.mxu0
  %v5632 = vld [vmem:[%s1294] sm:$0xff]
  %v5633 = vld [vmem:[%s1294 + $0x8] sm:$0xf]
  %v5634 = vld [vmem:[%s1294 + $0xc] sm:$0xff]
  %v5635 = vld [vmem:[%s1294 + $0x14] sm:$0xf]
  %v5636 = vld [vmem:[%s1294 + $0x18] sm:$0xff]
  %v5637 = vld [vmem:[%s1294 + $0x20] sm:$0xf]
  %v5638 = vld [vmem:[%s1294 + $0x24] sm:$0xff]
  %v5639 = vld [vmem:[%s1294 + $0x2c] sm:$0xf]
  %v5640 = vld [vmem:[%s1294 + $0x30] sm:$0xff]
  %v5641 = vld [vmem:[%s1294 + $0x38] sm:$0xf]
  %v5642 = vld [vmem:[%s1294 + $0x3c] sm:$0xff]
  %v5643 = vld [vmem:[%s1294 + $0x44] sm:$0xf]
  %v5644 = vld [vmem:[%s1294 + $0x48] sm:$0xff]
  %v5645 = vld [vmem:[%s1294 + $0x50] sm:$0xf]
  %v5646 = vld [vmem:[%s1294 + $0x54] sm:$0xff]
  %v5647 = vld [vmem:[%s1294 + $0x5c] sm:$0xf]
  %v5648 = vld [vmem:[%s1294 + $0x60] sm:$0xff]
  %v5649 = vld [vmem:[%s1294 + $0x68] sm:$0xf]
  %v5650 = vld [vmem:[%s1294 + $0x6c] sm:$0xff]
  %v5651 = vld [vmem:[%s1294 + $0x74] sm:$0xf]
  %v5652 = vld [vmem:[%s1294 + $0x78] sm:$0xff]
  %v5653 = vld [vmem:[%s1294 + $0x80] sm:$0xf]
  %v5654 = vld [vmem:[%s1294 + $0x84] sm:$0xff]
  %v5655 = vld [vmem:[%s1294 + $0x8c] sm:$0xf]
  %v5656 = vld [vmem:[%s1294 + $0x90] sm:$0xff]
  %v5657 = vld [vmem:[%s1294 + $0x98] sm:$0xf]
  %v5658 = vld [vmem:[%s1294 + $0x9c] sm:$0xff]
  %v5659 = vld [vmem:[%s1294 + $0xa4] sm:$0xf]
  %v5660 = vld [vmem:[%s1294 + $0xa8] sm:$0xff]
  %v5661 = vld [vmem:[%s1294 + $0xb0] sm:$0xf]
  %v5662 = vld [vmem:[%s1294 + $0xb4] sm:$0xff]
  %v5663 = vld [vmem:[%s1294 + $0xbc] sm:$0xf]
  %v5664 = vld [vmem:[%s1327] sm:$0x7]
  %v5665 = vpack.c.bf16 %v5163, %v5163
  %v5667 = vperm.slane %v5664, 0
  %v5668 = vperm.slane %v5664, 1
  %v5669 = vperm.slane %v5664, 2
  %v5705 = vunpack.c.l.b16 %v5632
  %v5706 = vunpack.c.h.b16 %v5632
  %v5707 = vunpack.c.l.b16 %v5633
  %v5708 = vunpack.c.l.b16 %v5634
  %v5709 = vunpack.c.h.b16 %v5634
  %v5710 = vunpack.c.l.b16 %v5635
  %v5711 = vunpack.c.l.b16 %v5636
  %v5712 = vunpack.c.h.b16 %v5636
  %v5713 = vunpack.c.l.b16 %v5637
  %v5714 = vunpack.c.l.b16 %v5638
  %v5715 = vunpack.c.h.b16 %v5638
  %v5716 = vunpack.c.l.b16 %v5639
  %v5717 = vunpack.c.l.b16 %v5640
  %v5718 = vunpack.c.h.b16 %v5640
  %v5719 = vunpack.c.l.b16 %v5641
  %v5720 = vunpack.c.l.b16 %v5642
  %v5721 = vunpack.c.h.b16 %v5642
  %v5722 = vunpack.c.l.b16 %v5643
  %v5723 = vunpack.c.l.b16 %v5644
  %v5724 = vunpack.c.h.b16 %v5644
  %v5725 = vunpack.c.l.b16 %v5645
  %v5726 = vunpack.c.l.b16 %v5646
  %v5727 = vunpack.c.h.b16 %v5646
  %v5728 = vunpack.c.l.b16 %v5647
  %v5729 = vunpack.c.l.b16 %v5648
  %v5730 = vunpack.c.h.b16 %v5648
  %v5731 = vunpack.c.l.b16 %v5649
  %v5732 = vunpack.c.l.b16 %v5650
  %v5733 = vunpack.c.h.b16 %v5650
  %v5734 = vunpack.c.l.b16 %v5651
  %v5735 = vunpack.c.l.b16 %v5652
  %v5736 = vunpack.c.h.b16 %v5652
  %v5737 = vunpack.c.l.b16 %v5653
  %v5738 = vunpack.c.l.b16 %v5654
  %v5739 = vunpack.c.h.b16 %v5654
  %v5740 = vunpack.c.l.b16 %v5655
  %v5741 = vunpack.c.l.b16 %v5656
  %v5742 = vunpack.c.h.b16 %v5656
  %v5743 = vunpack.c.l.b16 %v5657
  %v5744 = vunpack.c.l.b16 %v5658
  %v5745 = vunpack.c.h.b16 %v5658
  %v5746 = vunpack.c.l.b16 %v5659
  %v5747 = vunpack.c.l.b16 %v5660
  %v5748 = vunpack.c.h.b16 %v5660
  %v5749 = vunpack.c.l.b16 %v5661
  %v5750 = vunpack.c.l.b16 %v5662
  %v5751 = vunpack.c.h.b16 %v5662
  %v5752 = vunpack.c.l.b16 %v5663
  %v5753 = vpack.c.b16 %v5708, %v5705
  %v5754 = vpack.c.b16 %v5709, %v5706
  %v5755 = vpack.c.b16 %v5710, %v5707
  %v5756 = vpack.c.b16 %v5714, %v5711
  %v5757 = vpack.c.b16 %v5715, %v5712
  %v5758 = vpack.c.b16 %v5716, %v5713
  %v5759 = vpack.c.b16 %v5720, %v5717
  %v5760 = vpack.c.b16 %v5721, %v5718
  %v5761 = vpack.c.b16 %v5722, %v5719
  %v5762 = vpack.c.b16 %v5726, %v5723
  %v5763 = vpack.c.b16 %v5727, %v5724
  %v5764 = vpack.c.b16 %v5728, %v5725
  %v5765 = vpack.c.b16 %v5732, %v5729
  %v5766 = vpack.c.b16 %v5733, %v5730
  %v5767 = vpack.c.b16 %v5734, %v5731
  %v5768 = vpack.c.b16 %v5738, %v5735
  %v5769 = vpack.c.b16 %v5739, %v5736
  %v5770 = vpack.c.b16 %v5740, %v5737
  %v5771 = vpack.c.b16 %v5744, %v5741
  %v5772 = vpack.c.b16 %v5745, %v5742
  %v5773 = vpack.c.b16 %v5746, %v5743
  %v5774 = vpack.c.b16 %v5750, %v5747
  %v5775 = vpack.c.b16 %v5751, %v5748
  %v5776 = vpack.c.b16 %v5752, %v5749
  %5801 = vmatpush.bf16.msra.mxu0 %v5774
  %5802 = vmatpush.bf16.msra.mxu0 %v5771
  %5803 = vmatpush.bf16.msra.mxu0 %v5768
  %5804 = vmatpush.bf16.msra.mxu0 %v5765
  %5805 = vmatpush.bf16.msra.mxu0 %v5762
  %5806 = vmatpush.bf16.msra.mxu0 %v5759
  %5807 = vmatpush.bf16.msra.mxu0 %v5756
  %5808 = vmatpush.bf16.msra.mxu0 %v5753
  %5809 = vmatmul.bf16.gmra.mxu0 %v5665
  %v5810 = vpop.f32.mrf.mxu0
  %v5811 = vadd.f32 %v5667, %v5810
  %v5812 = vpop.f32.mrf.mxu0
  %5813 = vdwg.mxu0
  %5814 = vmatpush.bf16.msra.mxu0 %v5775
  %5815 = vmatpush.bf16.msra.mxu0 %v5772
  %5816 = vmatpush.bf16.msra.mxu0 %v5769
  %5817 = vmatpush.bf16.msra.mxu0 %v5766
  %5818 = vmatpush.bf16.msra.mxu0 %v5763
  %5819 = vmatpush.bf16.msra.mxu0 %v5760
  %5820 = vmatpush.bf16.msra.mxu0 %v5757
  %5821 = vmatpush.bf16.msra.mxu0 %v5754
  %5822 = vmatmul.bf16.gmra.mxu0 %v5665
  %v5823 = vpop.f32.mrf.mxu0
  %v5824 = vadd.f32 %v5668, %v5823
  %v5825 = vpop.f32.mrf.mxu0
  %5826 = vdwg.mxu0
  %5827 = vmatpush.bf16.msra.mxu0 %v5776
  %5828 = vmatpush.bf16.msra.mxu0 %v5773
  %5829 = vmatpush.bf16.msra.mxu0 %v5770
  %5830 = vmatpush.bf16.msra.mxu0 %v5767
  %5831 = vmatpush.bf16.msra.mxu0 %v5764
  %5832 = vmatpush.bf16.msra.mxu0 %v5761
  %5833 = vmatpush.bf16.msra.mxu0 %v5758
  %5834 = vmatpush.bf16.msra.mxu0 %v5755
  %5835 = vmatmul.bf16.gmra.mxu0 %v5665
  %v5836 = vpop.f32.mrf.mxu0
  %v5837 = vadd.f32 %v5669, %v5836
  %v5838 = vpop.f32.mrf.mxu0
  %5839 = vdwg.mxu0
  %v5840 = vadd.f32 %v5603, %v5811
  %v5841 = vxor.u32 %v5840, 2147483648
  %v5842 = vmul.f32 %v5841, 1.442695
  %v5843 = vpow.pop %v5842
  %v5844 = vadd.f32 %v5843, 1.0
  %v5845 = vrcp.pop %v5844
  %v5846 = vmul.f32 %v5844, %v5845
  %v5847 = vsub.f32 1.0, %v5846
  %v5848 = vmul.f32 %v5845, %v5847
  %v5849 = vadd.f32 %v5845, %v5848
  %vm5850 = vweird.f32 %v5844
  %vm5851 = vweird.f32 %v5845
  %vm5852 = vmor %vm5850, %vm5851
  %v5853 = vsel %vm5852, %v5845, %v5849
  %v5854 = vand.u32 2147483647, %v5844
  %vm5855 = vcmp.eq.f32.partialorder %v5854, 8.507059e+37
  %v5856 = vand.u32 %v5844, 2147483648
  %v5857 = vor.u32 1.1754944e-38, %v5856
  %v5858 = vsel %vm5855, %v5857, %v5853
  %v5859 = vmul.f32 1.0, %v5858
  %v5860 = vadd.f32 %v5616, %v5824
  %v5861 = vxor.u32 %v5860, 2147483648
  %v5862 = vmul.f32 %v5861, 1.442695
  %v5863 = vpow.pop %v5862
  %v5864 = vadd.f32 %v5863, 1.0
  %v5865 = vrcp.pop %v5864
  %v5866 = vmul.f32 %v5864, %v5865
  %v5867 = vsub.f32 1.0, %v5866
  %v5868 = vmul.f32 %v5865, %v5867
  %v5869 = vadd.f32 %v5865, %v5868
  %vm5870 = vweird.f32 %v5864
  %vm5871 = vweird.f32 %v5865
  %vm5872 = vmor %vm5870, %vm5871
  %v5873 = vsel %vm5872, %v5865, %v5869
  %v5874 = vand.u32 2147483647, %v5864
  %vm5875 = vcmp.eq.f32.partialorder %v5874, 8.507059e+37
  %v5876 = vand.u32 %v5864, 2147483648
  %v5877 = vor.u32 1.1754944e-38, %v5876
  %v5878 = vsel %vm5875, %v5877, %v5873
  %v5879 = vmul.f32 1.0, %v5878
  %v5880 = vmul.f32 %v5859, %v5837
  %v5881 = vadd.f32 %v5629, %v5880
  %v5882 = vtanh.pop %v5881
  %v5883 = vsub.f32 1.0, %v5879
  %v5884 = vmul.f32 %v5883, %v5882
  %v5885 = vmul.f32 %v5879, %v5163
  %v5886 = vadd.f32 %v5884, %v5885
  %s5887 = scalar_lea.vmem [#allocation3], 48
  %5888 = vst [vmem:[%s5887] sm:$0xff] %v5886
  %s5889 = scalar_lea.vmem [#allocation2], 168
  %v5890 = vld [vmem:[%s5889] sm:$0xff]
  %v5891 = vld [vmem:[%s5889 + $0x8] sm:$0xff]
  %v5892 = vld [vmem:[%s5889 + $0x10] sm:$0xff]
  %v5893 = vld [vmem:[%s5] sm:$0xff]
  %v5894 = vld [vmem:[%s5 + $0x8] sm:$0xf]
  %v5895 = vld [vmem:[%s5 + $0xc] sm:$0xff]
  %v5896 = vld [vmem:[%s5 + $0x14] sm:$0xf]
  %v5897 = vld [vmem:[%s5 + $0x18] sm:$0xff]
  %v5898 = vld [vmem:[%s5 + $0x20] sm:$0xf]
  %v5899 = vld [vmem:[%s5 + $0x24] sm:$0xff]
  %v5900 = vld [vmem:[%s5 + $0x2c] sm:$0xf]
  %v5901 = vld [vmem:[%s5 + $0x30] sm:$0xff]
  %v5902 = vld [vmem:[%s5 + $0x38] sm:$0xf]
  %v5903 = vld [vmem:[%s5 + $0x3c] sm:$0xff]
  %v5904 = vld [vmem:[%s5 + $0x44] sm:$0xf]
  %v5905 = vld [vmem:[%s5 + $0x48] sm:$0xff]
  %v5906 = vld [vmem:[%s5 + $0x50] sm:$0xf]
  %v5907 = vld [vmem:[%s5 + $0x54] sm:$0xff]
  %v5908 = vld [vmem:[%s5 + $0x5c] sm:$0xf]
  %v5909 = vld [vmem:[%s5 + $0x60] sm:$0xff]
  %v5910 = vld [vmem:[%s5 + $0x68] sm:$0xf]
  %v5911 = vld [vmem:[%s5 + $0x6c] sm:$0xff]
  %v5912 = vld [vmem:[%s5 + $0x74] sm:$0xf]
  %v5913 = vld [vmem:[%s5 + $0x78] sm:$0xff]
  %v5914 = vld [vmem:[%s5 + $0x80] sm:$0xf]
  %v5915 = vld [vmem:[%s5 + $0x84] sm:$0xff]
  %v5916 = vld [vmem:[%s5 + $0x8c] sm:$0xf]
  %v5917 = vld [vmem:[%s5 + $0x90] sm:$0xff]
  %v5918 = vld [vmem:[%s5 + $0x98] sm:$0xf]
  %v5919 = vld [vmem:[%s5 + $0x9c] sm:$0xff]
  %v5920 = vld [vmem:[%s5 + $0xa4] sm:$0xf]
  %v5921 = vld [vmem:[%s5 + $0xa8] sm:$0xff]
  %v5922 = vld [vmem:[%s5 + $0xb0] sm:$0xf]
  %v5923 = vld [vmem:[%s5 + $0xb4] sm:$0xff]
  %v5924 = vld [vmem:[%s5 + $0xbc] sm:$0xf]
  %v5925 = vld [vmem:[%s7] sm:$0x7]
  %v5927 = vperm.slane %v5925, 0
  %v5928 = vperm.slane %v5925, 1
  %v5929 = vperm.slane %v5925, 2
  %v5965 = vunpack.c.l.b16 %v5893
  %v5966 = vunpack.c.h.b16 %v5893
  %v5967 = vunpack.c.l.b16 %v5894
  %v5968 = vunpack.c.l.b16 %v5895
  %v5969 = vunpack.c.h.b16 %v5895
  %v5970 = vunpack.c.l.b16 %v5896
  %v5971 = vunpack.c.l.b16 %v5897
  %v5972 = vunpack.c.h.b16 %v5897
  %v5973 = vunpack.c.l.b16 %v5898
  %v5974 = vunpack.c.l.b16 %v5899
  %v5975 = vunpack.c.h.b16 %v5899
  %v5976 = vunpack.c.l.b16 %v5900
  %v5977 = vunpack.c.l.b16 %v5901
  %v5978 = vunpack.c.h.b16 %v5901
  %v5979 = vunpack.c.l.b16 %v5902
  %v5980 = vunpack.c.l.b16 %v5903
  %v5981 = vunpack.c.h.b16 %v5903
  %v5982 = vunpack.c.l.b16 %v5904
  %v5983 = vunpack.c.l.b16 %v5905
  %v5984 = vunpack.c.h.b16 %v5905
  %v5985 = vunpack.c.l.b16 %v5906
  %v5986 = vunpack.c.l.b16 %v5907
  %v5987 = vunpack.c.h.b16 %v5907
  %v5988 = vunpack.c.l.b16 %v5908
  %v5989 = vunpack.c.l.b16 %v5909
  %v5990 = vunpack.c.h.b16 %v5909
  %v5991 = vunpack.c.l.b16 %v5910
  %v5992 = vunpack.c.l.b16 %v5911
  %v5993 = vunpack.c.h.b16 %v5911
  %v5994 = vunpack.c.l.b16 %v5912
  %v5995 = vunpack.c.l.b16 %v5913
  %v5996 = vunpack.c.h.b16 %v5913
  %v5997 = vunpack.c.l.b16 %v5914
  %v5998 = vunpack.c.l.b16 %v5915
  %v5999 = vunpack.c.h.b16 %v5915
  %v6000 = vunpack.c.l.b16 %v5916
  %v6001 = vunpack.c.l.b16 %v5917
  %v6002 = vunpack.c.h.b16 %v5917
  %v6003 = vunpack.c.l.b16 %v5918
  %v6004 = vunpack.c.l.b16 %v5919
  %v6005 = vunpack.c.h.b16 %v5919
  %v6006 = vunpack.c.l.b16 %v5920
  %v6007 = vunpack.c.l.b16 %v5921
  %v6008 = vunpack.c.h.b16 %v5921
  %v6009 = vunpack.c.l.b16 %v5922
  %v6010 = vunpack.c.l.b16 %v5923
  %v6011 = vunpack.c.h.b16 %v5923
  %v6012 = vunpack.c.l.b16 %v5924
  %v6013 = vpack.c.b16 %v5968, %v5965
  %v6014 = vpack.c.b16 %v5969, %v5966
  %v6015 = vpack.c.b16 %v5970, %v5967
  %v6016 = vpack.c.b16 %v5974, %v5971
  %v6017 = vpack.c.b16 %v5975, %v5972
  %v6018 = vpack.c.b16 %v5976, %v5973
  %v6019 = vpack.c.b16 %v5980, %v5977
  %v6020 = vpack.c.b16 %v5981, %v5978
  %v6021 = vpack.c.b16 %v5982, %v5979
  %v6022 = vpack.c.b16 %v5986, %v5983
  %v6023 = vpack.c.b16 %v5987, %v5984
  %v6024 = vpack.c.b16 %v5988, %v5985
  %v6025 = vpack.c.b16 %v5992, %v5989
  %v6026 = vpack.c.b16 %v5993, %v5990
  %v6027 = vpack.c.b16 %v5994, %v5991
  %v6028 = vpack.c.b16 %v5998, %v5995
  %v6029 = vpack.c.b16 %v5999, %v5996
  %v6030 = vpack.c.b16 %v6000, %v5997
  %v6031 = vpack.c.b16 %v6004, %v6001
  %v6032 = vpack.c.b16 %v6005, %v6002
  %v6033 = vpack.c.b16 %v6006, %v6003
  %v6034 = vpack.c.b16 %v6010, %v6007
  %v6035 = vpack.c.b16 %v6011, %v6008
  %v6036 = vpack.c.b16 %v6012, %v6009
  %6061 = vmatpush.bf16.msra.mxu0 %v6034
  %6062 = vmatpush.bf16.msra.mxu0 %v6031
  %6063 = vmatpush.bf16.msra.mxu0 %v6028
  %6064 = vmatpush.bf16.msra.mxu0 %v6025
  %6065 = vmatpush.bf16.msra.mxu0 %v6022
  %6066 = vmatpush.bf16.msra.mxu0 %v6019
  %6067 = vmatpush.bf16.msra.mxu0 %v6016
  %6068 = vmatpush.bf16.msra.mxu0 %v6013
  %6069 = vmatmul.bf16.gmra.mxu0 %v5424
  %v6070 = vpop.f32.mrf.mxu0
  %v6071 = vadd.f32 %v5927, %v6070
  %v6072 = vpop.f32.mrf.mxu0
  %6073 = vdwg.mxu0
  %6074 = vmatpush.bf16.msra.mxu0 %v6035
  %6075 = vmatpush.bf16.msra.mxu0 %v6032
  %6076 = vmatpush.bf16.msra.mxu0 %v6029
  %6077 = vmatpush.bf16.msra.mxu0 %v6026
  %6078 = vmatpush.bf16.msra.mxu0 %v6023
  %6079 = vmatpush.bf16.msra.mxu0 %v6020
  %6080 = vmatpush.bf16.msra.mxu0 %v6017
  %6081 = vmatpush.bf16.msra.mxu0 %v6014
  %6082 = vmatmul.bf16.gmra.mxu0 %v5424
  %v6083 = vpop.f32.mrf.mxu0
  %v6084 = vadd.f32 %v5928, %v6083
  %v6085 = vpop.f32.mrf.mxu0
  %6086 = vdwg.mxu0
  %6087 = vmatpush.bf16.msra.mxu0 %v6036
  %6088 = vmatpush.bf16.msra.mxu0 %v6033
  %6089 = vmatpush.bf16.msra.mxu0 %v6030
  %6090 = vmatpush.bf16.msra.mxu0 %v6027
  %6091 = vmatpush.bf16.msra.mxu0 %v6024
  %6092 = vmatpush.bf16.msra.mxu0 %v6021
  %6093 = vmatpush.bf16.msra.mxu0 %v6018
  %6094 = vmatpush.bf16.msra.mxu0 %v6015
  %6095 = vmatmul.bf16.gmra.mxu0 %v5424
  %v6096 = vpop.f32.mrf.mxu0
  %v6097 = vadd.f32 %v5929, %v6096
  %v6098 = vpop.f32.mrf.mxu0
  %6099 = vdwg.mxu0
  %v6100 = vadd.f32 %v5890, %v6071
  %v6101 = vxor.u32 %v6100, 2147483648
  %v6102 = vmul.f32 %v6101, 1.442695
  %v6103 = vpow.pop %v6102
  %v6104 = vadd.f32 %v6103, 1.0
  %v6105 = vrcp.pop %v6104
  %v6106 = vmul.f32 %v6104, %v6105
  %v6107 = vsub.f32 1.0, %v6106
  %v6108 = vmul.f32 %v6105, %v6107
  %v6109 = vadd.f32 %v6105, %v6108
  %vm6110 = vweird.f32 %v6104
  %vm6111 = vweird.f32 %v6105
  %vm6112 = vmor %vm6110, %vm6111
  %v6113 = vsel %vm6112, %v6105, %v6109
  %v6114 = vand.u32 2147483647, %v6104
  %vm6115 = vcmp.eq.f32.partialorder %v6114, 8.507059e+37
  %v6116 = vand.u32 %v6104, 2147483648
  %v6117 = vor.u32 1.1754944e-38, %v6116
  %v6118 = vsel %vm6115, %v6117, %v6113
  %v6119 = vmul.f32 1.0, %v6118
  %v6120 = vadd.f32 %v5891, %v6084
  %v6121 = vxor.u32 %v6120, 2147483648
  %v6122 = vmul.f32 %v6121, 1.442695
  %v6123 = vpow.pop %v6122
  %v6124 = vadd.f32 %v6123, 1.0
  %v6125 = vrcp.pop %v6124
  %v6126 = vmul.f32 %v6124, %v6125
  %v6127 = vsub.f32 1.0, %v6126
  %v6128 = vmul.f32 %v6125, %v6127
  %v6129 = vadd.f32 %v6125, %v6128
  %vm6130 = vweird.f32 %v6124
  %vm6131 = vweird.f32 %v6125
  %vm6132 = vmor %vm6130, %vm6131
  %v6133 = vsel %vm6132, %v6125, %v6129
  %v6134 = vand.u32 2147483647, %v6124
  %vm6135 = vcmp.eq.f32.partialorder %v6134, 8.507059e+37
  %v6136 = vand.u32 %v6124, 2147483648
  %v6137 = vor.u32 1.1754944e-38, %v6136
  %v6138 = vsel %vm6135, %v6137, %v6133
  %v6139 = vmul.f32 1.0, %v6138
  %v6140 = vmul.f32 %v6119, %v6097
  %v6141 = vadd.f32 %v5892, %v6140
  %v6142 = vtanh.pop %v6141
  %v6143 = vsub.f32 1.0, %v6139
  %v6144 = vmul.f32 %v6143, %v6142
  %v6145 = vmul.f32 %v6139, %v5423
  %v6146 = vadd.f32 %v6144, %v6145
  %v6147 = vpack.c.bf16 %v6146, %v6146
  %v6148 = vld [vmem:[%s1085] sm:$0xff]
  %v6149 = vld [vmem:[%s1085 + $0x8] sm:$0xf]
  %v6150 = vld [vmem:[%s1085 + $0xc] sm:$0xff]
  %v6151 = vld [vmem:[%s1085 + $0x14] sm:$0xf]
  %v6152 = vld [vmem:[%s1085 + $0x18] sm:$0xff]
  %v6153 = vld [vmem:[%s1085 + $0x20] sm:$0xf]
  %v6154 = vld [vmem:[%s1085 + $0x24] sm:$0xff]
  %v6155 = vld [vmem:[%s1085 + $0x2c] sm:$0xf]
  %v6156 = vld [vmem:[%s1085 + $0x30] sm:$0xff]
  %v6157 = vld [vmem:[%s1085 + $0x38] sm:$0xf]
  %v6158 = vld [vmem:[%s1085 + $0x3c] sm:$0xff]
  %v6159 = vld [vmem:[%s1085 + $0x44] sm:$0xf]
  %v6160 = vld [vmem:[%s1085 + $0x48] sm:$0xff]
  %v6161 = vld [vmem:[%s1085 + $0x50] sm:$0xf]
  %v6162 = vld [vmem:[%s1085 + $0x54] sm:$0xff]
  %v6163 = vld [vmem:[%s1085 + $0x5c] sm:$0xf]
  %v6164 = vld [vmem:[%s1085 + $0x60] sm:$0xff]
  %v6165 = vld [vmem:[%s1085 + $0x68] sm:$0xf]
  %v6166 = vld [vmem:[%s1085 + $0x6c] sm:$0xff]
  %v6167 = vld [vmem:[%s1085 + $0x74] sm:$0xf]
  %v6168 = vld [vmem:[%s1085 + $0x78] sm:$0xff]
  %v6169 = vld [vmem:[%s1085 + $0x80] sm:$0xf]
  %v6170 = vld [vmem:[%s1085 + $0x84] sm:$0xff]
  %v6171 = vld [vmem:[%s1085 + $0x8c] sm:$0xf]
  %v6172 = vld [vmem:[%s1085 + $0x90] sm:$0xff]
  %v6173 = vld [vmem:[%s1085 + $0x98] sm:$0xf]
  %v6174 = vld [vmem:[%s1085 + $0x9c] sm:$0xff]
  %v6175 = vld [vmem:[%s1085 + $0xa4] sm:$0xf]
  %v6176 = vld [vmem:[%s1085 + $0xa8] sm:$0xff]
  %v6177 = vld [vmem:[%s1085 + $0xb0] sm:$0xf]
  %v6178 = vld [vmem:[%s1085 + $0xb4] sm:$0xff]
  %v6179 = vld [vmem:[%s1085 + $0xbc] sm:$0xf]
  %v6180 = vld [vmem:[%s1118] sm:$0x7]
  %v6182 = vperm.slane %v6180, 0
  %v6183 = vperm.slane %v6180, 1
  %v6184 = vperm.slane %v6180, 2
  %v6220 = vunpack.c.l.b16 %v6148
  %v6221 = vunpack.c.h.b16 %v6148
  %v6222 = vunpack.c.l.b16 %v6149
  %v6223 = vunpack.c.l.b16 %v6150
  %v6224 = vunpack.c.h.b16 %v6150
  %v6225 = vunpack.c.l.b16 %v6151
  %v6226 = vunpack.c.l.b16 %v6152
  %v6227 = vunpack.c.h.b16 %v6152
  %v6228 = vunpack.c.l.b16 %v6153
  %v6229 = vunpack.c.l.b16 %v6154
  %v6230 = vunpack.c.h.b16 %v6154
  %v6231 = vunpack.c.l.b16 %v6155
  %v6232 = vunpack.c.l.b16 %v6156
  %v6233 = vunpack.c.h.b16 %v6156
  %v6234 = vunpack.c.l.b16 %v6157
  %v6235 = vunpack.c.l.b16 %v6158
  %v6236 = vunpack.c.h.b16 %v6158
  %v6237 = vunpack.c.l.b16 %v6159
  %v6238 = vunpack.c.l.b16 %v6160
  %v6239 = vunpack.c.h.b16 %v6160
  %v6240 = vunpack.c.l.b16 %v6161
  %v6241 = vunpack.c.l.b16 %v6162
  %v6242 = vunpack.c.h.b16 %v6162
  %v6243 = vunpack.c.l.b16 %v6163
  %v6244 = vunpack.c.l.b16 %v6164
  %v6245 = vunpack.c.h.b16 %v6164
  %v6246 = vunpack.c.l.b16 %v6165
  %v6247 = vunpack.c.l.b16 %v6166
  %v6248 = vunpack.c.h.b16 %v6166
  %v6249 = vunpack.c.l.b16 %v6167
  %v6250 = vunpack.c.l.b16 %v6168
  %v6251 = vunpack.c.h.b16 %v6168
  %v6252 = vunpack.c.l.b16 %v6169
  %v6253 = vunpack.c.l.b16 %v6170
  %v6254 = vunpack.c.h.b16 %v6170
  %v6255 = vunpack.c.l.b16 %v6171
  %v6256 = vunpack.c.l.b16 %v6172
  %v6257 = vunpack.c.h.b16 %v6172
  %v6258 = vunpack.c.l.b16 %v6173
  %v6259 = vunpack.c.l.b16 %v6174
  %v6260 = vunpack.c.h.b16 %v6174
  %v6261 = vunpack.c.l.b16 %v6175
  %v6262 = vunpack.c.l.b16 %v6176
  %v6263 = vunpack.c.h.b16 %v6176
  %v6264 = vunpack.c.l.b16 %v6177
  %v6265 = vunpack.c.l.b16 %v6178
  %v6266 = vunpack.c.h.b16 %v6178
  %v6267 = vunpack.c.l.b16 %v6179
  %v6268 = vpack.c.b16 %v6223, %v6220
  %v6269 = vpack.c.b16 %v6224, %v6221
  %v6270 = vpack.c.b16 %v6225, %v6222
  %v6271 = vpack.c.b16 %v6229, %v6226
  %v6272 = vpack.c.b16 %v6230, %v6227
  %v6273 = vpack.c.b16 %v6231, %v6228
  %v6274 = vpack.c.b16 %v6235, %v6232
  %v6275 = vpack.c.b16 %v6236, %v6233
  %v6276 = vpack.c.b16 %v6237, %v6234
  %v6277 = vpack.c.b16 %v6241, %v6238
  %v6278 = vpack.c.b16 %v6242, %v6239
  %v6279 = vpack.c.b16 %v6243, %v6240
  %v6280 = vpack.c.b16 %v6247, %v6244
  %v6281 = vpack.c.b16 %v6248, %v6245
  %v6282 = vpack.c.b16 %v6249, %v6246
  %v6283 = vpack.c.b16 %v6253, %v6250
  %v6284 = vpack.c.b16 %v6254, %v6251
  %v6285 = vpack.c.b16 %v6255, %v6252
  %v6286 = vpack.c.b16 %v6259, %v6256
  %v6287 = vpack.c.b16 %v6260, %v6257
  %v6288 = vpack.c.b16 %v6261, %v6258
  %v6289 = vpack.c.b16 %v6265, %v6262
  %v6290 = vpack.c.b16 %v6266, %v6263
  %v6291 = vpack.c.b16 %v6267, %v6264
  %6316 = vmatpush.bf16.msra.mxu0 %v6289
  %6317 = vmatpush.bf16.msra.mxu0 %v6286
  %6318 = vmatpush.bf16.msra.mxu0 %v6283
  %6319 = vmatpush.bf16.msra.mxu0 %v6280
  %6320 = vmatpush.bf16.msra.mxu0 %v6277
  %6321 = vmatpush.bf16.msra.mxu0 %v6274
  %6322 = vmatpush.bf16.msra.mxu0 %v6271
  %6323 = vmatpush.bf16.msra.mxu0 %v6268
  %6324 = vmatmul.bf16.gmra.mxu0 %v6147
  %v6325 = vpop.f32.mrf.mxu0
  %v6326 = vadd.f32 %v6182, %v6325
  %v6327 = vpop.f32.mrf.mxu0
  %6328 = vdwg.mxu0
  %6329 = vmatpush.bf16.msra.mxu0 %v6290
  %6330 = vmatpush.bf16.msra.mxu0 %v6287
  %6331 = vmatpush.bf16.msra.mxu0 %v6284
  %6332 = vmatpush.bf16.msra.mxu0 %v6281
  %6333 = vmatpush.bf16.msra.mxu0 %v6278
  %6334 = vmatpush.bf16.msra.mxu0 %v6275
  %6335 = vmatpush.bf16.msra.mxu0 %v6272
  %6336 = vmatpush.bf16.msra.mxu0 %v6269
  %6337 = vmatmul.bf16.gmra.mxu0 %v6147
  %v6338 = vpop.f32.mrf.mxu0
  %v6339 = vadd.f32 %v6183, %v6338
  %v6340 = vpop.f32.mrf.mxu0
  %6341 = vdwg.mxu0
  %6342 = vmatpush.bf16.msra.mxu0 %v6291
  %6343 = vmatpush.bf16.msra.mxu0 %v6288
  %6344 = vmatpush.bf16.msra.mxu0 %v6285
  %6345 = vmatpush.bf16.msra.mxu0 %v6282
  %6346 = vmatpush.bf16.msra.mxu0 %v6279
  %6347 = vmatpush.bf16.msra.mxu0 %v6276
  %6348 = vmatpush.bf16.msra.mxu0 %v6273
  %6349 = vmatpush.bf16.msra.mxu0 %v6270
  %6350 = vmatmul.bf16.gmra.mxu0 %v6147
  %v6351 = vpop.f32.mrf.mxu0
  %v6352 = vadd.f32 %v6184, %v6351
  %v6353 = vpop.f32.mrf.mxu0
  %6354 = vdwg.mxu0
  %v6355 = vld [vmem:[%s1294] sm:$0xff]
  %v6356 = vld [vmem:[%s1294 + $0x8] sm:$0xf]
  %v6357 = vld [vmem:[%s1294 + $0xc] sm:$0xff]
  %v6358 = vld [vmem:[%s1294 + $0x14] sm:$0xf]
  %v6359 = vld [vmem:[%s1294 + $0x18] sm:$0xff]
  %v6360 = vld [vmem:[%s1294 + $0x20] sm:$0xf]
  %v6361 = vld [vmem:[%s1294 + $0x24] sm:$0xff]
  %v6362 = vld [vmem:[%s1294 + $0x2c] sm:$0xf]
  %v6363 = vld [vmem:[%s1294 + $0x30] sm:$0xff]
  %v6364 = vld [vmem:[%s1294 + $0x38] sm:$0xf]
  %v6365 = vld [vmem:[%s1294 + $0x3c] sm:$0xff]
  %v6366 = vld [vmem:[%s1294 + $0x44] sm:$0xf]
  %v6367 = vld [vmem:[%s1294 + $0x48] sm:$0xff]
  %v6368 = vld [vmem:[%s1294 + $0x50] sm:$0xf]
  %v6369 = vld [vmem:[%s1294 + $0x54] sm:$0xff]
  %v6370 = vld [vmem:[%s1294 + $0x5c] sm:$0xf]
  %v6371 = vld [vmem:[%s1294 + $0x60] sm:$0xff]
  %v6372 = vld [vmem:[%s1294 + $0x68] sm:$0xf]
  %v6373 = vld [vmem:[%s1294 + $0x6c] sm:$0xff]
  %v6374 = vld [vmem:[%s1294 + $0x74] sm:$0xf]
  %v6375 = vld [vmem:[%s1294 + $0x78] sm:$0xff]
  %v6376 = vld [vmem:[%s1294 + $0x80] sm:$0xf]
  %v6377 = vld [vmem:[%s1294 + $0x84] sm:$0xff]
  %v6378 = vld [vmem:[%s1294 + $0x8c] sm:$0xf]
  %v6379 = vld [vmem:[%s1294 + $0x90] sm:$0xff]
  %v6380 = vld [vmem:[%s1294 + $0x98] sm:$0xf]
  %v6381 = vld [vmem:[%s1294 + $0x9c] sm:$0xff]
  %v6382 = vld [vmem:[%s1294 + $0xa4] sm:$0xf]
  %v6383 = vld [vmem:[%s1294 + $0xa8] sm:$0xff]
  %v6384 = vld [vmem:[%s1294 + $0xb0] sm:$0xf]
  %v6385 = vld [vmem:[%s1294 + $0xb4] sm:$0xff]
  %v6386 = vld [vmem:[%s1294 + $0xbc] sm:$0xf]
  %v6387 = vld [vmem:[%s1327] sm:$0x7]
  %v6388 = vpack.c.bf16 %v5886, %v5886
  %v6390 = vperm.slane %v6387, 0
  %v6391 = vperm.slane %v6387, 1
  %v6392 = vperm.slane %v6387, 2
  %v6428 = vunpack.c.l.b16 %v6355
  %v6429 = vunpack.c.h.b16 %v6355
  %v6430 = vunpack.c.l.b16 %v6356
  %v6431 = vunpack.c.l.b16 %v6357
  %v6432 = vunpack.c.h.b16 %v6357
  %v6433 = vunpack.c.l.b16 %v6358
  %v6434 = vunpack.c.l.b16 %v6359
  %v6435 = vunpack.c.h.b16 %v6359
  %v6436 = vunpack.c.l.b16 %v6360
  %v6437 = vunpack.c.l.b16 %v6361
  %v6438 = vunpack.c.h.b16 %v6361
  %v6439 = vunpack.c.l.b16 %v6362
  %v6440 = vunpack.c.l.b16 %v6363
  %v6441 = vunpack.c.h.b16 %v6363
  %v6442 = vunpack.c.l.b16 %v6364
  %v6443 = vunpack.c.l.b16 %v6365
  %v6444 = vunpack.c.h.b16 %v6365
  %v6445 = vunpack.c.l.b16 %v6366
  %v6446 = vunpack.c.l.b16 %v6367
  %v6447 = vunpack.c.h.b16 %v6367
  %v6448 = vunpack.c.l.b16 %v6368
  %v6449 = vunpack.c.l.b16 %v6369
  %v6450 = vunpack.c.h.b16 %v6369
  %v6451 = vunpack.c.l.b16 %v6370
  %v6452 = vunpack.c.l.b16 %v6371
  %v6453 = vunpack.c.h.b16 %v6371
  %v6454 = vunpack.c.l.b16 %v6372
  %v6455 = vunpack.c.l.b16 %v6373
  %v6456 = vunpack.c.h.b16 %v6373
  %v6457 = vunpack.c.l.b16 %v6374
  %v6458 = vunpack.c.l.b16 %v6375
  %v6459 = vunpack.c.h.b16 %v6375
  %v6460 = vunpack.c.l.b16 %v6376
  %v6461 = vunpack.c.l.b16 %v6377
  %v6462 = vunpack.c.h.b16 %v6377
  %v6463 = vunpack.c.l.b16 %v6378
  %v6464 = vunpack.c.l.b16 %v6379
  %v6465 = vunpack.c.h.b16 %v6379
  %v6466 = vunpack.c.l.b16 %v6380
  %v6467 = vunpack.c.l.b16 %v6381
  %v6468 = vunpack.c.h.b16 %v6381
  %v6469 = vunpack.c.l.b16 %v6382
  %v6470 = vunpack.c.l.b16 %v6383
  %v6471 = vunpack.c.h.b16 %v6383
  %v6472 = vunpack.c.l.b16 %v6384
  %v6473 = vunpack.c.l.b16 %v6385
  %v6474 = vunpack.c.h.b16 %v6385
  %v6475 = vunpack.c.l.b16 %v6386
  %v6476 = vpack.c.b16 %v6431, %v6428
  %v6477 = vpack.c.b16 %v6432, %v6429
  %v6478 = vpack.c.b16 %v6433, %v6430
  %v6479 = vpack.c.b16 %v6437, %v6434
  %v6480 = vpack.c.b16 %v6438, %v6435
  %v6481 = vpack.c.b16 %v6439, %v6436
  %v6482 = vpack.c.b16 %v6443, %v6440
  %v6483 = vpack.c.b16 %v6444, %v6441
  %v6484 = vpack.c.b16 %v6445, %v6442
  %v6485 = vpack.c.b16 %v6449, %v6446
  %v6486 = vpack.c.b16 %v6450, %v6447
  %v6487 = vpack.c.b16 %v6451, %v6448
  %v6488 = vpack.c.b16 %v6455, %v6452
  %v6489 = vpack.c.b16 %v6456, %v6453
  %v6490 = vpack.c.b16 %v6457, %v6454
  %v6491 = vpack.c.b16 %v6461, %v6458
  %v6492 = vpack.c.b16 %v6462, %v6459
  %v6493 = vpack.c.b16 %v6463, %v6460
  %v6494 = vpack.c.b16 %v6467, %v6464
  %v6495 = vpack.c.b16 %v6468, %v6465
  %v6496 = vpack.c.b16 %v6469, %v6466
  %v6497 = vpack.c.b16 %v6473, %v6470
  %v6498 = vpack.c.b16 %v6474, %v6471
  %v6499 = vpack.c.b16 %v6475, %v6472
  %6524 = vmatpush.bf16.msra.mxu0 %v6497
  %6525 = vmatpush.bf16.msra.mxu0 %v6494
  %6526 = vmatpush.bf16.msra.mxu0 %v6491
  %6527 = vmatpush.bf16.msra.mxu0 %v6488
  %6528 = vmatpush.bf16.msra.mxu0 %v6485
  %6529 = vmatpush.bf16.msra.mxu0 %v6482
  %6530 = vmatpush.bf16.msra.mxu0 %v6479
  %6531 = vmatpush.bf16.msra.mxu0 %v6476
  %6532 = vmatmul.bf16.gmra.mxu0 %v6388
  %v6533 = vpop.f32.mrf.mxu0
  %v6534 = vadd.f32 %v6390, %v6533
  %v6535 = vpop.f32.mrf.mxu0
  %6536 = vdwg.mxu0
  %6537 = vmatpush.bf16.msra.mxu0 %v6498
  %6538 = vmatpush.bf16.msra.mxu0 %v6495
  %6539 = vmatpush.bf16.msra.mxu0 %v6492
  %6540 = vmatpush.bf16.msra.mxu0 %v6489
  %6541 = vmatpush.bf16.msra.mxu0 %v6486
  %6542 = vmatpush.bf16.msra.mxu0 %v6483
  %6543 = vmatpush.bf16.msra.mxu0 %v6480
  %6544 = vmatpush.bf16.msra.mxu0 %v6477
  %6545 = vmatmul.bf16.gmra.mxu0 %v6388
  %v6546 = vpop.f32.mrf.mxu0
  %v6547 = vadd.f32 %v6391, %v6546
  %v6548 = vpop.f32.mrf.mxu0
  %6549 = vdwg.mxu0
  %6550 = vmatpush.bf16.msra.mxu0 %v6499
  %6551 = vmatpush.bf16.msra.mxu0 %v6496
  %6552 = vmatpush.bf16.msra.mxu0 %v6493
  %6553 = vmatpush.bf16.msra.mxu0 %v6490
  %6554 = vmatpush.bf16.msra.mxu0 %v6487
  %6555 = vmatpush.bf16.msra.mxu0 %v6484
  %6556 = vmatpush.bf16.msra.mxu0 %v6481
  %6557 = vmatpush.bf16.msra.mxu0 %v6478
  %6558 = vmatmul.bf16.gmra.mxu0 %v6388
  %v6559 = vpop.f32.mrf.mxu0
  %v6560 = vadd.f32 %v6392, %v6559
  %v6561 = vpop.f32.mrf.mxu0
  %6562 = vdwg.mxu0
  %v6563 = vadd.f32 %v6326, %v6534
  %v6564 = vxor.u32 %v6563, 2147483648
  %v6565 = vmul.f32 %v6564, 1.442695
  %v6566 = vpow.pop %v6565
  %v6567 = vadd.f32 %v6566, 1.0
  %v6568 = vrcp.pop %v6567
  %v6569 = vmul.f32 %v6567, %v6568
  %v6570 = vsub.f32 1.0, %v6569
  %v6571 = vmul.f32 %v6568, %v6570
  %v6572 = vadd.f32 %v6568, %v6571
  %vm6573 = vweird.f32 %v6567
  %vm6574 = vweird.f32 %v6568
  %vm6575 = vmor %vm6573, %vm6574
  %v6576 = vsel %vm6575, %v6568, %v6572
  %v6577 = vand.u32 2147483647, %v6567
  %vm6578 = vcmp.eq.f32.partialorder %v6577, 8.507059e+37
  %v6579 = vand.u32 %v6567, 2147483648
  %v6580 = vor.u32 1.1754944e-38, %v6579
  %v6581 = vsel %vm6578, %v6580, %v6576
  %v6582 = vmul.f32 1.0, %v6581
  %v6583 = vadd.f32 %v6339, %v6547
  %v6584 = vxor.u32 %v6583, 2147483648
  %v6585 = vmul.f32 %v6584, 1.442695
  %v6586 = vpow.pop %v6585
  %v6587 = vadd.f32 %v6586, 1.0
  %v6588 = vrcp.pop %v6587
  %v6589 = vmul.f32 %v6587, %v6588
  %v6590 = vsub.f32 1.0, %v6589
  %v6591 = vmul.f32 %v6588, %v6590
  %v6592 = vadd.f32 %v6588, %v6591
  %vm6593 = vweird.f32 %v6587
  %vm6594 = vweird.f32 %v6588
  %vm6595 = vmor %vm6593, %vm6594
  %v6596 = vsel %vm6595, %v6588, %v6592
  %v6597 = vand.u32 2147483647, %v6587
  %vm6598 = vcmp.eq.f32.partialorder %v6597, 8.507059e+37
  %v6599 = vand.u32 %v6587, 2147483648
  %v6600 = vor.u32 1.1754944e-38, %v6599
  %v6601 = vsel %vm6598, %v6600, %v6596
  %v6602 = vmul.f32 1.0, %v6601
  %v6603 = vmul.f32 %v6582, %v6560
  %v6604 = vadd.f32 %v6352, %v6603
  %v6605 = vtanh.pop %v6604
  %v6606 = vsub.f32 1.0, %v6602
  %v6607 = vmul.f32 %v6606, %v6605
  %v6608 = vmul.f32 %v6602, %v5886
  %v6609 = vadd.f32 %v6607, %v6608
  %s6610 = scalar_lea.vmem [#allocation3], 56
  %6611 = vst [vmem:[%s6610] sm:$0xff] %v6609
  %v6612 = vld [vmem:[#allocation3] sm:$0xff]
  %v6614 = vrot.slane %v6612, 1
  %v6615 = vrot.slane %v6612, 2
  %v6616 = vrot.slane %v6612, 3
  %v6617 = vrot.slane %v6612, 4
  %v6618 = vrot.slane %v6612, 5
  %v6619 = vrot.slane %v6612, 6
  %v6620 = vrot.slane %v6612, 7
  %6628 = vst [vmem:[#allocation4] sm:$0x1] %v6612
  %6629 = vst [vmem:[#allocation4 + $0x8] sm:$0x1] %v6614
  %6630 = vst [vmem:[#allocation4 + $0x10] sm:$0x1] %v6615
  %6631 = vst [vmem:[#allocation4 + $0x18] sm:$0x1] %v6616
  %6632 = vst [vmem:[#allocation4 + $0x20] sm:$0x1] %v6617
  %6633 = vst [vmem:[#allocation4 + $0x28] sm:$0x1] %v6618
  %6634 = vst [vmem:[#allocation4 + $0x30] sm:$0x1] %v6619
  %6635 = vst [vmem:[#allocation4 + $0x38] sm:$0x1] %v6620
  %v6636 = vld [vmem:[%s2272] sm:$0xff]
  %v6638 = vrot.slane %v6636, 1
  %v6639 = vrot.slane %v6636, 2
  %v6640 = vrot.slane %v6636, 3
  %v6641 = vrot.slane %v6636, 4
  %v6642 = vrot.slane %v6636, 5
  %v6643 = vrot.slane %v6636, 6
  %v6644 = vrot.slane %v6636, 7
  %6652 = vst [vmem:[#allocation4 + $0x1] sm:$0x1] %v6636
  %6653 = vst [vmem:[#allocation4 + $0x9] sm:$0x1] %v6638
  %6654 = vst [vmem:[#allocation4 + $0x11] sm:$0x1] %v6639
  %6655 = vst [vmem:[#allocation4 + $0x19] sm:$0x1] %v6640
  %6656 = vst [vmem:[#allocation4 + $0x21] sm:$0x1] %v6641
  %6657 = vst [vmem:[#allocation4 + $0x29] sm:$0x1] %v6642
  %6658 = vst [vmem:[#allocation4 + $0x31] sm:$0x1] %v6643
  %6659 = vst [vmem:[#allocation4 + $0x39] sm:$0x1] %v6644
  %v6660 = vld [vmem:[%s2995] sm:$0xff]
  %v6662 = vrot.slane %v6660, 1
  %v6663 = vrot.slane %v6660, 2
  %v6664 = vrot.slane %v6660, 3
  %v6665 = vrot.slane %v6660, 4
  %v6666 = vrot.slane %v6660, 5
  %v6667 = vrot.slane %v6660, 6
  %v6668 = vrot.slane %v6660, 7
  %6676 = vst [vmem:[#allocation4 + $0x2] sm:$0x1] %v6660
  %6677 = vst [vmem:[#allocation4 + $0xa] sm:$0x1] %v6662
  %6678 = vst [vmem:[#allocation4 + $0x12] sm:$0x1] %v6663
  %6679 = vst [vmem:[#allocation4 + $0x1a] sm:$0x1] %v6664
  %6680 = vst [vmem:[#allocation4 + $0x22] sm:$0x1] %v6665
  %6681 = vst [vmem:[#allocation4 + $0x2a] sm:$0x1] %v6666
  %6682 = vst [vmem:[#allocation4 + $0x32] sm:$0x1] %v6667
  %6683 = vst [vmem:[#allocation4 + $0x3a] sm:$0x1] %v6668
  %v6684 = vld [vmem:[%s3718] sm:$0xff]
  %v6686 = vrot.slane %v6684, 1
  %v6687 = vrot.slane %v6684, 2
  %v6688 = vrot.slane %v6684, 3
  %v6689 = vrot.slane %v6684, 4
  %v6690 = vrot.slane %v6684, 5
  %v6691 = vrot.slane %v6684, 6
  %v6692 = vrot.slane %v6684, 7
  %6700 = vst [vmem:[#allocation4 + $0x3] sm:$0x1] %v6684
  %6701 = vst [vmem:[#allocation4 + $0xb] sm:$0x1] %v6686
  %6702 = vst [vmem:[#allocation4 + $0x13] sm:$0x1] %v6687
  %6703 = vst [vmem:[#allocation4 + $0x1b] sm:$0x1] %v6688
  %6704 = vst [vmem:[#allocation4 + $0x23] sm:$0x1] %v6689
  %6705 = vst [vmem:[#allocation4 + $0x2b] sm:$0x1] %v6690
  %6706 = vst [vmem:[#allocation4 + $0x33] sm:$0x1] %v6691
  %6707 = vst [vmem:[#allocation4 + $0x3b] sm:$0x1] %v6692
  %v6708 = vld [vmem:[%s4441] sm:$0xff]
  %v6710 = vrot.slane %v6708, 1
  %v6711 = vrot.slane %v6708, 2
  %v6712 = vrot.slane %v6708, 3
  %v6713 = vrot.slane %v6708, 4
  %v6714 = vrot.slane %v6708, 5
  %v6715 = vrot.slane %v6708, 6
  %v6716 = vrot.slane %v6708, 7
  %6724 = vst [vmem:[#allocation4 + $0x4] sm:$0x1] %v6708
  %6725 = vst [vmem:[#allocation4 + $0xc] sm:$0x1] %v6710
  %6726 = vst [vmem:[#allocation4 + $0x14] sm:$0x1] %v6711
  %6727 = vst [vmem:[#allocation4 + $0x1c] sm:$0x1] %v6712
  %6728 = vst [vmem:[#allocation4 + $0x24] sm:$0x1] %v6713
  %6729 = vst [vmem:[#allocation4 + $0x2c] sm:$0x1] %v6714
  %6730 = vst [vmem:[#allocation4 + $0x34] sm:$0x1] %v6715
  %6731 = vst [vmem:[#allocation4 + $0x3c] sm:$0x1] %v6716
  %v6732 = vld [vmem:[%s5164] sm:$0xff]
  %v6734 = vrot.slane %v6732, 1
  %v6735 = vrot.slane %v6732, 2
  %v6736 = vrot.slane %v6732, 3
  %v6737 = vrot.slane %v6732, 4
  %v6738 = vrot.slane %v6732, 5
  %v6739 = vrot.slane %v6732, 6
  %v6740 = vrot.slane %v6732, 7
  %6748 = vst [vmem:[#allocation4 + $0x5] sm:$0x1] %v6732
  %6749 = vst [vmem:[#allocation4 + $0xd] sm:$0x1] %v6734
  %6750 = vst [vmem:[#allocation4 + $0x15] sm:$0x1] %v6735
  %6751 = vst [vmem:[#allocation4 + $0x1d] sm:$0x1] %v6736
  %6752 = vst [vmem:[#allocation4 + $0x25] sm:$0x1] %v6737
  %6753 = vst [vmem:[#allocation4 + $0x2d] sm:$0x1] %v6738
  %6754 = vst [vmem:[#allocation4 + $0x35] sm:$0x1] %v6739
  %6755 = vst [vmem:[#allocation4 + $0x3d] sm:$0x1] %v6740
  %v6756 = vld [vmem:[%s5887] sm:$0xff]
  %v6758 = vrot.slane %v6756, 1
  %v6759 = vrot.slane %v6756, 2
  %v6760 = vrot.slane %v6756, 3
  %v6761 = vrot.slane %v6756, 4
  %v6762 = vrot.slane %v6756, 5
  %v6763 = vrot.slane %v6756, 6
  %v6764 = vrot.slane %v6756, 7
  %6772 = vst [vmem:[#allocation4 + $0x6] sm:$0x1] %v6756
  %6773 = vst [vmem:[#allocation4 + $0xe] sm:$0x1] %v6758
  %6774 = vst [vmem:[#allocation4 + $0x16] sm:$0x1] %v6759
  %6775 = vst [vmem:[#allocation4 + $0x1e] sm:$0x1] %v6760
  %6776 = vst [vmem:[#allocation4 + $0x26] sm:$0x1] %v6761
  %6777 = vst [vmem:[#allocation4 + $0x2e] sm:$0x1] %v6762
  %6778 = vst [vmem:[#allocation4 + $0x36] sm:$0x1] %v6763
  %6779 = vst [vmem:[#allocation4 + $0x3e] sm:$0x1] %v6764
  %v6780 = vld [vmem:[%s6610] sm:$0xff]
  %v6782 = vrot.slane %v6780, 1
  %v6783 = vrot.slane %v6780, 2
  %v6784 = vrot.slane %v6780, 3
  %v6785 = vrot.slane %v6780, 4
  %v6786 = vrot.slane %v6780, 5
  %v6787 = vrot.slane %v6780, 6
  %v6788 = vrot.slane %v6780, 7
  %6796 = vst [vmem:[#allocation4 + $0x7] sm:$0x1] %v6780
  %6797 = vst [vmem:[#allocation4 + $0xf] sm:$0x1] %v6782
  %6798 = vst [vmem:[#allocation4 + $0x17] sm:$0x1] %v6783
  %6799 = vst [vmem:[#allocation4 + $0x1f] sm:$0x1] %v6784
  %6800 = vst [vmem:[#allocation4 + $0x27] sm:$0x1] %v6785
  %6801 = vst [vmem:[#allocation4 + $0x2f] sm:$0x1] %v6786
  %6802 = vst [vmem:[#allocation4 + $0x37] sm:$0x1] %v6787
  %6803 = vst [vmem:[#allocation4 + $0x3f] sm:$0x1] %v6788
  %v6804 = vld [vmem:[#allocation4] sm:$0xff]
  %v6805 = vld [vmem:[#allocation4 + $0x8] sm:$0xff]
  %v6806 = vld [vmem:[#allocation4 + $0x10] sm:$0xff]
  %v6807 = vld [vmem:[#allocation4 + $0x18] sm:$0xff]
  %v6808 = vld [vmem:[#allocation4 + $0x20] sm:$0xff]
  %v6809 = vld [vmem:[#allocation4 + $0x28] sm:$0xff]
  %v6810 = vld [vmem:[#allocation4 + $0x30] sm:$0xff]
  %v6811 = vld [vmem:[#allocation4 + $0x38] sm:$0xff]
  %v6812 = vld [vmem:[%s2] sm:$0xff]
  %v6813 = vsub.f32 1.0, %v6812
  %v6814 = vmul.f32 %v6813, -10000.0
  %v6816 = vrot.slane %v6814, 1
  %v6817 = vrot.slane %v6814, 2
  %v6818 = vrot.slane %v6814, 3
  %v6819 = vrot.slane %v6814, 4
  %v6820 = vrot.slane %v6814, 5
  %v6821 = vrot.slane %v6814, 6
  %v6822 = vrot.slane %v6814, 7
  %v6823 = vpack.c.bf16 %v6805, %v6804
  %v6824 = vpack.c.bf16 %v6807, %v6806
  %v6825 = vpack.c.bf16 %v6809, %v6808
  %v6826 = vpack.c.bf16 %v6811, %v6810
  %v6827 = vld [vmem:[%s8] sm:$0xff]
  %v6828 = vld [vmem:[%s8 + $0x8] sm:$0xff]
  %v6829 = vld [vmem:[%s8 + $0x10] sm:$0xff]
  %v6830 = vld [vmem:[%s8 + $0x18] sm:$0xff]
  %v6831 = vld [vmem:[%s8 + $0x20] sm:$0xff]
  %v6832 = vld [vmem:[%s8 + $0x28] sm:$0xff]
  %v6833 = vld [vmem:[%s8 + $0x30] sm:$0xff]
  %v6834 = vld [vmem:[%s8 + $0x38] sm:$0xff]
  %v6835 = vld [vmem:[%s8 + $0x40] sm:$0xff]
  %v6836 = vld [vmem:[%s8 + $0x48] sm:$0xff]
  %v6837 = vld [vmem:[%s8 + $0x50] sm:$0xff]
  %v6838 = vld [vmem:[%s8 + $0x58] sm:$0xff]
  %v6839 = vld [vmem:[%s8 + $0x60] sm:$0xff]
  %v6840 = vld [vmem:[%s8 + $0x68] sm:$0xff]
  %v6841 = vld [vmem:[%s8 + $0x70] sm:$0xff]
  %v6842 = vld [vmem:[%s8 + $0x78] sm:$0xff]
  %v6843 = vld [vmem:[%s8 + $0x80] sm:$0xff]
  %v6844 = vld [vmem:[%s8 + $0x88] sm:$0xff]
  %v6845 = vld [vmem:[%s8 + $0x90] sm:$0xff]
  %v6846 = vld [vmem:[%s8 + $0x98] sm:$0xff]
  %v6847 = vld [vmem:[%s8 + $0xa0] sm:$0xff]
  %v6848 = vld [vmem:[%s8 + $0xa8] sm:$0xff]
  %v6849 = vld [vmem:[%s8 + $0xb0] sm:$0xff]
  %v6850 = vld [vmem:[%s8 + $0xb8] sm:$0xff]
  %v6851 = vld [vmem:[%s8 + $0xc0] sm:$0xff]
  %v6852 = vld [vmem:[%s8 + $0xc8] sm:$0xff]
  %v6853 = vld [vmem:[%s8 + $0xd0] sm:$0xff]
  %v6854 = vld [vmem:[%s8 + $0xd8] sm:$0xff]
  %v6855 = vld [vmem:[%s8 + $0xe0] sm:$0xff]
  %v6856 = vld [vmem:[%s8 + $0xe8] sm:$0xff]
  %v6857 = vld [vmem:[%s8 + $0xf0] sm:$0xff]
  %v6858 = vld [vmem:[%s8 + $0xf8] sm:$0xff]
  %v6859 = vld [vmem:[%s8 + $0x100] sm:$0xff]
  %v6860 = vld [vmem:[%s8 + $0x108] sm:$0xff]
  %v6861 = vld [vmem:[%s8 + $0x110] sm:$0xff]
  %v6862 = vld [vmem:[%s8 + $0x118] sm:$0xff]
  %v6863 = vld [vmem:[%s8 + $0x120] sm:$0xff]
  %v6864 = vld [vmem:[%s8 + $0x128] sm:$0xff]
  %v6865 = vld [vmem:[%s8 + $0x130] sm:$0xff]
  %v6866 = vld [vmem:[%s8 + $0x138] sm:$0xff]
  %v6867 = vld [vmem:[%s8 + $0x140] sm:$0xff]
  %v6868 = vld [vmem:[%s8 + $0x148] sm:$0xff]
  %v6869 = vld [vmem:[%s8 + $0x150] sm:$0xff]
  %v6870 = vld [vmem:[%s8 + $0x158] sm:$0xff]
  %v6871 = vld [vmem:[%s8 + $0x160] sm:$0xff]
  %v6872 = vld [vmem:[%s8 + $0x168] sm:$0xff]
  %v6873 = vld [vmem:[%s8 + $0x170] sm:$0xff]
  %v6874 = vld [vmem:[%s8 + $0x178] sm:$0xff]
  %v6875 = vld [vmem:[%s9] sm:$0x3f]
  %v6877 = vperm.slane %v6875, 0
  %v6878 = vperm.slane %v6875, 1
  %v6879 = vperm.slane %v6875, 2
  %v6880 = vperm.slane %v6875, 3
  %v6881 = vperm.slane %v6875, 4
  %v6882 = vperm.slane %v6875, 5
  %v6937 = vunpack.c.l.b16 %v6827
  %v6938 = vunpack.c.h.b16 %v6827
  %v6939 = vunpack.c.l.b16 %v6828
  %v6940 = vunpack.c.h.b16 %v6828
  %v6941 = vunpack.c.l.b16 %v6829
  %v6942 = vunpack.c.h.b16 %v6829
  %v6943 = vunpack.c.l.b16 %v6830
  %v6944 = vunpack.c.h.b16 %v6830
  %v6945 = vunpack.c.l.b16 %v6831
  %v6946 = vunpack.c.h.b16 %v6831
  %v6947 = vunpack.c.l.b16 %v6832
  %v6948 = vunpack.c.h.b16 %v6832
  %v6949 = vunpack.c.l.b16 %v6833
  %v6950 = vunpack.c.h.b16 %v6833
  %v6951 = vunpack.c.l.b16 %v6834
  %v6952 = vunpack.c.h.b16 %v6834
  %v6953 = vunpack.c.l.b16 %v6835
  %v6954 = vunpack.c.h.b16 %v6835
  %v6955 = vunpack.c.l.b16 %v6836
  %v6956 = vunpack.c.h.b16 %v6836
  %v6957 = vunpack.c.l.b16 %v6837
  %v6958 = vunpack.c.h.b16 %v6837
  %v6959 = vunpack.c.l.b16 %v6838
  %v6960 = vunpack.c.h.b16 %v6838
  %v6961 = vunpack.c.l.b16 %v6839
  %v6962 = vunpack.c.h.b16 %v6839
  %v6963 = vunpack.c.l.b16 %v6840
  %v6964 = vunpack.c.h.b16 %v6840
  %v6965 = vunpack.c.l.b16 %v6841
  %v6966 = vunpack.c.h.b16 %v6841
  %v6967 = vunpack.c.l.b16 %v6842
  %v6968 = vunpack.c.h.b16 %v6842
  %v6969 = vunpack.c.l.b16 %v6843
  %v6970 = vunpack.c.h.b16 %v6843
  %v6971 = vunpack.c.l.b16 %v6844
  %v6972 = vunpack.c.h.b16 %v6844
  %v6973 = vunpack.c.l.b16 %v6845
  %v6974 = vunpack.c.h.b16 %v6845
  %v6975 = vunpack.c.l.b16 %v6846
  %v6976 = vunpack.c.h.b16 %v6846
  %v6977 = vunpack.c.l.b16 %v6847
  %v6978 = vunpack.c.h.b16 %v6847
  %v6979 = vunpack.c.l.b16 %v6848
  %v6980 = vunpack.c.h.b16 %v6848
  %v6981 = vunpack.c.l.b16 %v6849
  %v6982 = vunpack.c.h.b16 %v6849
  %v6983 = vunpack.c.l.b16 %v6850
  %v6984 = vunpack.c.h.b16 %v6850
  %v6985 = vunpack.c.l.b16 %v6851
  %v6986 = vunpack.c.h.b16 %v6851
  %v6987 = vunpack.c.l.b16 %v6852
  %v6988 = vunpack.c.h.b16 %v6852
  %v6989 = vunpack.c.l.b16 %v6853
  %v6990 = vunpack.c.h.b16 %v6853
  %v6991 = vunpack.c.l.b16 %v6854
  %v6992 = vunpack.c.h.b16 %v6854
  %v6993 = vunpack.c.l.b16 %v6855
  %v6994 = vunpack.c.h.b16 %v6855
  %v6995 = vunpack.c.l.b16 %v6856
  %v6996 = vunpack.c.h.b16 %v6856
  %v6997 = vunpack.c.l.b16 %v6857
  %v6998 = vunpack.c.h.b16 %v6857
  %v6999 = vunpack.c.l.b16 %v6858
  %v7000 = vunpack.c.h.b16 %v6858
  %v7001 = vunpack.c.l.b16 %v6859
  %v7002 = vunpack.c.h.b16 %v6859
  %v7003 = vunpack.c.l.b16 %v6860
  %v7004 = vunpack.c.h.b16 %v6860
  %v7005 = vunpack.c.l.b16 %v6861
  %v7006 = vunpack.c.h.b16 %v6861
  %v7007 = vunpack.c.l.b16 %v6862
  %v7008 = vunpack.c.h.b16 %v6862
  %v7009 = vunpack.c.l.b16 %v6863
  %v7010 = vunpack.c.h.b16 %v6863
  %v7011 = vunpack.c.l.b16 %v6864
  %v7012 = vunpack.c.h.b16 %v6864
  %v7013 = vunpack.c.l.b16 %v6865
  %v7014 = vunpack.c.h.b16 %v6865
  %v7015 = vunpack.c.l.b16 %v6866
  %v7016 = vunpack.c.h.b16 %v6866
  %v7017 = vunpack.c.l.b16 %v6867
  %v7018 = vunpack.c.h.b16 %v6867
  %v7019 = vunpack.c.l.b16 %v6868
  %v7020 = vunpack.c.h.b16 %v6868
  %v7021 = vunpack.c.l.b16 %v6869
  %v7022 = vunpack.c.h.b16 %v6869
  %v7023 = vunpack.c.l.b16 %v6870
  %v7024 = vunpack.c.h.b16 %v6870
  %v7025 = vunpack.c.l.b16 %v6871
  %v7026 = vunpack.c.h.b16 %v6871
  %v7027 = vunpack.c.l.b16 %v6872
  %v7028 = vunpack.c.h.b16 %v6872
  %v7029 = vunpack.c.l.b16 %v6873
  %v7030 = vunpack.c.h.b16 %v6873
  %v7031 = vunpack.c.l.b16 %v6874
  %v7032 = vunpack.c.h.b16 %v6874
  %v7033 = vpack.c.b16 %v6943, %v6937
  %v7034 = vpack.c.b16 %v6944, %v6938
  %v7035 = vpack.c.b16 %v6945, %v6939
  %v7036 = vpack.c.b16 %v6946, %v6940
  %v7037 = vpack.c.b16 %v6947, %v6941
  %v7038 = vpack.c.b16 %v6948, %v6942
  %v7039 = vpack.c.b16 %v6955, %v6949
  %v7040 = vpack.c.b16 %v6956, %v6950
  %v7041 = vpack.c.b16 %v6957, %v6951
  %v7042 = vpack.c.b16 %v6958, %v6952
  %v7043 = vpack.c.b16 %v6959, %v6953
  %v7044 = vpack.c.b16 %v6960, %v6954
  %v7045 = vpack.c.b16 %v6967, %v6961
  %v7046 = vpack.c.b16 %v6968, %v6962
  %v7047 = vpack.c.b16 %v6969, %v6963
  %v7048 = vpack.c.b16 %v6970, %v6964
  %v7049 = vpack.c.b16 %v6971, %v6965
  %v7050 = vpack.c.b16 %v6972, %v6966
  %v7051 = vpack.c.b16 %v6979, %v6973
  %v7052 = vpack.c.b16 %v6980, %v6974
  %v7053 = vpack.c.b16 %v6981, %v6975
  %v7054 = vpack.c.b16 %v6982, %v6976
  %v7055 = vpack.c.b16 %v6983, %v6977
  %v7056 = vpack.c.b16 %v6984, %v6978
  %v7057 = vpack.c.b16 %v6991, %v6985
  %v7058 = vpack.c.b16 %v6992, %v6986
  %v7059 = vpack.c.b16 %v6993, %v6987
  %v7060 = vpack.c.b16 %v6994, %v6988
  %v7061 = vpack.c.b16 %v6995, %v6989
  %v7062 = vpack.c.b16 %v6996, %v6990
  %v7063 = vpack.c.b16 %v7003, %v6997
  %v7064 = vpack.c.b16 %v7004, %v6998
  %v7065 = vpack.c.b16 %v7005, %v6999
  %v7066 = vpack.c.b16 %v7006, %v7000
  %v7067 = vpack.c.b16 %v7007, %v7001
  %v7068 = vpack.c.b16 %v7008, %v7002
  %v7069 = vpack.c.b16 %v7015, %v7009
  %v7070 = vpack.c.b16 %v7016, %v7010
  %v7071 = vpack.c.b16 %v7017, %v7011
  %v7072 = vpack.c.b16 %v7018, %v7012
  %v7073 = vpack.c.b16 %v7019, %v7013
  %v7074 = vpack.c.b16 %v7020, %v7014
  %v7075 = vpack.c.b16 %v7027, %v7021
  %v7076 = vpack.c.b16 %v7028, %v7022
  %v7077 = vpack.c.b16 %v7029, %v7023
  %v7078 = vpack.c.b16 %v7030, %v7024
  %v7079 = vpack.c.b16 %v7031, %v7025
  %v7080 = vpack.c.b16 %v7032, %v7026
  %7129 = vmatpush.bf16.msra.mxu0 %v7075
  %7130 = vmatpush.bf16.msra.mxu0 %v7069
  %7131 = vmatpush.bf16.msra.mxu0 %v7063
  %7132 = vmatpush.bf16.msra.mxu0 %v7057
  %7133 = vmatpush.bf16.msra.mxu0 %v7051
  %7134 = vmatpush.bf16.msra.mxu0 %v7045
  %7135 = vmatpush.bf16.msra.mxu0 %v7039
  %7136 = vmatpush.bf16.msra.mxu0 %v7033
  %7137 = vmatmul.bf16.gmra.mxu0 %v6823
  %v7138 = vpop.f32.mrf.mxu0
  %v7139 = vadd.f32 %v6877, %v7138
  %v7140 = vpop.f32.mrf.mxu0
  %v7141 = vadd.f32 %v6877, %v7140
  %7142 = vmatmul.bf16.gmra.mxu0 %v6824
  %v7143 = vpop.f32.mrf.mxu0
  %v7144 = vadd.f32 %v6877, %v7143
  %v7145 = vpop.f32.mrf.mxu0
  %v7146 = vadd.f32 %v6877, %v7145
  %7147 = vmatmul.bf16.gmra.mxu0 %v6825
  %v7148 = vpop.f32.mrf.mxu0
  %v7149 = vadd.f32 %v6877, %v7148
  %v7150 = vpop.f32.mrf.mxu0
  %v7151 = vadd.f32 %v6877, %v7150
  %7152 = vmatmul.bf16.gmra.mxu0 %v6826
  %v7153 = vpop.f32.mrf.mxu0
  %v7154 = vadd.f32 %v6877, %v7153
  %v7155 = vpop.f32.mrf.mxu0
  %v7156 = vadd.f32 %v6877, %v7155
  %7157 = vdwg.mxu0
  %7158 = vmatpush.bf16.msra.mxu0 %v7076
  %7159 = vmatpush.bf16.msra.mxu0 %v7070
  %7160 = vmatpush.bf16.msra.mxu0 %v7064
  %7161 = vmatpush.bf16.msra.mxu0 %v7058
  %7162 = vmatpush.bf16.msra.mxu0 %v7052
  %7163 = vmatpush.bf16.msra.mxu0 %v7046
  %7164 = vmatpush.bf16.msra.mxu0 %v7040
  %7165 = vmatpush.bf16.msra.mxu0 %v7034
  %7166 = vmatmul.bf16.gmra.mxu0 %v6823
  %v7167 = vpop.f32.mrf.mxu0
  %v7168 = vadd.f32 %v6878, %v7167
  %v7169 = vpop.f32.mrf.mxu0
  %v7170 = vadd.f32 %v6878, %v7169
  %7171 = vmatmul.bf16.gmra.mxu0 %v6824
  %v7172 = vpop.f32.mrf.mxu0
  %v7173 = vadd.f32 %v6878, %v7172
  %v7174 = vpop.f32.mrf.mxu0
  %v7175 = vadd.f32 %v6878, %v7174
  %7176 = vmatmul.bf16.gmra.mxu0 %v6825
  %v7177 = vpop.f32.mrf.mxu0
  %v7178 = vadd.f32 %v6878, %v7177
  %v7179 = vpop.f32.mrf.mxu0
  %v7180 = vadd.f32 %v6878, %v7179
  %7181 = vmatmul.bf16.gmra.mxu0 %v6826
  %v7182 = vpop.f32.mrf.mxu0
  %v7183 = vadd.f32 %v6878, %v7182
  %v7184 = vpop.f32.mrf.mxu0
  %v7185 = vadd.f32 %v6878, %v7184
  %7186 = vdwg.mxu0
  %7187 = vmatpush.bf16.msra.mxu0 %v7077
  %7188 = vmatpush.bf16.msra.mxu0 %v7071
  %7189 = vmatpush.bf16.msra.mxu0 %v7065
  %7190 = vmatpush.bf16.msra.mxu0 %v7059
  %7191 = vmatpush.bf16.msra.mxu0 %v7053
  %7192 = vmatpush.bf16.msra.mxu0 %v7047
  %7193 = vmatpush.bf16.msra.mxu0 %v7041
  %7194 = vmatpush.bf16.msra.mxu0 %v7035
  %7195 = vmatmul.bf16.gmra.mxu0 %v6823
  %v7196 = vpop.f32.mrf.mxu0
  %v7197 = vadd.f32 %v6879, %v7196
  %v7198 = vpop.f32.mrf.mxu0
  %v7199 = vadd.f32 %v6879, %v7198
  %7200 = vmatmul.bf16.gmra.mxu0 %v6824
  %v7201 = vpop.f32.mrf.mxu0
  %v7202 = vadd.f32 %v6879, %v7201
  %v7203 = vpop.f32.mrf.mxu0
  %v7204 = vadd.f32 %v6879, %v7203
  %7205 = vmatmul.bf16.gmra.mxu0 %v6825
  %v7206 = vpop.f32.mrf.mxu0
  %v7207 = vadd.f32 %v6879, %v7206
  %v7208 = vpop.f32.mrf.mxu0
  %v7209 = vadd.f32 %v6879, %v7208
  %7210 = vmatmul.bf16.gmra.mxu0 %v6826
  %v7211 = vpop.f32.mrf.mxu0
  %v7212 = vadd.f32 %v6879, %v7211
  %v7213 = vpop.f32.mrf.mxu0
  %v7214 = vadd.f32 %v6879, %v7213
  %7215 = vdwg.mxu0
  %7216 = vmatpush.bf16.msra.mxu0 %v7078
  %7217 = vmatpush.bf16.msra.mxu0 %v7072
  %7218 = vmatpush.bf16.msra.mxu0 %v7066
  %7219 = vmatpush.bf16.msra.mxu0 %v7060
  %7220 = vmatpush.bf16.msra.mxu0 %v7054
  %7221 = vmatpush.bf16.msra.mxu0 %v7048
  %7222 = vmatpush.bf16.msra.mxu0 %v7042
  %7223 = vmatpush.bf16.msra.mxu0 %v7036
  %7224 = vmatmul.bf16.gmra.mxu0 %v6823
  %v7225 = vpop.f32.mrf.mxu0
  %v7226 = vadd.f32 %v6880, %v7225
  %v7227 = vpop.f32.mrf.mxu0
  %v7228 = vadd.f32 %v6880, %v7227
  %7229 = vmatmul.bf16.gmra.mxu0 %v6824
  %v7230 = vpop.f32.mrf.mxu0
  %v7231 = vadd.f32 %v6880, %v7230
  %v7232 = vpop.f32.mrf.mxu0
  %v7233 = vadd.f32 %v6880, %v7232
  %7234 = vmatmul.bf16.gmra.mxu0 %v6825
  %v7235 = vpop.f32.mrf.mxu0
  %v7236 = vadd.f32 %v6880, %v7235
  %v7237 = vpop.f32.mrf.mxu0
  %v7238 = vadd.f32 %v6880, %v7237
  %7239 = vmatmul.bf16.gmra.mxu0 %v6826
  %v7240 = vpop.f32.mrf.mxu0
  %v7241 = vadd.f32 %v6880, %v7240
  %v7242 = vpop.f32.mrf.mxu0
  %v7243 = vadd.f32 %v6880, %v7242
  %7244 = vdwg.mxu0
  %7245 = vmatpush.bf16.msra.mxu0 %v7079
  %7246 = vmatpush.bf16.msra.mxu0 %v7073
  %7247 = vmatpush.bf16.msra.mxu0 %v7067
  %7248 = vmatpush.bf16.msra.mxu0 %v7061
  %7249 = vmatpush.bf16.msra.mxu0 %v7055
  %7250 = vmatpush.bf16.msra.mxu0 %v7049
  %7251 = vmatpush.bf16.msra.mxu0 %v7043
  %7252 = vmatpush.bf16.msra.mxu0 %v7037
  %7253 = vmatmul.bf16.gmra.mxu0 %v6823
  %v7254 = vpop.f32.mrf.mxu0
  %v7255 = vadd.f32 %v6881, %v7254
  %v7256 = vpop.f32.mrf.mxu0
  %v7257 = vadd.f32 %v6881, %v7256
  %7258 = vmatmul.bf16.gmra.mxu0 %v6824
  %v7259 = vpop.f32.mrf.mxu0
  %v7260 = vadd.f32 %v6881, %v7259
  %v7261 = vpop.f32.mrf.mxu0
  %v7262 = vadd.f32 %v6881, %v7261
  %7263 = vmatmul.bf16.gmra.mxu0 %v6825
  %v7264 = vpop.f32.mrf.mxu0
  %v7265 = vadd.f32 %v6881, %v7264
  %v7266 = vpop.f32.mrf.mxu0
  %v7267 = vadd.f32 %v6881, %v7266
  %7268 = vmatmul.bf16.gmra.mxu0 %v6826
  %v7269 = vpop.f32.mrf.mxu0
  %v7270 = vadd.f32 %v6881, %v7269
  %v7271 = vpop.f32.mrf.mxu0
  %v7272 = vadd.f32 %v6881, %v7271
  %7273 = vdwg.mxu0
  %7274 = vmatpush.bf16.msra.mxu0 %v7080
  %7275 = vmatpush.bf16.msra.mxu0 %v7074
  %7276 = vmatpush.bf16.msra.mxu0 %v7068
  %7277 = vmatpush.bf16.msra.mxu0 %v7062
  %7278 = vmatpush.bf16.msra.mxu0 %v7056
  %7279 = vmatpush.bf16.msra.mxu0 %v7050
  %7280 = vmatpush.bf16.msra.mxu0 %v7044
  %7281 = vmatpush.bf16.msra.mxu0 %v7038
  %7282 = vmatmul.bf16.gmra.mxu0 %v6823
  %v7283 = vpop.f32.mrf.mxu0
  %v7284 = vadd.f32 %v6882, %v7283
  %v7285 = vpop.f32.mrf.mxu0
  %v7286 = vadd.f32 %v6882, %v7285
  %7287 = vmatmul.bf16.gmra.mxu0 %v6824
  %v7288 = vpop.f32.mrf.mxu0
  %v7289 = vadd.f32 %v6882, %v7288
  %v7290 = vpop.f32.mrf.mxu0
  %v7291 = vadd.f32 %v6882, %v7290
  %7292 = vmatmul.bf16.gmra.mxu0 %v6825
  %v7293 = vpop.f32.mrf.mxu0
  %v7294 = vadd.f32 %v6882, %v7293
  %v7295 = vpop.f32.mrf.mxu0
  %v7296 = vadd.f32 %v6882, %v7295
  %7297 = vmatmul.bf16.gmra.mxu0 %v6826
  %v7298 = vpop.f32.mrf.mxu0
  %v7299 = vadd.f32 %v6882, %v7298
  %v7300 = vpop.f32.mrf.mxu0
  %v7301 = vadd.f32 %v6882, %v7300
  %7302 = vdwg.mxu0
  %v7303 = vpack.c.bf16 %v7139, %v7139
  %v7304 = vpack.c.bf16 %v7141, %v7141
  %v7305 = vpack.c.bf16 %v7144, %v7144
  %v7306 = vpack.c.bf16 %v7146, %v7146
  %v7307 = vpack.c.bf16 %v7149, %v7149
  %v7308 = vpack.c.bf16 %v7151, %v7151
  %v7309 = vpack.c.bf16 %v7154, %v7154
  %v7310 = vpack.c.bf16 %v7156, %v7156
  %v7311 = vpack.c.bf16 %v7168, %v7168
  %v7312 = vpack.c.bf16 %v7170, %v7170
  %v7313 = vpack.c.bf16 %v7173, %v7173
  %v7314 = vpack.c.bf16 %v7175, %v7175
  %v7315 = vpack.c.bf16 %v7178, %v7178
  %v7316 = vpack.c.bf16 %v7180, %v7180
  %v7317 = vpack.c.bf16 %v7183, %v7183
  %v7318 = vpack.c.bf16 %v7185, %v7185
  %v7319 = vpack.c.bf16 %v7197, %v7197
  %v7320 = vpack.c.bf16 %v7199, %v7199
  %v7321 = vpack.c.bf16 %v7202, %v7202
  %v7322 = vpack.c.bf16 %v7204, %v7204
  %v7323 = vpack.c.bf16 %v7207, %v7207
  %v7324 = vpack.c.bf16 %v7209, %v7209
  %v7325 = vpack.c.bf16 %v7212, %v7212
  %v7326 = vpack.c.bf16 %v7214, %v7214
  %7327 = vmatpush.bf16.xpose.msra.mxu0 0
  %7328 = vmatpush.bf16.xpose.msra.mxu0 0
  %7329 = vmatpush.bf16.xpose.msra.mxu0 0
  %7330 = vmatpush.bf16.xpose.msra.mxu0 0
  %7331 = vmatpush.bf16.xpose.msra.mxu0 0
  %7332 = vmatpush.bf16.xpose.msra.mxu0 0
  %7333 = vmatpush.bf16.xpose.msra.mxu0 0
  %7334 = vmatpush.bf16.xpose.msra.mxu0 %v7311
  %7335 = vmatmul.bf16.gmra.mxu0 %v7303
  %v7336 = vpop.f32.mrf.mxu0
  %v7337 = vadd.f32 0.0, %v7336
  %v7338 = vpop.f32.mrf.mxu0
  %7339 = vdwg.mxu0
  %7340 = vmatpush.bf16.xpose.msra.mxu0 0
  %7341 = vmatpush.bf16.xpose.msra.mxu0 0
  %7342 = vmatpush.bf16.xpose.msra.mxu0 0
  %7343 = vmatpush.bf16.xpose.msra.mxu0 0
  %7344 = vmatpush.bf16.xpose.msra.mxu0 0
  %7345 = vmatpush.bf16.xpose.msra.mxu0 0
  %7346 = vmatpush.bf16.xpose.msra.mxu0 0
  %7347 = vmatpush.bf16.xpose.msra.mxu0 %v7312
  %7348 = vmatmul.bf16.gmra.mxu0 %v7304
  %v7349 = vpop.f32.mrf.mxu0
  %v7350 = vadd.f32 0.0, %v7349
  %v7351 = vpop.f32.mrf.mxu0
  %7352 = vdwg.mxu0
  %7353 = vmatpush.bf16.xpose.msra.mxu0 0
  %7354 = vmatpush.bf16.xpose.msra.mxu0 0
  %7355 = vmatpush.bf16.xpose.msra.mxu0 0
  %7356 = vmatpush.bf16.xpose.msra.mxu0 0
  %7357 = vmatpush.bf16.xpose.msra.mxu0 0
  %7358 = vmatpush.bf16.xpose.msra.mxu0 0
  %7359 = vmatpush.bf16.xpose.msra.mxu0 0
  %7360 = vmatpush.bf16.xpose.msra.mxu0 %v7313
  %7361 = vmatmul.bf16.gmra.mxu0 %v7305
  %v7362 = vpop.f32.mrf.mxu0
  %v7363 = vadd.f32 0.0, %v7362
  %v7364 = vpop.f32.mrf.mxu0
  %7365 = vdwg.mxu0
  %7366 = vmatpush.bf16.xpose.msra.mxu0 0
  %7367 = vmatpush.bf16.xpose.msra.mxu0 0
  %7368 = vmatpush.bf16.xpose.msra.mxu0 0
  %7369 = vmatpush.bf16.xpose.msra.mxu0 0
  %7370 = vmatpush.bf16.xpose.msra.mxu0 0
  %7371 = vmatpush.bf16.xpose.msra.mxu0 0
  %7372 = vmatpush.bf16.xpose.msra.mxu0 0
  %7373 = vmatpush.bf16.xpose.msra.mxu0 %v7314
  %7374 = vmatmul.bf16.gmra.mxu0 %v7306
  %v7375 = vpop.f32.mrf.mxu0
  %v7376 = vadd.f32 0.0, %v7375
  %v7377 = vpop.f32.mrf.mxu0
  %7378 = vdwg.mxu0
  %7379 = vmatpush.bf16.xpose.msra.mxu0 0
  %7380 = vmatpush.bf16.xpose.msra.mxu0 0
  %7381 = vmatpush.bf16.xpose.msra.mxu0 0
  %7382 = vmatpush.bf16.xpose.msra.mxu0 0
  %7383 = vmatpush.bf16.xpose.msra.mxu0 0
  %7384 = vmatpush.bf16.xpose.msra.mxu0 0
  %7385 = vmatpush.bf16.xpose.msra.mxu0 0
  %7386 = vmatpush.bf16.xpose.msra.mxu0 %v7315
  %7387 = vmatmul.bf16.gmra.mxu0 %v7307
  %v7388 = vpop.f32.mrf.mxu0
  %v7389 = vadd.f32 0.0, %v7388
  %v7390 = vpop.f32.mrf.mxu0
  %7391 = vdwg.mxu0
  %7392 = vmatpush.bf16.xpose.msra.mxu0 0
  %7393 = vmatpush.bf16.xpose.msra.mxu0 0
  %7394 = vmatpush.bf16.xpose.msra.mxu0 0
  %7395 = vmatpush.bf16.xpose.msra.mxu0 0
  %7396 = vmatpush.bf16.xpose.msra.mxu0 0
  %7397 = vmatpush.bf16.xpose.msra.mxu0 0
  %7398 = vmatpush.bf16.xpose.msra.mxu0 0
  %7399 = vmatpush.bf16.xpose.msra.mxu0 %v7316
  %7400 = vmatmul.bf16.gmra.mxu0 %v7308
  %v7401 = vpop.f32.mrf.mxu0
  %v7402 = vadd.f32 0.0, %v7401
  %v7403 = vpop.f32.mrf.mxu0
  %7404 = vdwg.mxu0
  %7405 = vmatpush.bf16.xpose.msra.mxu0 0
  %7406 = vmatpush.bf16.xpose.msra.mxu0 0
  %7407 = vmatpush.bf16.xpose.msra.mxu0 0
  %7408 = vmatpush.bf16.xpose.msra.mxu0 0
  %7409 = vmatpush.bf16.xpose.msra.mxu0 0
  %7410 = vmatpush.bf16.xpose.msra.mxu0 0
  %7411 = vmatpush.bf16.xpose.msra.mxu0 0
  %7412 = vmatpush.bf16.xpose.msra.mxu0 %v7317
  %7413 = vmatmul.bf16.gmra.mxu0 %v7309
  %v7414 = vpop.f32.mrf.mxu0
  %v7415 = vadd.f32 0.0, %v7414
  %v7416 = vpop.f32.mrf.mxu0
  %7417 = vdwg.mxu0
  %7418 = vmatpush.bf16.xpose.msra.mxu0 0
  %7419 = vmatpush.bf16.xpose.msra.mxu0 0
  %7420 = vmatpush.bf16.xpose.msra.mxu0 0
  %7421 = vmatpush.bf16.xpose.msra.mxu0 0
  %7422 = vmatpush.bf16.xpose.msra.mxu0 0
  %7423 = vmatpush.bf16.xpose.msra.mxu0 0
  %7424 = vmatpush.bf16.xpose.msra.mxu0 0
  %7425 = vmatpush.bf16.xpose.msra.mxu0 %v7318
  %7426 = vmatmul.bf16.gmra.mxu0 %v7310
  %v7427 = vpop.f32.mrf.mxu0
  %v7428 = vadd.f32 0.0, %v7427
  %v7429 = vpop.f32.mrf.mxu0
  %7430 = vdwg.mxu0
  %v7431 = vmul.f32 %v7337, 0.17677669
  %v7432 = vmul.f32 %v7350, 0.17677669
  %v7433 = vmul.f32 %v7363, 0.17677669
  %v7434 = vmul.f32 %v7376, 0.17677669
  %v7435 = vmul.f32 %v7389, 0.17677669
  %v7436 = vmul.f32 %v7402, 0.17677669
  %v7437 = vmul.f32 %v7415, 0.17677669
  %v7438 = vmul.f32 %v7428, 0.17677669
  %v7439 = vperm.slane %v6814, 0
  %v7440 = vperm.slane %v6816, 0
  %v7441 = vperm.slane %v6817, 0
  %v7442 = vperm.slane %v6818, 0
  %v7443 = vperm.slane %v6819, 0
  %v7444 = vperm.slane %v6820, 0
  %v7445 = vperm.slane %v6821, 0
  %v7446 = vperm.slane %v6822, 0
  %v7455 = vadd.f32 %v7431, %v7439
  %v7456 = vadd.f32 %v7432, %v7440
  %v7457 = vadd.f32 %v7433, %v7441
  %v7458 = vadd.f32 %v7434, %v7442
  %v7459 = vadd.f32 %v7435, %v7443
  %v7460 = vadd.f32 %v7436, %v7444
  %v7461 = vadd.f32 %v7437, %v7445
  %v7462 = vadd.f32 %v7438, %v7446
  %vm7463 = vcmask 64512
  %v7464 = vsel %vm7463, %v7455, -inf
  %7465 = vmax.xlane.f32.xlu0 %v7464
  %v7466 = vpop.xlane.xlu0 %7465
  %v7467 = vsel %vm7463, %v7456, -inf
  %7468 = vmax.xlane.f32.xlu0 %v7467
  %v7469 = vpop.xlane.xlu0 %7468
  %v7470 = vsel %vm7463, %v7457, -inf
  %7471 = vmax.xlane.f32.xlu0 %v7470
  %v7472 = vpop.xlane.xlu0 %7471
  %v7473 = vsel %vm7463, %v7458, -inf
  %7474 = vmax.xlane.f32.xlu0 %v7473
  %v7475 = vpop.xlane.xlu0 %7474
  %v7476 = vsel %vm7463, %v7459, -inf
  %7477 = vmax.xlane.f32.xlu0 %v7476
  %v7478 = vpop.xlane.xlu0 %7477
  %v7479 = vsel %vm7463, %v7460, -inf
  %7480 = vmax.xlane.f32.xlu0 %v7479
  %v7481 = vpop.xlane.xlu0 %7480
  %v7482 = vsel %vm7463, %v7461, -inf
  %7483 = vmax.xlane.f32.xlu0 %v7482
  %v7484 = vpop.xlane.xlu0 %7483
  %v7485 = vsel %vm7463, %v7462, -inf
  %7486 = vmax.xlane.f32.xlu0 %v7485
  %v7487 = vpop.xlane.xlu0 %7486
  %v7488 = vsub.f32 %v7455, %v7466
  %v7489 = vsub.f32 %v7456, %v7469
  %v7490 = vsub.f32 %v7457, %v7472
  %v7491 = vsub.f32 %v7458, %v7475
  %v7492 = vsub.f32 %v7459, %v7478
  %v7493 = vsub.f32 %v7460, %v7481
  %v7494 = vsub.f32 %v7461, %v7484
  %v7495 = vsub.f32 %v7462, %v7487
  %v7496 = vmul.f32 %v7488, 1.442695
  %v7497 = vpow.pop %v7496
  %v7498 = vmul.f32 %v7489, 1.442695
  %v7499 = vpow.pop %v7498
  %v7500 = vmul.f32 %v7490, 1.442695
  %v7501 = vpow.pop %v7500
  %v7502 = vmul.f32 %v7491, 1.442695
  %v7503 = vpow.pop %v7502
  %v7504 = vmul.f32 %v7492, 1.442695
  %v7505 = vpow.pop %v7504
  %v7506 = vmul.f32 %v7493, 1.442695
  %v7507 = vpow.pop %v7506
  %v7508 = vmul.f32 %v7494, 1.442695
  %v7509 = vpow.pop %v7508
  %v7510 = vmul.f32 %v7495, 1.442695
  %v7511 = vpow.pop %v7510
  %v7512 = vsel %vm7463, %v7497, 0.0
  %7513 = vadd.xlane.f32.xlu0 %v7512
  %v7514 = vpop.xlane.xlu0 %7513
  %v7515 = vsel %vm7463, %v7499, 0.0
  %7516 = vadd.xlane.f32.xlu0 %v7515
  %v7517 = vpop.xlane.xlu0 %7516
  %v7518 = vsel %vm7463, %v7501, 0.0
  %7519 = vadd.xlane.f32.xlu0 %v7518
  %v7520 = vpop.xlane.xlu0 %7519
  %v7521 = vsel %vm7463, %v7503, 0.0
  %7522 = vadd.xlane.f32.xlu0 %v7521
  %v7523 = vpop.xlane.xlu0 %7522
  %v7524 = vsel %vm7463, %v7505, 0.0
  %7525 = vadd.xlane.f32.xlu0 %v7524
  %v7526 = vpop.xlane.xlu0 %7525
  %v7527 = vsel %vm7463, %v7507, 0.0
  %7528 = vadd.xlane.f32.xlu0 %v7527
  %v7529 = vpop.xlane.xlu0 %7528
  %v7530 = vsel %vm7463, %v7509, 0.0
  %7531 = vadd.xlane.f32.xlu0 %v7530
  %v7532 = vpop.xlane.xlu0 %7531
  %v7533 = vsel %vm7463, %v7511, 0.0
  %7534 = vadd.xlane.f32.xlu0 %v7533
  %v7535 = vpop.xlane.xlu0 %7534
  %v7536 = vrcp.pop %v7514
  %v7537 = vrcp.pop %v7517
  %v7538 = vrcp.pop %v7520
  %v7539 = vrcp.pop %v7523
  %v7540 = vrcp.pop %v7526
  %v7541 = vrcp.pop %v7529
  %v7542 = vrcp.pop %v7532
  %v7543 = vrcp.pop %v7535
  %v7544 = vmul.f32 %v7497, %v7536
  %v7545 = vmul.f32 %v7499, %v7537
  %v7546 = vmul.f32 %v7501, %v7538
  %v7547 = vmul.f32 %v7503, %v7539
  %v7548 = vmul.f32 %v7505, %v7540
  %v7549 = vmul.f32 %v7507, %v7541
  %v7550 = vmul.f32 %v7509, %v7542
  %v7551 = vmul.f32 %v7511, %v7543
  %v7552 = vpack.c.bf16 %v7544, %v7544
  %v7553 = vpack.c.bf16 %v7545, %v7545
  %v7554 = vpack.c.bf16 %v7546, %v7546
  %v7555 = vpack.c.bf16 %v7547, %v7547
  %v7556 = vpack.c.bf16 %v7548, %v7548
  %v7557 = vpack.c.bf16 %v7549, %v7549
  %v7558 = vpack.c.bf16 %v7550, %v7550
  %v7559 = vpack.c.bf16 %v7551, %v7551
  %v7561 = vsel %vm7463, %v7552, 0
  %vm7563 = vcmask 1043456
  %v7565 = vsel %vm7563, %v7319, 0
  %7567 = vmatpush.bf16.msra.mxu0 0
  %7568 = vmatpush.bf16.msra.mxu0 0
  %7569 = vmatpush.bf16.msra.mxu0 0
  %7570 = vmatpush.bf16.msra.mxu0 0
  %7571 = vmatpush.bf16.msra.mxu0 0
  %7572 = vmatpush.bf16.msra.mxu0 0
  %7573 = vmatpush.bf16.msra.mxu0 0
  %7574 = vmatpush.bf16.msra.mxu0 %v7565
  %7575 = vmatmul.bf16.gmra.mxu0 %v7561
  %v7576 = vpop.f32.mrf.mxu0
  %v7577 = vadd.f32 0.0, %v7576
  %v7578 = vpop.f32.mrf.mxu0
  %7579 = vdwg.mxu0
  %v7581 = vsel %vm7463, %v7553, 0
  %v7584 = vsel %vm7563, %v7320, 0
  %7586 = vmatpush.bf16.msra.mxu0 0
  %7587 = vmatpush.bf16.msra.mxu0 0
  %7588 = vmatpush.bf16.msra.mxu0 0
  %7589 = vmatpush.bf16.msra.mxu0 0
  %7590 = vmatpush.bf16.msra.mxu0 0
  %7591 = vmatpush.bf16.msra.mxu0 0
  %7592 = vmatpush.bf16.msra.mxu0 0
  %7593 = vmatpush.bf16.msra.mxu0 %v7584
  %7594 = vmatmul.bf16.gmra.mxu0 %v7581
  %v7595 = vpop.f32.mrf.mxu0
  %v7596 = vadd.f32 0.0, %v7595
  %v7597 = vpop.f32.mrf.mxu0
  %7598 = vdwg.mxu0
  %v7600 = vsel %vm7463, %v7554, 0
  %v7603 = vsel %vm7563, %v7321, 0
  %7605 = vmatpush.bf16.msra.mxu0 0
  %7606 = vmatpush.bf16.msra.mxu0 0
  %7607 = vmatpush.bf16.msra.mxu0 0
  %7608 = vmatpush.bf16.msra.mxu0 0
  %7609 = vmatpush.bf16.msra.mxu0 0
  %7610 = vmatpush.bf16.msra.mxu0 0
  %7611 = vmatpush.bf16.msra.mxu0 0
  %7612 = vmatpush.bf16.msra.mxu0 %v7603
  %7613 = vmatmul.bf16.gmra.mxu0 %v7600
  %v7614 = vpop.f32.mrf.mxu0
  %v7615 = vadd.f32 0.0, %v7614
  %v7616 = vpop.f32.mrf.mxu0
  %7617 = vdwg.mxu0
  %v7619 = vsel %vm7463, %v7555, 0
  %v7622 = vsel %vm7563, %v7322, 0
  %7624 = vmatpush.bf16.msra.mxu0 0
  %7625 = vmatpush.bf16.msra.mxu0 0
  %7626 = vmatpush.bf16.msra.mxu0 0
  %7627 = vmatpush.bf16.msra.mxu0 0
  %7628 = vmatpush.bf16.msra.mxu0 0
  %7629 = vmatpush.bf16.msra.mxu0 0
  %7630 = vmatpush.bf16.msra.mxu0 0
  %7631 = vmatpush.bf16.msra.mxu0 %v7622
  %7632 = vmatmul.bf16.gmra.mxu0 %v7619
  %v7633 = vpop.f32.mrf.mxu0
  %v7634 = vadd.f32 0.0, %v7633
  %v7635 = vpop.f32.mrf.mxu0
  %7636 = vdwg.mxu0
  %v7638 = vsel %vm7463, %v7556, 0
  %v7641 = vsel %vm7563, %v7323, 0
  %7643 = vmatpush.bf16.msra.mxu0 0
  %7644 = vmatpush.bf16.msra.mxu0 0
  %7645 = vmatpush.bf16.msra.mxu0 0
  %7646 = vmatpush.bf16.msra.mxu0 0
  %7647 = vmatpush.bf16.msra.mxu0 0
  %7648 = vmatpush.bf16.msra.mxu0 0
  %7649 = vmatpush.bf16.msra.mxu0 0
  %7650 = vmatpush.bf16.msra.mxu0 %v7641
  %7651 = vmatmul.bf16.gmra.mxu0 %v7638
  %v7652 = vpop.f32.mrf.mxu0
  %v7653 = vadd.f32 0.0, %v7652
  %v7654 = vpop.f32.mrf.mxu0
  %7655 = vdwg.mxu0
  %v7657 = vsel %vm7463, %v7557, 0
  %v7660 = vsel %vm7563, %v7324, 0
  %7662 = vmatpush.bf16.msra.mxu0 0
  %7663 = vmatpush.bf16.msra.mxu0 0
  %7664 = vmatpush.bf16.msra.mxu0 0
  %7665 = vmatpush.bf16.msra.mxu0 0
  %7666 = vmatpush.bf16.msra.mxu0 0
  %7667 = vmatpush.bf16.msra.mxu0 0
  %7668 = vmatpush.bf16.msra.mxu0 0
  %7669 = vmatpush.bf16.msra.mxu0 %v7660
  %7670 = vmatmul.bf16.gmra.mxu0 %v7657
  %v7671 = vpop.f32.mrf.mxu0
  %v7672 = vadd.f32 0.0, %v7671
  %v7673 = vpop.f32.mrf.mxu0
  %7674 = vdwg.mxu0
  %v7676 = vsel %vm7463, %v7558, 0
  %v7679 = vsel %vm7563, %v7325, 0
  %7681 = vmatpush.bf16.msra.mxu0 0
  %7682 = vmatpush.bf16.msra.mxu0 0
  %7683 = vmatpush.bf16.msra.mxu0 0
  %7684 = vmatpush.bf16.msra.mxu0 0
  %7685 = vmatpush.bf16.msra.mxu0 0
  %7686 = vmatpush.bf16.msra.mxu0 0
  %7687 = vmatpush.bf16.msra.mxu0 0
  %7688 = vmatpush.bf16.msra.mxu0 %v7679
  %7689 = vmatmul.bf16.gmra.mxu0 %v7676
  %v7690 = vpop.f32.mrf.mxu0
  %v7691 = vadd.f32 0.0, %v7690
  %v7692 = vpop.f32.mrf.mxu0
  %7693 = vdwg.mxu0
  %v7695 = vsel %vm7463, %v7559, 0
  %v7698 = vsel %vm7563, %v7326, 0
  %7700 = vmatpush.bf16.msra.mxu0 0
  %7701 = vmatpush.bf16.msra.mxu0 0
  %7702 = vmatpush.bf16.msra.mxu0 0
  %7703 = vmatpush.bf16.msra.mxu0 0
  %7704 = vmatpush.bf16.msra.mxu0 0
  %7705 = vmatpush.bf16.msra.mxu0 0
  %7706 = vmatpush.bf16.msra.mxu0 0
  %7707 = vmatpush.bf16.msra.mxu0 %v7698
  %7708 = vmatmul.bf16.gmra.mxu0 %v7695
  %v7709 = vpop.f32.mrf.mxu0
  %v7710 = vadd.f32 0.0, %v7709
  %v7711 = vpop.f32.mrf.mxu0
  %7712 = vdwg.mxu0
  %v7713 = vpack.c.bf16 %v7596, %v7577
  %v7714 = vpack.c.bf16 %v7634, %v7615
  %v7715 = vpack.c.bf16 %v7672, %v7653
  %v7716 = vpack.c.bf16 %v7710, %v7691
  %v7717 = vld [vmem:[%s10] sm:$0xf]
  %v7718 = vld [vmem:[%s10 + $0x4] sm:$0xf]
  %v7719 = vld [vmem:[%s10 + $0x8] sm:$0xf]
  %v7720 = vld [vmem:[%s10 + $0xc] sm:$0xf]
  %v7721 = vld [vmem:[%s10 + $0x10] sm:$0xf]
  %v7722 = vld [vmem:[%s10 + $0x14] sm:$0xf]
  %v7723 = vld [vmem:[%s10 + $0x18] sm:$0xf]
  %v7724 = vld [vmem:[%s10 + $0x1c] sm:$0xf]
  %v7725 = vld [vmem:[%s10 + $0x20] sm:$0xf]
  %v7726 = vld [vmem:[%s10 + $0x24] sm:$0xf]
  %v7727 = vld [vmem:[%s10 + $0x28] sm:$0xf]
  %v7728 = vld [vmem:[%s10 + $0x2c] sm:$0xf]
  %v7729 = vld [vmem:[%s10 + $0x30] sm:$0xf]
  %v7730 = vld [vmem:[%s10 + $0x34] sm:$0xf]
  %v7731 = vld [vmem:[%s10 + $0x38] sm:$0xf]
  %v7732 = vld [vmem:[%s10 + $0x3c] sm:$0xf]
  %v7733 = vpack.c.bf16 %v7226, %v7226
  %v7734 = vpack.c.bf16 %v7228, %v7228
  %v7735 = vpack.c.bf16 %v7231, %v7231
  %v7736 = vpack.c.bf16 %v7233, %v7233
  %v7737 = vpack.c.bf16 %v7236, %v7236
  %v7738 = vpack.c.bf16 %v7238, %v7238
  %v7739 = vpack.c.bf16 %v7241, %v7241
  %v7740 = vpack.c.bf16 %v7243, %v7243
  %v7741 = vpack.c.bf16 %v7255, %v7255
  %v7742 = vpack.c.bf16 %v7257, %v7257
  %v7743 = vpack.c.bf16 %v7260, %v7260
  %v7744 = vpack.c.bf16 %v7262, %v7262
  %v7745 = vpack.c.bf16 %v7265, %v7265
  %v7746 = vpack.c.bf16 %v7267, %v7267
  %v7747 = vpack.c.bf16 %v7270, %v7270
  %v7748 = vpack.c.bf16 %v7272, %v7272
  %v7749 = vpack.c.bf16 %v7284, %v7284
  %v7750 = vpack.c.bf16 %v7286, %v7286
  %v7751 = vpack.c.bf16 %v7289, %v7289
  %v7752 = vpack.c.bf16 %v7291, %v7291
  %v7753 = vpack.c.bf16 %v7294, %v7294
  %v7754 = vpack.c.bf16 %v7296, %v7296
  %v7755 = vpack.c.bf16 %v7299, %v7299
  %v7756 = vpack.c.bf16 %v7301, %v7301
  %7757 = vmatpush.bf16.xpose.msra.mxu0 0
  %7758 = vmatpush.bf16.xpose.msra.mxu0 0
  %7759 = vmatpush.bf16.xpose.msra.mxu0 0
  %7760 = vmatpush.bf16.xpose.msra.mxu0 0
  %7761 = vmatpush.bf16.xpose.msra.mxu0 0
  %7762 = vmatpush.bf16.xpose.msra.mxu0 0
  %7763 = vmatpush.bf16.xpose.msra.mxu0 0
  %7764 = vmatpush.bf16.xpose.msra.mxu0 %v7741
  %7765 = vmatmul.bf16.gmra.mxu0 %v7733
  %v7766 = vpop.f32.mrf.mxu0
  %v7767 = vadd.f32 0.0, %v7766
  %v7768 = vpop.f32.mrf.mxu0
  %7769 = vdwg.mxu0
  %7770 = vmatpush.bf16.xpose.msra.mxu0 0
  %7771 = vmatpush.bf16.xpose.msra.mxu0 0
  %7772 = vmatpush.bf16.xpose.msra.mxu0 0
  %7773 = vmatpush.bf16.xpose.msra.mxu0 0
  %7774 = vmatpush.bf16.xpose.msra.mxu0 0
  %7775 = vmatpush.bf16.xpose.msra.mxu0 0
  %7776 = vmatpush.bf16.xpose.msra.mxu0 0
  %7777 = vmatpush.bf16.xpose.msra.mxu0 %v7742
  %7778 = vmatmul.bf16.gmra.mxu0 %v7734
  %v7779 = vpop.f32.mrf.mxu0
  %v7780 = vadd.f32 0.0, %v7779
  %v7781 = vpop.f32.mrf.mxu0
  %7782 = vdwg.mxu0
  %7783 = vmatpush.bf16.xpose.msra.mxu0 0
  %7784 = vmatpush.bf16.xpose.msra.mxu0 0
  %7785 = vmatpush.bf16.xpose.msra.mxu0 0
  %7786 = vmatpush.bf16.xpose.msra.mxu0 0
  %7787 = vmatpush.bf16.xpose.msra.mxu0 0
  %7788 = vmatpush.bf16.xpose.msra.mxu0 0
  %7789 = vmatpush.bf16.xpose.msra.mxu0 0
  %7790 = vmatpush.bf16.xpose.msra.mxu0 %v7743
  %7791 = vmatmul.bf16.gmra.mxu0 %v7735
  %v7792 = vpop.f32.mrf.mxu0
  %v7793 = vadd.f32 0.0, %v7792
  %v7794 = vpop.f32.mrf.mxu0
  %7795 = vdwg.mxu0
  %7796 = vmatpush.bf16.xpose.msra.mxu0 0
  %7797 = vmatpush.bf16.xpose.msra.mxu0 0
  %7798 = vmatpush.bf16.xpose.msra.mxu0 0
  %7799 = vmatpush.bf16.xpose.msra.mxu0 0
  %7800 = vmatpush.bf16.xpose.msra.mxu0 0
  %7801 = vmatpush.bf16.xpose.msra.mxu0 0
  %7802 = vmatpush.bf16.xpose.msra.mxu0 0
  %7803 = vmatpush.bf16.xpose.msra.mxu0 %v7744
  %7804 = vmatmul.bf16.gmra.mxu0 %v7736
  %v7805 = vpop.f32.mrf.mxu0
  %v7806 = vadd.f32 0.0, %v7805
  %v7807 = vpop.f32.mrf.mxu0
  %7808 = vdwg.mxu0
  %7809 = vmatpush.bf16.xpose.msra.mxu0 0
  %7810 = vmatpush.bf16.xpose.msra.mxu0 0
  %7811 = vmatpush.bf16.xpose.msra.mxu0 0
  %7812 = vmatpush.bf16.xpose.msra.mxu0 0
  %7813 = vmatpush.bf16.xpose.msra.mxu0 0
  %7814 = vmatpush.bf16.xpose.msra.mxu0 0
  %7815 = vmatpush.bf16.xpose.msra.mxu0 0
  %7816 = vmatpush.bf16.xpose.msra.mxu0 %v7745
  %7817 = vmatmul.bf16.gmra.mxu0 %v7737
  %v7818 = vpop.f32.mrf.mxu0
  %v7819 = vadd.f32 0.0, %v7818
  %v7820 = vpop.f32.mrf.mxu0
  %7821 = vdwg.mxu0
  %7822 = vmatpush.bf16.xpose.msra.mxu0 0
  %7823 = vmatpush.bf16.xpose.msra.mxu0 0
  %7824 = vmatpush.bf16.xpose.msra.mxu0 0
  %7825 = vmatpush.bf16.xpose.msra.mxu0 0
  %7826 = vmatpush.bf16.xpose.msra.mxu0 0
  %7827 = vmatpush.bf16.xpose.msra.mxu0 0
  %7828 = vmatpush.bf16.xpose.msra.mxu0 0
  %7829 = vmatpush.bf16.xpose.msra.mxu0 %v7746
  %7830 = vmatmul.bf16.gmra.mxu0 %v7738
  %v7831 = vpop.f32.mrf.mxu0
  %v7832 = vadd.f32 0.0, %v7831
  %v7833 = vpop.f32.mrf.mxu0
  %7834 = vdwg.mxu0
  %7835 = vmatpush.bf16.xpose.msra.mxu0 0
  %7836 = vmatpush.bf16.xpose.msra.mxu0 0
  %7837 = vmatpush.bf16.xpose.msra.mxu0 0
  %7838 = vmatpush.bf16.xpose.msra.mxu0 0
  %7839 = vmatpush.bf16.xpose.msra.mxu0 0
  %7840 = vmatpush.bf16.xpose.msra.mxu0 0
  %7841 = vmatpush.bf16.xpose.msra.mxu0 0
  %7842 = vmatpush.bf16.xpose.msra.mxu0 %v7747
  %7843 = vmatmul.bf16.gmra.mxu0 %v7739
  %v7844 = vpop.f32.mrf.mxu0
  %v7845 = vadd.f32 0.0, %v7844
  %v7846 = vpop.f32.mrf.mxu0
  %7847 = vdwg.mxu0
  %7848 = vmatpush.bf16.xpose.msra.mxu0 0
  %7849 = vmatpush.bf16.xpose.msra.mxu0 0
  %7850 = vmatpush.bf16.xpose.msra.mxu0 0
  %7851 = vmatpush.bf16.xpose.msra.mxu0 0
  %7852 = vmatpush.bf16.xpose.msra.mxu0 0
  %7853 = vmatpush.bf16.xpose.msra.mxu0 0
  %7854 = vmatpush.bf16.xpose.msra.mxu0 0
  %7855 = vmatpush.bf16.xpose.msra.mxu0 %v7748
  %7856 = vmatmul.bf16.gmra.mxu0 %v7740
  %v7857 = vpop.f32.mrf.mxu0
  %v7858 = vadd.f32 0.0, %v7857
  %v7859 = vpop.f32.mrf.mxu0
  %7860 = vdwg.mxu0
  %v7861 = vmul.f32 %v7767, 0.17677669
  %v7862 = vmul.f32 %v7780, 0.17677669
  %v7863 = vmul.f32 %v7793, 0.17677669
  %v7864 = vmul.f32 %v7806, 0.17677669
  %v7865 = vmul.f32 %v7819, 0.17677669
  %v7866 = vmul.f32 %v7832, 0.17677669
  %v7867 = vmul.f32 %v7845, 0.17677669
  %v7868 = vmul.f32 %v7858, 0.17677669
  %v7869 = vadd.f32 %v7861, %v7439
  %v7870 = vadd.f32 %v7862, %v7440
  %v7871 = vadd.f32 %v7863, %v7441
  %v7872 = vadd.f32 %v7864, %v7442
  %v7873 = vadd.f32 %v7865, %v7443
  %v7874 = vadd.f32 %v7866, %v7444
  %v7875 = vadd.f32 %v7867, %v7445
  %v7876 = vadd.f32 %v7868, %v7446
  %v7877 = vsel %vm7463, %v7869, -inf
  %7878 = vmax.xlane.f32.xlu0 %v7877
  %v7879 = vpop.xlane.xlu0 %7878
  %v7880 = vsel %vm7463, %v7870, -inf
  %7881 = vmax.xlane.f32.xlu0 %v7880
  %v7882 = vpop.xlane.xlu0 %7881
  %v7883 = vsel %vm7463, %v7871, -inf
  %7884 = vmax.xlane.f32.xlu0 %v7883
  %v7885 = vpop.xlane.xlu0 %7884
  %v7886 = vsel %vm7463, %v7872, -inf
  %7887 = vmax.xlane.f32.xlu0 %v7886
  %v7888 = vpop.xlane.xlu0 %7887
  %v7889 = vsel %vm7463, %v7873, -inf
  %7890 = vmax.xlane.f32.xlu0 %v7889
  %v7891 = vpop.xlane.xlu0 %7890
  %v7892 = vsel %vm7463, %v7874, -inf
  %7893 = vmax.xlane.f32.xlu0 %v7892
  %v7894 = vpop.xlane.xlu0 %7893
  %v7895 = vsel %vm7463, %v7875, -inf
  %7896 = vmax.xlane.f32.xlu0 %v7895
  %v7897 = vpop.xlane.xlu0 %7896
  %v7898 = vsel %vm7463, %v7876, -inf
  %7899 = vmax.xlane.f32.xlu0 %v7898
  %v7900 = vpop.xlane.xlu0 %7899
  %v7901 = vsub.f32 %v7869, %v7879
  %v7902 = vsub.f32 %v7870, %v7882
  %v7903 = vsub.f32 %v7871, %v7885
  %v7904 = vsub.f32 %v7872, %v7888
  %v7905 = vsub.f32 %v7873, %v7891
  %v7906 = vsub.f32 %v7874, %v7894
  %v7907 = vsub.f32 %v7875, %v7897
  %v7908 = vsub.f32 %v7876, %v7900
  %v7909 = vmul.f32 %v7901, 1.442695
  %v7910 = vpow.pop %v7909
  %v7911 = vmul.f32 %v7902, 1.442695
  %v7912 = vpow.pop %v7911
  %v7913 = vmul.f32 %v7903, 1.442695
  %v7914 = vpow.pop %v7913
  %v7915 = vmul.f32 %v7904, 1.442695
  %v7916 = vpow.pop %v7915
  %v7917 = vmul.f32 %v7905, 1.442695
  %v7918 = vpow.pop %v7917
  %v7919 = vmul.f32 %v7906, 1.442695
  %v7920 = vpow.pop %v7919
  %v7921 = vmul.f32 %v7907, 1.442695
  %v7922 = vpow.pop %v7921
  %v7923 = vmul.f32 %v7908, 1.442695
  %v7924 = vpow.pop %v7923
  %v7925 = vsel %vm7463, %v7910, 0.0
  %7926 = vadd.xlane.f32.xlu0 %v7925
  %v7927 = vpop.xlane.xlu0 %7926
  %v7928 = vsel %vm7463, %v7912, 0.0
  %7929 = vadd.xlane.f32.xlu0 %v7928
  %v7930 = vpop.xlane.xlu0 %7929
  %v7931 = vsel %vm7463, %v7914, 0.0
  %7932 = vadd.xlane.f32.xlu0 %v7931
  %v7933 = vpop.xlane.xlu0 %7932
  %v7934 = vsel %vm7463, %v7916, 0.0
  %7935 = vadd.xlane.f32.xlu0 %v7934
  %v7936 = vpop.xlane.xlu0 %7935
  %v7937 = vsel %vm7463, %v7918, 0.0
  %7938 = vadd.xlane.f32.xlu0 %v7937
  %v7939 = vpop.xlane.xlu0 %7938
  %v7940 = vsel %vm7463, %v7920, 0.0
  %7941 = vadd.xlane.f32.xlu0 %v7940
  %v7942 = vpop.xlane.xlu0 %7941
  %v7943 = vsel %vm7463, %v7922, 0.0
  %7944 = vadd.xlane.f32.xlu0 %v7943
  %v7945 = vpop.xlane.xlu0 %7944
  %v7946 = vsel %vm7463, %v7924, 0.0
  %7947 = vadd.xlane.f32.xlu0 %v7946
  %v7948 = vpop.xlane.xlu0 %7947
  %v7949 = vrcp.pop %v7927
  %v7950 = vrcp.pop %v7930
  %v7951 = vrcp.pop %v7933
  %v7952 = vrcp.pop %v7936
  %v7953 = vrcp.pop %v7939
  %v7954 = vrcp.pop %v7942
  %v7955 = vrcp.pop %v7945
  %v7956 = vrcp.pop %v7948
  %v7957 = vmul.f32 %v7910, %v7949
  %v7958 = vmul.f32 %v7912, %v7950
  %v7959 = vmul.f32 %v7914, %v7951
  %v7960 = vmul.f32 %v7916, %v7952
  %v7961 = vmul.f32 %v7918, %v7953
  %v7962 = vmul.f32 %v7920, %v7954
  %v7963 = vmul.f32 %v7922, %v7955
  %v7964 = vmul.f32 %v7924, %v7956
  %v7965 = vpack.c.bf16 %v7957, %v7957
  %v7966 = vpack.c.bf16 %v7958, %v7958
  %v7967 = vpack.c.bf16 %v7959, %v7959
  %v7968 = vpack.c.bf16 %v7960, %v7960
  %v7969 = vpack.c.bf16 %v7961, %v7961
  %v7970 = vpack.c.bf16 %v7962, %v7962
  %v7971 = vpack.c.bf16 %v7963, %v7963
  %v7972 = vpack.c.bf16 %v7964, %v7964
  %v7974 = vsel %vm7463, %v7965, 0
  %v7977 = vsel %vm7563, %v7749, 0
  %7979 = vmatpush.bf16.msra.mxu0 0
  %7980 = vmatpush.bf16.msra.mxu0 0
  %7981 = vmatpush.bf16.msra.mxu0 0
  %7982 = vmatpush.bf16.msra.mxu0 0
  %7983 = vmatpush.bf16.msra.mxu0 0
  %7984 = vmatpush.bf16.msra.mxu0 0
  %7985 = vmatpush.bf16.msra.mxu0 0
  %7986 = vmatpush.bf16.msra.mxu0 %v7977
  %7987 = vmatmul.bf16.gmra.mxu0 %v7974
  %v7988 = vpop.f32.mrf.mxu0
  %v7989 = vadd.f32 0.0, %v7988
  %v7990 = vpop.f32.mrf.mxu0
  %7991 = vdwg.mxu0
  %v7993 = vsel %vm7463, %v7966, 0
  %v7996 = vsel %vm7563, %v7750, 0
  %7998 = vmatpush.bf16.msra.mxu0 0
  %7999 = vmatpush.bf16.msra.mxu0 0
  %8000 = vmatpush.bf16.msra.mxu0 0
  %8001 = vmatpush.bf16.msra.mxu0 0
  %8002 = vmatpush.bf16.msra.mxu0 0
  %8003 = vmatpush.bf16.msra.mxu0 0
  %8004 = vmatpush.bf16.msra.mxu0 0
  %8005 = vmatpush.bf16.msra.mxu0 %v7996
  %8006 = vmatmul.bf16.gmra.mxu0 %v7993
  %v8007 = vpop.f32.mrf.mxu0
  %v8008 = vadd.f32 0.0, %v8007
  %v8009 = vpop.f32.mrf.mxu0
  %8010 = vdwg.mxu0
  %v8012 = vsel %vm7463, %v7967, 0
  %v8015 = vsel %vm7563, %v7751, 0
  %8017 = vmatpush.bf16.msra.mxu0 0
  %8018 = vmatpush.bf16.msra.mxu0 0
  %8019 = vmatpush.bf16.msra.mxu0 0
  %8020 = vmatpush.bf16.msra.mxu0 0
  %8021 = vmatpush.bf16.msra.mxu0 0
  %8022 = vmatpush.bf16.msra.mxu0 0
  %8023 = vmatpush.bf16.msra.mxu0 0
  %8024 = vmatpush.bf16.msra.mxu0 %v8015
  %8025 = vmatmul.bf16.gmra.mxu0 %v8012
  %v8026 = vpop.f32.mrf.mxu0
  %v8027 = vadd.f32 0.0, %v8026
  %v8028 = vpop.f32.mrf.mxu0
  %8029 = vdwg.mxu0
  %v8031 = vsel %vm7463, %v7968, 0
  %v8034 = vsel %vm7563, %v7752, 0
  %8036 = vmatpush.bf16.msra.mxu0 0
  %8037 = vmatpush.bf16.msra.mxu0 0
  %8038 = vmatpush.bf16.msra.mxu0 0
  %8039 = vmatpush.bf16.msra.mxu0 0
  %8040 = vmatpush.bf16.msra.mxu0 0
  %8041 = vmatpush.bf16.msra.mxu0 0
  %8042 = vmatpush.bf16.msra.mxu0 0
  %8043 = vmatpush.bf16.msra.mxu0 %v8034
  %8044 = vmatmul.bf16.gmra.mxu0 %v8031
  %v8045 = vpop.f32.mrf.mxu0
  %v8046 = vadd.f32 0.0, %v8045
  %v8047 = vpop.f32.mrf.mxu0
  %8048 = vdwg.mxu0
  %v8050 = vsel %vm7463, %v7969, 0
  %v8053 = vsel %vm7563, %v7753, 0
  %8055 = vmatpush.bf16.msra.mxu0 0
  %8056 = vmatpush.bf16.msra.mxu0 0
  %8057 = vmatpush.bf16.msra.mxu0 0
  %8058 = vmatpush.bf16.msra.mxu0 0
  %8059 = vmatpush.bf16.msra.mxu0 0
  %8060 = vmatpush.bf16.msra.mxu0 0
  %8061 = vmatpush.bf16.msra.mxu0 0
  %8062 = vmatpush.bf16.msra.mxu0 %v8053
  %8063 = vmatmul.bf16.gmra.mxu0 %v8050
  %v8064 = vpop.f32.mrf.mxu0
  %v8065 = vadd.f32 0.0, %v8064
  %v8066 = vpop.f32.mrf.mxu0
  %8067 = vdwg.mxu0
  %v8069 = vsel %vm7463, %v7970, 0
  %v8072 = vsel %vm7563, %v7754, 0
  %8074 = vmatpush.bf16.msra.mxu0 0
  %8075 = vmatpush.bf16.msra.mxu0 0
  %8076 = vmatpush.bf16.msra.mxu0 0
  %8077 = vmatpush.bf16.msra.mxu0 0
  %8078 = vmatpush.bf16.msra.mxu0 0
  %8079 = vmatpush.bf16.msra.mxu0 0
  %8080 = vmatpush.bf16.msra.mxu0 0
  %8081 = vmatpush.bf16.msra.mxu0 %v8072
  %8082 = vmatmul.bf16.gmra.mxu0 %v8069
  %v8083 = vpop.f32.mrf.mxu0
  %v8084 = vadd.f32 0.0, %v8083
  %v8085 = vpop.f32.mrf.mxu0
  %8086 = vdwg.mxu0
  %v8088 = vsel %vm7463, %v7971, 0
  %v8091 = vsel %vm7563, %v7755, 0
  %8093 = vmatpush.bf16.msra.mxu0 0
  %8094 = vmatpush.bf16.msra.mxu0 0
  %8095 = vmatpush.bf16.msra.mxu0 0
  %8096 = vmatpush.bf16.msra.mxu0 0
  %8097 = vmatpush.bf16.msra.mxu0 0
  %8098 = vmatpush.bf16.msra.mxu0 0
  %8099 = vmatpush.bf16.msra.mxu0 0
  %8100 = vmatpush.bf16.msra.mxu0 %v8091
  %8101 = vmatmul.bf16.gmra.mxu0 %v8088
  %v8102 = vpop.f32.mrf.mxu0
  %v8103 = vadd.f32 0.0, %v8102
  %v8104 = vpop.f32.mrf.mxu0
  %8105 = vdwg.mxu0
  %v8107 = vsel %vm7463, %v7972, 0
  %v8110 = vsel %vm7563, %v7756, 0
  %8112 = vmatpush.bf16.msra.mxu0 0
  %8113 = vmatpush.bf16.msra.mxu0 0
  %8114 = vmatpush.bf16.msra.mxu0 0
  %8115 = vmatpush.bf16.msra.mxu0 0
  %8116 = vmatpush.bf16.msra.mxu0 0
  %8117 = vmatpush.bf16.msra.mxu0 0
  %8118 = vmatpush.bf16.msra.mxu0 0
  %8119 = vmatpush.bf16.msra.mxu0 %v8110
  %8120 = vmatmul.bf16.gmra.mxu0 %v8107
  %v8121 = vpop.f32.mrf.mxu0
  %v8122 = vadd.f32 0.0, %v8121
  %v8123 = vpop.f32.mrf.mxu0
  %8124 = vdwg.mxu0
  %v8125 = vpack.c.bf16 %v8008, %v7989
  %v8126 = vpack.c.bf16 %v8046, %v8027
  %v8127 = vpack.c.bf16 %v8084, %v8065
  %v8128 = vpack.c.bf16 %v8122, %v8103
  %s8129 = scalar_lea.vmem %s10, 64
  %v8130 = vld [vmem:[%s8129] sm:$0xf]
  %v8131 = vld [vmem:[%s8129 + $0x4] sm:$0xf]
  %v8132 = vld [vmem:[%s8129 + $0x8] sm:$0xf]
  %v8133 = vld [vmem:[%s8129 + $0xc] sm:$0xf]
  %v8134 = vld [vmem:[%s8129 + $0x10] sm:$0xf]
  %v8135 = vld [vmem:[%s8129 + $0x14] sm:$0xf]
  %v8136 = vld [vmem:[%s8129 + $0x18] sm:$0xf]
  %v8137 = vld [vmem:[%s8129 + $0x1c] sm:$0xf]
  %v8138 = vld [vmem:[%s8129 + $0x20] sm:$0xf]
  %v8139 = vld [vmem:[%s8129 + $0x24] sm:$0xf]
  %v8140 = vld [vmem:[%s8129 + $0x28] sm:$0xf]
  %v8141 = vld [vmem:[%s8129 + $0x2c] sm:$0xf]
  %v8142 = vld [vmem:[%s8129 + $0x30] sm:$0xf]
  %v8143 = vld [vmem:[%s8129 + $0x34] sm:$0xf]
  %v8144 = vld [vmem:[%s8129 + $0x38] sm:$0xf]
  %v8145 = vld [vmem:[%s8129 + $0x3c] sm:$0xf]
  %v8162 = vunpack.c.l.b16 %v8130
  %v8163 = vunpack.c.l.b16 %v8131
  %v8164 = vunpack.c.l.b16 %v8132
  %v8165 = vunpack.c.l.b16 %v8133
  %v8166 = vunpack.c.l.b16 %v8134
  %v8167 = vunpack.c.l.b16 %v8135
  %v8168 = vunpack.c.l.b16 %v8136
  %v8169 = vunpack.c.l.b16 %v8137
  %v8170 = vunpack.c.l.b16 %v8138
  %v8171 = vunpack.c.l.b16 %v8139
  %v8172 = vunpack.c.l.b16 %v8140
  %v8173 = vunpack.c.l.b16 %v8141
  %v8174 = vunpack.c.l.b16 %v8142
  %v8175 = vunpack.c.l.b16 %v8143
  %v8176 = vunpack.c.l.b16 %v8144
  %v8177 = vunpack.c.l.b16 %v8145
  %v8178 = vpack.c.b16 %v8163, %v8162
  %v8179 = vpack.c.b16 %v8165, %v8164
  %v8180 = vpack.c.b16 %v8167, %v8166
  %v8181 = vpack.c.b16 %v8169, %v8168
  %v8182 = vpack.c.b16 %v8171, %v8170
  %v8183 = vpack.c.b16 %v8173, %v8172
  %v8184 = vpack.c.b16 %v8175, %v8174
  %v8185 = vpack.c.b16 %v8177, %v8176
  %8194 = vmatpush.bf16.msra.mxu0 %v8185
  %8195 = vmatpush.bf16.msra.mxu0 %v8184
  %8196 = vmatpush.bf16.msra.mxu0 %v8183
  %8197 = vmatpush.bf16.msra.mxu0 %v8182
  %8198 = vmatpush.bf16.msra.mxu0 %v8181
  %8199 = vmatpush.bf16.msra.mxu0 %v8180
  %8200 = vmatpush.bf16.msra.mxu0 %v8179
  %8201 = vmatpush.bf16.msra.mxu0 %v8178
  %8202 = vmatmul.bf16.gmra.mxu0 %v8125
  %v8203 = vpop.f32.mrf.mxu0
  %v8204 = vadd.f32 0.0, %v8203
  %v8205 = vpop.f32.mrf.mxu0
  %v8206 = vadd.f32 0.0, %v8205
  %8207 = vmatmul.bf16.gmra.mxu0 %v8126
  %v8208 = vpop.f32.mrf.mxu0
  %v8209 = vadd.f32 0.0, %v8208
  %v8210 = vpop.f32.mrf.mxu0
  %v8211 = vadd.f32 0.0, %v8210
  %8212 = vmatmul.bf16.gmra.mxu0 %v8127
  %v8213 = vpop.f32.mrf.mxu0
  %v8214 = vadd.f32 0.0, %v8213
  %v8215 = vpop.f32.mrf.mxu0
  %v8216 = vadd.f32 0.0, %v8215
  %8217 = vmatmul.bf16.gmra.mxu0 %v8128
  %v8218 = vpop.f32.mrf.mxu0
  %v8219 = vadd.f32 0.0, %v8218
  %v8220 = vpop.f32.mrf.mxu0
  %v8221 = vadd.f32 0.0, %v8220
  %8222 = vdwg.mxu0
  %v8239 = vunpack.c.l.b16 %v7717
  %v8240 = vunpack.c.l.b16 %v7718
  %v8241 = vunpack.c.l.b16 %v7719
  %v8242 = vunpack.c.l.b16 %v7720
  %v8243 = vunpack.c.l.b16 %v7721
  %v8244 = vunpack.c.l.b16 %v7722
  %v8245 = vunpack.c.l.b16 %v7723
  %v8246 = vunpack.c.l.b16 %v7724
  %v8247 = vunpack.c.l.b16 %v7725
  %v8248 = vunpack.c.l.b16 %v7726
  %v8249 = vunpack.c.l.b16 %v7727
  %v8250 = vunpack.c.l.b16 %v7728
  %v8251 = vunpack.c.l.b16 %v7729
  %v8252 = vunpack.c.l.b16 %v7730
  %v8253 = vunpack.c.l.b16 %v7731
  %v8254 = vunpack.c.l.b16 %v7732
  %v8255 = vpack.c.b16 %v8240, %v8239
  %v8256 = vpack.c.b16 %v8242, %v8241
  %v8257 = vpack.c.b16 %v8244, %v8243
  %v8258 = vpack.c.b16 %v8246, %v8245
  %v8259 = vpack.c.b16 %v8248, %v8247
  %v8260 = vpack.c.b16 %v8250, %v8249
  %v8261 = vpack.c.b16 %v8252, %v8251
  %v8262 = vpack.c.b16 %v8254, %v8253
  %8271 = vmatpush.bf16.msra.mxu0 %v8262
  %8272 = vmatpush.bf16.msra.mxu0 %v8261
  %8273 = vmatpush.bf16.msra.mxu0 %v8260
  %8274 = vmatpush.bf16.msra.mxu0 %v8259
  %8275 = vmatpush.bf16.msra.mxu0 %v8258
  %8276 = vmatpush.bf16.msra.mxu0 %v8257
  %8277 = vmatpush.bf16.msra.mxu0 %v8256
  %8278 = vmatpush.bf16.msra.mxu0 %v8255
  %8279 = vmatmul.bf16.gmra.mxu0 %v7713
  %v8280 = vpop.f32.mrf.mxu0
  %v8281 = vadd.f32 %v8204, %v8280
  %v8282 = vpop.f32.mrf.mxu0
  %v8283 = vadd.f32 %v8206, %v8282
  %8284 = vmatmul.bf16.gmra.mxu0 %v7714
  %v8285 = vpop.f32.mrf.mxu0
  %v8286 = vadd.f32 %v8209, %v8285
  %v8287 = vpop.f32.mrf.mxu0
  %v8288 = vadd.f32 %v8211, %v8287
  %8289 = vmatmul.bf16.gmra.mxu0 %v7715
  %v8290 = vpop.f32.mrf.mxu0
  %v8291 = vadd.f32 %v8214, %v8290
  %v8292 = vpop.f32.mrf.mxu0
  %v8293 = vadd.f32 %v8216, %v8292
  %8294 = vmatmul.bf16.gmra.mxu0 %v7716
  %v8295 = vpop.f32.mrf.mxu0
  %v8296 = vadd.f32 %v8219, %v8295
  %v8297 = vpop.f32.mrf.mxu0
  %v8298 = vadd.f32 %v8221, %v8297
  %8299 = vdwg.mxu0
  %s8300 = scalar_lea.vmem %s11, 4
  %v8301 = vld [vmem:[%s8300] sm:$0x1]
  %v8303 = vperm.slane %v8301, 0
  %v8305 = vadd.f32 %v8281, %v8303
  %v8306 = vadd.f32 %v8283, %v8303
  %v8307 = vadd.f32 %v8286, %v8303
  %v8308 = vadd.f32 %v8288, %v8303
  %v8309 = vadd.f32 %v8291, %v8303
  %v8310 = vadd.f32 %v8293, %v8303
  %v8311 = vadd.f32 %v8296, %v8303
  %v8312 = vadd.f32 %v8298, %v8303
  %v8313 = vadd.f32 %v8305, %v6804
  %v8314 = vadd.f32 %v8306, %v6805
  %v8315 = vadd.f32 %v8307, %v6806
  %v8316 = vadd.f32 %v8308, %v6807
  %v8317 = vadd.f32 %v8309, %v6808
  %v8318 = vadd.f32 %v8310, %v6809
  %v8319 = vadd.f32 %v8311, %v6810
  %v8320 = vadd.f32 %v8312, %v6811
  %s8321 = scalar_lea.vmem %s11, 5
  %v8322 = vld [vmem:[%s8321] sm:$0x1]
  %s8323 = scalar_lea.vmem %s11, 6
  %v8324 = vld [vmem:[%s8323] sm:$0x1]
  %v8325 = vmul.f32 %v8313, %v58
  %v8326 = vmul.f32 %v8314, %v58
  %v8327 = vmul.f32 %v8315, %v58
  %v8328 = vmul.f32 %v8316, %v58
  %v8329 = vmul.f32 %v8317, %v58
  %v8330 = vmul.f32 %v8318, %v58
  %v8331 = vmul.f32 %v8319, %v58
  %v8332 = vmul.f32 %v8320, %v58
  %8333 = vadd.xlane.f32.xlu0 %v8325
  %v8334 = vpop.xlane.xlu0 %8333
  %8335 = vadd.xlane.f32.xlu0 %v8326
  %v8336 = vpop.xlane.xlu0 %8335
  %8337 = vadd.xlane.f32.xlu0 %v8327
  %v8338 = vpop.xlane.xlu0 %8337
  %8339 = vadd.xlane.f32.xlu0 %v8328
  %v8340 = vpop.xlane.xlu0 %8339
  %8341 = vadd.xlane.f32.xlu0 %v8329
  %v8342 = vpop.xlane.xlu0 %8341
  %8343 = vadd.xlane.f32.xlu0 %v8330
  %v8344 = vpop.xlane.xlu0 %8343
  %8345 = vadd.xlane.f32.xlu0 %v8331
  %v8346 = vpop.xlane.xlu0 %8345
  %8347 = vadd.xlane.f32.xlu0 %v8332
  %v8348 = vpop.xlane.xlu0 %8347
  %v8349 = vmul.f32 %v8334, 0.015625
  %v8350 = vmul.f32 %v8336, 0.015625
  %v8351 = vmul.f32 %v8338, 0.015625
  %v8352 = vmul.f32 %v8340, 0.015625
  %v8353 = vmul.f32 %v8342, 0.015625
  %v8354 = vmul.f32 %v8344, 0.015625
  %v8355 = vmul.f32 %v8346, 0.015625
  %v8356 = vmul.f32 %v8348, 0.015625
  %v8357 = vsub.f32 %v8313, %v8349
  %v8358 = vsub.f32 %v8314, %v8350
  %v8359 = vsub.f32 %v8315, %v8351
  %v8360 = vsub.f32 %v8316, %v8352
  %v8361 = vsub.f32 %v8317, %v8353
  %v8362 = vsub.f32 %v8318, %v8354
  %v8363 = vsub.f32 %v8319, %v8355
  %v8364 = vsub.f32 %v8320, %v8356
  %v8365 = vmul.f32 %v8357, %v58
  %v8366 = vmul.f32 %v8358, %v58
  %v8367 = vmul.f32 %v8359, %v58
  %v8368 = vmul.f32 %v8360, %v58
  %v8369 = vmul.f32 %v8361, %v58
  %v8370 = vmul.f32 %v8362, %v58
  %v8371 = vmul.f32 %v8363, %v58
  %v8372 = vmul.f32 %v8364, %v58
  %v8373 = vmul.f32 %v8365, %v8365
  %v8374 = vmul.f32 %v8366, %v8366
  %v8375 = vmul.f32 %v8367, %v8367
  %v8376 = vmul.f32 %v8368, %v8368
  %v8377 = vmul.f32 %v8369, %v8369
  %v8378 = vmul.f32 %v8370, %v8370
  %v8379 = vmul.f32 %v8371, %v8371
  %v8380 = vmul.f32 %v8372, %v8372
  %8381 = vadd.xlane.f32.xlu0 %v8373
  %v8382 = vpop.xlane.xlu0 %8381
  %8383 = vadd.xlane.f32.xlu0 %v8374
  %v8384 = vpop.xlane.xlu0 %8383
  %8385 = vadd.xlane.f32.xlu0 %v8375
  %v8386 = vpop.xlane.xlu0 %8385
  %8387 = vadd.xlane.f32.xlu0 %v8376
  %v8388 = vpop.xlane.xlu0 %8387
  %8389 = vadd.xlane.f32.xlu0 %v8377
  %v8390 = vpop.xlane.xlu0 %8389
  %8391 = vadd.xlane.f32.xlu0 %v8378
  %v8392 = vpop.xlane.xlu0 %8391
  %8393 = vadd.xlane.f32.xlu0 %v8379
  %v8394 = vpop.xlane.xlu0 %8393
  %8395 = vadd.xlane.f32.xlu0 %v8380
  %v8396 = vpop.xlane.xlu0 %8395
  %v8397 = vmul.f32 %v8382, 0.015625
  %v8398 = vmul.f32 %v8384, 0.015625
  %v8399 = vmul.f32 %v8386, 0.015625
  %v8400 = vmul.f32 %v8388, 0.015625
  %v8401 = vmul.f32 %v8390, 0.015625
  %v8402 = vmul.f32 %v8392, 0.015625
  %v8403 = vmul.f32 %v8394, 0.015625
  %v8404 = vmul.f32 %v8396, 0.015625
  %v8405 = vadd.f32 %v8397, 1e-12
  %v8406 = vadd.f32 %v8398, 1e-12
  %v8407 = vadd.f32 %v8399, 1e-12
  %v8408 = vadd.f32 %v8400, 1e-12
  %v8409 = vadd.f32 %v8401, 1e-12
  %v8410 = vadd.f32 %v8402, 1e-12
  %v8411 = vadd.f32 %v8403, 1e-12
  %v8412 = vadd.f32 %v8404, 1e-12
  %v8413 = vrsqrt.pop %v8405
  %v8414 = vmul.f32 %v8413, %v8405
  %v8415 = vmul.f32 %v8414, %v8413
  %v8416 = vmul.f32 0.5, %v8415
  %v8417 = vsub.f32 1.5, %v8416
  %v8418 = vmul.f32 %v8413, %v8417
  %vm8419 = vweird.f32 %v8405
  %vm8420 = vweird.f32 %v8413
  %vm8421 = vmor %vm8419, %vm8420
  %v8422 = vsel %vm8421, %v8413, %v8418
  %v8423 = vrsqrt.pop %v8406
  %v8424 = vmul.f32 %v8423, %v8406
  %v8425 = vmul.f32 %v8424, %v8423
  %v8426 = vmul.f32 0.5, %v8425
  %v8427 = vsub.f32 1.5, %v8426
  %v8428 = vmul.f32 %v8423, %v8427
  %vm8429 = vweird.f32 %v8406
  %vm8430 = vweird.f32 %v8423
  %vm8431 = vmor %vm8429, %vm8430
  %v8432 = vsel %vm8431, %v8423, %v8428
  %v8433 = vrsqrt.pop %v8407
  %v8434 = vmul.f32 %v8433, %v8407
  %v8435 = vmul.f32 %v8434, %v8433
  %v8436 = vmul.f32 0.5, %v8435
  %v8437 = vsub.f32 1.5, %v8436
  %v8438 = vmul.f32 %v8433, %v8437
  %vm8439 = vweird.f32 %v8407
  %vm8440 = vweird.f32 %v8433
  %vm8441 = vmor %vm8439, %vm8440
  %v8442 = vsel %vm8441, %v8433, %v8438
  %v8443 = vrsqrt.pop %v8408
  %v8444 = vmul.f32 %v8443, %v8408
  %v8445 = vmul.f32 %v8444, %v8443
  %v8446 = vmul.f32 0.5, %v8445
  %v8447 = vsub.f32 1.5, %v8446
  %v8448 = vmul.f32 %v8443, %v8447
  %vm8449 = vweird.f32 %v8408
  %vm8450 = vweird.f32 %v8443
  %vm8451 = vmor %vm8449, %vm8450
  %v8452 = vsel %vm8451, %v8443, %v8448
  %v8453 = vrsqrt.pop %v8409
  %v8454 = vmul.f32 %v8453, %v8409
  %v8455 = vmul.f32 %v8454, %v8453
  %v8456 = vmul.f32 0.5, %v8455
  %v8457 = vsub.f32 1.5, %v8456
  %v8458 = vmul.f32 %v8453, %v8457
  %vm8459 = vweird.f32 %v8409
  %vm8460 = vweird.f32 %v8453
  %vm8461 = vmor %vm8459, %vm8460
  %v8462 = vsel %vm8461, %v8453, %v8458
  %v8463 = vrsqrt.pop %v8410
  %v8464 = vmul.f32 %v8463, %v8410
  %v8465 = vmul.f32 %v8464, %v8463
  %v8466 = vmul.f32 0.5, %v8465
  %v8467 = vsub.f32 1.5, %v8466
  %v8468 = vmul.f32 %v8463, %v8467
  %vm8469 = vweird.f32 %v8410
  %vm8470 = vweird.f32 %v8463
  %vm8471 = vmor %vm8469, %vm8470
  %v8472 = vsel %vm8471, %v8463, %v8468
  %v8473 = vrsqrt.pop %v8411
  %v8474 = vmul.f32 %v8473, %v8411
  %v8475 = vmul.f32 %v8474, %v8473
  %v8476 = vmul.f32 0.5, %v8475
  %v8477 = vsub.f32 1.5, %v8476
  %v8478 = vmul.f32 %v8473, %v8477
  %vm8479 = vweird.f32 %v8411
  %vm8480 = vweird.f32 %v8473
  %vm8481 = vmor %vm8479, %vm8480
  %v8482 = vsel %vm8481, %v8473, %v8478
  %v8483 = vrsqrt.pop %v8412
  %v8484 = vmul.f32 %v8483, %v8412
  %v8485 = vmul.f32 %v8484, %v8483
  %v8486 = vmul.f32 0.5, %v8485
  %v8487 = vsub.f32 1.5, %v8486
  %v8488 = vmul.f32 %v8483, %v8487
  %vm8489 = vweird.f32 %v8412
  %vm8490 = vweird.f32 %v8483
  %vm8491 = vmor %vm8489, %vm8490
  %v8492 = vsel %vm8491, %v8483, %v8488
  %v8493 = vmul.f32 %v8365, %v8422
  %v8494 = vmul.f32 %v8366, %v8432
  %v8495 = vmul.f32 %v8367, %v8442
  %v8496 = vmul.f32 %v8368, %v8452
  %v8497 = vmul.f32 %v8369, %v8462
  %v8498 = vmul.f32 %v8370, %v8472
  %v8499 = vmul.f32 %v8371, %v8482
  %v8500 = vmul.f32 %v8372, %v8492
  %v8502 = vperm.slane %v8322, 0
  %v8504 = vmul.f32 %v8493, %v8502
  %v8505 = vmul.f32 %v8494, %v8502
  %v8506 = vmul.f32 %v8495, %v8502
  %v8507 = vmul.f32 %v8496, %v8502
  %v8508 = vmul.f32 %v8497, %v8502
  %v8509 = vmul.f32 %v8498, %v8502
  %v8510 = vmul.f32 %v8499, %v8502
  %v8511 = vmul.f32 %v8500, %v8502
  %v8513 = vperm.slane %v8324, 0
  %v8515 = vadd.f32 %v8504, %v8513
  %v8516 = vadd.f32 %v8505, %v8513
  %v8517 = vadd.f32 %v8506, %v8513
  %v8518 = vadd.f32 %v8507, %v8513
  %v8519 = vadd.f32 %v8508, %v8513
  %v8520 = vadd.f32 %v8509, %v8513
  %v8521 = vadd.f32 %v8510, %v8513
  %v8522 = vadd.f32 %v8511, %v8513
  %v8523 = vpack.c.bf16 %v8516, %v8515
  %v8524 = vpack.c.bf16 %v8518, %v8517
  %v8525 = vpack.c.bf16 %v8520, %v8519
  %v8526 = vpack.c.bf16 %v8522, %v8521
  %s8527 = scalar_lea.vmem %s10, 128
  %v8528 = vld [vmem:[%s8527] sm:$0xf]
  %v8529 = vld [vmem:[%s8527 + $0x4] sm:$0xf]
  %v8530 = vld [vmem:[%s8527 + $0x8] sm:$0xf]
  %v8531 = vld [vmem:[%s8527 + $0xc] sm:$0xf]
  %v8532 = vld [vmem:[%s8527 + $0x10] sm:$0xf]
  %v8533 = vld [vmem:[%s8527 + $0x14] sm:$0xf]
  %v8534 = vld [vmem:[%s8527 + $0x18] sm:$0xf]
  %v8535 = vld [vmem:[%s8527 + $0x1c] sm:$0xf]
  %v8536 = vld [vmem:[%s8527 + $0x20] sm:$0xf]
  %v8537 = vld [vmem:[%s8527 + $0x24] sm:$0xf]
  %v8538 = vld [vmem:[%s8527 + $0x28] sm:$0xf]
  %v8539 = vld [vmem:[%s8527 + $0x2c] sm:$0xf]
  %v8540 = vld [vmem:[%s8527 + $0x30] sm:$0xf]
  %v8541 = vld [vmem:[%s8527 + $0x34] sm:$0xf]
  %v8542 = vld [vmem:[%s8527 + $0x38] sm:$0xf]
  %v8543 = vld [vmem:[%s8527 + $0x3c] sm:$0xf]
  %s8544 = scalar_lea.vmem %s11, 7
  %v8545 = vld [vmem:[%s8544] sm:$0x1]
  %v8547 = vperm.slane %v8545, 0
  %v8565 = vunpack.c.l.b16 %v8528
  %v8566 = vunpack.c.l.b16 %v8529
  %v8567 = vunpack.c.l.b16 %v8530
  %v8568 = vunpack.c.l.b16 %v8531
  %v8569 = vunpack.c.l.b16 %v8532
  %v8570 = vunpack.c.l.b16 %v8533
  %v8571 = vunpack.c.l.b16 %v8534
  %v8572 = vunpack.c.l.b16 %v8535
  %v8573 = vunpack.c.l.b16 %v8536
  %v8574 = vunpack.c.l.b16 %v8537
  %v8575 = vunpack.c.l.b16 %v8538
  %v8576 = vunpack.c.l.b16 %v8539
  %v8577 = vunpack.c.l.b16 %v8540
  %v8578 = vunpack.c.l.b16 %v8541
  %v8579 = vunpack.c.l.b16 %v8542
  %v8580 = vunpack.c.l.b16 %v8543
  %v8581 = vpack.c.b16 %v8566, %v8565
  %v8582 = vpack.c.b16 %v8568, %v8567
  %v8583 = vpack.c.b16 %v8570, %v8569
  %v8584 = vpack.c.b16 %v8572, %v8571
  %v8585 = vpack.c.b16 %v8574, %v8573
  %v8586 = vpack.c.b16 %v8576, %v8575
  %v8587 = vpack.c.b16 %v8578, %v8577
  %v8588 = vpack.c.b16 %v8580, %v8579
  %8597 = vmatpush.bf16.msra.mxu0 %v8588
  %8598 = vmatpush.bf16.msra.mxu0 %v8587
  %8599 = vmatpush.bf16.msra.mxu0 %v8586
  %8600 = vmatpush.bf16.msra.mxu0 %v8585
  %8601 = vmatpush.bf16.msra.mxu0 %v8584
  %8602 = vmatpush.bf16.msra.mxu0 %v8583
  %8603 = vmatpush.bf16.msra.mxu0 %v8582
  %8604 = vmatpush.bf16.msra.mxu0 %v8581
  %8605 = vmatmul.bf16.gmra.mxu0 %v8523
  %v8606 = vpop.f32.mrf.mxu0
  %v8607 = vadd.f32 %v8547, %v8606
  %v8608 = vpop.f32.mrf.mxu0
  %v8609 = vadd.f32 %v8547, %v8608
  %8610 = vmatmul.bf16.gmra.mxu0 %v8524
  %v8611 = vpop.f32.mrf.mxu0
  %v8612 = vadd.f32 %v8547, %v8611
  %v8613 = vpop.f32.mrf.mxu0
  %v8614 = vadd.f32 %v8547, %v8613
  %8615 = vmatmul.bf16.gmra.mxu0 %v8525
  %v8616 = vpop.f32.mrf.mxu0
  %v8617 = vadd.f32 %v8547, %v8616
  %v8618 = vpop.f32.mrf.mxu0
  %v8619 = vadd.f32 %v8547, %v8618
  %8620 = vmatmul.bf16.gmra.mxu0 %v8526
  %v8621 = vpop.f32.mrf.mxu0
  %v8622 = vadd.f32 %v8547, %v8621
  %v8623 = vpop.f32.mrf.mxu0
  %v8624 = vadd.f32 %v8547, %v8623
  %8625 = vdwg.mxu0
  %v8626 = vmul.f32 %v8607, %v8607
  %v8627 = vmul.f32 %v8609, %v8609
  %v8628 = vmul.f32 %v8612, %v8612
  %v8629 = vmul.f32 %v8614, %v8614
  %v8630 = vmul.f32 %v8617, %v8617
  %v8631 = vmul.f32 %v8619, %v8619
  %v8632 = vmul.f32 %v8622, %v8622
  %v8633 = vmul.f32 %v8624, %v8624
  %v8634 = vmul.f32 %v8607, %v8626
  %v8635 = vmul.f32 %v8609, %v8627
  %v8636 = vmul.f32 %v8612, %v8628
  %v8637 = vmul.f32 %v8614, %v8629
  %v8638 = vmul.f32 %v8617, %v8630
  %v8639 = vmul.f32 %v8619, %v8631
  %v8640 = vmul.f32 %v8622, %v8632
  %v8641 = vmul.f32 %v8624, %v8633
  %v8642 = vmul.f32 %v8634, 0.044715
  %v8643 = vmul.f32 %v8635, 0.044715
  %v8644 = vmul.f32 %v8636, 0.044715
  %v8645 = vmul.f32 %v8637, 0.044715
  %v8646 = vmul.f32 %v8638, 0.044715
  %v8647 = vmul.f32 %v8639, 0.044715
  %v8648 = vmul.f32 %v8640, 0.044715
  %v8649 = vmul.f32 %v8641, 0.044715
  %v8650 = vadd.f32 %v8607, %v8642
  %v8651 = vadd.f32 %v8609, %v8643
  %v8652 = vadd.f32 %v8612, %v8644
  %v8653 = vadd.f32 %v8614, %v8645
  %v8654 = vadd.f32 %v8617, %v8646
  %v8655 = vadd.f32 %v8619, %v8647
  %v8656 = vadd.f32 %v8622, %v8648
  %v8657 = vadd.f32 %v8624, %v8649
  %v8658 = vmul.f32 %v8650, 0.7978846
  %v8659 = vmul.f32 %v8651, 0.7978846
  %v8660 = vmul.f32 %v8652, 0.7978846
  %v8661 = vmul.f32 %v8653, 0.7978846
  %v8662 = vmul.f32 %v8654, 0.7978846
  %v8663 = vmul.f32 %v8655, 0.7978846
  %v8664 = vmul.f32 %v8656, 0.7978846
  %v8665 = vmul.f32 %v8657, 0.7978846
  %v8666 = vtanh.pop %v8658
  %v8667 = vtanh.pop %v8659
  %v8668 = vtanh.pop %v8660
  %v8669 = vtanh.pop %v8661
  %v8670 = vtanh.pop %v8662
  %v8671 = vtanh.pop %v8663
  %v8672 = vtanh.pop %v8664
  %v8673 = vtanh.pop %v8665
  %v8674 = vadd.f32 %v8666, 1.0
  %v8675 = vadd.f32 %v8667, 1.0
  %v8676 = vadd.f32 %v8668, 1.0
  %v8677 = vadd.f32 %v8669, 1.0
  %v8678 = vadd.f32 %v8670, 1.0
  %v8679 = vadd.f32 %v8671, 1.0
  %v8680 = vadd.f32 %v8672, 1.0
  %v8681 = vadd.f32 %v8673, 1.0
  %v8682 = vmul.f32 %v8674, 0.5
  %v8683 = vmul.f32 %v8675, 0.5
  %v8684 = vmul.f32 %v8676, 0.5
  %v8685 = vmul.f32 %v8677, 0.5
  %v8686 = vmul.f32 %v8678, 0.5
  %v8687 = vmul.f32 %v8679, 0.5
  %v8688 = vmul.f32 %v8680, 0.5
  %v8689 = vmul.f32 %v8681, 0.5
  %v8690 = vmul.f32 %v8607, %v8682
  %v8691 = vmul.f32 %v8609, %v8683
  %v8692 = vmul.f32 %v8612, %v8684
  %v8693 = vmul.f32 %v8614, %v8685
  %v8694 = vmul.f32 %v8617, %v8686
  %v8695 = vmul.f32 %v8619, %v8687
  %v8696 = vmul.f32 %v8622, %v8688
  %v8697 = vmul.f32 %v8624, %v8689
  %v8698 = vpack.c.bf16 %v8691, %v8690
  %v8699 = vpack.c.bf16 %v8693, %v8692
  %v8700 = vpack.c.bf16 %v8695, %v8694
  %v8701 = vpack.c.bf16 %v8697, %v8696
  %s8702 = scalar_lea.vmem %s10, 192
  %v8703 = vld [vmem:[%s8702] sm:$0xf]
  %v8704 = vld [vmem:[%s8702 + $0x4] sm:$0xf]
  %v8705 = vld [vmem:[%s8702 + $0x8] sm:$0xf]
  %v8706 = vld [vmem:[%s8702 + $0xc] sm:$0xf]
  %v8707 = vld [vmem:[%s8702 + $0x10] sm:$0xf]
  %v8708 = vld [vmem:[%s8702 + $0x14] sm:$0xf]
  %v8709 = vld [vmem:[%s8702 + $0x18] sm:$0xf]
  %v8710 = vld [vmem:[%s8702 + $0x1c] sm:$0xf]
  %v8711 = vld [vmem:[%s8702 + $0x20] sm:$0xf]
  %v8712 = vld [vmem:[%s8702 + $0x24] sm:$0xf]
  %v8713 = vld [vmem:[%s8702 + $0x28] sm:$0xf]
  %v8714 = vld [vmem:[%s8702 + $0x2c] sm:$0xf]
  %v8715 = vld [vmem:[%s8702 + $0x30] sm:$0xf]
  %v8716 = vld [vmem:[%s8702 + $0x34] sm:$0xf]
  %v8717 = vld [vmem:[%s8702 + $0x38] sm:$0xf]
  %v8718 = vld [vmem:[%s8702 + $0x3c] sm:$0xf]
  %s8719 = scalar_lea.vmem %s11, 8
  %v8720 = vld [vmem:[%s8719] sm:$0x1]
  %v8722 = vperm.slane %v8720, 0
  %v8740 = vunpack.c.l.b16 %v8703
  %v8741 = vunpack.c.l.b16 %v8704
  %v8742 = vunpack.c.l.b16 %v8705
  %v8743 = vunpack.c.l.b16 %v8706
  %v8744 = vunpack.c.l.b16 %v8707
  %v8745 = vunpack.c.l.b16 %v8708
  %v8746 = vunpack.c.l.b16 %v8709
  %v8747 = vunpack.c.l.b16 %v8710
  %v8748 = vunpack.c.l.b16 %v8711
  %v8749 = vunpack.c.l.b16 %v8712
  %v8750 = vunpack.c.l.b16 %v8713
  %v8751 = vunpack.c.l.b16 %v8714
  %v8752 = vunpack.c.l.b16 %v8715
  %v8753 = vunpack.c.l.b16 %v8716
  %v8754 = vunpack.c.l.b16 %v8717
  %v8755 = vunpack.c.l.b16 %v8718
  %v8756 = vpack.c.b16 %v8741, %v8740
  %v8757 = vpack.c.b16 %v8743, %v8742
  %v8758 = vpack.c.b16 %v8745, %v8744
  %v8759 = vpack.c.b16 %v8747, %v8746
  %v8760 = vpack.c.b16 %v8749, %v8748
  %v8761 = vpack.c.b16 %v8751, %v8750
  %v8762 = vpack.c.b16 %v8753, %v8752
  %v8763 = vpack.c.b16 %v8755, %v8754
  %8772 = vmatpush.bf16.msra.mxu0 %v8763
  %8773 = vmatpush.bf16.msra.mxu0 %v8762
  %8774 = vmatpush.bf16.msra.mxu0 %v8761
  %8775 = vmatpush.bf16.msra.mxu0 %v8760
  %8776 = vmatpush.bf16.msra.mxu0 %v8759
  %8777 = vmatpush.bf16.msra.mxu0 %v8758
  %8778 = vmatpush.bf16.msra.mxu0 %v8757
  %8779 = vmatpush.bf16.msra.mxu0 %v8756
  %8780 = vmatmul.bf16.gmra.mxu0 %v8698
  %v8781 = vpop.f32.mrf.mxu0
  %v8782 = vadd.f32 %v8722, %v8781
  %v8783 = vpop.f32.mrf.mxu0
  %v8784 = vadd.f32 %v8722, %v8783
  %8785 = vmatmul.bf16.gmra.mxu0 %v8699
  %v8786 = vpop.f32.mrf.mxu0
  %v8787 = vadd.f32 %v8722, %v8786
  %v8788 = vpop.f32.mrf.mxu0
  %v8789 = vadd.f32 %v8722, %v8788
  %8790 = vmatmul.bf16.gmra.mxu0 %v8700
  %v8791 = vpop.f32.mrf.mxu0
  %v8792 = vadd.f32 %v8722, %v8791
  %v8793 = vpop.f32.mrf.mxu0
  %v8794 = vadd.f32 %v8722, %v8793
  %8795 = vmatmul.bf16.gmra.mxu0 %v8701
  %v8796 = vpop.f32.mrf.mxu0
  %v8797 = vadd.f32 %v8722, %v8796
  %v8798 = vpop.f32.mrf.mxu0
  %v8799 = vadd.f32 %v8722, %v8798
  %8800 = vdwg.mxu0
  %v8801 = vadd.f32 %v8782, %v8515
  %v8802 = vadd.f32 %v8784, %v8516
  %v8803 = vadd.f32 %v8787, %v8517
  %v8804 = vadd.f32 %v8789, %v8518
  %v8805 = vadd.f32 %v8792, %v8519
  %v8806 = vadd.f32 %v8794, %v8520
  %v8807 = vadd.f32 %v8797, %v8521
  %v8808 = vadd.f32 %v8799, %v8522
  %s8809 = scalar_lea.vmem %s11, 9
  %v8810 = vld [vmem:[%s8809] sm:$0x1]
  %s8811 = scalar_lea.vmem %s11, 10
  %v8812 = vld [vmem:[%s8811] sm:$0x1]
  %v8813 = vmul.f32 %v8801, %v58
  %v8814 = vmul.f32 %v8802, %v58
  %v8815 = vmul.f32 %v8803, %v58
  %v8816 = vmul.f32 %v8804, %v58
  %v8817 = vmul.f32 %v8805, %v58
  %v8818 = vmul.f32 %v8806, %v58
  %v8819 = vmul.f32 %v8807, %v58
  %v8820 = vmul.f32 %v8808, %v58
  %8821 = vadd.xlane.f32.xlu0 %v8813
  %v8822 = vpop.xlane.xlu0 %8821
  %8823 = vadd.xlane.f32.xlu0 %v8814
  %v8824 = vpop.xlane.xlu0 %8823
  %8825 = vadd.xlane.f32.xlu0 %v8815
  %v8826 = vpop.xlane.xlu0 %8825
  %8827 = vadd.xlane.f32.xlu0 %v8816
  %v8828 = vpop.xlane.xlu0 %8827
  %8829 = vadd.xlane.f32.xlu0 %v8817
  %v8830 = vpop.xlane.xlu0 %8829
  %8831 = vadd.xlane.f32.xlu0 %v8818
  %v8832 = vpop.xlane.xlu0 %8831
  %8833 = vadd.xlane.f32.xlu0 %v8819
  %v8834 = vpop.xlane.xlu0 %8833
  %8835 = vadd.xlane.f32.xlu0 %v8820
  %v8836 = vpop.xlane.xlu0 %8835
  %v8837 = vmul.f32 %v8822, 0.015625
  %v8838 = vmul.f32 %v8824, 0.015625
  %v8839 = vmul.f32 %v8826, 0.015625
  %v8840 = vmul.f32 %v8828, 0.015625
  %v8841 = vmul.f32 %v8830, 0.015625
  %v8842 = vmul.f32 %v8832, 0.015625
  %v8843 = vmul.f32 %v8834, 0.015625
  %v8844 = vmul.f32 %v8836, 0.015625
  %v8845 = vsub.f32 %v8801, %v8837
  %v8846 = vsub.f32 %v8802, %v8838
  %v8847 = vsub.f32 %v8803, %v8839
  %v8848 = vsub.f32 %v8804, %v8840
  %v8849 = vsub.f32 %v8805, %v8841
  %v8850 = vsub.f32 %v8806, %v8842
  %v8851 = vsub.f32 %v8807, %v8843
  %v8852 = vsub.f32 %v8808, %v8844
  %v8853 = vmul.f32 %v8845, %v58
  %v8854 = vmul.f32 %v8846, %v58
  %v8855 = vmul.f32 %v8847, %v58
  %v8856 = vmul.f32 %v8848, %v58
  %v8857 = vmul.f32 %v8849, %v58
  %v8858 = vmul.f32 %v8850, %v58
  %v8859 = vmul.f32 %v8851, %v58
  %v8860 = vmul.f32 %v8852, %v58
  %v8861 = vmul.f32 %v8853, %v8853
  %v8862 = vmul.f32 %v8854, %v8854
  %v8863 = vmul.f32 %v8855, %v8855
  %v8864 = vmul.f32 %v8856, %v8856
  %v8865 = vmul.f32 %v8857, %v8857
  %v8866 = vmul.f32 %v8858, %v8858
  %v8867 = vmul.f32 %v8859, %v8859
  %v8868 = vmul.f32 %v8860, %v8860
  %8869 = vadd.xlane.f32.xlu0 %v8861
  %v8870 = vpop.xlane.xlu0 %8869
  %8871 = vadd.xlane.f32.xlu0 %v8862
  %v8872 = vpop.xlane.xlu0 %8871
  %8873 = vadd.xlane.f32.xlu0 %v8863
  %v8874 = vpop.xlane.xlu0 %8873
  %8875 = vadd.xlane.f32.xlu0 %v8864
  %v8876 = vpop.xlane.xlu0 %8875
  %8877 = vadd.xlane.f32.xlu0 %v8865
  %v8878 = vpop.xlane.xlu0 %8877
  %8879 = vadd.xlane.f32.xlu0 %v8866
  %v8880 = vpop.xlane.xlu0 %8879
  %8881 = vadd.xlane.f32.xlu0 %v8867
  %v8882 = vpop.xlane.xlu0 %8881
  %8883 = vadd.xlane.f32.xlu0 %v8868
  %v8884 = vpop.xlane.xlu0 %8883
  %v8885 = vmul.f32 %v8870, 0.015625
  %v8886 = vmul.f32 %v8872, 0.015625
  %v8887 = vmul.f32 %v8874, 0.015625
  %v8888 = vmul.f32 %v8876, 0.015625
  %v8889 = vmul.f32 %v8878, 0.015625
  %v8890 = vmul.f32 %v8880, 0.015625
  %v8891 = vmul.f32 %v8882, 0.015625
  %v8892 = vmul.f32 %v8884, 0.015625
  %v8893 = vadd.f32 %v8885, 1e-12
  %v8894 = vadd.f32 %v8886, 1e-12
  %v8895 = vadd.f32 %v8887, 1e-12
  %v8896 = vadd.f32 %v8888, 1e-12
  %v8897 = vadd.f32 %v8889, 1e-12
  %v8898 = vadd.f32 %v8890, 1e-12
  %v8899 = vadd.f32 %v8891, 1e-12
  %v8900 = vadd.f32 %v8892, 1e-12
  %v8901 = vrsqrt.pop %v8893
  %v8902 = vmul.f32 %v8901, %v8893
  %v8903 = vmul.f32 %v8902, %v8901
  %v8904 = vmul.f32 0.5, %v8903
  %v8905 = vsub.f32 1.5, %v8904
  %v8906 = vmul.f32 %v8901, %v8905
  %vm8907 = vweird.f32 %v8893
  %vm8908 = vweird.f32 %v8901
  %vm8909 = vmor %vm8907, %vm8908
  %v8910 = vsel %vm8909, %v8901, %v8906
  %v8911 = vrsqrt.pop %v8894
  %v8912 = vmul.f32 %v8911, %v8894
  %v8913 = vmul.f32 %v8912, %v8911
  %v8914 = vmul.f32 0.5, %v8913
  %v8915 = vsub.f32 1.5, %v8914
  %v8916 = vmul.f32 %v8911, %v8915
  %vm8917 = vweird.f32 %v8894
  %vm8918 = vweird.f32 %v8911
  %vm8919 = vmor %vm8917, %vm8918
  %v8920 = vsel %vm8919, %v8911, %v8916
  %v8921 = vrsqrt.pop %v8895
  %v8922 = vmul.f32 %v8921, %v8895
  %v8923 = vmul.f32 %v8922, %v8921
  %v8924 = vmul.f32 0.5, %v8923
  %v8925 = vsub.f32 1.5, %v8924
  %v8926 = vmul.f32 %v8921, %v8925
  %vm8927 = vweird.f32 %v8895
  %vm8928 = vweird.f32 %v8921
  %vm8929 = vmor %vm8927, %vm8928
  %v8930 = vsel %vm8929, %v8921, %v8926
  %v8931 = vrsqrt.pop %v8896
  %v8932 = vmul.f32 %v8931, %v8896
  %v8933 = vmul.f32 %v8932, %v8931
  %v8934 = vmul.f32 0.5, %v8933
  %v8935 = vsub.f32 1.5, %v8934
  %v8936 = vmul.f32 %v8931, %v8935
  %vm8937 = vweird.f32 %v8896
  %vm8938 = vweird.f32 %v8931
  %vm8939 = vmor %vm8937, %vm8938
  %v8940 = vsel %vm8939, %v8931, %v8936
  %v8941 = vrsqrt.pop %v8897
  %v8942 = vmul.f32 %v8941, %v8897
  %v8943 = vmul.f32 %v8942, %v8941
  %v8944 = vmul.f32 0.5, %v8943
  %v8945 = vsub.f32 1.5, %v8944
  %v8946 = vmul.f32 %v8941, %v8945
  %vm8947 = vweird.f32 %v8897
  %vm8948 = vweird.f32 %v8941
  %vm8949 = vmor %vm8947, %vm8948
  %v8950 = vsel %vm8949, %v8941, %v8946
  %v8951 = vrsqrt.pop %v8898
  %v8952 = vmul.f32 %v8951, %v8898
  %v8953 = vmul.f32 %v8952, %v8951
  %v8954 = vmul.f32 0.5, %v8953
  %v8955 = vsub.f32 1.5, %v8954
  %v8956 = vmul.f32 %v8951, %v8955
  %vm8957 = vweird.f32 %v8898
  %vm8958 = vweird.f32 %v8951
  %vm8959 = vmor %vm8957, %vm8958
  %v8960 = vsel %vm8959, %v8951, %v8956
  %v8961 = vrsqrt.pop %v8899
  %v8962 = vmul.f32 %v8961, %v8899
  %v8963 = vmul.f32 %v8962, %v8961
  %v8964 = vmul.f32 0.5, %v8963
  %v8965 = vsub.f32 1.5, %v8964
  %v8966 = vmul.f32 %v8961, %v8965
  %vm8967 = vweird.f32 %v8899
  %vm8968 = vweird.f32 %v8961
  %vm8969 = vmor %vm8967, %vm8968
  %v8970 = vsel %vm8969, %v8961, %v8966
  %v8971 = vrsqrt.pop %v8900
  %v8972 = vmul.f32 %v8971, %v8900
  %v8973 = vmul.f32 %v8972, %v8971
  %v8974 = vmul.f32 0.5, %v8973
  %v8975 = vsub.f32 1.5, %v8974
  %v8976 = vmul.f32 %v8971, %v8975
  %vm8977 = vweird.f32 %v8900
  %vm8978 = vweird.f32 %v8971
  %vm8979 = vmor %vm8977, %vm8978
  %v8980 = vsel %vm8979, %v8971, %v8976
  %v8981 = vmul.f32 %v8853, %v8910
  %v8982 = vmul.f32 %v8854, %v8920
  %v8983 = vmul.f32 %v8855, %v8930
  %v8984 = vmul.f32 %v8856, %v8940
  %v8985 = vmul.f32 %v8857, %v8950
  %v8986 = vmul.f32 %v8858, %v8960
  %v8987 = vmul.f32 %v8859, %v8970
  %v8988 = vmul.f32 %v8860, %v8980
  %v8990 = vperm.slane %v8810, 0
  %v8992 = vmul.f32 %v8981, %v8990
  %v8993 = vmul.f32 %v8982, %v8990
  %v8994 = vmul.f32 %v8983, %v8990
  %v8995 = vmul.f32 %v8984, %v8990
  %v8996 = vmul.f32 %v8985, %v8990
  %v8997 = vmul.f32 %v8986, %v8990
  %v8998 = vmul.f32 %v8987, %v8990
  %v8999 = vmul.f32 %v8988, %v8990
  %v9001 = vperm.slane %v8812, 0
  %v9003 = vadd.f32 %v8992, %v9001
  %v9004 = vadd.f32 %v8993, %v9001
  %v9005 = vadd.f32 %v8994, %v9001
  %v9006 = vadd.f32 %v8995, %v9001
  %v9007 = vadd.f32 %v8996, %v9001
  %v9008 = vadd.f32 %v8997, %v9001
  %v9009 = vadd.f32 %v8998, %v9001
  %v9010 = vadd.f32 %v8999, %v9001
  %s9011 = scalar_lea.vmem %s11, 11
  %v9012 = vld [vmem:[%s9011] sm:$0x1]
  %v9014 = vperm.slane %v9012, 0
  %v9016 = vmul.f32 %v9003, %v9014
  %v9017 = vmul.f32 %v9004, %v9014
  %v9018 = vmul.f32 %v9005, %v9014
  %v9019 = vmul.f32 %v9006, %v9014
  %v9020 = vmul.f32 %v9007, %v9014
  %v9021 = vmul.f32 %v9008, %v9014
  %v9022 = vmul.f32 %v9009, %v9014
  %v9023 = vmul.f32 %v9010, %v9014
  %9024 = vadd.xlane.f32.xlu0 %v9016
  %v9025 = vpop.xlane.xlu0 %9024
  %9026 = vadd.xlane.f32.xlu0 %v9017
  %v9027 = vpop.xlane.xlu0 %9026
  %9028 = vadd.xlane.f32.xlu0 %v9018
  %v9029 = vpop.xlane.xlu0 %9028
  %9030 = vadd.xlane.f32.xlu0 %v9019
  %v9031 = vpop.xlane.xlu0 %9030
  %9032 = vadd.xlane.f32.xlu0 %v9020
  %v9033 = vpop.xlane.xlu0 %9032
  %9034 = vadd.xlane.f32.xlu0 %v9021
  %v9035 = vpop.xlane.xlu0 %9034
  %9036 = vadd.xlane.f32.xlu0 %v9022
  %v9037 = vpop.xlane.xlu0 %9036
  %9038 = vadd.xlane.f32.xlu0 %v9023
  %v9039 = vpop.xlane.xlu0 %9038
  %v9040 = vld [vmem:[#allocation5] sm:$0x1]
  %v9042 = vperm.slane %v9040, 0
  %9043 = vset.pattern.permute.xlu0 0
  %9044 = vperm.xlu0 %9043, %v9042
  %v9045 = vpop.permute.xlu0 %9044
  %v9047 = vadd.f32 %v9025, %v9045
  %v9048 = vadd.f32 %v9027, %v9045
  %v9049 = vadd.f32 %v9029, %v9045
  %v9050 = vadd.f32 %v9031, %v9045
  %v9051 = vadd.f32 %v9033, %v9045
  %v9052 = vadd.f32 %v9035, %v9045
  %v9053 = vadd.f32 %v9037, %v9045
  %v9054 = vadd.f32 %v9039, %v9045
  %v9063 = vperm.slane %v9047, %v48
  %v9064 = vperm.slane %v9048, %v48
  %v9065 = vperm.slane %v9049, %v48
  %v9066 = vperm.slane %v9050, %v48
  %v9067 = vperm.slane %v9051, %v48
  %v9068 = vperm.slane %v9052, %v48
  %v9069 = vperm.slane %v9053, %v48
  %v9070 = vperm.slane %v9054, %v48
  %vm9071 = vcmask 1041409
  %v9072 = vsel %vm9071, %v9064, %v9063
  %vm9073 = vcmask 1042434
  %v9074 = vsel %vm9073, %v9065, %v9072
  %vm9075 = vcmask 1043459
  %v9076 = vsel %vm9075, %v9066, %v9074
  %vm9077 = vcmask 1044484
  %v9078 = vsel %vm9077, %v9067, %v9076
  %vm9079 = vcmask 1045509
  %v9080 = vsel %vm9079, %v9068, %v9078
  %vm9081 = vcmask 1046534
  %v9082 = vsel %vm9081, %v9069, %v9080
  %vm9083 = vcmask 1047559
  %v9084 = vsel %vm9083, %v9070, %v9082
  %9086 = vst.msk [vmem:[%s13] sm:$0xff] %vm7463, %v9084
  // Predicated region
  $region54: #{_lambda_.1} parent=0 // pred_check
    _
  $region55: #{_lambda_.1} parent=0 // pred_check_branch
    %9088 = sbr.rel (0) target = $region57
  $region56: #{_lambda_.1} parent=0 // pred_region
    _
  $region57: #{_lambda_.1} parent=0 // pred_fallthru
    _
  // Predicated region
  $region58: #{_lambda_.1} parent=0 // pred_check
    _
  $region59: #{_lambda_.1} parent=0 // pred_check_branch
    %9090 = sbr.rel (0) target = $region61
  $region60: #{_lambda_.1} parent=0 // pred_region
    _
  $region61: #{_lambda_.1} parent=0 // pred_fallthru
    _

</llo_original>
